<compile_context>
chip_gen: v6e
topology: v6e:2x2x1
jax: 0.10.0
libtpu: 0.0.40
codegen_flags: <defaults>
</compile_context>

<pallas_src>
import jax
import jax.numpy as jnp
import numpy as np
from jax import lax
from jax.experimental import pallas as pl
from jax.experimental.pallas import tpu as pltpu


BT = 32  # images per grid step


def cnn_kernel(xp_ref, w1_ref, b1_ref, w2_ref, b2_ref, wf_ref, bf_ref,
               out_ref, r1_ref, p1_ref, x2_ref, r2_ref):
    """One batch tile (BT images) per grid step; all rows are h-major (h*BT + b).

    xp_ref : (28*BT, 128) bf16  conv1 LHS; row = h*BT + b,
                                lane = kh*30 + wp (wp = padded col 0..29), 90..127 zero
    w1_ref : (128, 224) bf16    conv1 weights; col = (w%2)*112 + (w//2)*8 + cout
    b1_ref : (1, 224)   f32
    w2_ref : (384, 224) bf16    conv2 weights; row = kh*128 + j*8 + cin (j = pool1 col),
                                col = (w%2)*112 + (w//2)*16 + cout
    b2_ref : (1, 224)   f32
    wf_ref : (7, 112, 128) bf16 fc weights per pool2 row; [h, j*16 + c, out]
    bf_ref : (1, 128)   f32
    out_ref: (BT, 128)  f32     fc output (lanes 10..127 unused)
    scratch:
    r1_ref : (28*BT, 224) f32   conv1+relu   (row = h*BT + b)
    p1_ref : (16*BT, 128) bf16  zero-padded pool1 band (block p = padded row p)
    x2_ref : (14*BT, 384) bf16  conv2 LHS (3 kh taps stacked along K)
    r2_ref : (14*BT, 224) f32   conv2+relu
    """
    f32 = jnp.float32
    bf16 = jnp.bfloat16

    # ---- conv1 (3x3, pad=1, Cin=1): all kh/kw taps folded into one K=128 GEMM ----
    acc1 = jnp.dot(xp_ref[...], w1_ref[...], preferred_element_type=f32)  # (28*BT, 224)
    r1_ref[...] = jnp.maximum(acc1 + b1_ref[...], 0.0)

    # ---- maxpool 2x2/2 -> zero-padded conv2 input band ---------------------------
    # h-major rows: even/odd output rows are aligned BT-row blocks; width pairs are
    # the two lane halves (by weight packing).  Halo blocks (p=0,15) + lanes 112..127
    # stay zero from the full zeroing (cheap, and keeps "parallel" sharding safe).
    p1_ref[...] = jnp.zeros((16 * BT, 128), bf16)
    for h in range(14):
        even = r1_ref[(2 * h) * BT:(2 * h + 1) * BT, :]
        odd = r1_ref[(2 * h + 1) * BT:(2 * h + 2) * BT, :]
        hp = jnp.maximum(even, odd)
        pooled = jnp.maximum(hp[:, 0:112], hp[:, 112:224])          # (BT, 112), lane = j*8+cin
        p1_ref[(h + 1) * BT:(h + 2) * BT, 0:112] = pooled.astype(bf16)

    # ---- conv2 (3x3, pad=1, Cin=8): stack the 3 kh taps along K -> one K=384 GEMM -
    x2_ref[:, 0:128] = p1_ref[0:14 * BT, :]        # tap kh=0 : padded rows h
    x2_ref[:, 128:256] = p1_ref[BT:15 * BT, :]     # tap kh=1 : padded rows h+1
    x2_ref[:, 256:384] = p1_ref[2 * BT:16 * BT, :]  # tap kh=2 : padded rows h+2
    acc2 = jnp.dot(x2_ref[...], w2_ref[...], preferred_element_type=f32)  # (14*BT, 224)
    r2_ref[...] = jnp.maximum(acc2 + b2_ref[...], 0.0)

    # ---- maxpool 2x2/2 fused with fc: 7 accumulating (BT,112)@(112,128) GEMMs ----
    accf = jnp.zeros((BT, 128), f32)
    for h in range(7):
        even = r2_ref[(2 * h) * BT:(2 * h + 1) * BT, :]
        odd = r2_ref[(2 * h + 1) * BT:(2 * h + 2) * BT, :]
        hp = jnp.maximum(even, odd)
        p2 = jnp.maximum(hp[:, 0:112], hp[:, 112:224])              # (BT, 112), lane = j*16+c
        accf = accf + jnp.dot(p2.astype(bf16), wf_ref[h], preferred_element_type=f32)
    out_ref[...] = accf + bf_ref[...]


def init_params(key):
    """Deterministic parameters in PyTorch-convention shapes."""
    ks = jax.random.split(key, 6)
    w1 = jax.random.normal(ks[0], (8, 1, 3, 3), jnp.float32) * 0.1      # conv1 OIHW
    b1 = jax.random.normal(ks[1], (8,), jnp.float32) * 0.1
    w2 = jax.random.normal(ks[2], (16, 8, 3, 3), jnp.float32) * 0.1     # conv2 OIHW
    b2 = jax.random.normal(ks[3], (16,), jnp.float32) * 0.1
    wf = jax.random.normal(ks[4], (10, 16 * 7 * 7), jnp.float32) * 0.05  # fc (out, in)
    bf = jax.random.normal(ks[5], (10,), jnp.float32) * 0.05
    return w1, b1, w2, b2, wf, bf


def pack_params(params):
    """Repack PyTorch-layout weights to the kernel's GEMM layouts (host-side glue)."""
    w1, b1, w2, b2, wf, bf = (np.asarray(p, np.float32) for p in params)

    # conv1: row = kh*30 + wp (padded col), col = (w%2)*112 + (w//2)*8 + cout
    w1k = np.zeros((128, 224), np.float32)
    b1row = np.zeros((1, 224), np.float32)
    for w in range(28):
        col = (w % 2) * 112 + (w // 2) * 8
        b1row[0, col:col + 8] = b1
        for kw in range(3):
            wp = w + kw
            for kh in range(3):
                w1k[kh * 30 + wp, col:col + 8] = w1[:, 0, kh, kw]

    # conv2: row = kh*128 + j*8 + cin (j = pool1 col), col = (w%2)*112 + (w//2)*16 + cout
    w2k = np.zeros((384, 224), np.float32)
    b2row = np.zeros((1, 224), np.float32)
    for w in range(14):
        col = (w % 2) * 112 + (w // 2) * 16
        b2row[0, col:col + 16] = b2
        for kw in range(3):
            j = w + kw - 1                 # out-of-range taps hit zero padding -> dropped
            if 0 <= j <= 13:
                for kh in range(3):
                    w2k[kh * 128 + j * 8:kh * 128 + j * 8 + 8, col:col + 16] = w2[:, :, kh, kw].T

    # fc: PyTorch flatten index c*49 + h*7 + j  ->  wfk[h, j*16 + c, out] (out padded to 128)
    wf4 = wf.reshape(10, 16, 7, 7)                               # (o, c, h, j)
    wfk = np.zeros((7, 112, 128), np.float32)
    wfk[:, :, 0:10] = np.transpose(wf4, (2, 3, 1, 0)).reshape(7, 112, 10)
    bfrow = np.zeros((1, 128), np.float32)
    bfrow[0, 0:10] = bf

    return (jnp.asarray(w1k, jnp.bfloat16), jnp.asarray(b1row, jnp.float32),
            jnp.asarray(w2k, jnp.bfloat16), jnp.asarray(b2row, jnp.float32),
            jnp.asarray(wfk, jnp.bfloat16), jnp.asarray(bfrow, jnp.float32))


def cnn_forward(x_nchw, params):
    B = x_nchw.shape[0]
    NB = max(1, pl.cdiv(B, BT))
    B_pad = NB * BT

    # --- glue: squeeze Cin=1, pad, fold the 3 kh taps into 90 (->128) lanes, h-major ---
    x = x_nchw[:, 0].astype(jnp.float32)                          # (B, 28, 28)
    xpad = jnp.pad(x, ((0, B_pad - B), (1, 1), (1, 1)))           # (B_pad, 30, 30)
    xr = jnp.stack([xpad[:, 0:28, :], xpad[:, 1:29, :], xpad[:, 2:30, :]], axis=2)
    x90 = xr.reshape(B_pad, 28, 90)                               # lane = kh*30 + wp
    x128 = jnp.pad(x90, ((0, 0), (0, 0), (0, 38)))                # zero-pad K to 128
    xp = (x128.reshape(NB, BT, 28, 128)
               .transpose(0, 2, 1, 3)                             # h-major inside each tile
               .reshape(NB * 28 * BT, 128)
               .astype(jnp.bfloat16))

    w1k, b1row, w2k, b2row, wfk, bfrow = pack_params(params)

    out = pl.pallas_call(
        cnn_kernel,
        out_shape=jax.ShapeDtypeStruct((B_pad, 128), jnp.float32),
        grid_spec=pltpu.PrefetchScalarGridSpec(
            num_scalar_prefetch=0,
            grid=(NB,),
            in_specs=[
                pl.BlockSpec((28 * BT, 128), lambda i: (i, 0)),
                pl.BlockSpec((128, 224), lambda i: (0, 0)),
                pl.BlockSpec((1, 224), lambda i: (0, 0)),
                pl.BlockSpec((384, 224), lambda i: (0, 0)),
                pl.BlockSpec((1, 224), lambda i: (0, 0)),
                pl.BlockSpec((7, 112, 128), lambda i: (0, 0, 0)),
                pl.BlockSpec((1, 128), lambda i: (0, 0)),
            ],
            out_specs=pl.BlockSpec((BT, 128), lambda i: (i, 0)),
            scratch_shapes=[
                pltpu.VMEM((28 * BT, 224), jnp.float32),    # conv1+relu output
                pltpu.VMEM((16 * BT, 128), jnp.bfloat16),   # padded pool1 band
                pltpu.VMEM((14 * BT, 384), jnp.bfloat16),   # conv2 LHS (kh stacked on K)
                pltpu.VMEM((14 * BT, 224), jnp.float32),    # conv2+relu output
            ],
        ),
        compiler_params=pltpu.CompilerParams(dimension_semantics=("parallel",)),
    )(xp, w1k, b1row, w2k, b2row, wfk, bfrow)
    return out[:B, :10]                                           # (B, 10)


def cnn_reference(x_nchw, params):
    """Pure-JAX f32 reference matching the PyTorch forward exactly."""
    w1, b1, w2, b2, wf, bf = params
    dn = ('NCHW', 'OIHW', 'NCHW')
    y = lax.conv_general_dilated(x_nchw, w1, (1, 1), ((1, 1), (1, 1)), dimension_numbers=dn)
    y = jax.nn.relu(y + b1.reshape(1, -1, 1, 1))
    B, C, H, W = y.shape
    y = y.reshape(B, C, H // 2, 2, W // 2, 2).max(axis=(3, 5))
    y = lax.conv_general_dilated(y, w2, (1, 1), ((1, 1), (1, 1)), dimension_numbers=dn)
    y = jax.nn.relu(y + b2.reshape(1, -1, 1, 1))
    B, C, H, W = y.shape
    y = y.reshape(B, C, H // 2, 2, W // 2, 2).max(axis=(3, 5))
    flat = y.reshape(B, -1)                                       # (B, 16*7*7) in (c,h,w) order
    return flat @ wf.T + bf[None, :]


if __name__ == "__main__":
    key = jax.random.PRNGKey(0)
    kx, kp = jax.random.split(key)
    x = jax.random.normal(kx, (2, 1, 28, 28), jnp.float32)        # MNIST-like NCHW input
    params = init_params(kp)

    out = cnn_forward(x, params)
    out = jax.block_until_ready(out)
    assert out.shape == (2, 10) and out.dtype == jnp.float32

    ref = cnn_reference(x, params)
    max_err = float(jnp.max(jnp.abs(out - ref)))
    # bf16 GEMM operands with f32 accumulation: tolerance covers the operand rounding.
    assert jnp.allclose(out, ref, atol=3e-2, rtol=3e-2), f"mismatch vs reference, max|err|={max_err}"

    print("KERNEL_OK")
</pallas_src>

<mosaic_0001>
module attributes {stable_mosaic.version = 11 : i64} {
  func.func @cnn_kernel(%arg0: i32, %arg1: memref<896x128xbf16, #tpu.memory_space<vmem>>, %arg2: memref<128x224xbf16, #tpu.memory_space<vmem>>, %arg3: memref<1x224xf32, #tpu.memory_space<vmem>>, %arg4: memref<384x224xbf16, #tpu.memory_space<vmem>>, %arg5: memref<1x224xf32, #tpu.memory_space<vmem>>, %arg6: memref<7x112x128xbf16, #tpu.memory_space<vmem>>, %arg7: memref<1x128xf32, #tpu.memory_space<vmem>>, %arg8: memref<32x128xf32, #tpu.memory_space<vmem>>, %arg9: memref<896x224xf32, #tpu.memory_space<vmem>>, %arg10: memref<512x128xbf16, #tpu.memory_space<vmem>>, %arg11: memref<448x384xbf16, #tpu.memory_space<vmem>>, %arg12: memref<448x224xf32, #tpu.memory_space<vmem>>) attributes {dimension_semantics = [#tpu.dimension_semantics<parallel>], iteration_bounds = array<i64: 1>, scalar_prefetch = 0 : i64, scratch_operands = 4 : i64, tpu.core_type = #tpu.core_type<tc>, window_params = [{transform_indices = @transform_0, window_bounds = array<i64: 896, 128>}, {pipeline_mode = #tpu.pipeline_mode<synchronous>, transform_indices = @transform_1, window_bounds = array<i64: 128, 224>}, {pipeline_mode = #tpu.pipeline_mode<synchronous>, transform_indices = @transform_2, window_bounds = array<i64: 1, 224>}, {pipeline_mode = #tpu.pipeline_mode<synchronous>, transform_indices = @transform_3, window_bounds = array<i64: 384, 224>}, {pipeline_mode = #tpu.pipeline_mode<synchronous>, transform_indices = @transform_4, window_bounds = array<i64: 1, 224>}, {pipeline_mode = #tpu.pipeline_mode<synchronous>, transform_indices = @transform_5, window_bounds = array<i64: 7, 112, 128>}, {pipeline_mode = #tpu.pipeline_mode<synchronous>, transform_indices = @transform_6, window_bounds = array<i64: 1, 128>}, {transform_indices = @transform_7, window_bounds = array<i64: 32, 128>}]} {
    %c0 = arith.constant 0 : index
    %c0_0 = arith.constant 0 : index
    %0 = vector.load %arg1[%c0, %c0_0] : memref<896x128xbf16, #tpu.memory_space<vmem>>, vector<896x128xbf16>
    %c0_1 = arith.constant 0 : index
    %c0_2 = arith.constant 0 : index
    %1 = vector.load %arg2[%c0_1, %c0_2] : memref<128x224xbf16, #tpu.memory_space<vmem>>, vector<128x224xbf16>
    %cst = arith.constant dense<0.000000e+00> : vector<896x224xf32>
    %2 = tpu.matmul %0, %1, %cst {dimension_numbers = #tpu.dot_dimension_numbers<[1], [0], [0], [1], [0, 0, 1, 1], [], []>} : vector<896x128xbf16>, vector<128x224xbf16>, vector<896x224xf32> -> vector<896x224xf32>
    %c0_3 = arith.constant 0 : index
    %c0_4 = arith.constant 0 : index
    %3 = vector.load %arg3[%c0_3, %c0_4] : memref<1x224xf32, #tpu.memory_space<vmem>>, vector<1x224xf32>
    %4 = vector.broadcast %3 : vector<1x224xf32> to vector<896x224xf32>
    %5 = arith.addf %2, %4 : vector<896x224xf32>
    %cst_5 = arith.constant 0.000000e+00 : f32
    %6 = vector.broadcast %cst_5 : f32 to vector<896x224xf32>
    %7 = arith.maximumf %5, %6 : vector<896x224xf32>
    %c0_6 = arith.constant 0 : index
    %c0_7 = arith.constant 0 : index
    %8 = vector.load %arg9[%c0_6, %c0_7] : memref<896x224xf32, #tpu.memory_space<vmem>>, vector<896x224xf32>
    tpu.vector_store %arg9[%c0_6, %c0_7], %7 {strides = array<i32>} : memref<896x224xf32, #tpu.memory_space<vmem>>, vector<896x224xf32>,
    %cst_8 = arith.constant 0.000000e+00 : bf16
    %9 = vector.broadcast %cst_8 : bf16 to vector<512x128xbf16>
    %c0_9 = arith.constant 0 : index
    %c0_10 = arith.constant 0 : index
    %10 = vector.load %arg10[%c0_9, %c0_10] : memref<512x128xbf16, #tpu.memory_space<vmem>>, vector<512x128xbf16>
    tpu.vector_store %arg10[%c0_9, %c0_10], %9 {strides = array<i32>} : memref<512x128xbf16, #tpu.memory_space<vmem>>, vector<512x128xbf16>,
    %c0_11 = arith.constant 0 : index
    %c0_12 = arith.constant 0 : index
    %11 = vector.load %arg9[%c0_11, %c0_12] : memref<896x224xf32, #tpu.memory_space<vmem>>, vector<32x224xf32>
    %c32 = arith.constant 32 : index
    %c0_13 = arith.constant 0 : index
    %12 = vector.load %arg9[%c32, %c0_13] : memref<896x224xf32, #tpu.memory_space<vmem>>, vector<32x224xf32>
    %13 = arith.maximumf %11, %12 : vector<32x224xf32>
    %14 = vector.extract_strided_slice %13 {offsets = [0, 0], sizes = [32, 112], strides = [1, 1]} : vector<32x224xf32> to vector<32x112xf32>
    %15 = vector.extract_strided_slice %13 {offsets = [0, 112], sizes = [32, 112], strides = [1, 1]} : vector<32x224xf32> to vector<32x112xf32>
    %16 = arith.maximumf %14, %15 : vector<32x112xf32>
    %17 = arith.truncf %16 : vector<32x112xf32> to vector<32x112xbf16>
    %c32_14 = arith.constant 32 : index
    %c0_15 = arith.constant 0 : index
    %18 = vector.load %arg10[%c32_14, %c0_15] : memref<512x128xbf16, #tpu.memory_space<vmem>>, vector<32x112xbf16>
    tpu.vector_store %arg10[%c32_14, %c0_15], %17 {strides = array<i32>} : memref<512x128xbf16, #tpu.memory_space<vmem>>, vector<32x112xbf16>,
    %c64 = arith.constant 64 : index
    %c0_16 = arith.constant 0 : index
    %19 = vector.load %arg9[%c64, %c0_16] : memref<896x224xf32, #tpu.memory_space<vmem>>, vector<32x224xf32>
    %c96 = arith.constant 96 : index
    %c0_17 = arith.constant 0 : index
    %20 = vector.load %arg9[%c96, %c0_17] : memref<896x224xf32, #tpu.memory_space<vmem>>, vector<32x224xf32>
    %21 = arith.maximumf %19, %20 : vector<32x224xf32>
    %22 = vector.extract_strided_slice %21 {offsets = [0, 0], sizes = [32, 112], strides = [1, 1]} : vector<32x224xf32> to vector<32x112xf32>
    %23 = vector.extract_strided_slice %21 {offsets = [0, 112], sizes = [32, 112], strides = [1, 1]} : vector<32x224xf32> to vector<32x112xf32>
    %24 = arith.maximumf %22, %23 : vector<32x112xf32>
    %25 = arith.truncf %24 : vector<32x112xf32> to vector<32x112xbf16>
    %c64_18 = arith.constant 64 : index
    %c0_19 = arith.constant 0 : index
    %26 = vector.load %arg10[%c64_18, %c0_19] : memref<512x128xbf16, #tpu.memory_space<vmem>>, vector<32x112xbf16>
    tpu.vector_store %arg10[%c64_18, %c0_19], %25 {strides = array<i32>} : memref<512x128xbf16, #tpu.memory_space<vmem>>, vector<32x112xbf16>,
    %c128 = arith.constant 128 : index
    %c0_20 = arith.constant 0 : index
    %27 = vector.load %arg9[%c128, %c0_20] : memref<896x224xf32, #tpu.memory_space<vmem>>, vector<32x224xf32>
    %c160 = arith.constant 160 : index
    %c0_21 = arith.constant 0 : index
    %28 = vector.load %arg9[%c160, %c0_21] : memref<896x224xf32, #tpu.memory_space<vmem>>, vector<32x224xf32>
    %29 = arith.maximumf %27, %28 : vector<32x224xf32>
    %30 = vector.extract_strided_slice %29 {offsets = [0, 0], sizes = [32, 112], strides = [1, 1]} : vector<32x224xf32> to vector<32x112xf32>
    %31 = vector.extract_strided_slice %29 {offsets = [0, 112], sizes = [32, 112], strides = [1, 1]} : vector<32x224xf32> to vector<32x112xf32>
    %32 = arith.maximumf %30, %31 : vector<32x112xf32>
    %33 = arith.truncf %32 : vector<32x112xf32> to vector<32x112xbf16>
    %c96_22 = arith.constant 96 : index
    %c0_23 = arith.constant 0 : index
    %34 = vector.load %arg10[%c96_22, %c0_23] : memref<512x128xbf16, #tpu.memory_space<vmem>>, vector<32x112xbf16>
    tpu.vector_store %arg10[%c96_22, %c0_23], %33 {strides = array<i32>} : memref<512x128xbf16, #tpu.memory_space<vmem>>, vector<32x112xbf16>,
    %c192 = arith.constant 192 : index
    %c0_24 = arith.constant 0 : index
    %35 = vector.load %arg9[%c192, %c0_24] : memref<896x224xf32, #tpu.memory_space<vmem>>, vector<32x224xf32>
    %c224 = arith.constant 224 : index
    %c0_25 = arith.constant 0 : index
    %36 = vector.load %arg9[%c224, %c0_25] : memref<896x224xf32, #tpu.memory_space<vmem>>, vector<32x224xf32>
    %37 = arith.maximumf %35, %36 : vector<32x224xf32>
    %38 = vector.extract_strided_slice %37 {offsets = [0, 0], sizes = [32, 112], strides = [1, 1]} : vector<32x224xf32> to vector<32x112xf32>
    %39 = vector.extract_strided_slice %37 {offsets = [0, 112], sizes = [32, 112], strides = [1, 1]} : vector<32x224xf32> to vector<32x112xf32>
    %40 = arith.maximumf %38, %39 : vector<32x112xf32>
    %41 = arith.truncf %40 : vector<32x112xf32> to vector<32x112xbf16>
    %c128_26 = arith.constant 128 : index
    %c0_27 = arith.constant 0 : index
    %42 = vector.load %arg10[%c128_26, %c0_27] : memref<512x128xbf16, #tpu.memory_space<vmem>>, vector<32x112xbf16>
    tpu.vector_store %arg10[%c128_26, %c0_27], %41 {strides = array<i32>} : memref<512x128xbf16, #tpu.memory_space<vmem>>, vector<32x112xbf16>,
    %c256 = arith.constant 256 : index
    %c0_28 = arith.constant 0 : index
    %43 = vector.load %arg9[%c256, %c0_28] : memref<896x224xf32, #tpu.memory_space<vmem>>, vector<32x224xf32>
    %c288 = arith.constant 288 : index
    %c0_29 = arith.constant 0 : index
    %44 = vector.load %arg9[%c288, %c0_29] : memref<896x224xf32, #tpu.memory_space<vmem>>, vector<32x224xf32>
    %45 = arith.maximumf %43, %44 : vector<32x224xf32>
    %46 = vector.extract_strided_slice %45 {offsets = [0, 0], sizes = [32, 112], strides = [1, 1]} : vector<32x224xf32> to vector<32x112xf32>
    %47 = vector.extract_strided_slice %45 {offsets = [0, 112], sizes = [32, 112], strides = [1, 1]} : vector<32x224xf32> to vector<32x112xf32>
    %48 = arith.maximumf %46, %47 : vector<32x112xf32>
    %49 = arith.truncf %48 : vector<32x112xf32> to vector<32x112xbf16>
    %c160_30 = arith.constant 160 : index
    %c0_31 = arith.constant 0 : index
    %50 = vector.load %arg10[%c160_30, %c0_31] : memref<512x128xbf16, #tpu.memory_space<vmem>>, vector<32x112xbf16>
    tpu.vector_store %arg10[%c160_30, %c0_31], %49 {strides = array<i32>} : memref<512x128xbf16, #tpu.memory_space<vmem>>, vector<32x112xbf16>,
    %c320 = arith.constant 320 : index
    %c0_32 = arith.constant 0 : index
    %51 = vector.load %arg9[%c320, %c0_32] : memref<896x224xf32, #tpu.memory_space<vmem>>, vector<32x224xf32>
    %c352 = arith.constant 352 : index
    %c0_33 = arith.constant 0 : index
    %52 = vector.load %arg9[%c352, %c0_33] : memref<896x224xf32, #tpu.memory_space<vmem>>, vector<32x224xf32>
    %53 = arith.maximumf %51, %52 : vector<32x224xf32>
    %54 = vector.extract_strided_slice %53 {offsets = [0, 0], sizes = [32, 112], strides = [1, 1]} : vector<32x224xf32> to vector<32x112xf32>
    %55 = vector.extract_strided_slice %53 {offsets = [0, 112], sizes = [32, 112], strides = [1, 1]} : vector<32x224xf32> to vector<32x112xf32>
    %56 = arith.maximumf %54, %55 : vector<32x112xf32>
    %57 = arith.truncf %56 : vector<32x112xf32> to vector<32x112xbf16>
    %c192_34 = arith.constant 192 : index
    %c0_35 = arith.constant 0 : index
    %58 = vector.load %arg10[%c192_34, %c0_35] : memref<512x128xbf16, #tpu.memory_space<vmem>>, vector<32x112xbf16>
    tpu.vector_store %arg10[%c192_34, %c0_35], %57 {strides = array<i32>} : memref<512x128xbf16, #tpu.memory_space<vmem>>, vector<32x112xbf16>,
    %c384 = arith.constant 384 : index
    %c0_36 = arith.constant 0 : index
    %59 = vector.load %arg9[%c384, %c0_36] : memref<896x224xf32, #tpu.memory_space<vmem>>, vector<32x224xf32>
    %c416 = arith.constant 416 : index
    %c0_37 = arith.constant 0 : index
    %60 = vector.load %arg9[%c416, %c0_37] : memref<896x224xf32, #tpu.memory_space<vmem>>, vector<32x224xf32>
    %61 = arith.maximumf %59, %60 : vector<32x224xf32>
    %62 = vector.extract_strided_slice %61 {offsets = [0, 0], sizes = [32, 112], strides = [1, 1]} : vector<32x224xf32> to vector<32x112xf32>
    %63 = vector.extract_strided_slice %61 {offsets = [0, 112], sizes = [32, 112], strides = [1, 1]} : vector<32x224xf32> to vector<32x112xf32>
    %64 = arith.maximumf %62, %63 : vector<32x112xf32>
    %65 = arith.truncf %64 : vector<32x112xf32> to vector<32x112xbf16>
    %c224_38 = arith.constant 224 : index
    %c0_39 = arith.constant 0 : index
    %66 = vector.load %arg10[%c224_38, %c0_39] : memref<512x128xbf16, #tpu.memory_space<vmem>>, vector<32x112xbf16>
    tpu.vector_store %arg10[%c224_38, %c0_39], %65 {strides = array<i32>} : memref<512x128xbf16, #tpu.memory_space<vmem>>, vector<32x112xbf16>,
    %c448 = arith.constant 448 : index
    %c0_40 = arith.constant 0 : index
    %67 = vector.load %arg9[%c448, %c0_40] : memref<896x224xf32, #tpu.memory_space<vmem>>, vector<32x224xf32>
    %c480 = arith.constant 480 : index
    %c0_41 = arith.constant 0 : index
    %68 = vector.load %arg9[%c480, %c0_41] : memref<896x224xf32, #tpu.memory_space<vmem>>, vector<32x224xf32>
    %69 = arith.maximumf %67, %68 : vector<32x224xf32>
    %70 = vector.extract_strided_slice %69 {offsets = [0, 0], sizes = [32, 112], strides = [1, 1]} : vector<32x224xf32> to vector<32x112xf32>
    %71 = vector.extract_strided_slice %69 {offsets = [0, 112], sizes = [32, 112], strides = [1, 1]} : vector<32x224xf32> to vector<32x112xf32>
    %72 = arith.maximumf %70, %71 : vector<32x112xf32>
    %73 = arith.truncf %72 : vector<32x112xf32> to vector<32x112xbf16>
    %c256_42 = arith.constant 256 : index
    %c0_43 = arith.constant 0 : index
    %74 = vector.load %arg10[%c256_42, %c0_43] : memref<512x128xbf16, #tpu.memory_space<vmem>>, vector<32x112xbf16>
    tpu.vector_store %arg10[%c256_42, %c0_43], %73 {strides = array<i32>} : memref<512x128xbf16, #tpu.memory_space<vmem>>, vector<32x112xbf16>,
    %c512 = arith.constant 512 : index
    %c0_44 = arith.constant 0 : index
    %75 = vector.load %arg9[%c512, %c0_44] : memref<896x224xf32, #tpu.memory_space<vmem>>, vector<32x224xf32>
    %c544 = arith.constant 544 : index
    %c0_45 = arith.constant 0 : index
    %76 = vector.load %arg9[%c544, %c0_45] : memref<896x224xf32, #tpu.memory_space<vmem>>, vector<32x224xf32>
    %77 = arith.maximumf %75, %76 : vector<32x224xf32>
    %78 = vector.extract_strided_slice %77 {offsets = [0, 0], sizes = [32, 112], strides = [1, 1]} : vector<32x224xf32> to vector<32x112xf32>
    %79 = vector.extract_strided_slice %77 {offsets = [0, 112], sizes = [32, 112], strides = [1, 1]} : vector<32x224xf32> to vector<32x112xf32>
    %80 = arith.maximumf %78, %79 : vector<32x112xf32>
    %81 = arith.truncf %80 : vector<32x112xf32> to vector<32x112xbf16>
    %c288_46 = arith.constant 288 : index
    %c0_47 = arith.constant 0 : index
    %82 = vector.load %arg10[%c288_46, %c0_47] : memref<512x128xbf16, #tpu.memory_space<vmem>>, vector<32x112xbf16>
    tpu.vector_store %arg10[%c288_46, %c0_47], %81 {strides = array<i32>} : memref<512x128xbf16, #tpu.memory_space<vmem>>, vector<32x112xbf16>,
    %c576 = arith.constant 576 : index
    %c0_48 = arith.constant 0 : index
    %83 = vector.load %arg9[%c576, %c0_48] : memref<896x224xf32, #tpu.memory_space<vmem>>, vector<32x224xf32>
    %c608 = arith.constant 608 : index
    %c0_49 = arith.constant 0 : index
    %84 = vector.load %arg9[%c608, %c0_49] : memref<896x224xf32, #tpu.memory_space<vmem>>, vector<32x224xf32>
    %85 = arith.maximumf %83, %84 : vector<32x224xf32>
    %86 = vector.extract_strided_slice %85 {offsets = [0, 0], sizes = [32, 112], strides = [1, 1]} : vector<32x224xf32> to vector<32x112xf32>
    %87 = vector.extract_strided_slice %85 {offsets = [0, 112], sizes = [32, 112], strides = [1, 1]} : vector<32x224xf32> to vector<32x112xf32>
    %88 = arith.maximumf %86, %87 : vector<32x112xf32>
    %89 = arith.truncf %88 : vector<32x112xf32> to vector<32x112xbf16>
    %c320_50 = arith.constant 320 : index
    %c0_51 = arith.constant 0 : index
    %90 = vector.load %arg10[%c320_50, %c0_51] : memref<512x128xbf16, #tpu.memory_space<vmem>>, vector<32x112xbf16>
    tpu.vector_store %arg10[%c320_50, %c0_51], %89 {strides = array<i32>} : memref<512x128xbf16, #tpu.memory_space<vmem>>, vector<32x112xbf16>,
    %c640 = arith.constant 640 : index
    %c0_52 = arith.constant 0 : index
    %91 = vector.load %arg9[%c640, %c0_52] : memref<896x224xf32, #tpu.memory_space<vmem>>, vector<32x224xf32>
    %c672 = arith.constant 672 : index
    %c0_53 = arith.constant 0 : index
    %92 = vector.load %arg9[%c672, %c0_53] : memref<896x224xf32, #tpu.memory_space<vmem>>, vector<32x224xf32>
    %93 = arith.maximumf %91, %92 : vector<32x224xf32>
    %94 = vector.extract_strided_slice %93 {offsets = [0, 0], sizes = [32, 112], strides = [1, 1]} : vector<32x224xf32> to vector<32x112xf32>
    %95 = vector.extract_strided_slice %93 {offsets = [0, 112], sizes = [32, 112], strides = [1, 1]} : vector<32x224xf32> to vector<32x112xf32>
    %96 = arith.maximumf %94, %95 : vector<32x112xf32>
    %97 = arith.truncf %96 : vector<32x112xf32> to vector<32x112xbf16>
    %c352_54 = arith.constant 352 : index
    %c0_55 = arith.constant 0 : index
    %98 = vector.load %arg10[%c352_54, %c0_55] : memref<512x128xbf16, #tpu.memory_space<vmem>>, vector<32x112xbf16>
    tpu.vector_store %arg10[%c352_54, %c0_55], %97 {strides = array<i32>} : memref<512x128xbf16, #tpu.memory_space<vmem>>, vector<32x112xbf16>,
    %c704 = arith.constant 704 : index
    %c0_56 = arith.constant 0 : index
    %99 = vector.load %arg9[%c704, %c0_56] : memref<896x224xf32, #tpu.memory_space<vmem>>, vector<32x224xf32>
    %c736 = arith.constant 736 : index
    %c0_57 = arith.constant 0 : index
    %100 = vector.load %arg9[%c736, %c0_57] : memref<896x224xf32, #tpu.memory_space<vmem>>, vector<32x224xf32>
    %101 = arith.maximumf %99, %100 : vector<32x224xf32>
    %102 = vector.extract_strided_slice %101 {offsets = [0, 0], sizes = [32, 112], strides = [1, 1]} : vector<32x224xf32> to vector<32x112xf32>
    %103 = vector.extract_strided_slice %101 {offsets = [0, 112], sizes = [32, 112], strides = [1, 1]} : vector<32x224xf32> to vector<32x112xf32>
    %104 = arith.maximumf %102, %103 : vector<32x112xf32>
    %105 = arith.truncf %104 : vector<32x112xf32> to vector<32x112xbf16>
    %c384_58 = arith.constant 384 : index
    %c0_59 = arith.constant 0 : index
    %106 = vector.load %arg10[%c384_58, %c0_59] : memref<512x128xbf16, #tpu.memory_space<vmem>>, vector<32x112xbf16>
    tpu.vector_store %arg10[%c384_58, %c0_59], %105 {strides = array<i32>} : memref<512x128xbf16, #tpu.memory_space<vmem>>, vector<32x112xbf16>,
    %c768 = arith.constant 768 : index
    %c0_60 = arith.constant 0 : index
    %107 = vector.load %arg9[%c768, %c0_60] : memref<896x224xf32, #tpu.memory_space<vmem>>, vector<32x224xf32>
    %c800 = arith.constant 800 : index
    %c0_61 = arith.constant 0 : index
    %108 = vector.load %arg9[%c800, %c0_61] : memref<896x224xf32, #tpu.memory_space<vmem>>, vector<32x224xf32>
    %109 = arith.maximumf %107, %108 : vector<32x224xf32>
    %110 = vector.extract_strided_slice %109 {offsets = [0, 0], sizes = [32, 112], strides = [1, 1]} : vector<32x224xf32> to vector<32x112xf32>
    %111 = vector.extract_strided_slice %109 {offsets = [0, 112], sizes = [32, 112], strides = [1, 1]} : vector<32x224xf32> to vector<32x112xf32>
    %112 = arith.maximumf %110, %111 : vector<32x112xf32>
    %113 = arith.truncf %112 : vector<32x112xf32> to vector<32x112xbf16>
    %c416_62 = arith.constant 416 : index
    %c0_63 = arith.constant 0 : index
    %114 = vector.load %arg10[%c416_62, %c0_63] : memref<512x128xbf16, #tpu.memory_space<vmem>>, vector<32x112xbf16>
    tpu.vector_store %arg10[%c416_62, %c0_63], %113 {strides = array<i32>} : memref<512x128xbf16, #tpu.memory_space<vmem>>, vector<32x112xbf16>,
    %c832 = arith.constant 832 : index
    %c0_64 = arith.constant 0 : index
    %115 = vector.load %arg9[%c832, %c0_64] : memref<896x224xf32, #tpu.memory_space<vmem>>, vector<32x224xf32>
    %c864 = arith.constant 864 : index
    %c0_65 = arith.constant 0 : index
    %116 = vector.load %arg9[%c864, %c0_65] : memref<896x224xf32, #tpu.memory_space<vmem>>, vector<32x224xf32>
    %117 = arith.maximumf %115, %116 : vector<32x224xf32>
    %118 = vector.extract_strided_slice %117 {offsets = [0, 0], sizes = [32, 112], strides = [1, 1]} : vector<32x224xf32> to vector<32x112xf32>
    %119 = vector.extract_strided_slice %117 {offsets = [0, 112], sizes = [32, 112], strides = [1, 1]} : vector<32x224xf32> to vector<32x112xf32>
    %120 = arith.maximumf %118, %119 : vector<32x112xf32>
    %121 = arith.truncf %120 : vector<32x112xf32> to vector<32x112xbf16>
    %c448_66 = arith.constant 448 : index
    %c0_67 = arith.constant 0 : index
    %122 = vector.load %arg10[%c448_66, %c0_67] : memref<512x128xbf16, #tpu.memory_space<vmem>>, vector<32x112xbf16>
    tpu.vector_store %arg10[%c448_66, %c0_67], %121 {strides = array<i32>} : memref<512x128xbf16, #tpu.memory_space<vmem>>, vector<32x112xbf16>,
    %c0_68 = arith.constant 0 : index
    %c0_69 = arith.constant 0 : index
    %123 = vector.load %arg10[%c0_68, %c0_69] : memref<512x128xbf16, #tpu.memory_space<vmem>>, vector<448x128xbf16>
    %c0_70 = arith.constant 0 : index
    %c0_71 = arith.constant 0 : index
    %124 = vector.load %arg11[%c0_70, %c0_71] : memref<448x384xbf16, #tpu.memory_space<vmem>>, vector<448x128xbf16>
    tpu.vector_store %arg11[%c0_70, %c0_71], %123 {strides = array<i32>} : memref<448x384xbf16, #tpu.memory_space<vmem>>, vector<448x128xbf16>,
    %c32_72 = arith.constant 32 : index
    %c0_73 = arith.constant 0 : index
    %125 = vector.load %arg10[%c32_72, %c0_73] : memref<512x128xbf16, #tpu.memory_space<vmem>>, vector<448x128xbf16>
    %c0_74 = arith.constant 0 : index
    %c128_75 = arith.constant 128 : index
    %126 = vector.load %arg11[%c0_74, %c128_75] : memref<448x384xbf16, #tpu.memory_space<vmem>>, vector<448x128xbf16>
    tpu.vector_store %arg11[%c0_74, %c128_75], %125 {strides = array<i32>} : memref<448x384xbf16, #tpu.memory_space<vmem>>, vector<448x128xbf16>,
    %c64_76 = arith.constant 64 : index
    %c0_77 = arith.constant 0 : index
    %127 = vector.load %arg10[%c64_76, %c0_77] : memref<512x128xbf16, #tpu.memory_space<vmem>>, vector<448x128xbf16>
    %c0_78 = arith.constant 0 : index
    %c256_79 = arith.constant 256 : index
    %128 = vector.load %arg11[%c0_78, %c256_79] : memref<448x384xbf16, #tpu.memory_space<vmem>>, vector<448x128xbf16>
    tpu.vector_store %arg11[%c0_78, %c256_79], %127 {strides = array<i32>} : memref<448x384xbf16, #tpu.memory_space<vmem>>, vector<448x128xbf16>,
    %c0_80 = arith.constant 0 : index
    %c0_81 = arith.constant 0 : index
    %129 = vector.load %arg11[%c0_80, %c0_81] : memref<448x384xbf16, #tpu.memory_space<vmem>>, vector<448x384xbf16>
    %c0_82 = arith.constant 0 : index
    %c0_83 = arith.constant 0 : index
    %130 = vector.load %arg4[%c0_82, %c0_83] : memref<384x224xbf16, #tpu.memory_space<vmem>>, vector<384x224xbf16>
    %cst_84 = arith.constant dense<0.000000e+00> : vector<448x224xf32>
    %131 = tpu.matmul %129, %130, %cst_84 {dimension_numbers = #tpu.dot_dimension_numbers<[1], [0], [0], [1], [0, 0, 1, 1], [], []>} : vector<448x384xbf16>, vector<384x224xbf16>, vector<448x224xf32> -> vector<448x224xf32>
    %c0_85 = arith.constant 0 : index
    %c0_86 = arith.constant 0 : index
    %132 = vector.load %arg5[%c0_85, %c0_86] : memref<1x224xf32, #tpu.memory_space<vmem>>, vector<1x224xf32>
    %133 = vector.broadcast %132 : vector<1x224xf32> to vector<448x224xf32>
    %134 = arith.addf %131, %133 : vector<448x224xf32>
    %cst_87 = arith.constant 0.000000e+00 : f32
    %135 = vector.broadcast %cst_87 : f32 to vector<448x224xf32>
    %136 = arith.maximumf %134, %135 : vector<448x224xf32>
    %c0_88 = arith.constant 0 : index
    %c0_89 = arith.constant 0 : index
    %137 = vector.load %arg12[%c0_88, %c0_89] : memref<448x224xf32, #tpu.memory_space<vmem>>, vector<448x224xf32>
    tpu.vector_store %arg12[%c0_88, %c0_89], %136 {strides = array<i32>} : memref<448x224xf32, #tpu.memory_space<vmem>>, vector<448x224xf32>,
    %cst_90 = arith.constant 0.000000e+00 : f32
    %138 = vector.broadcast %cst_90 : f32 to vector<32x128xf32>
    %c0_91 = arith.constant 0 : index
    %c0_92 = arith.constant 0 : index
    %139 = vector.load %arg12[%c0_91, %c0_92] : memref<448x224xf32, #tpu.memory_space<vmem>>, vector<32x224xf32>
    %c32_93 = arith.constant 32 : index
    %c0_94 = arith.constant 0 : index
    %140 = vector.load %arg12[%c32_93, %c0_94] : memref<448x224xf32, #tpu.memory_space<vmem>>, vector<32x224xf32>
    %141 = arith.maximumf %139, %140 : vector<32x224xf32>
    %142 = vector.extract_strided_slice %141 {offsets = [0, 0], sizes = [32, 112], strides = [1, 1]} : vector<32x224xf32> to vector<32x112xf32>
    %143 = vector.extract_strided_slice %141 {offsets = [0, 112], sizes = [32, 112], strides = [1, 1]} : vector<32x224xf32> to vector<32x112xf32>
    %144 = arith.maximumf %142, %143 : vector<32x112xf32>
    %145 = arith.truncf %144 : vector<32x112xf32> to vector<32x112xbf16>
    %c0_95 = arith.constant 0 : index
    %c0_96 = arith.constant 0 : index
    %c0_97 = arith.constant 0 : index
    %146 = vector.load %arg6[%c0_95, %c0_96, %c0_97] : memref<7x112x128xbf16, #tpu.memory_space<vmem>>, vector<1x112x128xbf16>
    %147 = vector.shape_cast %146 : vector<1x112x128xbf16> to vector<112x128xbf16>
    %cst_98 = arith.constant dense<0.000000e+00> : vector<32x128xf32>
    %148 = tpu.matmul %145, %147, %cst_98 {dimension_numbers = #tpu.dot_dimension_numbers<[1], [0], [0], [1], [0, 0, 1, 1], [], []>} : vector<32x112xbf16>, vector<112x128xbf16>, vector<32x128xf32> -> vector<32x128xf32>
    %149 = arith.addf %138, %148 : vector<32x128xf32>
    %c64_99 = arith.constant 64 : index
    %c0_100 = arith.constant 0 : index
    %150 = vector.load %arg12[%c64_99, %c0_100] : memref<448x224xf32, #tpu.memory_space<vmem>>, vector<32x224xf32>
    %c96_101 = arith.constant 96 : index
    %c0_102 = arith.constant 0 : index
    %151 = vector.load %arg12[%c96_101, %c0_102] : memref<448x224xf32, #tpu.memory_space<vmem>>, vector<32x224xf32>
    %152 = arith.maximumf %150, %151 : vector<32x224xf32>
    %153 = vector.extract_strided_slice %152 {offsets = [0, 0], sizes = [32, 112], strides = [1, 1]} : vector<32x224xf32> to vector<32x112xf32>
    %154 = vector.extract_strided_slice %152 {offsets = [0, 112], sizes = [32, 112], strides = [1, 1]} : vector<32x224xf32> to vector<32x112xf32>
    %155 = arith.maximumf %153, %154 : vector<32x112xf32>
    %156 = arith.truncf %155 : vector<32x112xf32> to vector<32x112xbf16>
    %c1 = arith.constant 1 : index
    %c0_103 = arith.constant 0 : index
    %c0_104 = arith.constant 0 : index
    %157 = vector.load %arg6[%c1, %c0_103, %c0_104] : memref<7x112x128xbf16, #tpu.memory_space<vmem>>, vector<1x112x128xbf16>
    %158 = vector.shape_cast %157 : vector<1x112x128xbf16> to vector<112x128xbf16>
    %cst_105 = arith.constant dense<0.000000e+00> : vector<32x128xf32>
    %159 = tpu.matmul %156, %158, %cst_105 {dimension_numbers = #tpu.dot_dimension_numbers<[1], [0], [0], [1], [0, 0, 1, 1], [], []>} : vector<32x112xbf16>, vector<112x128xbf16>, vector<32x128xf32> -> vector<32x128xf32>
    %160 = arith.addf %149, %159 : vector<32x128xf32>
    %c128_106 = arith.constant 128 : index
    %c0_107 = arith.constant 0 : index
    %161 = vector.load %arg12[%c128_106, %c0_107] : memref<448x224xf32, #tpu.memory_space<vmem>>, vector<32x224xf32>
    %c160_108 = arith.constant 160 : index
    %c0_109 = arith.constant 0 : index
    %162 = vector.load %arg12[%c160_108, %c0_109] : memref<448x224xf32, #tpu.memory_space<vmem>>, vector<32x224xf32>
    %163 = arith.maximumf %161, %162 : vector<32x224xf32>
    %164 = vector.extract_strided_slice %163 {offsets = [0, 0], sizes = [32, 112], strides = [1, 1]} : vector<32x224xf32> to vector<32x112xf32>
    %165 = vector.extract_strided_slice %163 {offsets = [0, 112], sizes = [32, 112], strides = [1, 1]} : vector<32x224xf32> to vector<32x112xf32>
    %166 = arith.maximumf %164, %165 : vector<32x112xf32>
    %167 = arith.truncf %166 : vector<32x112xf32> to vector<32x112xbf16>
    %c2 = arith.constant 2 : index
    %c0_110 = arith.constant 0 : index
    %c0_111 = arith.constant 0 : index
    %168 = vector.load %arg6[%c2, %c0_110, %c0_111] : memref<7x112x128xbf16, #tpu.memory_space<vmem>>, vector<1x112x128xbf16>
    %169 = vector.shape_cast %168 : vector<1x112x128xbf16> to vector<112x128xbf16>
    %cst_112 = arith.constant dense<0.000000e+00> : vector<32x128xf32>
    %170 = tpu.matmul %167, %169, %cst_112 {dimension_numbers = #tpu.dot_dimension_numbers<[1], [0], [0], [1], [0, 0, 1, 1], [], []>} : vector<32x112xbf16>, vector<112x128xbf16>, vector<32x128xf32> -> vector<32x128xf32>
    %171 = arith.addf %160, %170 : vector<32x128xf32>
    %c192_113 = arith.constant 192 : index
    %c0_114 = arith.constant 0 : index
    %172 = vector.load %arg12[%c192_113, %c0_114] : memref<448x224xf32, #tpu.memory_space<vmem>>, vector<32x224xf32>
    %c224_115 = arith.constant 224 : index
    %c0_116 = arith.constant 0 : index
    %173 = vector.load %arg12[%c224_115, %c0_116] : memref<448x224xf32, #tpu.memory_space<vmem>>, vector<32x224xf32>
    %174 = arith.maximumf %172, %173 : vector<32x224xf32>
    %175 = vector.extract_strided_slice %174 {offsets = [0, 0], sizes = [32, 112], strides = [1, 1]} : vector<32x224xf32> to vector<32x112xf32>
    %176 = vector.extract_strided_slice %174 {offsets = [0, 112], sizes = [32, 112], strides = [1, 1]} : vector<32x224xf32> to vector<32x112xf32>
    %177 = arith.maximumf %175, %176 : vector<32x112xf32>
    %178 = arith.truncf %177 : vector<32x112xf32> to vector<32x112xbf16>
    %c3 = arith.constant 3 : index
    %c0_117 = arith.constant 0 : index
    %c0_118 = arith.constant 0 : index
    %179 = vector.load %arg6[%c3, %c0_117, %c0_118] : memref<7x112x128xbf16, #tpu.memory_space<vmem>>, vector<1x112x128xbf16>
    %180 = vector.shape_cast %179 : vector<1x112x128xbf16> to vector<112x128xbf16>
    %cst_119 = arith.constant dense<0.000000e+00> : vector<32x128xf32>
    %181 = tpu.matmul %178, %180, %cst_119 {dimension_numbers = #tpu.dot_dimension_numbers<[1], [0], [0], [1], [0, 0, 1, 1], [], []>} : vector<32x112xbf16>, vector<112x128xbf16>, vector<32x128xf32> -> vector<32x128xf32>
    %182 = arith.addf %171, %181 : vector<32x128xf32>
    %c256_120 = arith.constant 256 : index
    %c0_121 = arith.constant 0 : index
    %183 = vector.load %arg12[%c256_120, %c0_121] : memref<448x224xf32, #tpu.memory_space<vmem>>, vector<32x224xf32>
    %c288_122 = arith.constant 288 : index
    %c0_123 = arith.constant 0 : index
    %184 = vector.load %arg12[%c288_122, %c0_123] : memref<448x224xf32, #tpu.memory_space<vmem>>, vector<32x224xf32>
    %185 = arith.maximumf %183, %184 : vector<32x224xf32>
    %186 = vector.extract_strided_slice %185 {offsets = [0, 0], sizes = [32, 112], strides = [1, 1]} : vector<32x224xf32> to vector<32x112xf32>
    %187 = vector.extract_strided_slice %185 {offsets = [0, 112], sizes = [32, 112], strides = [1, 1]} : vector<32x224xf32> to vector<32x112xf32>
    %188 = arith.maximumf %186, %187 : vector<32x112xf32>
    %189 = arith.truncf %188 : vector<32x112xf32> to vector<32x112xbf16>
    %c4 = arith.constant 4 : index
    %c0_124 = arith.constant 0 : index
    %c0_125 = arith.constant 0 : index
    %190 = vector.load %arg6[%c4, %c0_124, %c0_125] : memref<7x112x128xbf16, #tpu.memory_space<vmem>>, vector<1x112x128xbf16>
    %191 = vector.shape_cast %190 : vector<1x112x128xbf16> to vector<112x128xbf16>
    %cst_126 = arith.constant dense<0.000000e+00> : vector<32x128xf32>
    %192 = tpu.matmul %189, %191, %cst_126 {dimension_numbers = #tpu.dot_dimension_numbers<[1], [0], [0], [1], [0, 0, 1, 1], [], []>} : vector<32x112xbf16>, vector<112x128xbf16>, vector<32x128xf32> -> vector<32x128xf32>
    %193 = arith.addf %182, %192 : vector<32x128xf32>
    %c320_127 = arith.constant 320 : index
    %c0_128 = arith.constant 0 : index
    %194 = vector.load %arg12[%c320_127, %c0_128] : memref<448x224xf32, #tpu.memory_space<vmem>>, vector<32x224xf32>
    %c352_129 = arith.constant 352 : index
    %c0_130 = arith.constant 0 : index
    %195 = vector.load %arg12[%c352_129, %c0_130] : memref<448x224xf32, #tpu.memory_space<vmem>>, vector<32x224xf32>
    %196 = arith.maximumf %194, %195 : vector<32x224xf32>
    %197 = vector.extract_strided_slice %196 {offsets = [0, 0], sizes = [32, 112], strides = [1, 1]} : vector<32x224xf32> to vector<32x112xf32>
    %198 = vector.extract_strided_slice %196 {offsets = [0, 112], sizes = [32, 112], strides = [1, 1]} : vector<32x224xf32> to vector<32x112xf32>
    %199 = arith.maximumf %197, %198 : vector<32x112xf32>
    %200 = arith.truncf %199 : vector<32x112xf32> to vector<32x112xbf16>
    %c5 = arith.constant 5 : index
    %c0_131 = arith.constant 0 : index
    %c0_132 = arith.constant 0 : index
    %201 = vector.load %arg6[%c5, %c0_131, %c0_132] : memref<7x112x128xbf16, #tpu.memory_space<vmem>>, vector<1x112x128xbf16>
    %202 = vector.shape_cast %201 : vector<1x112x128xbf16> to vector<112x128xbf16>
    %cst_133 = arith.constant dense<0.000000e+00> : vector<32x128xf32>
    %203 = tpu.matmul %200, %202, %cst_133 {dimension_numbers = #tpu.dot_dimension_numbers<[1], [0], [0], [1], [0, 0, 1, 1], [], []>} : vector<32x112xbf16>, vector<112x128xbf16>, vector<32x128xf32> -> vector<32x128xf32>
    %204 = arith.addf %193, %203 : vector<32x128xf32>
    %c384_134 = arith.constant 384 : index
    %c0_135 = arith.constant 0 : index
    %205 = vector.load %arg12[%c384_134, %c0_135] : memref<448x224xf32, #tpu.memory_space<vmem>>, vector<32x224xf32>
    %c416_136 = arith.constant 416 : index
    %c0_137 = arith.constant 0 : index
    %206 = vector.load %arg12[%c416_136, %c0_137] : memref<448x224xf32, #tpu.memory_space<vmem>>, vector<32x224xf32>
    %207 = arith.maximumf %205, %206 : vector<32x224xf32>
    %208 = vector.extract_strided_slice %207 {offsets = [0, 0], sizes = [32, 112], strides = [1, 1]} : vector<32x224xf32> to vector<32x112xf32>
    %209 = vector.extract_strided_slice %207 {offsets = [0, 112], sizes = [32, 112], strides = [1, 1]} : vector<32x224xf32> to vector<32x112xf32>
    %210 = arith.maximumf %208, %209 : vector<32x112xf32>
    %211 = arith.truncf %210 : vector<32x112xf32> to vector<32x112xbf16>
    %c6 = arith.constant 6 : index
    %c0_138 = arith.constant 0 : index
    %c0_139 = arith.constant 0 : index
    %212 = vector.load %arg6[%c6, %c0_138, %c0_139] : memref<7x112x128xbf16, #tpu.memory_space<vmem>>, vector<1x112x128xbf16>
    %213 = vector.shape_cast %212 : vector<1x112x128xbf16> to vector<112x128xbf16>
    %cst_140 = arith.constant dense<0.000000e+00> : vector<32x128xf32>
    %214 = tpu.matmul %211, %213, %cst_140 {dimension_numbers = #tpu.dot_dimension_numbers<[1], [0], [0], [1], [0, 0, 1, 1], [], []>} : vector<32x112xbf16>, vector<112x128xbf16>, vector<32x128xf32> -> vector<32x128xf32>
    %215 = arith.addf %204, %214 : vector<32x128xf32>
    %c0_141 = arith.constant 0 : index
    %c0_142 = arith.constant 0 : index
    %216 = vector.load %arg7[%c0_141, %c0_142] : memref<1x128xf32, #tpu.memory_space<vmem>>, vector<1x128xf32>
    %217 = vector.broadcast %216 : vector<1x128xf32> to vector<32x128xf32>
    %218 = arith.addf %215, %217 : vector<32x128xf32>
    %c0_143 = arith.constant 0 : index
    %c0_144 = arith.constant 0 : index
    %219 = vector.load %arg8[%c0_143, %c0_144] : memref<32x128xf32, #tpu.memory_space<vmem>>, vector<32x128xf32>
    tpu.vector_store %arg8[%c0_143, %c0_144], %218 {strides = array<i32>} : memref<32x128xf32, #tpu.memory_space<vmem>>, vector<32x128xf32>,
    return
  }
  func.func @transform_0(%arg0: i32) -> (i32, i32) {
    %c0_i32 = arith.constant 0 : i32
    %c0_i32_0 = arith.constant 0 : i32
    return %arg0, %c0_i32 : i32, i32
  }
  func.func @transform_1(%arg0: i32) -> (i32, i32) {
    %c0_i32 = arith.constant 0 : i32
    %c0_i32_0 = arith.constant 0 : i32
    %c0_i32_1 = arith.constant 0 : i32
    return %c0_i32, %c0_i32_0 : i32, i32
  }
  func.func @transform_2(%arg0: i32) -> (i32, i32) {
    %c0_i32 = arith.constant 0 : i32
    %c0_i32_0 = arith.constant 0 : i32
    %c0_i32_1 = arith.constant 0 : i32
    return %c0_i32, %c0_i32_0 : i32, i32
  }
  func.func @transform_3(%arg0: i32) -> (i32, i32) {
    %c0_i32 = arith.constant 0 : i32
    %c0_i32_0 = arith.constant 0 : i32
    %c0_i32_1 = arith.constant 0 : i32
    return %c0_i32, %c0_i32_0 : i32, i32
  }
  func.func @transform_4(%arg0: i32) -> (i32, i32) {
    %c0_i32 = arith.constant 0 : i32
    %c0_i32_0 = arith.constant 0 : i32
    %c0_i32_1 = arith.constant 0 : i32
    return %c0_i32, %c0_i32_0 : i32, i32
  }
  func.func @transform_5(%arg0: i32) -> (i32, i32, i32) {
    %c0_i32 = arith.constant 0 : i32
    %c0_i32_0 = arith.constant 0 : i32
    %c0_i32_1 = arith.constant 0 : i32
    %c0_i32_2 = arith.constant 0 : i32
    return %c0_i32, %c0_i32_0, %c0_i32_1 : i32, i32, i32
  }
  func.func @transform_6(%arg0: i32) -> (i32, i32) {
    %c0_i32 = arith.constant 0 : i32
    %c0_i32_0 = arith.constant 0 : i32
    %c0_i32_1 = arith.constant 0 : i32
    return %c0_i32, %c0_i32_0 : i32, i32
  }
  func.func @transform_7(%arg0: i32) -> (i32, i32) {
    %c0_i32 = arith.constant 0 : i32
    %c0_i32_0 = arith.constant 0 : i32
    return %arg0, %c0_i32 : i32, i32
  }
}

</mosaic_0001>

<llo_original>
// kernel: tpu_custom_call.1
$region0: #{tpu_custom_call.1}
  #allocation0 [shape = 'u32[]', space=smem, size = 0x4, offset = 0x4, fixed_abs, tag = 'smem constant byte address 0x4 - core index']
  #allocation1 [shape = 'u32[144,128]{1,0:T(1,128)}', space=vmem, size = 0x12000, scoped, tag = 'internal scratch']
  #allocation2 [shape = 'f32[896,224]{1,0:T(8,128)}', space=vmem, size = 0xe0000, scoped, tag = 'scratch operand']
  #allocation3 [shape = 'bf16[512,128]{1,0:T(8,128)(2,1)}', space=vmem, size = 0x20000, scoped, tag = 'scratch operand']
  #allocation4 [shape = 'bf16[448,384]{1,0:T(8,128)(2,1)}', space=vmem, size = 0x54000, scoped, tag = 'scratch operand']
  #allocation5 [shape = 'f32[448,224]{1,0:T(8,128)}', space=vmem, size = 0x70000, scoped, tag = 'scratch operand']
  %s0 = inlined_call_operand.vmem [shape: bf16[896,128], index: 0, kind: input, shape index: {}]
  %s1 = inlined_call_operand.vmem [shape: bf16[128,224], index: 1, kind: input, shape index: {}]
  %s2 = inlined_call_operand.vmem [shape: f32[1,224], index: 2, kind: input, shape index: {}]
  %s3 = inlined_call_operand.vmem [shape: bf16[384,224], index: 3, kind: input, shape index: {}]
  %s4 = inlined_call_operand.vmem [shape: f32[1,224], index: 4, kind: input, shape index: {}]
  %s5 = inlined_call_operand.vmem [shape: bf16[7,112,128], index: 5, kind: input, shape index: {}]
  %s6 = inlined_call_operand.vmem [shape: f32[1,128], index: 6, kind: input, shape index: {}]
  %s7 = inlined_call_operand.hbm [shape: f32[32,128], index: 7, kind: output, shape index: {}]
  %s8 = sld [smem:[#allocation0]]
  $region38: #{tpu_custom_call.1} parent=0
    _
  %s10 = ssub.s32 1, %s8
  %s11 = scalar_select 0, %s10, %s8
  $region1: #{tpu_custom_call.1} parent=0
    #allocation6 [shape = 'u8[16384]{0}', space=vmem, size = 0x4000, scoped, tag = 'output window, operand 0, single buffered']
    #allocation7 [shape = 's32[1]{0}', space=sflag, size = 0x4, scoped, tag = 'scoped memory for tpu_custom_call.1']
    %12 = vsyncpa [#allocation7], 0
    // Predicated region
    $region2: #{tpu_custom_call.1} parent=1 // pred_check
      _
    $region3: #{tpu_custom_call.1} parent=1 // pred_check_branch
      %14 = sbr.rel (0) target = $region5
    $region4: #{tpu_custom_call.1} parent=1 // pred_region
      _
    $region5: #{tpu_custom_call.1} parent=1 // pred_fallthru
      _
    // Predicated region
    $region6: #{tpu_custom_call.1} parent=1 // pred_check
      _
    $region7: #{tpu_custom_call.1} parent=1 // pred_check_branch
      %16 = sbr.rel (0) target = $region9
    $region8: #{tpu_custom_call.1} parent=1 // pred_region
      _
    $region9: #{tpu_custom_call.1} parent=1 // pred_fallthru
      _
    // Predicated region
    $region10: #{tpu_custom_call.1} parent=1 // pred_check
      _
    $region11: #{tpu_custom_call.1} parent=1 // pred_check_branch
      %18 = sbr.rel (0) target = $region13
    $region12: #{tpu_custom_call.1} parent=1 // pred_region
      _
    $region13: #{tpu_custom_call.1} parent=1 // pred_fallthru
      _
    // Predicated region
    $region14: #{tpu_custom_call.1} parent=1 // pred_check
      _
    $region15: #{tpu_custom_call.1} parent=1 // pred_check_branch
      %20 = sbr.rel (0) target = $region17
    $region16: #{tpu_custom_call.1} parent=1 // pred_region
      _
    $region17: #{tpu_custom_call.1} parent=1 // pred_fallthru
      _
    // Predicated region
    $region18: #{tpu_custom_call.1} parent=1 // pred_check
      _
    $region19: #{tpu_custom_call.1} parent=1 // pred_check_branch
      %22 = sbr.rel (0) target = $region21
    $region20: #{tpu_custom_call.1} parent=1 // pred_region
      _
    $region21: #{tpu_custom_call.1} parent=1 // pred_fallthru
      _
    // Predicated region
    $region22: #{tpu_custom_call.1} parent=1 // pred_check
      _
    $region23: #{tpu_custom_call.1} parent=1 // pred_check_branch
      %24 = sbr.rel (0) target = $region25
    $region24: #{tpu_custom_call.1} parent=1 // pred_region
      _
    $region25: #{tpu_custom_call.1} parent=1 // pred_fallthru
      _
    // Predicated region
    $region26: #{tpu_custom_call.1} parent=1 // pred_check
      _
    $region27: #{tpu_custom_call.1} parent=1 // pred_check_branch
      %26 = sbr.rel (0) target = $region29
    $region28: #{tpu_custom_call.1} parent=1 // pred_region
      _
    $region29: #{tpu_custom_call.1} parent=1 // pred_fallthru
      _
    %v28 = vld [vmem:[%s0] sm:$0xf]
    %v29 = vld [vmem:[%s0 + $0x4] sm:$0xf]
    %v30 = vld [vmem:[%s0 + $0x8] sm:$0xf]
    %v31 = vld [vmem:[%s0 + $0xc] sm:$0xf]
    %v32 = vld [vmem:[%s0 + $0x10] sm:$0xf]
    %v33 = vld [vmem:[%s0 + $0x14] sm:$0xf]
    %v34 = vld [vmem:[%s0 + $0x18] sm:$0xf]
    %v35 = vld [vmem:[%s0 + $0x1c] sm:$0xf]
    %v36 = vld [vmem:[%s0 + $0x20] sm:$0xf]
    %v37 = vld [vmem:[%s0 + $0x24] sm:$0xf]
    %v38 = vld [vmem:[%s0 + $0x28] sm:$0xf]
    %v39 = vld [vmem:[%s0 + $0x2c] sm:$0xf]
    %v40 = vld [vmem:[%s0 + $0x30] sm:$0xf]
    %v41 = vld [vmem:[%s0 + $0x34] sm:$0xf]
    %v42 = vld [vmem:[%s0 + $0x38] sm:$0xf]
    %v43 = vld [vmem:[%s0 + $0x3c] sm:$0xf]
    %v44 = vld [vmem:[%s0 + $0x40] sm:$0xf]
    %v45 = vld [vmem:[%s0 + $0x44] sm:$0xf]
    %v46 = vld [vmem:[%s0 + $0x48] sm:$0xf]
    %v47 = vld [vmem:[%s0 + $0x4c] sm:$0xf]
    %v48 = vld [vmem:[%s0 + $0x50] sm:$0xf]
    %v49 = vld [vmem:[%s0 + $0x54] sm:$0xf]
    %v50 = vld [vmem:[%s0 + $0x58] sm:$0xf]
    %v51 = vld [vmem:[%s0 + $0x5c] sm:$0xf]
    %v52 = vld [vmem:[%s0 + $0x60] sm:$0xf]
    %v53 = vld [vmem:[%s0 + $0x64] sm:$0xf]
    %v54 = vld [vmem:[%s0 + $0x68] sm:$0xf]
    %v55 = vld [vmem:[%s0 + $0x6c] sm:$0xf]
    %v56 = vld [vmem:[%s0 + $0x70] sm:$0xf]
    %v57 = vld [vmem:[%s0 + $0x74] sm:$0xf]
    %v58 = vld [vmem:[%s0 + $0x78] sm:$0xf]
    %v59 = vld [vmem:[%s0 + $0x7c] sm:$0xf]
    %v60 = vld [vmem:[%s0 + $0x80] sm:$0xf]
    %v61 = vld [vmem:[%s0 + $0x84] sm:$0xf]
    %v62 = vld [vmem:[%s0 + $0x88] sm:$0xf]
    %v63 = vld [vmem:[%s0 + $0x8c] sm:$0xf]
    %v64 = vld [vmem:[%s0 + $0x90] sm:$0xf]
    %v65 = vld [vmem:[%s0 + $0x94] sm:$0xf]
    %v66 = vld [vmem:[%s0 + $0x98] sm:$0xf]
    %v67 = vld [vmem:[%s0 + $0x9c] sm:$0xf]
    %v68 = vld [vmem:[%s0 + $0xa0] sm:$0xf]
    %v69 = vld [vmem:[%s0 + $0xa4] sm:$0xf]
    %v70 = vld [vmem:[%s0 + $0xa8] sm:$0xf]
    %v71 = vld [vmem:[%s0 + $0xac] sm:$0xf]
    %v72 = vld [vmem:[%s0 + $0xb0] sm:$0xf]
    %v73 = vld [vmem:[%s0 + $0xb4] sm:$0xf]
    %v74 = vld [vmem:[%s0 + $0xb8] sm:$0xf]
    %v75 = vld [vmem:[%s0 + $0xbc] sm:$0xf]
    %v76 = vld [vmem:[%s0 + $0xc0] sm:$0xf]
    %v77 = vld [vmem:[%s0 + $0xc4] sm:$0xf]
    %v78 = vld [vmem:[%s0 + $0xc8] sm:$0xf]
    %v79 = vld [vmem:[%s0 + $0xcc] sm:$0xf]
    %v80 = vld [vmem:[%s0 + $0xd0] sm:$0xf]
    %v81 = vld [vmem:[%s0 + $0xd4] sm:$0xf]
    %v82 = vld [vmem:[%s0 + $0xd8] sm:$0xf]
    %v83 = vld [vmem:[%s0 + $0xdc] sm:$0xf]
    %v84 = vld [vmem:[%s0 + $0xe0] sm:$0xf]
    %v85 = vld [vmem:[%s0 + $0xe4] sm:$0xf]
    %v86 = vld [vmem:[%s0 + $0xe8] sm:$0xf]
    %v87 = vld [vmem:[%s0 + $0xec] sm:$0xf]
    %v88 = vld [vmem:[%s0 + $0xf0] sm:$0xf]
    %v89 = vld [vmem:[%s0 + $0xf4] sm:$0xf]
    %v90 = vld [vmem:[%s0 + $0xf8] sm:$0xf]
    %v91 = vld [vmem:[%s0 + $0xfc] sm:$0xf]
    %v92 = vld [vmem:[%s0 + $0x100] sm:$0xf]
    %v93 = vld [vmem:[%s0 + $0x104] sm:$0xf]
    %v94 = vld [vmem:[%s0 + $0x108] sm:$0xf]
    %v95 = vld [vmem:[%s0 + $0x10c] sm:$0xf]
    %v96 = vld [vmem:[%s0 + $0x110] sm:$0xf]
    %v97 = vld [vmem:[%s0 + $0x114] sm:$0xf]
    %v98 = vld [vmem:[%s0 + $0x118] sm:$0xf]
    %v99 = vld [vmem:[%s0 + $0x11c] sm:$0xf]
    %v100 = vld [vmem:[%s0 + $0x120] sm:$0xf]
    %v101 = vld [vmem:[%s0 + $0x124] sm:$0xf]
    %v102 = vld [vmem:[%s0 + $0x128] sm:$0xf]
    %v103 = vld [vmem:[%s0 + $0x12c] sm:$0xf]
    %v104 = vld [vmem:[%s0 + $0x130] sm:$0xf]
    %v105 = vld [vmem:[%s0 + $0x134] sm:$0xf]
    %v106 = vld [vmem:[%s0 + $0x138] sm:$0xf]
    %v107 = vld [vmem:[%s0 + $0x13c] sm:$0xf]
    %v108 = vld [vmem:[%s0 + $0x140] sm:$0xf]
    %v109 = vld [vmem:[%s0 + $0x144] sm:$0xf]
    %v110 = vld [vmem:[%s0 + $0x148] sm:$0xf]
    %v111 = vld [vmem:[%s0 + $0x14c] sm:$0xf]
    %v112 = vld [vmem:[%s0 + $0x150] sm:$0xf]
    %v113 = vld [vmem:[%s0 + $0x154] sm:$0xf]
    %v114 = vld [vmem:[%s0 + $0x158] sm:$0xf]
    %v115 = vld [vmem:[%s0 + $0x15c] sm:$0xf]
    %v116 = vld [vmem:[%s0 + $0x160] sm:$0xf]
    %v117 = vld [vmem:[%s0 + $0x164] sm:$0xf]
    %v118 = vld [vmem:[%s0 + $0x168] sm:$0xf]
    %v119 = vld [vmem:[%s0 + $0x16c] sm:$0xf]
    %v120 = vld [vmem:[%s0 + $0x170] sm:$0xf]
    %v121 = vld [vmem:[%s0 + $0x174] sm:$0xf]
    %v122 = vld [vmem:[%s0 + $0x178] sm:$0xf]
    %v123 = vld [vmem:[%s0 + $0x17c] sm:$0xf]
    %v124 = vld [vmem:[%s0 + $0x180] sm:$0xf]
    %v125 = vld [vmem:[%s0 + $0x184] sm:$0xf]
    %v126 = vld [vmem:[%s0 + $0x188] sm:$0xf]
    %v127 = vld [vmem:[%s0 + $0x18c] sm:$0xf]
    %v128 = vld [vmem:[%s0 + $0x190] sm:$0xf]
    %v129 = vld [vmem:[%s0 + $0x194] sm:$0xf]
    %v130 = vld [vmem:[%s0 + $0x198] sm:$0xf]
    %v131 = vld [vmem:[%s0 + $0x19c] sm:$0xf]
    %v132 = vld [vmem:[%s0 + $0x1a0] sm:$0xf]
    %v133 = vld [vmem:[%s0 + $0x1a4] sm:$0xf]
    %v134 = vld [vmem:[%s0 + $0x1a8] sm:$0xf]
    %v135 = vld [vmem:[%s0 + $0x1ac] sm:$0xf]
    %v136 = vld [vmem:[%s0 + $0x1b0] sm:$0xf]
    %v137 = vld [vmem:[%s0 + $0x1b4] sm:$0xf]
    %v138 = vld [vmem:[%s0 + $0x1b8] sm:$0xf]
    %v139 = vld [vmem:[%s0 + $0x1bc] sm:$0xf]
    %v140 = vld [vmem:[%s1] sm:$0xff]
    %v141 = vld [vmem:[%s1 + $0x8] sm:$0xff]
    %v142 = vld [vmem:[%s1 + $0x10] sm:$0xff]
    %v143 = vld [vmem:[%s1 + $0x18] sm:$0xff]
    %v144 = vld [vmem:[%s1 + $0x20] sm:$0xff]
    %v145 = vld [vmem:[%s1 + $0x28] sm:$0xff]
    %v146 = vld [vmem:[%s1 + $0x30] sm:$0xff]
    %v147 = vld [vmem:[%s1 + $0x38] sm:$0xff]
    %v148 = vld [vmem:[%s1 + $0x40] sm:$0xff]
    %v149 = vld [vmem:[%s1 + $0x48] sm:$0xff]
    %v150 = vld [vmem:[%s1 + $0x50] sm:$0xff]
    %v151 = vld [vmem:[%s1 + $0x58] sm:$0xff]
    %v152 = vld [vmem:[%s1 + $0x60] sm:$0xff]
    %v153 = vld [vmem:[%s1 + $0x68] sm:$0xff]
    %v154 = vld [vmem:[%s1 + $0x70] sm:$0xff]
    %v155 = vld [vmem:[%s1 + $0x78] sm:$0xff]
    %v156 = vld [vmem:[%s2] sm:$0x3]
    %v158 = vlaneseq
    %v159 = vshrl.u32 %v158, 7
    %v160 = vsub.s32 0, %v159
    %v161 = vrot.slane %v156, %v160
    %v162 = vlaneseq
    %v163 = vshrl.u32 %v162, 7
    %v164 = vsub.s32 1, %v163
    %v165 = vrot.slane %v156, %v164
    %v280 = vunpack.c.l.b16 %v28
    %v281 = vunpack.c.l.b16 %v29
    %v282 = vunpack.c.l.b16 %v30
    %v283 = vunpack.c.l.b16 %v31
    %v284 = vunpack.c.l.b16 %v32
    %v285 = vunpack.c.l.b16 %v33
    %v286 = vunpack.c.l.b16 %v34
    %v287 = vunpack.c.l.b16 %v35
    %v288 = vunpack.c.l.b16 %v36
    %v289 = vunpack.c.l.b16 %v37
    %v290 = vunpack.c.l.b16 %v38
    %v291 = vunpack.c.l.b16 %v39
    %v292 = vunpack.c.l.b16 %v40
    %v293 = vunpack.c.l.b16 %v41
    %v294 = vunpack.c.l.b16 %v42
    %v295 = vunpack.c.l.b16 %v43
    %v296 = vunpack.c.l.b16 %v44
    %v297 = vunpack.c.l.b16 %v45
    %v298 = vunpack.c.l.b16 %v46
    %v299 = vunpack.c.l.b16 %v47
    %v300 = vunpack.c.l.b16 %v48
    %v301 = vunpack.c.l.b16 %v49
    %v302 = vunpack.c.l.b16 %v50
    %v303 = vunpack.c.l.b16 %v51
    %v304 = vunpack.c.l.b16 %v52
    %v305 = vunpack.c.l.b16 %v53
    %v306 = vunpack.c.l.b16 %v54
    %v307 = vunpack.c.l.b16 %v55
    %v308 = vunpack.c.l.b16 %v56
    %v309 = vunpack.c.l.b16 %v57
    %v310 = vunpack.c.l.b16 %v58
    %v311 = vunpack.c.l.b16 %v59
    %v312 = vunpack.c.l.b16 %v60
    %v313 = vunpack.c.l.b16 %v61
    %v314 = vunpack.c.l.b16 %v62
    %v315 = vunpack.c.l.b16 %v63
    %v316 = vunpack.c.l.b16 %v64
    %v317 = vunpack.c.l.b16 %v65
    %v318 = vunpack.c.l.b16 %v66
    %v319 = vunpack.c.l.b16 %v67
    %v320 = vunpack.c.l.b16 %v68
    %v321 = vunpack.c.l.b16 %v69
    %v322 = vunpack.c.l.b16 %v70
    %v323 = vunpack.c.l.b16 %v71
    %v324 = vunpack.c.l.b16 %v72
    %v325 = vunpack.c.l.b16 %v73
    %v326 = vunpack.c.l.b16 %v74
    %v327 = vunpack.c.l.b16 %v75
    %v328 = vunpack.c.l.b16 %v76
    %v329 = vunpack.c.l.b16 %v77
    %v330 = vunpack.c.l.b16 %v78
    %v331 = vunpack.c.l.b16 %v79
    %v332 = vunpack.c.l.b16 %v80
    %v333 = vunpack.c.l.b16 %v81
    %v334 = vunpack.c.l.b16 %v82
    %v335 = vunpack.c.l.b16 %v83
    %v336 = vunpack.c.l.b16 %v84
    %v337 = vunpack.c.l.b16 %v85
    %v338 = vunpack.c.l.b16 %v86
    %v339 = vunpack.c.l.b16 %v87
    %v340 = vunpack.c.l.b16 %v88
    %v341 = vunpack.c.l.b16 %v89
    %v342 = vunpack.c.l.b16 %v90
    %v343 = vunpack.c.l.b16 %v91
    %v344 = vunpack.c.l.b16 %v92
    %v345 = vunpack.c.l.b16 %v93
    %v346 = vunpack.c.l.b16 %v94
    %v347 = vunpack.c.l.b16 %v95
    %v348 = vunpack.c.l.b16 %v96
    %v349 = vunpack.c.l.b16 %v97
    %v350 = vunpack.c.l.b16 %v98
    %v351 = vunpack.c.l.b16 %v99
    %v352 = vunpack.c.l.b16 %v100
    %v353 = vunpack.c.l.b16 %v101
    %v354 = vunpack.c.l.b16 %v102
    %v355 = vunpack.c.l.b16 %v103
    %v356 = vunpack.c.l.b16 %v104
    %v357 = vunpack.c.l.b16 %v105
    %v358 = vunpack.c.l.b16 %v106
    %v359 = vunpack.c.l.b16 %v107
    %v360 = vunpack.c.l.b16 %v108
    %v361 = vunpack.c.l.b16 %v109
    %v362 = vunpack.c.l.b16 %v110
    %v363 = vunpack.c.l.b16 %v111
    %v364 = vunpack.c.l.b16 %v112
    %v365 = vunpack.c.l.b16 %v113
    %v366 = vunpack.c.l.b16 %v114
    %v367 = vunpack.c.l.b16 %v115
    %v368 = vunpack.c.l.b16 %v116
    %v369 = vunpack.c.l.b16 %v117
    %v370 = vunpack.c.l.b16 %v118
    %v371 = vunpack.c.l.b16 %v119
    %v372 = vunpack.c.l.b16 %v120
    %v373 = vunpack.c.l.b16 %v121
    %v374 = vunpack.c.l.b16 %v122
    %v375 = vunpack.c.l.b16 %v123
    %v376 = vunpack.c.l.b16 %v124
    %v377 = vunpack.c.l.b16 %v125
    %v378 = vunpack.c.l.b16 %v126
    %v379 = vunpack.c.l.b16 %v127
    %v380 = vunpack.c.l.b16 %v128
    %v381 = vunpack.c.l.b16 %v129
    %v382 = vunpack.c.l.b16 %v130
    %v383 = vunpack.c.l.b16 %v131
    %v384 = vunpack.c.l.b16 %v132
    %v385 = vunpack.c.l.b16 %v133
    %v386 = vunpack.c.l.b16 %v134
    %v387 = vunpack.c.l.b16 %v135
    %v388 = vunpack.c.l.b16 %v136
    %v389 = vunpack.c.l.b16 %v137
    %v390 = vunpack.c.l.b16 %v138
    %v391 = vunpack.c.l.b16 %v139
    %v392 = vpack.c.b16 %v281, %v280
    %v393 = vpack.c.b16 %v283, %v282
    %v394 = vpack.c.b16 %v285, %v284
    %v395 = vpack.c.b16 %v287, %v286
    %v396 = vpack.c.b16 %v289, %v288
    %v397 = vpack.c.b16 %v291, %v290
    %v398 = vpack.c.b16 %v293, %v292
    %v399 = vpack.c.b16 %v295, %v294
    %v400 = vpack.c.b16 %v297, %v296
    %v401 = vpack.c.b16 %v299, %v298
    %v402 = vpack.c.b16 %v301, %v300
    %v403 = vpack.c.b16 %v303, %v302
    %v404 = vpack.c.b16 %v305, %v304
    %v405 = vpack.c.b16 %v307, %v306
    %v406 = vpack.c.b16 %v309, %v308
    %v407 = vpack.c.b16 %v311, %v310
    %v408 = vpack.c.b16 %v313, %v312
    %v409 = vpack.c.b16 %v315, %v314
    %v410 = vpack.c.b16 %v317, %v316
    %v411 = vpack.c.b16 %v319, %v318
    %v412 = vpack.c.b16 %v321, %v320
    %v413 = vpack.c.b16 %v323, %v322
    %v414 = vpack.c.b16 %v325, %v324
    %v415 = vpack.c.b16 %v327, %v326
    %v416 = vpack.c.b16 %v329, %v328
    %v417 = vpack.c.b16 %v331, %v330
    %v418 = vpack.c.b16 %v333, %v332
    %v419 = vpack.c.b16 %v335, %v334
    %v420 = vpack.c.b16 %v337, %v336
    %v421 = vpack.c.b16 %v339, %v338
    %v422 = vpack.c.b16 %v341, %v340
    %v423 = vpack.c.b16 %v343, %v342
    %v424 = vpack.c.b16 %v345, %v344
    %v425 = vpack.c.b16 %v347, %v346
    %v426 = vpack.c.b16 %v349, %v348
    %v427 = vpack.c.b16 %v351, %v350
    %v428 = vpack.c.b16 %v353, %v352
    %v429 = vpack.c.b16 %v355, %v354
    %v430 = vpack.c.b16 %v357, %v356
    %v431 = vpack.c.b16 %v359, %v358
    %v432 = vpack.c.b16 %v361, %v360
    %v433 = vpack.c.b16 %v363, %v362
    %v434 = vpack.c.b16 %v365, %v364
    %v435 = vpack.c.b16 %v367, %v366
    %v436 = vpack.c.b16 %v369, %v368
    %v437 = vpack.c.b16 %v371, %v370
    %v438 = vpack.c.b16 %v373, %v372
    %v439 = vpack.c.b16 %v375, %v374
    %v440 = vpack.c.b16 %v377, %v376
    %v441 = vpack.c.b16 %v379, %v378
    %v442 = vpack.c.b16 %v381, %v380
    %v443 = vpack.c.b16 %v383, %v382
    %v444 = vpack.c.b16 %v385, %v384
    %v445 = vpack.c.b16 %v387, %v386
    %v446 = vpack.c.b16 %v389, %v388
    %v447 = vpack.c.b16 %v391, %v390
    %v520 = vunpack.c.l.b16 %v140
    %v521 = vunpack.c.h.b16 %v140
    %v522 = vunpack.c.l.b16 %v141
    %v523 = vunpack.c.h.b16 %v141
    %v524 = vunpack.c.l.b16 %v142
    %v525 = vunpack.c.h.b16 %v142
    %v526 = vunpack.c.l.b16 %v143
    %v527 = vunpack.c.h.b16 %v143
    %v528 = vunpack.c.l.b16 %v144
    %v529 = vunpack.c.h.b16 %v144
    %v530 = vunpack.c.l.b16 %v145
    %v531 = vunpack.c.h.b16 %v145
    %v532 = vunpack.c.l.b16 %v146
    %v533 = vunpack.c.h.b16 %v146
    %v534 = vunpack.c.l.b16 %v147
    %v535 = vunpack.c.h.b16 %v147
    %v536 = vunpack.c.l.b16 %v148
    %v537 = vunpack.c.h.b16 %v148
    %v538 = vunpack.c.l.b16 %v149
    %v539 = vunpack.c.h.b16 %v149
    %v540 = vunpack.c.l.b16 %v150
    %v541 = vunpack.c.h.b16 %v150
    %v542 = vunpack.c.l.b16 %v151
    %v543 = vunpack.c.h.b16 %v151
    %v544 = vunpack.c.l.b16 %v152
    %v545 = vunpack.c.h.b16 %v152
    %v546 = vunpack.c.l.b16 %v153
    %v547 = vunpack.c.h.b16 %v153
    %v548 = vunpack.c.l.b16 %v154
    %v549 = vunpack.c.h.b16 %v154
    %v550 = vunpack.c.l.b16 %v155
    %v551 = vunpack.c.h.b16 %v155
    %v552 = vpack.c.b16 %v522, %v520
    %v553 = vpack.c.b16 %v523, %v521
    %v554 = vpack.c.b16 %v526, %v524
    %v555 = vpack.c.b16 %v527, %v525
    %v556 = vpack.c.b16 %v530, %v528
    %v557 = vpack.c.b16 %v531, %v529
    %v558 = vpack.c.b16 %v534, %v532
    %v559 = vpack.c.b16 %v535, %v533
    %v560 = vpack.c.b16 %v538, %v536
    %v561 = vpack.c.b16 %v539, %v537
    %v562 = vpack.c.b16 %v542, %v540
    %v563 = vpack.c.b16 %v543, %v541
    %v564 = vpack.c.b16 %v546, %v544
    %v565 = vpack.c.b16 %v547, %v545
    %v566 = vpack.c.b16 %v550, %v548
    %v567 = vpack.c.b16 %v551, %v549
    %584 = vmatprep.subr.bf16.mxu0 %v567
    %585 = vmatpush1.bf16.msra.mxu0 %v566
    %586 = vmatprep.subr.bf16.mxu0 %v565
    %587 = vmatpush1.bf16.msra.mxu0 %v564
    %588 = vmatprep.subr.bf16.mxu0 %v563
    %589 = vmatpush1.bf16.msra.mxu0 %v562
    %590 = vmatprep.subr.bf16.mxu0 %v561
    %591 = vmatpush1.bf16.msra.mxu0 %v560
    %592 = vmatprep.subr.bf16.mxu0 %v559
    %593 = vmatpush1.bf16.msra.mxu0 %v558
    %594 = vmatprep.subr.bf16.mxu0 %v557
    %595 = vmatpush1.bf16.msra.mxu0 %v556
    %596 = vmatprep.subr.bf16.mxu0 %v555
    %597 = vmatpush1.bf16.msra.mxu0 %v554
    %598 = vmatprep.subr.bf16.mxu0 %v553
    %599 = vmatpush1.bf16.msra.mxu0 %v552
    %600 = vmatprep.subr.bf16.mxu0 0
    %601 = vmatpush2.bf16.msra.mxu0 0
    %602 = vmatprep.subr.bf16.mxu0 0
    %603 = vmatpush2.bf16.msra.mxu0 0
    %604 = vmatprep.subr.bf16.mxu0 0
    %605 = vmatpush2.bf16.msra.mxu0 0
    %606 = vmatprep.subr.bf16.mxu0 0
    %607 = vmatpush2.bf16.msra.mxu0 0
    %608 = vmatprep.subr.bf16.mxu0 0
    %609 = vmatpush2.bf16.msra.mxu0 0
    %610 = vmatprep.subr.bf16.mxu0 0
    %611 = vmatpush2.bf16.msra.mxu0 0
    %612 = vmatprep.subr.bf16.mxu0 0
    %613 = vmatpush2.bf16.msra.mxu0 0
    %614 = vmatprep.subr.bf16.mxu0 0
    %615 = vmatpush2.bf16.msra.mxu0 0
    %616 = vmatprep.mubr.bf16.mxu0 0
    %617 = vmatmul.mubr.bf16.gmra.mxu0 %v392
    %v618 = vpop.f32.mrf.mxu0
    %v619 = vadd.f32 %v161, %v618
    %v620 = vpop.f32.mrf.mxu0
    %v621 = vadd.f32 %v165, %v620
    %v622 = vpop.f32.mrf.mxu0
    %v623 = vadd.f32 %v161, %v622
    %v624 = vpop.f32.mrf.mxu0
    %v625 = vadd.f32 %v165, %v624
    %626 = vmatprep.mubr.bf16.mxu0 0
    %627 = vmatmul.mubr.bf16.gmra.mxu0 %v393
    %v628 = vpop.f32.mrf.mxu0
    %v629 = vadd.f32 %v161, %v628
    %v630 = vpop.f32.mrf.mxu0
    %v631 = vadd.f32 %v165, %v630
    %v632 = vpop.f32.mrf.mxu0
    %v633 = vadd.f32 %v161, %v632
    %v634 = vpop.f32.mrf.mxu0
    %v635 = vadd.f32 %v165, %v634
    %636 = vmatprep.mubr.bf16.mxu0 0
    %637 = vmatmul.mubr.bf16.gmra.mxu0 %v394
    %v638 = vpop.f32.mrf.mxu0
    %v639 = vadd.f32 %v161, %v638
    %v640 = vpop.f32.mrf.mxu0
    %v641 = vadd.f32 %v165, %v640
    %v642 = vpop.f32.mrf.mxu0
    %v643 = vadd.f32 %v161, %v642
    %v644 = vpop.f32.mrf.mxu0
    %v645 = vadd.f32 %v165, %v644
    %646 = vmatprep.mubr.bf16.mxu0 0
    %647 = vmatmul.mubr.bf16.gmra.mxu0 %v395
    %v648 = vpop.f32.mrf.mxu0
    %v649 = vadd.f32 %v161, %v648
    %v650 = vpop.f32.mrf.mxu0
    %v651 = vadd.f32 %v165, %v650
    %v652 = vpop.f32.mrf.mxu0
    %v653 = vadd.f32 %v161, %v652
    %v654 = vpop.f32.mrf.mxu0
    %v655 = vadd.f32 %v165, %v654
    %656 = vmatprep.mubr.bf16.mxu0 0
    %657 = vmatmul.mubr.bf16.gmra.mxu0 %v396
    %v658 = vpop.f32.mrf.mxu0
    %v659 = vadd.f32 %v161, %v658
    %v660 = vpop.f32.mrf.mxu0
    %v661 = vadd.f32 %v165, %v660
    %v662 = vpop.f32.mrf.mxu0
    %v663 = vadd.f32 %v161, %v662
    %v664 = vpop.f32.mrf.mxu0
    %v665 = vadd.f32 %v165, %v664
    %666 = vmatprep.mubr.bf16.mxu0 0
    %667 = vmatmul.mubr.bf16.gmra.mxu0 %v397
    %v668 = vpop.f32.mrf.mxu0
    %v669 = vadd.f32 %v161, %v668
    %v670 = vpop.f32.mrf.mxu0
    %v671 = vadd.f32 %v165, %v670
    %v672 = vpop.f32.mrf.mxu0
    %v673 = vadd.f32 %v161, %v672
    %v674 = vpop.f32.mrf.mxu0
    %v675 = vadd.f32 %v165, %v674
    %676 = vmatprep.mubr.bf16.mxu0 0
    %677 = vmatmul.mubr.bf16.gmra.mxu0 %v398
    %v678 = vpop.f32.mrf.mxu0
    %v679 = vadd.f32 %v161, %v678
    %v680 = vpop.f32.mrf.mxu0
    %v681 = vadd.f32 %v165, %v680
    %v682 = vpop.f32.mrf.mxu0
    %v683 = vadd.f32 %v161, %v682
    %v684 = vpop.f32.mrf.mxu0
    %v685 = vadd.f32 %v165, %v684
    %686 = vmatprep.mubr.bf16.mxu0 0
    %687 = vmatmul.mubr.bf16.gmra.mxu0 %v399
    %v688 = vpop.f32.mrf.mxu0
    %v689 = vadd.f32 %v161, %v688
    %v690 = vpop.f32.mrf.mxu0
    %v691 = vadd.f32 %v165, %v690
    %v692 = vpop.f32.mrf.mxu0
    %v693 = vadd.f32 %v161, %v692
    %v694 = vpop.f32.mrf.mxu0
    %v695 = vadd.f32 %v165, %v694
    %696 = vmatprep.mubr.bf16.mxu0 0
    %697 = vmatmul.mubr.bf16.gmra.mxu0 %v400
    %v698 = vpop.f32.mrf.mxu0
    %v699 = vadd.f32 %v161, %v698
    %v700 = vpop.f32.mrf.mxu0
    %v701 = vadd.f32 %v165, %v700
    %v702 = vpop.f32.mrf.mxu0
    %v703 = vadd.f32 %v161, %v702
    %v704 = vpop.f32.mrf.mxu0
    %v705 = vadd.f32 %v165, %v704
    %706 = vmatprep.mubr.bf16.mxu0 0
    %707 = vmatmul.mubr.bf16.gmra.mxu0 %v401
    %v708 = vpop.f32.mrf.mxu0
    %v709 = vadd.f32 %v161, %v708
    %v710 = vpop.f32.mrf.mxu0
    %v711 = vadd.f32 %v165, %v710
    %v712 = vpop.f32.mrf.mxu0
    %v713 = vadd.f32 %v161, %v712
    %v714 = vpop.f32.mrf.mxu0
    %v715 = vadd.f32 %v165, %v714
    %716 = vmatprep.mubr.bf16.mxu0 0
    %717 = vmatmul.mubr.bf16.gmra.mxu0 %v402
    %v718 = vpop.f32.mrf.mxu0
    %v719 = vadd.f32 %v161, %v718
    %v720 = vpop.f32.mrf.mxu0
    %v721 = vadd.f32 %v165, %v720
    %v722 = vpop.f32.mrf.mxu0
    %v723 = vadd.f32 %v161, %v722
    %v724 = vpop.f32.mrf.mxu0
    %v725 = vadd.f32 %v165, %v724
    %726 = vmatprep.mubr.bf16.mxu0 0
    %727 = vmatmul.mubr.bf16.gmra.mxu0 %v403
    %v728 = vpop.f32.mrf.mxu0
    %v729 = vadd.f32 %v161, %v728
    %v730 = vpop.f32.mrf.mxu0
    %v731 = vadd.f32 %v165, %v730
    %v732 = vpop.f32.mrf.mxu0
    %v733 = vadd.f32 %v161, %v732
    %v734 = vpop.f32.mrf.mxu0
    %v735 = vadd.f32 %v165, %v734
    %736 = vmatprep.mubr.bf16.mxu0 0
    %737 = vmatmul.mubr.bf16.gmra.mxu0 %v404
    %v738 = vpop.f32.mrf.mxu0
    %v739 = vadd.f32 %v161, %v738
    %v740 = vpop.f32.mrf.mxu0
    %v741 = vadd.f32 %v165, %v740
    %v742 = vpop.f32.mrf.mxu0
    %v743 = vadd.f32 %v161, %v742
    %v744 = vpop.f32.mrf.mxu0
    %v745 = vadd.f32 %v165, %v744
    %746 = vmatprep.mubr.bf16.mxu0 0
    %747 = vmatmul.mubr.bf16.gmra.mxu0 %v405
    %v748 = vpop.f32.mrf.mxu0
    %v749 = vadd.f32 %v161, %v748
    %v750 = vpop.f32.mrf.mxu0
    %v751 = vadd.f32 %v165, %v750
    %v752 = vpop.f32.mrf.mxu0
    %v753 = vadd.f32 %v161, %v752
    %v754 = vpop.f32.mrf.mxu0
    %v755 = vadd.f32 %v165, %v754
    %756 = vmatprep.mubr.bf16.mxu0 0
    %757 = vmatmul.mubr.bf16.gmra.mxu0 %v406
    %v758 = vpop.f32.mrf.mxu0
    %v759 = vadd.f32 %v161, %v758
    %v760 = vpop.f32.mrf.mxu0
    %v761 = vadd.f32 %v165, %v760
    %v762 = vpop.f32.mrf.mxu0
    %v763 = vadd.f32 %v161, %v762
    %v764 = vpop.f32.mrf.mxu0
    %v765 = vadd.f32 %v165, %v764
    %766 = vmatprep.mubr.bf16.mxu0 0
    %767 = vmatmul.mubr.bf16.gmra.mxu0 %v407
    %v768 = vpop.f32.mrf.mxu0
    %v769 = vadd.f32 %v161, %v768
    %v770 = vpop.f32.mrf.mxu0
    %v771 = vadd.f32 %v165, %v770
    %v772 = vpop.f32.mrf.mxu0
    %v773 = vadd.f32 %v161, %v772
    %v774 = vpop.f32.mrf.mxu0
    %v775 = vadd.f32 %v165, %v774
    %776 = vmatprep.mubr.bf16.mxu0 0
    %777 = vmatmul.mubr.bf16.gmra.mxu0 %v408
    %v778 = vpop.f32.mrf.mxu0
    %v779 = vadd.f32 %v161, %v778
    %v780 = vpop.f32.mrf.mxu0
    %v781 = vadd.f32 %v165, %v780
    %v782 = vpop.f32.mrf.mxu0
    %v783 = vadd.f32 %v161, %v782
    %v784 = vpop.f32.mrf.mxu0
    %v785 = vadd.f32 %v165, %v784
    %786 = vmatprep.mubr.bf16.mxu0 0
    %787 = vmatmul.mubr.bf16.gmra.mxu0 %v409
    %v788 = vpop.f32.mrf.mxu0
    %v789 = vadd.f32 %v161, %v788
    %v790 = vpop.f32.mrf.mxu0
    %v791 = vadd.f32 %v165, %v790
    %v792 = vpop.f32.mrf.mxu0
    %v793 = vadd.f32 %v161, %v792
    %v794 = vpop.f32.mrf.mxu0
    %v795 = vadd.f32 %v165, %v794
    %796 = vmatprep.mubr.bf16.mxu0 0
    %797 = vmatmul.mubr.bf16.gmra.mxu0 %v410
    %v798 = vpop.f32.mrf.mxu0
    %v799 = vadd.f32 %v161, %v798
    %v800 = vpop.f32.mrf.mxu0
    %v801 = vadd.f32 %v165, %v800
    %v802 = vpop.f32.mrf.mxu0
    %v803 = vadd.f32 %v161, %v802
    %v804 = vpop.f32.mrf.mxu0
    %v805 = vadd.f32 %v165, %v804
    %806 = vmatprep.mubr.bf16.mxu0 0
    %807 = vmatmul.mubr.bf16.gmra.mxu0 %v411
    %v808 = vpop.f32.mrf.mxu0
    %v809 = vadd.f32 %v161, %v808
    %v810 = vpop.f32.mrf.mxu0
    %v811 = vadd.f32 %v165, %v810
    %v812 = vpop.f32.mrf.mxu0
    %v813 = vadd.f32 %v161, %v812
    %v814 = vpop.f32.mrf.mxu0
    %v815 = vadd.f32 %v165, %v814
    %816 = vmatprep.mubr.bf16.mxu0 0
    %817 = vmatmul.mubr.bf16.gmra.mxu0 %v412
    %v818 = vpop.f32.mrf.mxu0
    %v819 = vadd.f32 %v161, %v818
    %v820 = vpop.f32.mrf.mxu0
    %v821 = vadd.f32 %v165, %v820
    %v822 = vpop.f32.mrf.mxu0
    %v823 = vadd.f32 %v161, %v822
    %v824 = vpop.f32.mrf.mxu0
    %v825 = vadd.f32 %v165, %v824
    %826 = vmatprep.mubr.bf16.mxu0 0
    %827 = vmatmul.mubr.bf16.gmra.mxu0 %v413
    %v828 = vpop.f32.mrf.mxu0
    %v829 = vadd.f32 %v161, %v828
    %v830 = vpop.f32.mrf.mxu0
    %v831 = vadd.f32 %v165, %v830
    %v832 = vpop.f32.mrf.mxu0
    %v833 = vadd.f32 %v161, %v832
    %v834 = vpop.f32.mrf.mxu0
    %v835 = vadd.f32 %v165, %v834
    %836 = vmatprep.mubr.bf16.mxu0 0
    %837 = vmatmul.mubr.bf16.gmra.mxu0 %v414
    %v838 = vpop.f32.mrf.mxu0
    %v839 = vadd.f32 %v161, %v838
    %v840 = vpop.f32.mrf.mxu0
    %v841 = vadd.f32 %v165, %v840
    %v842 = vpop.f32.mrf.mxu0
    %v843 = vadd.f32 %v161, %v842
    %v844 = vpop.f32.mrf.mxu0
    %v845 = vadd.f32 %v165, %v844
    %846 = vmatprep.mubr.bf16.mxu0 0
    %847 = vmatmul.mubr.bf16.gmra.mxu0 %v415
    %v848 = vpop.f32.mrf.mxu0
    %v849 = vadd.f32 %v161, %v848
    %v850 = vpop.f32.mrf.mxu0
    %v851 = vadd.f32 %v165, %v850
    %v852 = vpop.f32.mrf.mxu0
    %v853 = vadd.f32 %v161, %v852
    %v854 = vpop.f32.mrf.mxu0
    %v855 = vadd.f32 %v165, %v854
    %856 = vmatprep.mubr.bf16.mxu0 0
    %857 = vmatmul.mubr.bf16.gmra.mxu0 %v416
    %v858 = vpop.f32.mrf.mxu0
    %v859 = vadd.f32 %v161, %v858
    %v860 = vpop.f32.mrf.mxu0
    %v861 = vadd.f32 %v165, %v860
    %v862 = vpop.f32.mrf.mxu0
    %v863 = vadd.f32 %v161, %v862
    %v864 = vpop.f32.mrf.mxu0
    %v865 = vadd.f32 %v165, %v864
    %866 = vmatprep.mubr.bf16.mxu0 0
    %867 = vmatmul.mubr.bf16.gmra.mxu0 %v417
    %v868 = vpop.f32.mrf.mxu0
    %v869 = vadd.f32 %v161, %v868
    %v870 = vpop.f32.mrf.mxu0
    %v871 = vadd.f32 %v165, %v870
    %v872 = vpop.f32.mrf.mxu0
    %v873 = vadd.f32 %v161, %v872
    %v874 = vpop.f32.mrf.mxu0
    %v875 = vadd.f32 %v165, %v874
    %876 = vmatprep.mubr.bf16.mxu0 0
    %877 = vmatmul.mubr.bf16.gmra.mxu0 %v418
    %v878 = vpop.f32.mrf.mxu0
    %v879 = vadd.f32 %v161, %v878
    %v880 = vpop.f32.mrf.mxu0
    %v881 = vadd.f32 %v165, %v880
    %v882 = vpop.f32.mrf.mxu0
    %v883 = vadd.f32 %v161, %v882
    %v884 = vpop.f32.mrf.mxu0
    %v885 = vadd.f32 %v165, %v884
    %886 = vmatprep.mubr.bf16.mxu0 0
    %887 = vmatmul.mubr.bf16.gmra.mxu0 %v419
    %v888 = vpop.f32.mrf.mxu0
    %v889 = vadd.f32 %v161, %v888
    %v890 = vpop.f32.mrf.mxu0
    %v891 = vadd.f32 %v165, %v890
    %v892 = vpop.f32.mrf.mxu0
    %v893 = vadd.f32 %v161, %v892
    %v894 = vpop.f32.mrf.mxu0
    %v895 = vadd.f32 %v165, %v894
    %896 = vmatprep.mubr.bf16.mxu0 0
    %897 = vmatmul.mubr.bf16.gmra.mxu0 %v420
    %v898 = vpop.f32.mrf.mxu0
    %v899 = vadd.f32 %v161, %v898
    %v900 = vpop.f32.mrf.mxu0
    %v901 = vadd.f32 %v165, %v900
    %v902 = vpop.f32.mrf.mxu0
    %v903 = vadd.f32 %v161, %v902
    %v904 = vpop.f32.mrf.mxu0
    %v905 = vadd.f32 %v165, %v904
    %906 = vmatprep.mubr.bf16.mxu0 0
    %907 = vmatmul.mubr.bf16.gmra.mxu0 %v421
    %v908 = vpop.f32.mrf.mxu0
    %v909 = vadd.f32 %v161, %v908
    %v910 = vpop.f32.mrf.mxu0
    %v911 = vadd.f32 %v165, %v910
    %v912 = vpop.f32.mrf.mxu0
    %v913 = vadd.f32 %v161, %v912
    %v914 = vpop.f32.mrf.mxu0
    %v915 = vadd.f32 %v165, %v914
    %916 = vmatprep.mubr.bf16.mxu0 0
    %917 = vmatmul.mubr.bf16.gmra.mxu0 %v422
    %v918 = vpop.f32.mrf.mxu0
    %v919 = vadd.f32 %v161, %v918
    %v920 = vpop.f32.mrf.mxu0
    %v921 = vadd.f32 %v165, %v920
    %v922 = vpop.f32.mrf.mxu0
    %v923 = vadd.f32 %v161, %v922
    %v924 = vpop.f32.mrf.mxu0
    %v925 = vadd.f32 %v165, %v924
    %926 = vmatprep.mubr.bf16.mxu0 0
    %927 = vmatmul.mubr.bf16.gmra.mxu0 %v423
    %v928 = vpop.f32.mrf.mxu0
    %v929 = vadd.f32 %v161, %v928
    %v930 = vpop.f32.mrf.mxu0
    %v931 = vadd.f32 %v165, %v930
    %v932 = vpop.f32.mrf.mxu0
    %v933 = vadd.f32 %v161, %v932
    %v934 = vpop.f32.mrf.mxu0
    %v935 = vadd.f32 %v165, %v934
    %936 = vmatprep.mubr.bf16.mxu0 0
    %937 = vmatmul.mubr.bf16.gmra.mxu0 %v424
    %v938 = vpop.f32.mrf.mxu0
    %v939 = vadd.f32 %v161, %v938
    %v940 = vpop.f32.mrf.mxu0
    %v941 = vadd.f32 %v165, %v940
    %v942 = vpop.f32.mrf.mxu0
    %v943 = vadd.f32 %v161, %v942
    %v944 = vpop.f32.mrf.mxu0
    %v945 = vadd.f32 %v165, %v944
    %946 = vmatprep.mubr.bf16.mxu0 0
    %947 = vmatmul.mubr.bf16.gmra.mxu0 %v425
    %v948 = vpop.f32.mrf.mxu0
    %v949 = vadd.f32 %v161, %v948
    %v950 = vpop.f32.mrf.mxu0
    %v951 = vadd.f32 %v165, %v950
    %v952 = vpop.f32.mrf.mxu0
    %v953 = vadd.f32 %v161, %v952
    %v954 = vpop.f32.mrf.mxu0
    %v955 = vadd.f32 %v165, %v954
    %956 = vmatprep.mubr.bf16.mxu0 0
    %957 = vmatmul.mubr.bf16.gmra.mxu0 %v426
    %v958 = vpop.f32.mrf.mxu0
    %v959 = vadd.f32 %v161, %v958
    %v960 = vpop.f32.mrf.mxu0
    %v961 = vadd.f32 %v165, %v960
    %v962 = vpop.f32.mrf.mxu0
    %v963 = vadd.f32 %v161, %v962
    %v964 = vpop.f32.mrf.mxu0
    %v965 = vadd.f32 %v165, %v964
    %966 = vmatprep.mubr.bf16.mxu0 0
    %967 = vmatmul.mubr.bf16.gmra.mxu0 %v427
    %v968 = vpop.f32.mrf.mxu0
    %v969 = vadd.f32 %v161, %v968
    %v970 = vpop.f32.mrf.mxu0
    %v971 = vadd.f32 %v165, %v970
    %v972 = vpop.f32.mrf.mxu0
    %v973 = vadd.f32 %v161, %v972
    %v974 = vpop.f32.mrf.mxu0
    %v975 = vadd.f32 %v165, %v974
    %976 = vmatprep.mubr.bf16.mxu0 0
    %977 = vmatmul.mubr.bf16.gmra.mxu0 %v428
    %v978 = vpop.f32.mrf.mxu0
    %v979 = vadd.f32 %v161, %v978
    %v980 = vpop.f32.mrf.mxu0
    %v981 = vadd.f32 %v165, %v980
    %v982 = vpop.f32.mrf.mxu0
    %v983 = vadd.f32 %v161, %v982
    %v984 = vpop.f32.mrf.mxu0
    %v985 = vadd.f32 %v165, %v984
    %986 = vmatprep.mubr.bf16.mxu0 0
    %987 = vmatmul.mubr.bf16.gmra.mxu0 %v429
    %v988 = vpop.f32.mrf.mxu0
    %v989 = vadd.f32 %v161, %v988
    %v990 = vpop.f32.mrf.mxu0
    %v991 = vadd.f32 %v165, %v990
    %v992 = vpop.f32.mrf.mxu0
    %v993 = vadd.f32 %v161, %v992
    %v994 = vpop.f32.mrf.mxu0
    %v995 = vadd.f32 %v165, %v994
    %996 = vmatprep.mubr.bf16.mxu0 0
    %997 = vmatmul.mubr.bf16.gmra.mxu0 %v430
    %v998 = vpop.f32.mrf.mxu0
    %v999 = vadd.f32 %v161, %v998
    %v1000 = vpop.f32.mrf.mxu0
    %v1001 = vadd.f32 %v165, %v1000
    %v1002 = vpop.f32.mrf.mxu0
    %v1003 = vadd.f32 %v161, %v1002
    %v1004 = vpop.f32.mrf.mxu0
    %v1005 = vadd.f32 %v165, %v1004
    %1006 = vmatprep.mubr.bf16.mxu0 0
    %1007 = vmatmul.mubr.bf16.gmra.mxu0 %v431
    %v1008 = vpop.f32.mrf.mxu0
    %v1009 = vadd.f32 %v161, %v1008
    %v1010 = vpop.f32.mrf.mxu0
    %v1011 = vadd.f32 %v165, %v1010
    %v1012 = vpop.f32.mrf.mxu0
    %v1013 = vadd.f32 %v161, %v1012
    %v1014 = vpop.f32.mrf.mxu0
    %v1015 = vadd.f32 %v165, %v1014
    %1016 = vmatprep.mubr.bf16.mxu0 0
    %1017 = vmatmul.mubr.bf16.gmra.mxu0 %v432
    %v1018 = vpop.f32.mrf.mxu0
    %v1019 = vadd.f32 %v161, %v1018
    %v1020 = vpop.f32.mrf.mxu0
    %v1021 = vadd.f32 %v165, %v1020
    %v1022 = vpop.f32.mrf.mxu0
    %v1023 = vadd.f32 %v161, %v1022
    %v1024 = vpop.f32.mrf.mxu0
    %v1025 = vadd.f32 %v165, %v1024
    %1026 = vmatprep.mubr.bf16.mxu0 0
    %1027 = vmatmul.mubr.bf16.gmra.mxu0 %v433
    %v1028 = vpop.f32.mrf.mxu0
    %v1029 = vadd.f32 %v161, %v1028
    %v1030 = vpop.f32.mrf.mxu0
    %v1031 = vadd.f32 %v165, %v1030
    %v1032 = vpop.f32.mrf.mxu0
    %v1033 = vadd.f32 %v161, %v1032
    %v1034 = vpop.f32.mrf.mxu0
    %v1035 = vadd.f32 %v165, %v1034
    %1036 = vmatprep.mubr.bf16.mxu0 0
    %1037 = vmatmul.mubr.bf16.gmra.mxu0 %v434
    %v1038 = vpop.f32.mrf.mxu0
    %v1039 = vadd.f32 %v161, %v1038
    %v1040 = vpop.f32.mrf.mxu0
    %v1041 = vadd.f32 %v165, %v1040
    %v1042 = vpop.f32.mrf.mxu0
    %v1043 = vadd.f32 %v161, %v1042
    %v1044 = vpop.f32.mrf.mxu0
    %v1045 = vadd.f32 %v165, %v1044
    %1046 = vmatprep.mubr.bf16.mxu0 0
    %1047 = vmatmul.mubr.bf16.gmra.mxu0 %v435
    %v1048 = vpop.f32.mrf.mxu0
    %v1049 = vadd.f32 %v161, %v1048
    %v1050 = vpop.f32.mrf.mxu0
    %v1051 = vadd.f32 %v165, %v1050
    %v1052 = vpop.f32.mrf.mxu0
    %v1053 = vadd.f32 %v161, %v1052
    %v1054 = vpop.f32.mrf.mxu0
    %v1055 = vadd.f32 %v165, %v1054
    %1056 = vmatprep.mubr.bf16.mxu0 0
    %1057 = vmatmul.mubr.bf16.gmra.mxu0 %v436
    %v1058 = vpop.f32.mrf.mxu0
    %v1059 = vadd.f32 %v161, %v1058
    %v1060 = vpop.f32.mrf.mxu0
    %v1061 = vadd.f32 %v165, %v1060
    %v1062 = vpop.f32.mrf.mxu0
    %v1063 = vadd.f32 %v161, %v1062
    %v1064 = vpop.f32.mrf.mxu0
    %v1065 = vadd.f32 %v165, %v1064
    %1066 = vmatprep.mubr.bf16.mxu0 0
    %1067 = vmatmul.mubr.bf16.gmra.mxu0 %v437
    %v1068 = vpop.f32.mrf.mxu0
    %v1069 = vadd.f32 %v161, %v1068
    %v1070 = vpop.f32.mrf.mxu0
    %v1071 = vadd.f32 %v165, %v1070
    %v1072 = vpop.f32.mrf.mxu0
    %v1073 = vadd.f32 %v161, %v1072
    %v1074 = vpop.f32.mrf.mxu0
    %v1075 = vadd.f32 %v165, %v1074
    %1076 = vmatprep.mubr.bf16.mxu0 0
    %1077 = vmatmul.mubr.bf16.gmra.mxu0 %v438
    %v1078 = vpop.f32.mrf.mxu0
    %v1079 = vadd.f32 %v161, %v1078
    %v1080 = vpop.f32.mrf.mxu0
    %v1081 = vadd.f32 %v165, %v1080
    %v1082 = vpop.f32.mrf.mxu0
    %v1083 = vadd.f32 %v161, %v1082
    %v1084 = vpop.f32.mrf.mxu0
    %v1085 = vadd.f32 %v165, %v1084
    %1086 = vmatprep.mubr.bf16.mxu0 0
    %1087 = vmatmul.mubr.bf16.gmra.mxu0 %v439
    %v1088 = vpop.f32.mrf.mxu0
    %v1089 = vadd.f32 %v161, %v1088
    %v1090 = vpop.f32.mrf.mxu0
    %v1091 = vadd.f32 %v165, %v1090
    %v1092 = vpop.f32.mrf.mxu0
    %v1093 = vadd.f32 %v161, %v1092
    %v1094 = vpop.f32.mrf.mxu0
    %v1095 = vadd.f32 %v165, %v1094
    %1096 = vmatprep.mubr.bf16.mxu0 0
    %1097 = vmatmul.mubr.bf16.gmra.mxu0 %v440
    %v1098 = vpop.f32.mrf.mxu0
    %v1099 = vadd.f32 %v161, %v1098
    %v1100 = vpop.f32.mrf.mxu0
    %v1101 = vadd.f32 %v165, %v1100
    %v1102 = vpop.f32.mrf.mxu0
    %v1103 = vadd.f32 %v161, %v1102
    %v1104 = vpop.f32.mrf.mxu0
    %v1105 = vadd.f32 %v165, %v1104
    %1106 = vmatprep.mubr.bf16.mxu0 0
    %1107 = vmatmul.mubr.bf16.gmra.mxu0 %v441
    %v1108 = vpop.f32.mrf.mxu0
    %v1109 = vadd.f32 %v161, %v1108
    %v1110 = vpop.f32.mrf.mxu0
    %v1111 = vadd.f32 %v165, %v1110
    %v1112 = vpop.f32.mrf.mxu0
    %v1113 = vadd.f32 %v161, %v1112
    %v1114 = vpop.f32.mrf.mxu0
    %v1115 = vadd.f32 %v165, %v1114
    %1116 = vmatprep.mubr.bf16.mxu0 0
    %1117 = vmatmul.mubr.bf16.gmra.mxu0 %v442
    %v1118 = vpop.f32.mrf.mxu0
    %v1119 = vadd.f32 %v161, %v1118
    %v1120 = vpop.f32.mrf.mxu0
    %v1121 = vadd.f32 %v165, %v1120
    %v1122 = vpop.f32.mrf.mxu0
    %v1123 = vadd.f32 %v161, %v1122
    %v1124 = vpop.f32.mrf.mxu0
    %v1125 = vadd.f32 %v165, %v1124
    %1126 = vmatprep.mubr.bf16.mxu0 0
    %1127 = vmatmul.mubr.bf16.gmra.mxu0 %v443
    %v1128 = vpop.f32.mrf.mxu0
    %v1129 = vadd.f32 %v161, %v1128
    %v1130 = vpop.f32.mrf.mxu0
    %v1131 = vadd.f32 %v165, %v1130
    %v1132 = vpop.f32.mrf.mxu0
    %v1133 = vadd.f32 %v161, %v1132
    %v1134 = vpop.f32.mrf.mxu0
    %v1135 = vadd.f32 %v165, %v1134
    %1136 = vmatprep.mubr.bf16.mxu0 0
    %1137 = vmatmul.mubr.bf16.gmra.mxu0 %v444
    %v1138 = vpop.f32.mrf.mxu0
    %v1139 = vadd.f32 %v161, %v1138
    %v1140 = vpop.f32.mrf.mxu0
    %v1141 = vadd.f32 %v165, %v1140
    %v1142 = vpop.f32.mrf.mxu0
    %v1143 = vadd.f32 %v161, %v1142
    %v1144 = vpop.f32.mrf.mxu0
    %v1145 = vadd.f32 %v165, %v1144
    %1146 = vmatprep.mubr.bf16.mxu0 0
    %1147 = vmatmul.mubr.bf16.gmra.mxu0 %v445
    %v1148 = vpop.f32.mrf.mxu0
    %v1149 = vadd.f32 %v161, %v1148
    %v1150 = vpop.f32.mrf.mxu0
    %v1151 = vadd.f32 %v165, %v1150
    %v1152 = vpop.f32.mrf.mxu0
    %v1153 = vadd.f32 %v161, %v1152
    %v1154 = vpop.f32.mrf.mxu0
    %v1155 = vadd.f32 %v165, %v1154
    %1156 = vmatprep.mubr.bf16.mxu0 0
    %1157 = vmatmul.mubr.bf16.gmra.mxu0 %v446
    %v1158 = vpop.f32.mrf.mxu0
    %v1159 = vadd.f32 %v161, %v1158
    %v1160 = vpop.f32.mrf.mxu0
    %v1161 = vadd.f32 %v165, %v1160
    %v1162 = vpop.f32.mrf.mxu0
    %v1163 = vadd.f32 %v161, %v1162
    %v1164 = vpop.f32.mrf.mxu0
    %v1165 = vadd.f32 %v165, %v1164
    %1166 = vmatprep.mubr.bf16.mxu0 0
    %1167 = vmatmul.mubr.bf16.gmra.mxu0 %v447
    %v1168 = vpop.f32.mrf.mxu0
    %v1169 = vadd.f32 %v161, %v1168
    %v1170 = vpop.f32.mrf.mxu0
    %v1171 = vadd.f32 %v165, %v1170
    %v1172 = vpop.f32.mrf.mxu0
    %v1173 = vadd.f32 %v161, %v1172
    %v1174 = vpop.f32.mrf.mxu0
    %v1175 = vadd.f32 %v165, %v1174
    %1176 = vdwg.mxu0
    %v1177 = vmax.f32 %v619, 0.0
    %v1178 = vmax.f32 %v621, 0.0
    %v1179 = vmax.f32 %v623, 0.0
    %v1180 = vmax.f32 %v625, 0.0
    %v1181 = vmax.f32 %v629, 0.0
    %v1182 = vmax.f32 %v631, 0.0
    %v1183 = vmax.f32 %v633, 0.0
    %v1184 = vmax.f32 %v635, 0.0
    %v1185 = vmax.f32 %v639, 0.0
    %v1186 = vmax.f32 %v641, 0.0
    %v1187 = vmax.f32 %v643, 0.0
    %v1188 = vmax.f32 %v645, 0.0
    %v1189 = vmax.f32 %v649, 0.0
    %v1190 = vmax.f32 %v651, 0.0
    %v1191 = vmax.f32 %v653, 0.0
    %v1192 = vmax.f32 %v655, 0.0
    %v1193 = vmax.f32 %v659, 0.0
    %v1194 = vmax.f32 %v661, 0.0
    %v1195 = vmax.f32 %v663, 0.0
    %v1196 = vmax.f32 %v665, 0.0
    %v1197 = vmax.f32 %v669, 0.0
    %v1198 = vmax.f32 %v671, 0.0
    %v1199 = vmax.f32 %v673, 0.0
    %v1200 = vmax.f32 %v675, 0.0
    %v1201 = vmax.f32 %v679, 0.0
    %v1202 = vmax.f32 %v681, 0.0
    %v1203 = vmax.f32 %v683, 0.0
    %v1204 = vmax.f32 %v685, 0.0
    %v1205 = vmax.f32 %v689, 0.0
    %v1206 = vmax.f32 %v691, 0.0
    %v1207 = vmax.f32 %v693, 0.0
    %v1208 = vmax.f32 %v695, 0.0
    %v1209 = vmax.f32 %v699, 0.0
    %v1210 = vmax.f32 %v701, 0.0
    %v1211 = vmax.f32 %v703, 0.0
    %v1212 = vmax.f32 %v705, 0.0
    %v1213 = vmax.f32 %v709, 0.0
    %v1214 = vmax.f32 %v711, 0.0
    %v1215 = vmax.f32 %v713, 0.0
    %v1216 = vmax.f32 %v715, 0.0
    %v1217 = vmax.f32 %v719, 0.0
    %v1218 = vmax.f32 %v721, 0.0
    %v1219 = vmax.f32 %v723, 0.0
    %v1220 = vmax.f32 %v725, 0.0
    %v1221 = vmax.f32 %v729, 0.0
    %v1222 = vmax.f32 %v731, 0.0
    %v1223 = vmax.f32 %v733, 0.0
    %v1224 = vmax.f32 %v735, 0.0
    %v1225 = vmax.f32 %v739, 0.0
    %v1226 = vmax.f32 %v741, 0.0
    %v1227 = vmax.f32 %v743, 0.0
    %v1228 = vmax.f32 %v745, 0.0
    %v1229 = vmax.f32 %v749, 0.0
    %v1230 = vmax.f32 %v751, 0.0
    %v1231 = vmax.f32 %v753, 0.0
    %v1232 = vmax.f32 %v755, 0.0
    %v1233 = vmax.f32 %v759, 0.0
    %v1234 = vmax.f32 %v761, 0.0
    %v1235 = vmax.f32 %v763, 0.0
    %v1236 = vmax.f32 %v765, 0.0
    %v1237 = vmax.f32 %v769, 0.0
    %v1238 = vmax.f32 %v771, 0.0
    %v1239 = vmax.f32 %v773, 0.0
    %v1240 = vmax.f32 %v775, 0.0
    %v1241 = vmax.f32 %v779, 0.0
    %v1242 = vmax.f32 %v781, 0.0
    %v1243 = vmax.f32 %v783, 0.0
    %v1244 = vmax.f32 %v785, 0.0
    %v1245 = vmax.f32 %v789, 0.0
    %v1246 = vmax.f32 %v791, 0.0
    %v1247 = vmax.f32 %v793, 0.0
    %v1248 = vmax.f32 %v795, 0.0
    %v1249 = vmax.f32 %v799, 0.0
    %v1250 = vmax.f32 %v801, 0.0
    %v1251 = vmax.f32 %v803, 0.0
    %v1252 = vmax.f32 %v805, 0.0
    %v1253 = vmax.f32 %v809, 0.0
    %v1254 = vmax.f32 %v811, 0.0
    %v1255 = vmax.f32 %v813, 0.0
    %v1256 = vmax.f32 %v815, 0.0
    %v1257 = vmax.f32 %v819, 0.0
    %v1258 = vmax.f32 %v821, 0.0
    %v1259 = vmax.f32 %v823, 0.0
    %v1260 = vmax.f32 %v825, 0.0
    %v1261 = vmax.f32 %v829, 0.0
    %v1262 = vmax.f32 %v831, 0.0
    %v1263 = vmax.f32 %v833, 0.0
    %v1264 = vmax.f32 %v835, 0.0
    %v1265 = vmax.f32 %v839, 0.0
    %v1266 = vmax.f32 %v841, 0.0
    %v1267 = vmax.f32 %v843, 0.0
    %v1268 = vmax.f32 %v845, 0.0
    %v1269 = vmax.f32 %v849, 0.0
    %v1270 = vmax.f32 %v851, 0.0
    %v1271 = vmax.f32 %v853, 0.0
    %v1272 = vmax.f32 %v855, 0.0
    %v1273 = vmax.f32 %v859, 0.0
    %v1274 = vmax.f32 %v861, 0.0
    %v1275 = vmax.f32 %v863, 0.0
    %v1276 = vmax.f32 %v865, 0.0
    %v1277 = vmax.f32 %v869, 0.0
    %v1278 = vmax.f32 %v871, 0.0
    %v1279 = vmax.f32 %v873, 0.0
    %v1280 = vmax.f32 %v875, 0.0
    %v1281 = vmax.f32 %v879, 0.0
    %v1282 = vmax.f32 %v881, 0.0
    %v1283 = vmax.f32 %v883, 0.0
    %v1284 = vmax.f32 %v885, 0.0
    %v1285 = vmax.f32 %v889, 0.0
    %v1286 = vmax.f32 %v891, 0.0
    %v1287 = vmax.f32 %v893, 0.0
    %v1288 = vmax.f32 %v895, 0.0
    %v1289 = vmax.f32 %v899, 0.0
    %v1290 = vmax.f32 %v901, 0.0
    %v1291 = vmax.f32 %v903, 0.0
    %v1292 = vmax.f32 %v905, 0.0
    %v1293 = vmax.f32 %v909, 0.0
    %v1294 = vmax.f32 %v911, 0.0
    %v1295 = vmax.f32 %v913, 0.0
    %v1296 = vmax.f32 %v915, 0.0
    %v1297 = vmax.f32 %v919, 0.0
    %v1298 = vmax.f32 %v921, 0.0
    %v1299 = vmax.f32 %v923, 0.0
    %v1300 = vmax.f32 %v925, 0.0
    %v1301 = vmax.f32 %v929, 0.0
    %v1302 = vmax.f32 %v931, 0.0
    %v1303 = vmax.f32 %v933, 0.0
    %v1304 = vmax.f32 %v935, 0.0
    %v1305 = vmax.f32 %v939, 0.0
    %v1306 = vmax.f32 %v941, 0.0
    %v1307 = vmax.f32 %v943, 0.0
    %v1308 = vmax.f32 %v945, 0.0
    %v1309 = vmax.f32 %v949, 0.0
    %v1310 = vmax.f32 %v951, 0.0
    %v1311 = vmax.f32 %v953, 0.0
    %v1312 = vmax.f32 %v955, 0.0
    %v1313 = vmax.f32 %v959, 0.0
    %v1314 = vmax.f32 %v961, 0.0
    %v1315 = vmax.f32 %v963, 0.0
    %v1316 = vmax.f32 %v965, 0.0
    %v1317 = vmax.f32 %v969, 0.0
    %v1318 = vmax.f32 %v971, 0.0
    %v1319 = vmax.f32 %v973, 0.0
    %v1320 = vmax.f32 %v975, 0.0
    %v1321 = vmax.f32 %v979, 0.0
    %v1322 = vmax.f32 %v981, 0.0
    %v1323 = vmax.f32 %v983, 0.0
    %v1324 = vmax.f32 %v985, 0.0
    %v1325 = vmax.f32 %v989, 0.0
    %v1326 = vmax.f32 %v991, 0.0
    %v1327 = vmax.f32 %v993, 0.0
    %v1328 = vmax.f32 %v995, 0.0
    %v1329 = vmax.f32 %v999, 0.0
    %v1330 = vmax.f32 %v1001, 0.0
    %v1331 = vmax.f32 %v1003, 0.0
    %v1332 = vmax.f32 %v1005, 0.0
    %v1333 = vmax.f32 %v1009, 0.0
    %v1334 = vmax.f32 %v1011, 0.0
    %v1335 = vmax.f32 %v1013, 0.0
    %v1336 = vmax.f32 %v1015, 0.0
    %v1337 = vmax.f32 %v1019, 0.0
    %v1338 = vmax.f32 %v1021, 0.0
    %v1339 = vmax.f32 %v1023, 0.0
    %v1340 = vmax.f32 %v1025, 0.0
    %v1341 = vmax.f32 %v1029, 0.0
    %v1342 = vmax.f32 %v1031, 0.0
    %v1343 = vmax.f32 %v1033, 0.0
    %v1344 = vmax.f32 %v1035, 0.0
    %v1345 = vmax.f32 %v1039, 0.0
    %v1346 = vmax.f32 %v1041, 0.0
    %v1347 = vmax.f32 %v1043, 0.0
    %v1348 = vmax.f32 %v1045, 0.0
    %v1349 = vmax.f32 %v1049, 0.0
    %v1350 = vmax.f32 %v1051, 0.0
    %v1351 = vmax.f32 %v1053, 0.0
    %v1352 = vmax.f32 %v1055, 0.0
    %v1353 = vmax.f32 %v1059, 0.0
    %v1354 = vmax.f32 %v1061, 0.0
    %v1355 = vmax.f32 %v1063, 0.0
    %v1356 = vmax.f32 %v1065, 0.0
    %v1357 = vmax.f32 %v1069, 0.0
    %v1358 = vmax.f32 %v1071, 0.0
    %v1359 = vmax.f32 %v1073, 0.0
    %v1360 = vmax.f32 %v1075, 0.0
    %v1361 = vmax.f32 %v1079, 0.0
    %v1362 = vmax.f32 %v1081, 0.0
    %v1363 = vmax.f32 %v1083, 0.0
    %v1364 = vmax.f32 %v1085, 0.0
    %v1365 = vmax.f32 %v1089, 0.0
    %v1366 = vmax.f32 %v1091, 0.0
    %v1367 = vmax.f32 %v1093, 0.0
    %v1368 = vmax.f32 %v1095, 0.0
    %v1369 = vmax.f32 %v1099, 0.0
    %v1370 = vmax.f32 %v1101, 0.0
    %v1371 = vmax.f32 %v1103, 0.0
    %v1372 = vmax.f32 %v1105, 0.0
    %v1373 = vmax.f32 %v1109, 0.0
    %v1374 = vmax.f32 %v1111, 0.0
    %v1375 = vmax.f32 %v1113, 0.0
    %v1376 = vmax.f32 %v1115, 0.0
    %v1377 = vmax.f32 %v1119, 0.0
    %v1378 = vmax.f32 %v1121, 0.0
    %v1379 = vmax.f32 %v1123, 0.0
    %v1380 = vmax.f32 %v1125, 0.0
    %v1381 = vmax.f32 %v1129, 0.0
    %v1382 = vmax.f32 %v1131, 0.0
    %v1383 = vmax.f32 %v1133, 0.0
    %v1384 = vmax.f32 %v1135, 0.0
    %v1385 = vmax.f32 %v1139, 0.0
    %v1386 = vmax.f32 %v1141, 0.0
    %v1387 = vmax.f32 %v1143, 0.0
    %v1388 = vmax.f32 %v1145, 0.0
    %v1389 = vmax.f32 %v1149, 0.0
    %v1390 = vmax.f32 %v1151, 0.0
    %v1391 = vmax.f32 %v1153, 0.0
    %v1392 = vmax.f32 %v1155, 0.0
    %v1393 = vmax.f32 %v1159, 0.0
    %v1394 = vmax.f32 %v1161, 0.0
    %v1395 = vmax.f32 %v1163, 0.0
    %v1396 = vmax.f32 %v1165, 0.0
    %v1397 = vmax.f32 %v1169, 0.0
    %v1398 = vmax.f32 %v1171, 0.0
    %v1399 = vmax.f32 %v1173, 0.0
    %v1400 = vmax.f32 %v1175, 0.0
    %1401 = vst [vmem:[#allocation2] sm:$0xff] %v1177
    %vm1402 = vcmask 785408
    %1403 = vst.msk [vmem:[#allocation2 + $0x8] sm:$0xff] %vm1402, %v1178
    %1404 = vst [vmem:[#allocation2 + $0x10] sm:$0xff] %v1179
    %1405 = vst.msk [vmem:[#allocation2 + $0x18] sm:$0xff] %vm1402, %v1180
    %1406 = vst [vmem:[#allocation2 + $0x20] sm:$0xff] %v1181
    %1407 = vst.msk [vmem:[#allocation2 + $0x28] sm:$0xff] %vm1402, %v1182
    %1408 = vst [vmem:[#allocation2 + $0x30] sm:$0xff] %v1183
    %1409 = vst.msk [vmem:[#allocation2 + $0x38] sm:$0xff] %vm1402, %v1184
    %1410 = vst [vmem:[#allocation2 + $0x40] sm:$0xff] %v1185
    %1411 = vst.msk [vmem:[#allocation2 + $0x48] sm:$0xff] %vm1402, %v1186
    %1412 = vst [vmem:[#allocation2 + $0x50] sm:$0xff] %v1187
    %1413 = vst.msk [vmem:[#allocation2 + $0x58] sm:$0xff] %vm1402, %v1188
    %1414 = vst [vmem:[#allocation2 + $0x60] sm:$0xff] %v1189
    %1415 = vst.msk [vmem:[#allocation2 + $0x68] sm:$0xff] %vm1402, %v1190
    %1416 = vst [vmem:[#allocation2 + $0x70] sm:$0xff] %v1191
    %1417 = vst.msk [vmem:[#allocation2 + $0x78] sm:$0xff] %vm1402, %v1192
    %1418 = vst [vmem:[#allocation2 + $0x80] sm:$0xff] %v1193
    %1419 = vst.msk [vmem:[#allocation2 + $0x88] sm:$0xff] %vm1402, %v1194
    %1420 = vst [vmem:[#allocation2 + $0x90] sm:$0xff] %v1195
    %1421 = vst.msk [vmem:[#allocation2 + $0x98] sm:$0xff] %vm1402, %v1196
    %1422 = vst [vmem:[#allocation2 + $0xa0] sm:$0xff] %v1197
    %1423 = vst.msk [vmem:[#allocation2 + $0xa8] sm:$0xff] %vm1402, %v1198
    %1424 = vst [vmem:[#allocation2 + $0xb0] sm:$0xff] %v1199
    %1425 = vst.msk [vmem:[#allocation2 + $0xb8] sm:$0xff] %vm1402, %v1200
    %1426 = vst [vmem:[#allocation2 + $0xc0] sm:$0xff] %v1201
    %1427 = vst.msk [vmem:[#allocation2 + $0xc8] sm:$0xff] %vm1402, %v1202
    %1428 = vst [vmem:[#allocation2 + $0xd0] sm:$0xff] %v1203
    %1429 = vst.msk [vmem:[#allocation2 + $0xd8] sm:$0xff] %vm1402, %v1204
    %1430 = vst [vmem:[#allocation2 + $0xe0] sm:$0xff] %v1205
    %1431 = vst.msk [vmem:[#allocation2 + $0xe8] sm:$0xff] %vm1402, %v1206
    %1432 = vst [vmem:[#allocation2 + $0xf0] sm:$0xff] %v1207
    %1433 = vst.msk [vmem:[#allocation2 + $0xf8] sm:$0xff] %vm1402, %v1208
    %1434 = vst [vmem:[#allocation2 + $0x100] sm:$0xff] %v1209
    %1435 = vst.msk [vmem:[#allocation2 + $0x108] sm:$0xff] %vm1402, %v1210
    %1436 = vst [vmem:[#allocation2 + $0x110] sm:$0xff] %v1211
    %1437 = vst.msk [vmem:[#allocation2 + $0x118] sm:$0xff] %vm1402, %v1212
    %1438 = vst [vmem:[#allocation2 + $0x120] sm:$0xff] %v1213
    %1439 = vst.msk [vmem:[#allocation2 + $0x128] sm:$0xff] %vm1402, %v1214
    %1440 = vst [vmem:[#allocation2 + $0x130] sm:$0xff] %v1215
    %1441 = vst.msk [vmem:[#allocation2 + $0x138] sm:$0xff] %vm1402, %v1216
    %1442 = vst [vmem:[#allocation2 + $0x140] sm:$0xff] %v1217
    %1443 = vst.msk [vmem:[#allocation2 + $0x148] sm:$0xff] %vm1402, %v1218
    %1444 = vst [vmem:[#allocation2 + $0x150] sm:$0xff] %v1219
    %1445 = vst.msk [vmem:[#allocation2 + $0x158] sm:$0xff] %vm1402, %v1220
    %1446 = vst [vmem:[#allocation2 + $0x160] sm:$0xff] %v1221
    %1447 = vst.msk [vmem:[#allocation2 + $0x168] sm:$0xff] %vm1402, %v1222
    %1448 = vst [vmem:[#allocation2 + $0x170] sm:$0xff] %v1223
    %1449 = vst.msk [vmem:[#allocation2 + $0x178] sm:$0xff] %vm1402, %v1224
    %1450 = vst [vmem:[#allocation2 + $0x180] sm:$0xff] %v1225
    %1451 = vst.msk [vmem:[#allocation2 + $0x188] sm:$0xff] %vm1402, %v1226
    %1452 = vst [vmem:[#allocation2 + $0x190] sm:$0xff] %v1227
    %1453 = vst.msk [vmem:[#allocation2 + $0x198] sm:$0xff] %vm1402, %v1228
    %1454 = vst [vmem:[#allocation2 + $0x1a0] sm:$0xff] %v1229
    %1455 = vst.msk [vmem:[#allocation2 + $0x1a8] sm:$0xff] %vm1402, %v1230
    %1456 = vst [vmem:[#allocation2 + $0x1b0] sm:$0xff] %v1231
    %1457 = vst.msk [vmem:[#allocation2 + $0x1b8] sm:$0xff] %vm1402, %v1232
    %1458 = vst [vmem:[#allocation2 + $0x1c0] sm:$0xff] %v1233
    %1459 = vst.msk [vmem:[#allocation2 + $0x1c8] sm:$0xff] %vm1402, %v1234
    %1460 = vst [vmem:[#allocation2 + $0x1d0] sm:$0xff] %v1235
    %1461 = vst.msk [vmem:[#allocation2 + $0x1d8] sm:$0xff] %vm1402, %v1236
    %1462 = vst [vmem:[#allocation2 + $0x1e0] sm:$0xff] %v1237
    %1463 = vst.msk [vmem:[#allocation2 + $0x1e8] sm:$0xff] %vm1402, %v1238
    %1464 = vst [vmem:[#allocation2 + $0x1f0] sm:$0xff] %v1239
    %1465 = vst.msk [vmem:[#allocation2 + $0x1f8] sm:$0xff] %vm1402, %v1240
    %1466 = vst [vmem:[#allocation2 + $0x200] sm:$0xff] %v1241
    %1467 = vst.msk [vmem:[#allocation2 + $0x208] sm:$0xff] %vm1402, %v1242
    %1468 = vst [vmem:[#allocation2 + $0x210] sm:$0xff] %v1243
    %1469 = vst.msk [vmem:[#allocation2 + $0x218] sm:$0xff] %vm1402, %v1244
    %1470 = vst [vmem:[#allocation2 + $0x220] sm:$0xff] %v1245
    %1471 = vst.msk [vmem:[#allocation2 + $0x228] sm:$0xff] %vm1402, %v1246
    %1472 = vst [vmem:[#allocation2 + $0x230] sm:$0xff] %v1247
    %1473 = vst.msk [vmem:[#allocation2 + $0x238] sm:$0xff] %vm1402, %v1248
    %1474 = vst [vmem:[#allocation2 + $0x240] sm:$0xff] %v1249
    %1475 = vst.msk [vmem:[#allocation2 + $0x248] sm:$0xff] %vm1402, %v1250
    %1476 = vst [vmem:[#allocation2 + $0x250] sm:$0xff] %v1251
    %1477 = vst.msk [vmem:[#allocation2 + $0x258] sm:$0xff] %vm1402, %v1252
    %1478 = vst [vmem:[#allocation2 + $0x260] sm:$0xff] %v1253
    %1479 = vst.msk [vmem:[#allocation2 + $0x268] sm:$0xff] %vm1402, %v1254
    %1480 = vst [vmem:[#allocation2 + $0x270] sm:$0xff] %v1255
    %1481 = vst.msk [vmem:[#allocation2 + $0x278] sm:$0xff] %vm1402, %v1256
    %1482 = vst [vmem:[#allocation2 + $0x280] sm:$0xff] %v1257
    %1483 = vst.msk [vmem:[#allocation2 + $0x288] sm:$0xff] %vm1402, %v1258
    %1484 = vst [vmem:[#allocation2 + $0x290] sm:$0xff] %v1259
    %1485 = vst.msk [vmem:[#allocation2 + $0x298] sm:$0xff] %vm1402, %v1260
    %1486 = vst [vmem:[#allocation2 + $0x2a0] sm:$0xff] %v1261
    %1487 = vst.msk [vmem:[#allocation2 + $0x2a8] sm:$0xff] %vm1402, %v1262
    %1488 = vst [vmem:[#allocation2 + $0x2b0] sm:$0xff] %v1263
    %1489 = vst.msk [vmem:[#allocation2 + $0x2b8] sm:$0xff] %vm1402, %v1264
    %1490 = vst [vmem:[#allocation2 + $0x2c0] sm:$0xff] %v1265
    %1491 = vst.msk [vmem:[#allocation2 + $0x2c8] sm:$0xff] %vm1402, %v1266
    %1492 = vst [vmem:[#allocation2 + $0x2d0] sm:$0xff] %v1267
    %1493 = vst.msk [vmem:[#allocation2 + $0x2d8] sm:$0xff] %vm1402, %v1268
    %1494 = vst [vmem:[#allocation2 + $0x2e0] sm:$0xff] %v1269
    %1495 = vst.msk [vmem:[#allocation2 + $0x2e8] sm:$0xff] %vm1402, %v1270
    %1496 = vst [vmem:[#allocation2 + $0x2f0] sm:$0xff] %v1271
    %1497 = vst.msk [vmem:[#allocation2 + $0x2f8] sm:$0xff] %vm1402, %v1272
    %1498 = vst [vmem:[#allocation2 + $0x300] sm:$0xff] %v1273
    %1499 = vst.msk [vmem:[#allocation2 + $0x308] sm:$0xff] %vm1402, %v1274
    %1500 = vst [vmem:[#allocation2 + $0x310] sm:$0xff] %v1275
    %1501 = vst.msk [vmem:[#allocation2 + $0x318] sm:$0xff] %vm1402, %v1276
    %1502 = vst [vmem:[#allocation2 + $0x320] sm:$0xff] %v1277
    %1503 = vst.msk [vmem:[#allocation2 + $0x328] sm:$0xff] %vm1402, %v1278
    %1504 = vst [vmem:[#allocation2 + $0x330] sm:$0xff] %v1279
    %1505 = vst.msk [vmem:[#allocation2 + $0x338] sm:$0xff] %vm1402, %v1280
    %1506 = vst [vmem:[#allocation2 + $0x340] sm:$0xff] %v1281
    %1507 = vst.msk [vmem:[#allocation2 + $0x348] sm:$0xff] %vm1402, %v1282
    %1508 = vst [vmem:[#allocation2 + $0x350] sm:$0xff] %v1283
    %1509 = vst.msk [vmem:[#allocation2 + $0x358] sm:$0xff] %vm1402, %v1284
    %1510 = vst [vmem:[#allocation2 + $0x360] sm:$0xff] %v1285
    %1511 = vst.msk [vmem:[#allocation2 + $0x368] sm:$0xff] %vm1402, %v1286
    %1512 = vst [vmem:[#allocation2 + $0x370] sm:$0xff] %v1287
    %1513 = vst.msk [vmem:[#allocation2 + $0x378] sm:$0xff] %vm1402, %v1288
    %1514 = vst [vmem:[#allocation2 + $0x380] sm:$0xff] %v1289
    %1515 = vst.msk [vmem:[#allocation2 + $0x388] sm:$0xff] %vm1402, %v1290
    %1516 = vst [vmem:[#allocation2 + $0x390] sm:$0xff] %v1291
    %1517 = vst.msk [vmem:[#allocation2 + $0x398] sm:$0xff] %vm1402, %v1292
    %1518 = vst [vmem:[#allocation2 + $0x3a0] sm:$0xff] %v1293
    %1519 = vst.msk [vmem:[#allocation2 + $0x3a8] sm:$0xff] %vm1402, %v1294
    %1520 = vst [vmem:[#allocation2 + $0x3b0] sm:$0xff] %v1295
    %1521 = vst.msk [vmem:[#allocation2 + $0x3b8] sm:$0xff] %vm1402, %v1296
    %1522 = vst [vmem:[#allocation2 + $0x3c0] sm:$0xff] %v1297
    %1523 = vst.msk [vmem:[#allocation2 + $0x3c8] sm:$0xff] %vm1402, %v1298
    %1524 = vst [vmem:[#allocation2 + $0x3d0] sm:$0xff] %v1299
    %1525 = vst.msk [vmem:[#allocation2 + $0x3d8] sm:$0xff] %vm1402, %v1300
    %1526 = vst [vmem:[#allocation2 + $0x3e0] sm:$0xff] %v1301
    %1527 = vst.msk [vmem:[#allocation2 + $0x3e8] sm:$0xff] %vm1402, %v1302
    %1528 = vst [vmem:[#allocation2 + $0x3f0] sm:$0xff] %v1303
    %1529 = vst.msk [vmem:[#allocation2 + $0x3f8] sm:$0xff] %vm1402, %v1304
    %1530 = vst [vmem:[#allocation2 + $0x400] sm:$0xff] %v1305
    %1531 = vst.msk [vmem:[#allocation2 + $0x408] sm:$0xff] %vm1402, %v1306
    %1532 = vst [vmem:[#allocation2 + $0x410] sm:$0xff] %v1307
    %1533 = vst.msk [vmem:[#allocation2 + $0x418] sm:$0xff] %vm1402, %v1308
    %1534 = vst [vmem:[#allocation2 + $0x420] sm:$0xff] %v1309
    %1535 = vst.msk [vmem:[#allocation2 + $0x428] sm:$0xff] %vm1402, %v1310
    %1536 = vst [vmem:[#allocation2 + $0x430] sm:$0xff] %v1311
    %1537 = vst.msk [vmem:[#allocation2 + $0x438] sm:$0xff] %vm1402, %v1312
    %1538 = vst [vmem:[#allocation2 + $0x440] sm:$0xff] %v1313
    %1539 = vst.msk [vmem:[#allocation2 + $0x448] sm:$0xff] %vm1402, %v1314
    %1540 = vst [vmem:[#allocation2 + $0x450] sm:$0xff] %v1315
    %1541 = vst.msk [vmem:[#allocation2 + $0x458] sm:$0xff] %vm1402, %v1316
    %1542 = vst [vmem:[#allocation2 + $0x460] sm:$0xff] %v1317
    %1543 = vst.msk [vmem:[#allocation2 + $0x468] sm:$0xff] %vm1402, %v1318
    %1544 = vst [vmem:[#allocation2 + $0x470] sm:$0xff] %v1319
    %1545 = vst.msk [vmem:[#allocation2 + $0x478] sm:$0xff] %vm1402, %v1320
    %1546 = vst [vmem:[#allocation2 + $0x480] sm:$0xff] %v1321
    %1547 = vst.msk [vmem:[#allocation2 + $0x488] sm:$0xff] %vm1402, %v1322
    %1548 = vst [vmem:[#allocation2 + $0x490] sm:$0xff] %v1323
    %1549 = vst.msk [vmem:[#allocation2 + $0x498] sm:$0xff] %vm1402, %v1324
    %1550 = vst [vmem:[#allocation2 + $0x4a0] sm:$0xff] %v1325
    %1551 = vst.msk [vmem:[#allocation2 + $0x4a8] sm:$0xff] %vm1402, %v1326
    %1552 = vst [vmem:[#allocation2 + $0x4b0] sm:$0xff] %v1327
    %1553 = vst.msk [vmem:[#allocation2 + $0x4b8] sm:$0xff] %vm1402, %v1328
    %1554 = vst [vmem:[#allocation2 + $0x4c0] sm:$0xff] %v1329
    %1555 = vst.msk [vmem:[#allocation2 + $0x4c8] sm:$0xff] %vm1402, %v1330
    %1556 = vst [vmem:[#allocation2 + $0x4d0] sm:$0xff] %v1331
    %1557 = vst.msk [vmem:[#allocation2 + $0x4d8] sm:$0xff] %vm1402, %v1332
    %1558 = vst [vmem:[#allocation2 + $0x4e0] sm:$0xff] %v1333
    %1559 = vst.msk [vmem:[#allocation2 + $0x4e8] sm:$0xff] %vm1402, %v1334
    %1560 = vst [vmem:[#allocation2 + $0x4f0] sm:$0xff] %v1335
    %1561 = vst.msk [vmem:[#allocation2 + $0x4f8] sm:$0xff] %vm1402, %v1336
    %1562 = vst [vmem:[#allocation2 + $0x500] sm:$0xff] %v1337
    %1563 = vst.msk [vmem:[#allocation2 + $0x508] sm:$0xff] %vm1402, %v1338
    %1564 = vst [vmem:[#allocation2 + $0x510] sm:$0xff] %v1339
    %1565 = vst.msk [vmem:[#allocation2 + $0x518] sm:$0xff] %vm1402, %v1340
    %1566 = vst [vmem:[#allocation2 + $0x520] sm:$0xff] %v1341
    %1567 = vst.msk [vmem:[#allocation2 + $0x528] sm:$0xff] %vm1402, %v1342
    %1568 = vst [vmem:[#allocation2 + $0x530] sm:$0xff] %v1343
    %1569 = vst.msk [vmem:[#allocation2 + $0x538] sm:$0xff] %vm1402, %v1344
    %1570 = vst [vmem:[#allocation2 + $0x540] sm:$0xff] %v1345
    %1571 = vst.msk [vmem:[#allocation2 + $0x548] sm:$0xff] %vm1402, %v1346
    %1572 = vst [vmem:[#allocation2 + $0x550] sm:$0xff] %v1347
    %1573 = vst.msk [vmem:[#allocation2 + $0x558] sm:$0xff] %vm1402, %v1348
    %1574 = vst [vmem:[#allocation2 + $0x560] sm:$0xff] %v1349
    %1575 = vst.msk [vmem:[#allocation2 + $0x568] sm:$0xff] %vm1402, %v1350
    %1576 = vst [vmem:[#allocation2 + $0x570] sm:$0xff] %v1351
    %1577 = vst.msk [vmem:[#allocation2 + $0x578] sm:$0xff] %vm1402, %v1352
    %1578 = vst [vmem:[#allocation2 + $0x580] sm:$0xff] %v1353
    %1579 = vst.msk [vmem:[#allocation2 + $0x588] sm:$0xff] %vm1402, %v1354
    %1580 = vst [vmem:[#allocation2 + $0x590] sm:$0xff] %v1355
    %1581 = vst.msk [vmem:[#allocation2 + $0x598] sm:$0xff] %vm1402, %v1356
    %1582 = vst [vmem:[#allocation2 + $0x5a0] sm:$0xff] %v1357
    %1583 = vst.msk [vmem:[#allocation2 + $0x5a8] sm:$0xff] %vm1402, %v1358
    %1584 = vst [vmem:[#allocation2 + $0x5b0] sm:$0xff] %v1359
    %1585 = vst.msk [vmem:[#allocation2 + $0x5b8] sm:$0xff] %vm1402, %v1360
    %1586 = vst [vmem:[#allocation2 + $0x5c0] sm:$0xff] %v1361
    %1587 = vst.msk [vmem:[#allocation2 + $0x5c8] sm:$0xff] %vm1402, %v1362
    %1588 = vst [vmem:[#allocation2 + $0x5d0] sm:$0xff] %v1363
    %1589 = vst.msk [vmem:[#allocation2 + $0x5d8] sm:$0xff] %vm1402, %v1364
    %1590 = vst [vmem:[#allocation2 + $0x5e0] sm:$0xff] %v1365
    %1591 = vst.msk [vmem:[#allocation2 + $0x5e8] sm:$0xff] %vm1402, %v1366
    %1592 = vst [vmem:[#allocation2 + $0x5f0] sm:$0xff] %v1367
    %1593 = vst.msk [vmem:[#allocation2 + $0x5f8] sm:$0xff] %vm1402, %v1368
    %1594 = vst [vmem:[#allocation2 + $0x600] sm:$0xff] %v1369
    %1595 = vst.msk [vmem:[#allocation2 + $0x608] sm:$0xff] %vm1402, %v1370
    %1596 = vst [vmem:[#allocation2 + $0x610] sm:$0xff] %v1371
    %1597 = vst.msk [vmem:[#allocation2 + $0x618] sm:$0xff] %vm1402, %v1372
    %1598 = vst [vmem:[#allocation2 + $0x620] sm:$0xff] %v1373
    %1599 = vst.msk [vmem:[#allocation2 + $0x628] sm:$0xff] %vm1402, %v1374
    %1600 = vst [vmem:[#allocation2 + $0x630] sm:$0xff] %v1375
    %1601 = vst.msk [vmem:[#allocation2 + $0x638] sm:$0xff] %vm1402, %v1376
    %1602 = vst [vmem:[#allocation2 + $0x640] sm:$0xff] %v1377
    %1603 = vst.msk [vmem:[#allocation2 + $0x648] sm:$0xff] %vm1402, %v1378
    %1604 = vst [vmem:[#allocation2 + $0x650] sm:$0xff] %v1379
    %1605 = vst.msk [vmem:[#allocation2 + $0x658] sm:$0xff] %vm1402, %v1380
    %1606 = vst [vmem:[#allocation2 + $0x660] sm:$0xff] %v1381
    %1607 = vst.msk [vmem:[#allocation2 + $0x668] sm:$0xff] %vm1402, %v1382
    %1608 = vst [vmem:[#allocation2 + $0x670] sm:$0xff] %v1383
    %1609 = vst.msk [vmem:[#allocation2 + $0x678] sm:$0xff] %vm1402, %v1384
    %1610 = vst [vmem:[#allocation2 + $0x680] sm:$0xff] %v1385
    %1611 = vst.msk [vmem:[#allocation2 + $0x688] sm:$0xff] %vm1402, %v1386
    %1612 = vst [vmem:[#allocation2 + $0x690] sm:$0xff] %v1387
    %1613 = vst.msk [vmem:[#allocation2 + $0x698] sm:$0xff] %vm1402, %v1388
    %1614 = vst [vmem:[#allocation2 + $0x6a0] sm:$0xff] %v1389
    %1615 = vst.msk [vmem:[#allocation2 + $0x6a8] sm:$0xff] %vm1402, %v1390
    %1616 = vst [vmem:[#allocation2 + $0x6b0] sm:$0xff] %v1391
    %1617 = vst.msk [vmem:[#allocation2 + $0x6b8] sm:$0xff] %vm1402, %v1392
    %1618 = vst [vmem:[#allocation2 + $0x6c0] sm:$0xff] %v1393
    %1619 = vst.msk [vmem:[#allocation2 + $0x6c8] sm:$0xff] %vm1402, %v1394
    %1620 = vst [vmem:[#allocation2 + $0x6d0] sm:$0xff] %v1395
    %1621 = vst.msk [vmem:[#allocation2 + $0x6d8] sm:$0xff] %vm1402, %v1396
    %1622 = vst [vmem:[#allocation2 + $0x6e0] sm:$0xff] %v1397
    %1623 = vst.msk [vmem:[#allocation2 + $0x6e8] sm:$0xff] %vm1402, %v1398
    %1624 = vst [vmem:[#allocation2 + $0x6f0] sm:$0xff] %v1399
    %1625 = vst.msk [vmem:[#allocation2 + $0x6f8] sm:$0xff] %vm1402, %v1400
    %1626 = vst [vmem:[#allocation3] sm:$0xf] 0
    %1627 = vst [vmem:[#allocation3 + $0x4] sm:$0xf] 0
    %1628 = vst [vmem:[#allocation3 + $0x8] sm:$0xf] 0
    %1629 = vst [vmem:[#allocation3 + $0xc] sm:$0xf] 0
    %1630 = vst [vmem:[#allocation3 + $0x10] sm:$0xf] 0
    %1631 = vst [vmem:[#allocation3 + $0x14] sm:$0xf] 0
    %1632 = vst [vmem:[#allocation3 + $0x18] sm:$0xf] 0
    %1633 = vst [vmem:[#allocation3 + $0x1c] sm:$0xf] 0
    %1634 = vst [vmem:[#allocation3 + $0x20] sm:$0xf] 0
    %1635 = vst [vmem:[#allocation3 + $0x24] sm:$0xf] 0
    %1636 = vst [vmem:[#allocation3 + $0x28] sm:$0xf] 0
    %1637 = vst [vmem:[#allocation3 + $0x2c] sm:$0xf] 0
    %1638 = vst [vmem:[#allocation3 + $0x30] sm:$0xf] 0
    %1639 = vst [vmem:[#allocation3 + $0x34] sm:$0xf] 0
    %1640 = vst [vmem:[#allocation3 + $0x38] sm:$0xf] 0
    %1641 = vst [vmem:[#allocation3 + $0x3c] sm:$0xf] 0
    %1642 = vst [vmem:[#allocation3 + $0x40] sm:$0xf] 0
    %1643 = vst [vmem:[#allocation3 + $0x44] sm:$0xf] 0
    %1644 = vst [vmem:[#allocation3 + $0x48] sm:$0xf] 0
    %1645 = vst [vmem:[#allocation3 + $0x4c] sm:$0xf] 0
    %1646 = vst [vmem:[#allocation3 + $0x50] sm:$0xf] 0
    %1647 = vst [vmem:[#allocation3 + $0x54] sm:$0xf] 0
    %1648 = vst [vmem:[#allocation3 + $0x58] sm:$0xf] 0
    %1649 = vst [vmem:[#allocation3 + $0x5c] sm:$0xf] 0
    %1650 = vst [vmem:[#allocation3 + $0x60] sm:$0xf] 0
    %1651 = vst [vmem:[#allocation3 + $0x64] sm:$0xf] 0
    %1652 = vst [vmem:[#allocation3 + $0x68] sm:$0xf] 0
    %1653 = vst [vmem:[#allocation3 + $0x6c] sm:$0xf] 0
    %1654 = vst [vmem:[#allocation3 + $0x70] sm:$0xf] 0
    %1655 = vst [vmem:[#allocation3 + $0x74] sm:$0xf] 0
    %1656 = vst [vmem:[#allocation3 + $0x78] sm:$0xf] 0
    %1657 = vst [vmem:[#allocation3 + $0x7c] sm:$0xf] 0
    %1658 = vst [vmem:[#allocation3 + $0x80] sm:$0xf] 0
    %1659 = vst [vmem:[#allocation3 + $0x84] sm:$0xf] 0
    %1660 = vst [vmem:[#allocation3 + $0x88] sm:$0xf] 0
    %1661 = vst [vmem:[#allocation3 + $0x8c] sm:$0xf] 0
    %1662 = vst [vmem:[#allocation3 + $0x90] sm:$0xf] 0
    %1663 = vst [vmem:[#allocation3 + $0x94] sm:$0xf] 0
    %1664 = vst [vmem:[#allocation3 + $0x98] sm:$0xf] 0
    %1665 = vst [vmem:[#allocation3 + $0x9c] sm:$0xf] 0
    %1666 = vst [vmem:[#allocation3 + $0xa0] sm:$0xf] 0
    %1667 = vst [vmem:[#allocation3 + $0xa4] sm:$0xf] 0
    %1668 = vst [vmem:[#allocation3 + $0xa8] sm:$0xf] 0
    %1669 = vst [vmem:[#allocation3 + $0xac] sm:$0xf] 0
    %1670 = vst [vmem:[#allocation3 + $0xb0] sm:$0xf] 0
    %1671 = vst [vmem:[#allocation3 + $0xb4] sm:$0xf] 0
    %1672 = vst [vmem:[#allocation3 + $0xb8] sm:$0xf] 0
    %1673 = vst [vmem:[#allocation3 + $0xbc] sm:$0xf] 0
    %1674 = vst [vmem:[#allocation3 + $0xc0] sm:$0xf] 0
    %1675 = vst [vmem:[#allocation3 + $0xc4] sm:$0xf] 0
    %1676 = vst [vmem:[#allocation3 + $0xc8] sm:$0xf] 0
    %1677 = vst [vmem:[#allocation3 + $0xcc] sm:$0xf] 0
    %1678 = vst [vmem:[#allocation3 + $0xd0] sm:$0xf] 0
    %1679 = vst [vmem:[#allocation3 + $0xd4] sm:$0xf] 0
    %1680 = vst [vmem:[#allocation3 + $0xd8] sm:$0xf] 0
    %1681 = vst [vmem:[#allocation3 + $0xdc] sm:$0xf] 0
    %1682 = vst [vmem:[#allocation3 + $0xe0] sm:$0xf] 0
    %1683 = vst [vmem:[#allocation3 + $0xe4] sm:$0xf] 0
    %1684 = vst [vmem:[#allocation3 + $0xe8] sm:$0xf] 0
    %1685 = vst [vmem:[#allocation3 + $0xec] sm:$0xf] 0
    %1686 = vst [vmem:[#allocation3 + $0xf0] sm:$0xf] 0
    %1687 = vst [vmem:[#allocation3 + $0xf4] sm:$0xf] 0
    %1688 = vst [vmem:[#allocation3 + $0xf8] sm:$0xf] 0
    %1689 = vst [vmem:[#allocation3 + $0xfc] sm:$0xf] 0
    %v1690 = vld [vmem:[#allocation2] sm:$0xff]
    %v1691 = vld [vmem:[#allocation2 + $0x8] sm:$0xff]
    %v1692 = vld [vmem:[#allocation2 + $0x10] sm:$0xff]
    %v1693 = vld [vmem:[#allocation2 + $0x18] sm:$0xff]
    %v1694 = vld [vmem:[#allocation2 + $0x20] sm:$0xff]
    %v1695 = vld [vmem:[#allocation2 + $0x28] sm:$0xff]
    %v1696 = vld [vmem:[#allocation2 + $0x30] sm:$0xff]
    %v1697 = vld [vmem:[#allocation2 + $0x38] sm:$0xff]
    %v1698 = vld [vmem:[#allocation2 + $0x40] sm:$0xff]
    %v1699 = vld [vmem:[#allocation2 + $0x48] sm:$0xff]
    %v1700 = vld [vmem:[#allocation2 + $0x50] sm:$0xff]
    %v1701 = vld [vmem:[#allocation2 + $0x58] sm:$0xff]
    %v1702 = vld [vmem:[#allocation2 + $0x60] sm:$0xff]
    %v1703 = vld [vmem:[#allocation2 + $0x68] sm:$0xff]
    %v1704 = vld [vmem:[#allocation2 + $0x70] sm:$0xff]
    %v1705 = vld [vmem:[#allocation2 + $0x78] sm:$0xff]
    %v1706 = vmax.f32 %v1690, %v1698
    %v1707 = vmax.f32 %v1691, %v1699
    %v1708 = vmax.f32 %v1692, %v1700
    %v1709 = vmax.f32 %v1693, %v1701
    %v1710 = vmax.f32 %v1694, %v1702
    %v1711 = vmax.f32 %v1695, %v1703
    %v1712 = vmax.f32 %v1696, %v1704
    %v1713 = vmax.f32 %v1697, %v1705
    %1722 = vrot.lane.b32.xlu0 %v1706, 16
    %v1723 = vpop.permute.xlu0 %1722
    %1724 = vrot.lane.b32.xlu0 %v1707, 16
    %v1725 = vpop.permute.xlu0 %1724
    %1726 = vrot.lane.b32.xlu0 %v1708, 16
    %v1727 = vpop.permute.xlu0 %1726
    %1728 = vrot.lane.b32.xlu0 %v1709, 16
    %v1729 = vpop.permute.xlu0 %1728
    %1730 = vrot.lane.b32.xlu0 %v1710, 16
    %v1731 = vpop.permute.xlu0 %1730
    %1732 = vrot.lane.b32.xlu0 %v1711, 16
    %v1733 = vpop.permute.xlu0 %1732
    %1734 = vrot.lane.b32.xlu0 %v1712, 16
    %v1735 = vpop.permute.xlu0 %1734
    %1736 = vrot.lane.b32.xlu0 %v1713, 16
    %v1737 = vpop.permute.xlu0 %1736
    %vm1738 = vcmask 130048
    %v1739 = vsel %vm1738, %v1723, %v1725
    %v1740 = vsel %vm1738, %v1727, %v1729
    %v1741 = vsel %vm1738, %v1731, %v1733
    %v1742 = vsel %vm1738, %v1735, %v1737
    %v1747 = vmax.f32 %v1706, %v1739
    %v1748 = vmax.f32 %v1708, %v1740
    %v1749 = vmax.f32 %v1710, %v1741
    %v1750 = vmax.f32 %v1712, %v1742
    %v1751 = vpack.c.bf16 %v1748, %v1747
    %v1752 = vpack.c.bf16 %v1750, %v1749
    %v1755 = vunpack.c.l.b16 %v1751
    %v1756 = vunpack.c.h.b16 %v1751
    %v1757 = vunpack.c.l.b16 %v1752
    %v1758 = vunpack.c.h.b16 %v1752
    %v1759 = vpack.c.b16 %v1755, %v1755
    %v1760 = vpack.c.b16 %v1756, %v1756
    %v1761 = vpack.c.b16 %v1757, %v1757
    %v1762 = vpack.c.b16 %v1758, %v1758
    %vm1767 = vcmask 912384
    %1768 = vst.msk [vmem:[#allocation3 + $0x10] sm:$0xf] %vm1767, %v1759
    %1769 = vst.msk [vmem:[#allocation3 + $0x14] sm:$0xf] %vm1767, %v1760
    %1770 = vst.msk [vmem:[#allocation3 + $0x18] sm:$0xf] %vm1767, %v1761
    %1771 = vst.msk [vmem:[#allocation3 + $0x1c] sm:$0xf] %vm1767, %v1762
    %v1772 = vld [vmem:[#allocation2 + $0x80] sm:$0xff]
    %v1773 = vld [vmem:[#allocation2 + $0x88] sm:$0xff]
    %v1774 = vld [vmem:[#allocation2 + $0x90] sm:$0xff]
    %v1775 = vld [vmem:[#allocation2 + $0x98] sm:$0xff]
    %v1776 = vld [vmem:[#allocation2 + $0xa0] sm:$0xff]
    %v1777 = vld [vmem:[#allocation2 + $0xa8] sm:$0xff]
    %v1778 = vld [vmem:[#allocation2 + $0xb0] sm:$0xff]
    %v1779 = vld [vmem:[#allocation2 + $0xb8] sm:$0xff]
    %v1780 = vld [vmem:[#allocation2 + $0xc0] sm:$0xff]
    %v1781 = vld [vmem:[#allocation2 + $0xc8] sm:$0xff]
    %v1782 = vld [vmem:[#allocation2 + $0xd0] sm:$0xff]
    %v1783 = vld [vmem:[#allocation2 + $0xd8] sm:$0xff]
    %v1784 = vld [vmem:[#allocation2 + $0xe0] sm:$0xff]
    %v1785 = vld [vmem:[#allocation2 + $0xe8] sm:$0xff]
    %v1786 = vld [vmem:[#allocation2 + $0xf0] sm:$0xff]
    %v1787 = vld [vmem:[#allocation2 + $0xf8] sm:$0xff]
    %v1788 = vmax.f32 %v1772, %v1780
    %v1789 = vmax.f32 %v1773, %v1781
    %v1790 = vmax.f32 %v1774, %v1782
    %v1791 = vmax.f32 %v1775, %v1783
    %v1792 = vmax.f32 %v1776, %v1784
    %v1793 = vmax.f32 %v1777, %v1785
    %v1794 = vmax.f32 %v1778, %v1786
    %v1795 = vmax.f32 %v1779, %v1787
    %1804 = vrot.lane.b32.xlu0 %v1788, 16
    %v1805 = vpop.permute.xlu0 %1804
    %1806 = vrot.lane.b32.xlu0 %v1789, 16
    %v1807 = vpop.permute.xlu0 %1806
    %1808 = vrot.lane.b32.xlu0 %v1790, 16
    %v1809 = vpop.permute.xlu0 %1808
    %1810 = vrot.lane.b32.xlu0 %v1791, 16
    %v1811 = vpop.permute.xlu0 %1810
    %1812 = vrot.lane.b32.xlu0 %v1792, 16
    %v1813 = vpop.permute.xlu0 %1812
    %1814 = vrot.lane.b32.xlu0 %v1793, 16
    %v1815 = vpop.permute.xlu0 %1814
    %1816 = vrot.lane.b32.xlu0 %v1794, 16
    %v1817 = vpop.permute.xlu0 %1816
    %1818 = vrot.lane.b32.xlu0 %v1795, 16
    %v1819 = vpop.permute.xlu0 %1818
    %v1820 = vsel %vm1738, %v1805, %v1807
    %v1821 = vsel %vm1738, %v1809, %v1811
    %v1822 = vsel %vm1738, %v1813, %v1815
    %v1823 = vsel %vm1738, %v1817, %v1819
    %v1828 = vmax.f32 %v1788, %v1820
    %v1829 = vmax.f32 %v1790, %v1821
    %v1830 = vmax.f32 %v1792, %v1822
    %v1831 = vmax.f32 %v1794, %v1823
    %v1832 = vpack.c.bf16 %v1829, %v1828
    %v1833 = vpack.c.bf16 %v1831, %v1830
    %v1836 = vunpack.c.l.b16 %v1832
    %v1837 = vunpack.c.h.b16 %v1832
    %v1838 = vunpack.c.l.b16 %v1833
    %v1839 = vunpack.c.h.b16 %v1833
    %v1840 = vpack.c.b16 %v1836, %v1836
    %v1841 = vpack.c.b16 %v1837, %v1837
    %v1842 = vpack.c.b16 %v1838, %v1838
    %v1843 = vpack.c.b16 %v1839, %v1839
    %1848 = vst.msk [vmem:[#allocation3 + $0x20] sm:$0xf] %vm1767, %v1840
    %1849 = vst.msk [vmem:[#allocation3 + $0x24] sm:$0xf] %vm1767, %v1841
    %1850 = vst.msk [vmem:[#allocation3 + $0x28] sm:$0xf] %vm1767, %v1842
    %1851 = vst.msk [vmem:[#allocation3 + $0x2c] sm:$0xf] %vm1767, %v1843
    %v1852 = vld [vmem:[#allocation2 + $0x100] sm:$0xff]
    %v1853 = vld [vmem:[#allocation2 + $0x108] sm:$0xff]
    %v1854 = vld [vmem:[#allocation2 + $0x110] sm:$0xff]
    %v1855 = vld [vmem:[#allocation2 + $0x118] sm:$0xff]
    %v1856 = vld [vmem:[#allocation2 + $0x120] sm:$0xff]
    %v1857 = vld [vmem:[#allocation2 + $0x128] sm:$0xff]
    %v1858 = vld [vmem:[#allocation2 + $0x130] sm:$0xff]
    %v1859 = vld [vmem:[#allocation2 + $0x138] sm:$0xff]
    %v1860 = vld [vmem:[#allocation2 + $0x140] sm:$0xff]
    %v1861 = vld [vmem:[#allocation2 + $0x148] sm:$0xff]
    %v1862 = vld [vmem:[#allocation2 + $0x150] sm:$0xff]
    %v1863 = vld [vmem:[#allocation2 + $0x158] sm:$0xff]
    %v1864 = vld [vmem:[#allocation2 + $0x160] sm:$0xff]
    %v1865 = vld [vmem:[#allocation2 + $0x168] sm:$0xff]
    %v1866 = vld [vmem:[#allocation2 + $0x170] sm:$0xff]
    %v1867 = vld [vmem:[#allocation2 + $0x178] sm:$0xff]
    %v1868 = vmax.f32 %v1852, %v1860
    %v1869 = vmax.f32 %v1853, %v1861
    %v1870 = vmax.f32 %v1854, %v1862
    %v1871 = vmax.f32 %v1855, %v1863
    %v1872 = vmax.f32 %v1856, %v1864
    %v1873 = vmax.f32 %v1857, %v1865
    %v1874 = vmax.f32 %v1858, %v1866
    %v1875 = vmax.f32 %v1859, %v1867
    %1884 = vrot.lane.b32.xlu0 %v1868, 16
    %v1885 = vpop.permute.xlu0 %1884
    %1886 = vrot.lane.b32.xlu0 %v1869, 16
    %v1887 = vpop.permute.xlu0 %1886
    %1888 = vrot.lane.b32.xlu0 %v1870, 16
    %v1889 = vpop.permute.xlu0 %1888
    %1890 = vrot.lane.b32.xlu0 %v1871, 16
    %v1891 = vpop.permute.xlu0 %1890
    %1892 = vrot.lane.b32.xlu0 %v1872, 16
    %v1893 = vpop.permute.xlu0 %1892
    %1894 = vrot.lane.b32.xlu0 %v1873, 16
    %v1895 = vpop.permute.xlu0 %1894
    %1896 = vrot.lane.b32.xlu0 %v1874, 16
    %v1897 = vpop.permute.xlu0 %1896
    %1898 = vrot.lane.b32.xlu0 %v1875, 16
    %v1899 = vpop.permute.xlu0 %1898
    %v1900 = vsel %vm1738, %v1885, %v1887
    %v1901 = vsel %vm1738, %v1889, %v1891
    %v1902 = vsel %vm1738, %v1893, %v1895
    %v1903 = vsel %vm1738, %v1897, %v1899
    %v1908 = vmax.f32 %v1868, %v1900
    %v1909 = vmax.f32 %v1870, %v1901
    %v1910 = vmax.f32 %v1872, %v1902
    %v1911 = vmax.f32 %v1874, %v1903
    %v1912 = vpack.c.bf16 %v1909, %v1908
    %v1913 = vpack.c.bf16 %v1911, %v1910
    %v1916 = vunpack.c.l.b16 %v1912
    %v1917 = vunpack.c.h.b16 %v1912
    %v1918 = vunpack.c.l.b16 %v1913
    %v1919 = vunpack.c.h.b16 %v1913
    %v1920 = vpack.c.b16 %v1916, %v1916
    %v1921 = vpack.c.b16 %v1917, %v1917
    %v1922 = vpack.c.b16 %v1918, %v1918
    %v1923 = vpack.c.b16 %v1919, %v1919
    %1928 = vst.msk [vmem:[#allocation3 + $0x30] sm:$0xf] %vm1767, %v1920
    %1929 = vst.msk [vmem:[#allocation3 + $0x34] sm:$0xf] %vm1767, %v1921
    %1930 = vst.msk [vmem:[#allocation3 + $0x38] sm:$0xf] %vm1767, %v1922
    %1931 = vst.msk [vmem:[#allocation3 + $0x3c] sm:$0xf] %vm1767, %v1923
    %v1932 = vld [vmem:[#allocation2 + $0x180] sm:$0xff]
    %v1933 = vld [vmem:[#allocation2 + $0x188] sm:$0xff]
    %v1934 = vld [vmem:[#allocation2 + $0x190] sm:$0xff]
    %v1935 = vld [vmem:[#allocation2 + $0x198] sm:$0xff]
    %v1936 = vld [vmem:[#allocation2 + $0x1a0] sm:$0xff]
    %v1937 = vld [vmem:[#allocation2 + $0x1a8] sm:$0xff]
    %v1938 = vld [vmem:[#allocation2 + $0x1b0] sm:$0xff]
    %v1939 = vld [vmem:[#allocation2 + $0x1b8] sm:$0xff]
    %v1940 = vld [vmem:[#allocation2 + $0x1c0] sm:$0xff]
    %v1941 = vld [vmem:[#allocation2 + $0x1c8] sm:$0xff]
    %v1942 = vld [vmem:[#allocation2 + $0x1d0] sm:$0xff]
    %v1943 = vld [vmem:[#allocation2 + $0x1d8] sm:$0xff]
    %v1944 = vld [vmem:[#allocation2 + $0x1e0] sm:$0xff]
    %v1945 = vld [vmem:[#allocation2 + $0x1e8] sm:$0xff]
    %v1946 = vld [vmem:[#allocation2 + $0x1f0] sm:$0xff]
    %v1947 = vld [vmem:[#allocation2 + $0x1f8] sm:$0xff]
    %v1948 = vmax.f32 %v1932, %v1940
    %v1949 = vmax.f32 %v1933, %v1941
    %v1950 = vmax.f32 %v1934, %v1942
    %v1951 = vmax.f32 %v1935, %v1943
    %v1952 = vmax.f32 %v1936, %v1944
    %v1953 = vmax.f32 %v1937, %v1945
    %v1954 = vmax.f32 %v1938, %v1946
    %v1955 = vmax.f32 %v1939, %v1947
    %1964 = vrot.lane.b32.xlu0 %v1948, 16
    %v1965 = vpop.permute.xlu0 %1964
    %1966 = vrot.lane.b32.xlu0 %v1949, 16
    %v1967 = vpop.permute.xlu0 %1966
    %1968 = vrot.lane.b32.xlu0 %v1950, 16
    %v1969 = vpop.permute.xlu0 %1968
    %1970 = vrot.lane.b32.xlu0 %v1951, 16
    %v1971 = vpop.permute.xlu0 %1970
    %1972 = vrot.lane.b32.xlu0 %v1952, 16
    %v1973 = vpop.permute.xlu0 %1972
    %1974 = vrot.lane.b32.xlu0 %v1953, 16
    %v1975 = vpop.permute.xlu0 %1974
    %1976 = vrot.lane.b32.xlu0 %v1954, 16
    %v1977 = vpop.permute.xlu0 %1976
    %1978 = vrot.lane.b32.xlu0 %v1955, 16
    %v1979 = vpop.permute.xlu0 %1978
    %v1980 = vsel %vm1738, %v1965, %v1967
    %v1981 = vsel %vm1738, %v1969, %v1971
    %v1982 = vsel %vm1738, %v1973, %v1975
    %v1983 = vsel %vm1738, %v1977, %v1979
    %v1988 = vmax.f32 %v1948, %v1980
    %v1989 = vmax.f32 %v1950, %v1981
    %v1990 = vmax.f32 %v1952, %v1982
    %v1991 = vmax.f32 %v1954, %v1983
    %v1992 = vpack.c.bf16 %v1989, %v1988
    %v1993 = vpack.c.bf16 %v1991, %v1990
    %v1996 = vunpack.c.l.b16 %v1992
    %v1997 = vunpack.c.h.b16 %v1992
    %v1998 = vunpack.c.l.b16 %v1993
    %v1999 = vunpack.c.h.b16 %v1993
    %v2000 = vpack.c.b16 %v1996, %v1996
    %v2001 = vpack.c.b16 %v1997, %v1997
    %v2002 = vpack.c.b16 %v1998, %v1998
    %v2003 = vpack.c.b16 %v1999, %v1999
    %2008 = vst.msk [vmem:[#allocation3 + $0x40] sm:$0xf] %vm1767, %v2000
    %2009 = vst.msk [vmem:[#allocation3 + $0x44] sm:$0xf] %vm1767, %v2001
    %2010 = vst.msk [vmem:[#allocation3 + $0x48] sm:$0xf] %vm1767, %v2002
    %2011 = vst.msk [vmem:[#allocation3 + $0x4c] sm:$0xf] %vm1767, %v2003
    %v2012 = vld [vmem:[#allocation2 + $0x200] sm:$0xff]
    %v2013 = vld [vmem:[#allocation2 + $0x208] sm:$0xff]
    %v2014 = vld [vmem:[#allocation2 + $0x210] sm:$0xff]
    %v2015 = vld [vmem:[#allocation2 + $0x218] sm:$0xff]
    %v2016 = vld [vmem:[#allocation2 + $0x220] sm:$0xff]
    %v2017 = vld [vmem:[#allocation2 + $0x228] sm:$0xff]
    %v2018 = vld [vmem:[#allocation2 + $0x230] sm:$0xff]
    %v2019 = vld [vmem:[#allocation2 + $0x238] sm:$0xff]
    %v2020 = vld [vmem:[#allocation2 + $0x240] sm:$0xff]
    %v2021 = vld [vmem:[#allocation2 + $0x248] sm:$0xff]
    %v2022 = vld [vmem:[#allocation2 + $0x250] sm:$0xff]
    %v2023 = vld [vmem:[#allocation2 + $0x258] sm:$0xff]
    %v2024 = vld [vmem:[#allocation2 + $0x260] sm:$0xff]
    %v2025 = vld [vmem:[#allocation2 + $0x268] sm:$0xff]
    %v2026 = vld [vmem:[#allocation2 + $0x270] sm:$0xff]
    %v2027 = vld [vmem:[#allocation2 + $0x278] sm:$0xff]
    %v2028 = vmax.f32 %v2012, %v2020
    %v2029 = vmax.f32 %v2013, %v2021
    %v2030 = vmax.f32 %v2014, %v2022
    %v2031 = vmax.f32 %v2015, %v2023
    %v2032 = vmax.f32 %v2016, %v2024
    %v2033 = vmax.f32 %v2017, %v2025
    %v2034 = vmax.f32 %v2018, %v2026
    %v2035 = vmax.f32 %v2019, %v2027
    %2044 = vrot.lane.b32.xlu0 %v2028, 16
    %v2045 = vpop.permute.xlu0 %2044
    %2046 = vrot.lane.b32.xlu0 %v2029, 16
    %v2047 = vpop.permute.xlu0 %2046
    %2048 = vrot.lane.b32.xlu0 %v2030, 16
    %v2049 = vpop.permute.xlu0 %2048
    %2050 = vrot.lane.b32.xlu0 %v2031, 16
    %v2051 = vpop.permute.xlu0 %2050
    %2052 = vrot.lane.b32.xlu0 %v2032, 16
    %v2053 = vpop.permute.xlu0 %2052
    %2054 = vrot.lane.b32.xlu0 %v2033, 16
    %v2055 = vpop.permute.xlu0 %2054
    %2056 = vrot.lane.b32.xlu0 %v2034, 16
    %v2057 = vpop.permute.xlu0 %2056
    %2058 = vrot.lane.b32.xlu0 %v2035, 16
    %v2059 = vpop.permute.xlu0 %2058
    %v2060 = vsel %vm1738, %v2045, %v2047
    %v2061 = vsel %vm1738, %v2049, %v2051
    %v2062 = vsel %vm1738, %v2053, %v2055
    %v2063 = vsel %vm1738, %v2057, %v2059
    %v2068 = vmax.f32 %v2028, %v2060
    %v2069 = vmax.f32 %v2030, %v2061
    %v2070 = vmax.f32 %v2032, %v2062
    %v2071 = vmax.f32 %v2034, %v2063
    %v2072 = vpack.c.bf16 %v2069, %v2068
    %v2073 = vpack.c.bf16 %v2071, %v2070
    %v2076 = vunpack.c.l.b16 %v2072
    %v2077 = vunpack.c.h.b16 %v2072
    %v2078 = vunpack.c.l.b16 %v2073
    %v2079 = vunpack.c.h.b16 %v2073
    %v2080 = vpack.c.b16 %v2076, %v2076
    %v2081 = vpack.c.b16 %v2077, %v2077
    %v2082 = vpack.c.b16 %v2078, %v2078
    %v2083 = vpack.c.b16 %v2079, %v2079
    %2088 = vst.msk [vmem:[#allocation3 + $0x50] sm:$0xf] %vm1767, %v2080
    %2089 = vst.msk [vmem:[#allocation3 + $0x54] sm:$0xf] %vm1767, %v2081
    %2090 = vst.msk [vmem:[#allocation3 + $0x58] sm:$0xf] %vm1767, %v2082
    %2091 = vst.msk [vmem:[#allocation3 + $0x5c] sm:$0xf] %vm1767, %v2083
    %v2092 = vld [vmem:[#allocation2 + $0x280] sm:$0xff]
    %v2093 = vld [vmem:[#allocation2 + $0x288] sm:$0xff]
    %v2094 = vld [vmem:[#allocation2 + $0x290] sm:$0xff]
    %v2095 = vld [vmem:[#allocation2 + $0x298] sm:$0xff]
    %v2096 = vld [vmem:[#allocation2 + $0x2a0] sm:$0xff]
    %v2097 = vld [vmem:[#allocation2 + $0x2a8] sm:$0xff]
    %v2098 = vld [vmem:[#allocation2 + $0x2b0] sm:$0xff]
    %v2099 = vld [vmem:[#allocation2 + $0x2b8] sm:$0xff]
    %v2100 = vld [vmem:[#allocation2 + $0x2c0] sm:$0xff]
    %v2101 = vld [vmem:[#allocation2 + $0x2c8] sm:$0xff]
    %v2102 = vld [vmem:[#allocation2 + $0x2d0] sm:$0xff]
    %v2103 = vld [vmem:[#allocation2 + $0x2d8] sm:$0xff]
    %v2104 = vld [vmem:[#allocation2 + $0x2e0] sm:$0xff]
    %v2105 = vld [vmem:[#allocation2 + $0x2e8] sm:$0xff]
    %v2106 = vld [vmem:[#allocation2 + $0x2f0] sm:$0xff]
    %v2107 = vld [vmem:[#allocation2 + $0x2f8] sm:$0xff]
    %v2108 = vmax.f32 %v2092, %v2100
    %v2109 = vmax.f32 %v2093, %v2101
    %v2110 = vmax.f32 %v2094, %v2102
    %v2111 = vmax.f32 %v2095, %v2103
    %v2112 = vmax.f32 %v2096, %v2104
    %v2113 = vmax.f32 %v2097, %v2105
    %v2114 = vmax.f32 %v2098, %v2106
    %v2115 = vmax.f32 %v2099, %v2107
    %2124 = vrot.lane.b32.xlu0 %v2108, 16
    %v2125 = vpop.permute.xlu0 %2124
    %2126 = vrot.lane.b32.xlu0 %v2109, 16
    %v2127 = vpop.permute.xlu0 %2126
    %2128 = vrot.lane.b32.xlu0 %v2110, 16
    %v2129 = vpop.permute.xlu0 %2128
    %2130 = vrot.lane.b32.xlu0 %v2111, 16
    %v2131 = vpop.permute.xlu0 %2130
    %2132 = vrot.lane.b32.xlu0 %v2112, 16
    %v2133 = vpop.permute.xlu0 %2132
    %2134 = vrot.lane.b32.xlu0 %v2113, 16
    %v2135 = vpop.permute.xlu0 %2134
    %2136 = vrot.lane.b32.xlu0 %v2114, 16
    %v2137 = vpop.permute.xlu0 %2136
    %2138 = vrot.lane.b32.xlu0 %v2115, 16
    %v2139 = vpop.permute.xlu0 %2138
    %v2140 = vsel %vm1738, %v2125, %v2127
    %v2141 = vsel %vm1738, %v2129, %v2131
    %v2142 = vsel %vm1738, %v2133, %v2135
    %v2143 = vsel %vm1738, %v2137, %v2139
    %v2148 = vmax.f32 %v2108, %v2140
    %v2149 = vmax.f32 %v2110, %v2141
    %v2150 = vmax.f32 %v2112, %v2142
    %v2151 = vmax.f32 %v2114, %v2143
    %v2152 = vpack.c.bf16 %v2149, %v2148
    %v2153 = vpack.c.bf16 %v2151, %v2150
    %v2156 = vunpack.c.l.b16 %v2152
    %v2157 = vunpack.c.h.b16 %v2152
    %v2158 = vunpack.c.l.b16 %v2153
    %v2159 = vunpack.c.h.b16 %v2153
    %v2160 = vpack.c.b16 %v2156, %v2156
    %v2161 = vpack.c.b16 %v2157, %v2157
    %v2162 = vpack.c.b16 %v2158, %v2158
    %v2163 = vpack.c.b16 %v2159, %v2159
    %2168 = vst.msk [vmem:[#allocation3 + $0x60] sm:$0xf] %vm1767, %v2160
    %2169 = vst.msk [vmem:[#allocation3 + $0x64] sm:$0xf] %vm1767, %v2161
    %2170 = vst.msk [vmem:[#allocation3 + $0x68] sm:$0xf] %vm1767, %v2162
    %2171 = vst.msk [vmem:[#allocation3 + $0x6c] sm:$0xf] %vm1767, %v2163
    %v2172 = vld [vmem:[#allocation2 + $0x300] sm:$0xff]
    %v2173 = vld [vmem:[#allocation2 + $0x308] sm:$0xff]
    %v2174 = vld [vmem:[#allocation2 + $0x310] sm:$0xff]
    %v2175 = vld [vmem:[#allocation2 + $0x318] sm:$0xff]
    %v2176 = vld [vmem:[#allocation2 + $0x320] sm:$0xff]
    %v2177 = vld [vmem:[#allocation2 + $0x328] sm:$0xff]
    %v2178 = vld [vmem:[#allocation2 + $0x330] sm:$0xff]
    %v2179 = vld [vmem:[#allocation2 + $0x338] sm:$0xff]
    %v2180 = vld [vmem:[#allocation2 + $0x340] sm:$0xff]
    %v2181 = vld [vmem:[#allocation2 + $0x348] sm:$0xff]
    %v2182 = vld [vmem:[#allocation2 + $0x350] sm:$0xff]
    %v2183 = vld [vmem:[#allocation2 + $0x358] sm:$0xff]
    %v2184 = vld [vmem:[#allocation2 + $0x360] sm:$0xff]
    %v2185 = vld [vmem:[#allocation2 + $0x368] sm:$0xff]
    %v2186 = vld [vmem:[#allocation2 + $0x370] sm:$0xff]
    %v2187 = vld [vmem:[#allocation2 + $0x378] sm:$0xff]
    %v2188 = vmax.f32 %v2172, %v2180
    %v2189 = vmax.f32 %v2173, %v2181
    %v2190 = vmax.f32 %v2174, %v2182
    %v2191 = vmax.f32 %v2175, %v2183
    %v2192 = vmax.f32 %v2176, %v2184
    %v2193 = vmax.f32 %v2177, %v2185
    %v2194 = vmax.f32 %v2178, %v2186
    %v2195 = vmax.f32 %v2179, %v2187
    %2204 = vrot.lane.b32.xlu0 %v2188, 16
    %v2205 = vpop.permute.xlu0 %2204
    %2206 = vrot.lane.b32.xlu0 %v2189, 16
    %v2207 = vpop.permute.xlu0 %2206
    %2208 = vrot.lane.b32.xlu0 %v2190, 16
    %v2209 = vpop.permute.xlu0 %2208
    %2210 = vrot.lane.b32.xlu0 %v2191, 16
    %v2211 = vpop.permute.xlu0 %2210
    %2212 = vrot.lane.b32.xlu0 %v2192, 16
    %v2213 = vpop.permute.xlu0 %2212
    %2214 = vrot.lane.b32.xlu0 %v2193, 16
    %v2215 = vpop.permute.xlu0 %2214
    %2216 = vrot.lane.b32.xlu0 %v2194, 16
    %v2217 = vpop.permute.xlu0 %2216
    %2218 = vrot.lane.b32.xlu0 %v2195, 16
    %v2219 = vpop.permute.xlu0 %2218
    %v2220 = vsel %vm1738, %v2205, %v2207
    %v2221 = vsel %vm1738, %v2209, %v2211
    %v2222 = vsel %vm1738, %v2213, %v2215
    %v2223 = vsel %vm1738, %v2217, %v2219
    %v2228 = vmax.f32 %v2188, %v2220
    %v2229 = vmax.f32 %v2190, %v2221
    %v2230 = vmax.f32 %v2192, %v2222
    %v2231 = vmax.f32 %v2194, %v2223
    %v2232 = vpack.c.bf16 %v2229, %v2228
    %v2233 = vpack.c.bf16 %v2231, %v2230
    %v2236 = vunpack.c.l.b16 %v2232
    %v2237 = vunpack.c.h.b16 %v2232
    %v2238 = vunpack.c.l.b16 %v2233
    %v2239 = vunpack.c.h.b16 %v2233
    %v2240 = vpack.c.b16 %v2236, %v2236
    %v2241 = vpack.c.b16 %v2237, %v2237
    %v2242 = vpack.c.b16 %v2238, %v2238
    %v2243 = vpack.c.b16 %v2239, %v2239
    %2248 = vst.msk [vmem:[#allocation3 + $0x70] sm:$0xf] %vm1767, %v2240
    %2249 = vst.msk [vmem:[#allocation3 + $0x74] sm:$0xf] %vm1767, %v2241
    %2250 = vst.msk [vmem:[#allocation3 + $0x78] sm:$0xf] %vm1767, %v2242
    %2251 = vst.msk [vmem:[#allocation3 + $0x7c] sm:$0xf] %vm1767, %v2243
    %v2252 = vld [vmem:[#allocation2 + $0x380] sm:$0xff]
    %v2253 = vld [vmem:[#allocation2 + $0x388] sm:$0xff]
    %v2254 = vld [vmem:[#allocation2 + $0x390] sm:$0xff]
    %v2255 = vld [vmem:[#allocation2 + $0x398] sm:$0xff]
    %v2256 = vld [vmem:[#allocation2 + $0x3a0] sm:$0xff]
    %v2257 = vld [vmem:[#allocation2 + $0x3a8] sm:$0xff]
    %v2258 = vld [vmem:[#allocation2 + $0x3b0] sm:$0xff]
    %v2259 = vld [vmem:[#allocation2 + $0x3b8] sm:$0xff]
    %v2260 = vld [vmem:[#allocation2 + $0x3c0] sm:$0xff]
    %v2261 = vld [vmem:[#allocation2 + $0x3c8] sm:$0xff]
    %v2262 = vld [vmem:[#allocation2 + $0x3d0] sm:$0xff]
    %v2263 = vld [vmem:[#allocation2 + $0x3d8] sm:$0xff]
    %v2264 = vld [vmem:[#allocation2 + $0x3e0] sm:$0xff]
    %v2265 = vld [vmem:[#allocation2 + $0x3e8] sm:$0xff]
    %v2266 = vld [vmem:[#allocation2 + $0x3f0] sm:$0xff]
    %v2267 = vld [vmem:[#allocation2 + $0x3f8] sm:$0xff]
    %v2268 = vmax.f32 %v2252, %v2260
    %v2269 = vmax.f32 %v2253, %v2261
    %v2270 = vmax.f32 %v2254, %v2262
    %v2271 = vmax.f32 %v2255, %v2263
    %v2272 = vmax.f32 %v2256, %v2264
    %v2273 = vmax.f32 %v2257, %v2265
    %v2274 = vmax.f32 %v2258, %v2266
    %v2275 = vmax.f32 %v2259, %v2267
    %2284 = vrot.lane.b32.xlu0 %v2268, 16
    %v2285 = vpop.permute.xlu0 %2284
    %2286 = vrot.lane.b32.xlu0 %v2269, 16
    %v2287 = vpop.permute.xlu0 %2286
    %2288 = vrot.lane.b32.xlu0 %v2270, 16
    %v2289 = vpop.permute.xlu0 %2288
    %2290 = vrot.lane.b32.xlu0 %v2271, 16
    %v2291 = vpop.permute.xlu0 %2290
    %2292 = vrot.lane.b32.xlu0 %v2272, 16
    %v2293 = vpop.permute.xlu0 %2292
    %2294 = vrot.lane.b32.xlu0 %v2273, 16
    %v2295 = vpop.permute.xlu0 %2294
    %2296 = vrot.lane.b32.xlu0 %v2274, 16
    %v2297 = vpop.permute.xlu0 %2296
    %2298 = vrot.lane.b32.xlu0 %v2275, 16
    %v2299 = vpop.permute.xlu0 %2298
    %v2300 = vsel %vm1738, %v2285, %v2287
    %v2301 = vsel %vm1738, %v2289, %v2291
    %v2302 = vsel %vm1738, %v2293, %v2295
    %v2303 = vsel %vm1738, %v2297, %v2299
    %v2308 = vmax.f32 %v2268, %v2300
    %v2309 = vmax.f32 %v2270, %v2301
    %v2310 = vmax.f32 %v2272, %v2302
    %v2311 = vmax.f32 %v2274, %v2303
    %v2312 = vpack.c.bf16 %v2309, %v2308
    %v2313 = vpack.c.bf16 %v2311, %v2310
    %v2316 = vunpack.c.l.b16 %v2312
    %v2317 = vunpack.c.h.b16 %v2312
    %v2318 = vunpack.c.l.b16 %v2313
    %v2319 = vunpack.c.h.b16 %v2313
    %v2320 = vpack.c.b16 %v2316, %v2316
    %v2321 = vpack.c.b16 %v2317, %v2317
    %v2322 = vpack.c.b16 %v2318, %v2318
    %v2323 = vpack.c.b16 %v2319, %v2319
    %2328 = vst.msk [vmem:[#allocation3 + $0x80] sm:$0xf] %vm1767, %v2320
    %2329 = vst.msk [vmem:[#allocation3 + $0x84] sm:$0xf] %vm1767, %v2321
    %2330 = vst.msk [vmem:[#allocation3 + $0x88] sm:$0xf] %vm1767, %v2322
    %2331 = vst.msk [vmem:[#allocation3 + $0x8c] sm:$0xf] %vm1767, %v2323
    %v2332 = vld [vmem:[#allocation2 + $0x400] sm:$0xff]
    %v2333 = vld [vmem:[#allocation2 + $0x408] sm:$0xff]
    %v2334 = vld [vmem:[#allocation2 + $0x410] sm:$0xff]
    %v2335 = vld [vmem:[#allocation2 + $0x418] sm:$0xff]
    %v2336 = vld [vmem:[#allocation2 + $0x420] sm:$0xff]
    %v2337 = vld [vmem:[#allocation2 + $0x428] sm:$0xff]
    %v2338 = vld [vmem:[#allocation2 + $0x430] sm:$0xff]
    %v2339 = vld [vmem:[#allocation2 + $0x438] sm:$0xff]
    %v2340 = vld [vmem:[#allocation2 + $0x440] sm:$0xff]
    %v2341 = vld [vmem:[#allocation2 + $0x448] sm:$0xff]
    %v2342 = vld [vmem:[#allocation2 + $0x450] sm:$0xff]
    %v2343 = vld [vmem:[#allocation2 + $0x458] sm:$0xff]
    %v2344 = vld [vmem:[#allocation2 + $0x460] sm:$0xff]
    %v2345 = vld [vmem:[#allocation2 + $0x468] sm:$0xff]
    %v2346 = vld [vmem:[#allocation2 + $0x470] sm:$0xff]
    %v2347 = vld [vmem:[#allocation2 + $0x478] sm:$0xff]
    %v2348 = vmax.f32 %v2332, %v2340
    %v2349 = vmax.f32 %v2333, %v2341
    %v2350 = vmax.f32 %v2334, %v2342
    %v2351 = vmax.f32 %v2335, %v2343
    %v2352 = vmax.f32 %v2336, %v2344
    %v2353 = vmax.f32 %v2337, %v2345
    %v2354 = vmax.f32 %v2338, %v2346
    %v2355 = vmax.f32 %v2339, %v2347
    %2364 = vrot.lane.b32.xlu0 %v2348, 16
    %v2365 = vpop.permute.xlu0 %2364
    %2366 = vrot.lane.b32.xlu0 %v2349, 16
    %v2367 = vpop.permute.xlu0 %2366
    %2368 = vrot.lane.b32.xlu0 %v2350, 16
    %v2369 = vpop.permute.xlu0 %2368
    %2370 = vrot.lane.b32.xlu0 %v2351, 16
    %v2371 = vpop.permute.xlu0 %2370
    %2372 = vrot.lane.b32.xlu0 %v2352, 16
    %v2373 = vpop.permute.xlu0 %2372
    %2374 = vrot.lane.b32.xlu0 %v2353, 16
    %v2375 = vpop.permute.xlu0 %2374
    %2376 = vrot.lane.b32.xlu0 %v2354, 16
    %v2377 = vpop.permute.xlu0 %2376
    %2378 = vrot.lane.b32.xlu0 %v2355, 16
    %v2379 = vpop.permute.xlu0 %2378
    %v2380 = vsel %vm1738, %v2365, %v2367
    %v2381 = vsel %vm1738, %v2369, %v2371
    %v2382 = vsel %vm1738, %v2373, %v2375
    %v2383 = vsel %vm1738, %v2377, %v2379
    %v2388 = vmax.f32 %v2348, %v2380
    %v2389 = vmax.f32 %v2350, %v2381
    %v2390 = vmax.f32 %v2352, %v2382
    %v2391 = vmax.f32 %v2354, %v2383
    %v2392 = vpack.c.bf16 %v2389, %v2388
    %v2393 = vpack.c.bf16 %v2391, %v2390
    %v2396 = vunpack.c.l.b16 %v2392
    %v2397 = vunpack.c.h.b16 %v2392
    %v2398 = vunpack.c.l.b16 %v2393
    %v2399 = vunpack.c.h.b16 %v2393
    %v2400 = vpack.c.b16 %v2396, %v2396
    %v2401 = vpack.c.b16 %v2397, %v2397
    %v2402 = vpack.c.b16 %v2398, %v2398
    %v2403 = vpack.c.b16 %v2399, %v2399
    %2408 = vst.msk [vmem:[#allocation3 + $0x90] sm:$0xf] %vm1767, %v2400
    %2409 = vst.msk [vmem:[#allocation3 + $0x94] sm:$0xf] %vm1767, %v2401
    %2410 = vst.msk [vmem:[#allocation3 + $0x98] sm:$0xf] %vm1767, %v2402
    %2411 = vst.msk [vmem:[#allocation3 + $0x9c] sm:$0xf] %vm1767, %v2403
    %v2412 = vld [vmem:[#allocation2 + $0x480] sm:$0xff]
    %v2413 = vld [vmem:[#allocation2 + $0x488] sm:$0xff]
    %v2414 = vld [vmem:[#allocation2 + $0x490] sm:$0xff]
    %v2415 = vld [vmem:[#allocation2 + $0x498] sm:$0xff]
    %v2416 = vld [vmem:[#allocation2 + $0x4a0] sm:$0xff]
    %v2417 = vld [vmem:[#allocation2 + $0x4a8] sm:$0xff]
    %v2418 = vld [vmem:[#allocation2 + $0x4b0] sm:$0xff]
    %v2419 = vld [vmem:[#allocation2 + $0x4b8] sm:$0xff]
    %v2420 = vld [vmem:[#allocation2 + $0x4c0] sm:$0xff]
    %v2421 = vld [vmem:[#allocation2 + $0x4c8] sm:$0xff]
    %v2422 = vld [vmem:[#allocation2 + $0x4d0] sm:$0xff]
    %v2423 = vld [vmem:[#allocation2 + $0x4d8] sm:$0xff]
    %v2424 = vld [vmem:[#allocation2 + $0x4e0] sm:$0xff]
    %v2425 = vld [vmem:[#allocation2 + $0x4e8] sm:$0xff]
    %v2426 = vld [vmem:[#allocation2 + $0x4f0] sm:$0xff]
    %v2427 = vld [vmem:[#allocation2 + $0x4f8] sm:$0xff]
    %v2428 = vmax.f32 %v2412, %v2420
    %v2429 = vmax.f32 %v2413, %v2421
    %v2430 = vmax.f32 %v2414, %v2422
    %v2431 = vmax.f32 %v2415, %v2423
    %v2432 = vmax.f32 %v2416, %v2424
    %v2433 = vmax.f32 %v2417, %v2425
    %v2434 = vmax.f32 %v2418, %v2426
    %v2435 = vmax.f32 %v2419, %v2427
    %2444 = vrot.lane.b32.xlu0 %v2428, 16
    %v2445 = vpop.permute.xlu0 %2444
    %2446 = vrot.lane.b32.xlu0 %v2429, 16
    %v2447 = vpop.permute.xlu0 %2446
    %2448 = vrot.lane.b32.xlu0 %v2430, 16
    %v2449 = vpop.permute.xlu0 %2448
    %2450 = vrot.lane.b32.xlu0 %v2431, 16
    %v2451 = vpop.permute.xlu0 %2450
    %2452 = vrot.lane.b32.xlu0 %v2432, 16
    %v2453 = vpop.permute.xlu0 %2452
    %2454 = vrot.lane.b32.xlu0 %v2433, 16
    %v2455 = vpop.permute.xlu0 %2454
    %2456 = vrot.lane.b32.xlu0 %v2434, 16
    %v2457 = vpop.permute.xlu0 %2456
    %2458 = vrot.lane.b32.xlu0 %v2435, 16
    %v2459 = vpop.permute.xlu0 %2458
    %v2460 = vsel %vm1738, %v2445, %v2447
    %v2461 = vsel %vm1738, %v2449, %v2451
    %v2462 = vsel %vm1738, %v2453, %v2455
    %v2463 = vsel %vm1738, %v2457, %v2459
    %v2468 = vmax.f32 %v2428, %v2460
    %v2469 = vmax.f32 %v2430, %v2461
    %v2470 = vmax.f32 %v2432, %v2462
    %v2471 = vmax.f32 %v2434, %v2463
    %v2472 = vpack.c.bf16 %v2469, %v2468
    %v2473 = vpack.c.bf16 %v2471, %v2470
    %v2476 = vunpack.c.l.b16 %v2472
    %v2477 = vunpack.c.h.b16 %v2472
    %v2478 = vunpack.c.l.b16 %v2473
    %v2479 = vunpack.c.h.b16 %v2473
    %v2480 = vpack.c.b16 %v2476, %v2476
    %v2481 = vpack.c.b16 %v2477, %v2477
    %v2482 = vpack.c.b16 %v2478, %v2478
    %v2483 = vpack.c.b16 %v2479, %v2479
    %2488 = vst.msk [vmem:[#allocation3 + $0xa0] sm:$0xf] %vm1767, %v2480
    %2489 = vst.msk [vmem:[#allocation3 + $0xa4] sm:$0xf] %vm1767, %v2481
    %2490 = vst.msk [vmem:[#allocation3 + $0xa8] sm:$0xf] %vm1767, %v2482
    %2491 = vst.msk [vmem:[#allocation3 + $0xac] sm:$0xf] %vm1767, %v2483
    %v2492 = vld [vmem:[#allocation2 + $0x500] sm:$0xff]
    %v2493 = vld [vmem:[#allocation2 + $0x508] sm:$0xff]
    %v2494 = vld [vmem:[#allocation2 + $0x510] sm:$0xff]
    %v2495 = vld [vmem:[#allocation2 + $0x518] sm:$0xff]
    %v2496 = vld [vmem:[#allocation2 + $0x520] sm:$0xff]
    %v2497 = vld [vmem:[#allocation2 + $0x528] sm:$0xff]
    %v2498 = vld [vmem:[#allocation2 + $0x530] sm:$0xff]
    %v2499 = vld [vmem:[#allocation2 + $0x538] sm:$0xff]
    %v2500 = vld [vmem:[#allocation2 + $0x540] sm:$0xff]
    %v2501 = vld [vmem:[#allocation2 + $0x548] sm:$0xff]
    %v2502 = vld [vmem:[#allocation2 + $0x550] sm:$0xff]
    %v2503 = vld [vmem:[#allocation2 + $0x558] sm:$0xff]
    %v2504 = vld [vmem:[#allocation2 + $0x560] sm:$0xff]
    %v2505 = vld [vmem:[#allocation2 + $0x568] sm:$0xff]
    %v2506 = vld [vmem:[#allocation2 + $0x570] sm:$0xff]
    %v2507 = vld [vmem:[#allocation2 + $0x578] sm:$0xff]
    %v2508 = vmax.f32 %v2492, %v2500
    %v2509 = vmax.f32 %v2493, %v2501
    %v2510 = vmax.f32 %v2494, %v2502
    %v2511 = vmax.f32 %v2495, %v2503
    %v2512 = vmax.f32 %v2496, %v2504
    %v2513 = vmax.f32 %v2497, %v2505
    %v2514 = vmax.f32 %v2498, %v2506
    %v2515 = vmax.f32 %v2499, %v2507
    %2524 = vrot.lane.b32.xlu0 %v2508, 16
    %v2525 = vpop.permute.xlu0 %2524
    %2526 = vrot.lane.b32.xlu0 %v2509, 16
    %v2527 = vpop.permute.xlu0 %2526
    %2528 = vrot.lane.b32.xlu0 %v2510, 16
    %v2529 = vpop.permute.xlu0 %2528
    %2530 = vrot.lane.b32.xlu0 %v2511, 16
    %v2531 = vpop.permute.xlu0 %2530
    %2532 = vrot.lane.b32.xlu0 %v2512, 16
    %v2533 = vpop.permute.xlu0 %2532
    %2534 = vrot.lane.b32.xlu0 %v2513, 16
    %v2535 = vpop.permute.xlu0 %2534
    %2536 = vrot.lane.b32.xlu0 %v2514, 16
    %v2537 = vpop.permute.xlu0 %2536
    %2538 = vrot.lane.b32.xlu0 %v2515, 16
    %v2539 = vpop.permute.xlu0 %2538
    %v2540 = vsel %vm1738, %v2525, %v2527
    %v2541 = vsel %vm1738, %v2529, %v2531
    %v2542 = vsel %vm1738, %v2533, %v2535
    %v2543 = vsel %vm1738, %v2537, %v2539
    %v2548 = vmax.f32 %v2508, %v2540
    %v2549 = vmax.f32 %v2510, %v2541
    %v2550 = vmax.f32 %v2512, %v2542
    %v2551 = vmax.f32 %v2514, %v2543
    %v2552 = vpack.c.bf16 %v2549, %v2548
    %v2553 = vpack.c.bf16 %v2551, %v2550
    %v2556 = vunpack.c.l.b16 %v2552
    %v2557 = vunpack.c.h.b16 %v2552
    %v2558 = vunpack.c.l.b16 %v2553
    %v2559 = vunpack.c.h.b16 %v2553
    %v2560 = vpack.c.b16 %v2556, %v2556
    %v2561 = vpack.c.b16 %v2557, %v2557
    %v2562 = vpack.c.b16 %v2558, %v2558
    %v2563 = vpack.c.b16 %v2559, %v2559
    %2568 = vst.msk [vmem:[#allocation3 + $0xb0] sm:$0xf] %vm1767, %v2560
    %2569 = vst.msk [vmem:[#allocation3 + $0xb4] sm:$0xf] %vm1767, %v2561
    %2570 = vst.msk [vmem:[#allocation3 + $0xb8] sm:$0xf] %vm1767, %v2562
    %2571 = vst.msk [vmem:[#allocation3 + $0xbc] sm:$0xf] %vm1767, %v2563
    %v2572 = vld [vmem:[#allocation2 + $0x580] sm:$0xff]
    %v2573 = vld [vmem:[#allocation2 + $0x588] sm:$0xff]
    %v2574 = vld [vmem:[#allocation2 + $0x590] sm:$0xff]
    %v2575 = vld [vmem:[#allocation2 + $0x598] sm:$0xff]
    %v2576 = vld [vmem:[#allocation2 + $0x5a0] sm:$0xff]
    %v2577 = vld [vmem:[#allocation2 + $0x5a8] sm:$0xff]
    %v2578 = vld [vmem:[#allocation2 + $0x5b0] sm:$0xff]
    %v2579 = vld [vmem:[#allocation2 + $0x5b8] sm:$0xff]
    %v2580 = vld [vmem:[#allocation2 + $0x5c0] sm:$0xff]
    %v2581 = vld [vmem:[#allocation2 + $0x5c8] sm:$0xff]
    %v2582 = vld [vmem:[#allocation2 + $0x5d0] sm:$0xff]
    %v2583 = vld [vmem:[#allocation2 + $0x5d8] sm:$0xff]
    %v2584 = vld [vmem:[#allocation2 + $0x5e0] sm:$0xff]
    %v2585 = vld [vmem:[#allocation2 + $0x5e8] sm:$0xff]
    %v2586 = vld [vmem:[#allocation2 + $0x5f0] sm:$0xff]
    %v2587 = vld [vmem:[#allocation2 + $0x5f8] sm:$0xff]
    %v2588 = vmax.f32 %v2572, %v2580
    %v2589 = vmax.f32 %v2573, %v2581
    %v2590 = vmax.f32 %v2574, %v2582
    %v2591 = vmax.f32 %v2575, %v2583
    %v2592 = vmax.f32 %v2576, %v2584
    %v2593 = vmax.f32 %v2577, %v2585
    %v2594 = vmax.f32 %v2578, %v2586
    %v2595 = vmax.f32 %v2579, %v2587
    %2604 = vrot.lane.b32.xlu0 %v2588, 16
    %v2605 = vpop.permute.xlu0 %2604
    %2606 = vrot.lane.b32.xlu0 %v2589, 16
    %v2607 = vpop.permute.xlu0 %2606
    %2608 = vrot.lane.b32.xlu0 %v2590, 16
    %v2609 = vpop.permute.xlu0 %2608
    %2610 = vrot.lane.b32.xlu0 %v2591, 16
    %v2611 = vpop.permute.xlu0 %2610
    %2612 = vrot.lane.b32.xlu0 %v2592, 16
    %v2613 = vpop.permute.xlu0 %2612
    %2614 = vrot.lane.b32.xlu0 %v2593, 16
    %v2615 = vpop.permute.xlu0 %2614
    %2616 = vrot.lane.b32.xlu0 %v2594, 16
    %v2617 = vpop.permute.xlu0 %2616
    %2618 = vrot.lane.b32.xlu0 %v2595, 16
    %v2619 = vpop.permute.xlu0 %2618
    %v2620 = vsel %vm1738, %v2605, %v2607
    %v2621 = vsel %vm1738, %v2609, %v2611
    %v2622 = vsel %vm1738, %v2613, %v2615
    %v2623 = vsel %vm1738, %v2617, %v2619
    %v2628 = vmax.f32 %v2588, %v2620
    %v2629 = vmax.f32 %v2590, %v2621
    %v2630 = vmax.f32 %v2592, %v2622
    %v2631 = vmax.f32 %v2594, %v2623
    %v2632 = vpack.c.bf16 %v2629, %v2628
    %v2633 = vpack.c.bf16 %v2631, %v2630
    %v2636 = vunpack.c.l.b16 %v2632
    %v2637 = vunpack.c.h.b16 %v2632
    %v2638 = vunpack.c.l.b16 %v2633
    %v2639 = vunpack.c.h.b16 %v2633
    %v2640 = vpack.c.b16 %v2636, %v2636
    %v2641 = vpack.c.b16 %v2637, %v2637
    %v2642 = vpack.c.b16 %v2638, %v2638
    %v2643 = vpack.c.b16 %v2639, %v2639
    %2648 = vst.msk [vmem:[#allocation3 + $0xc0] sm:$0xf] %vm1767, %v2640
    %2649 = vst.msk [vmem:[#allocation3 + $0xc4] sm:$0xf] %vm1767, %v2641
    %2650 = vst.msk [vmem:[#allocation3 + $0xc8] sm:$0xf] %vm1767, %v2642
    %2651 = vst.msk [vmem:[#allocation3 + $0xcc] sm:$0xf] %vm1767, %v2643
    %v2652 = vld [vmem:[#allocation2 + $0x600] sm:$0xff]
    %v2653 = vld [vmem:[#allocation2 + $0x608] sm:$0xff]
    %v2654 = vld [vmem:[#allocation2 + $0x610] sm:$0xff]
    %v2655 = vld [vmem:[#allocation2 + $0x618] sm:$0xff]
    %v2656 = vld [vmem:[#allocation2 + $0x620] sm:$0xff]
    %v2657 = vld [vmem:[#allocation2 + $0x628] sm:$0xff]
    %v2658 = vld [vmem:[#allocation2 + $0x630] sm:$0xff]
    %v2659 = vld [vmem:[#allocation2 + $0x638] sm:$0xff]
    %v2660 = vld [vmem:[#allocation2 + $0x640] sm:$0xff]
    %v2661 = vld [vmem:[#allocation2 + $0x648] sm:$0xff]
    %v2662 = vld [vmem:[#allocation2 + $0x650] sm:$0xff]
    %v2663 = vld [vmem:[#allocation2 + $0x658] sm:$0xff]
    %v2664 = vld [vmem:[#allocation2 + $0x660] sm:$0xff]
    %v2665 = vld [vmem:[#allocation2 + $0x668] sm:$0xff]
    %v2666 = vld [vmem:[#allocation2 + $0x670] sm:$0xff]
    %v2667 = vld [vmem:[#allocation2 + $0x678] sm:$0xff]
    %v2668 = vmax.f32 %v2652, %v2660
    %v2669 = vmax.f32 %v2653, %v2661
    %v2670 = vmax.f32 %v2654, %v2662
    %v2671 = vmax.f32 %v2655, %v2663
    %v2672 = vmax.f32 %v2656, %v2664
    %v2673 = vmax.f32 %v2657, %v2665
    %v2674 = vmax.f32 %v2658, %v2666
    %v2675 = vmax.f32 %v2659, %v2667
    %2684 = vrot.lane.b32.xlu0 %v2668, 16
    %v2685 = vpop.permute.xlu0 %2684
    %2686 = vrot.lane.b32.xlu0 %v2669, 16
    %v2687 = vpop.permute.xlu0 %2686
    %2688 = vrot.lane.b32.xlu0 %v2670, 16
    %v2689 = vpop.permute.xlu0 %2688
    %2690 = vrot.lane.b32.xlu0 %v2671, 16
    %v2691 = vpop.permute.xlu0 %2690
    %2692 = vrot.lane.b32.xlu0 %v2672, 16
    %v2693 = vpop.permute.xlu0 %2692
    %2694 = vrot.lane.b32.xlu0 %v2673, 16
    %v2695 = vpop.permute.xlu0 %2694
    %2696 = vrot.lane.b32.xlu0 %v2674, 16
    %v2697 = vpop.permute.xlu0 %2696
    %2698 = vrot.lane.b32.xlu0 %v2675, 16
    %v2699 = vpop.permute.xlu0 %2698
    %v2700 = vsel %vm1738, %v2685, %v2687
    %v2701 = vsel %vm1738, %v2689, %v2691
    %v2702 = vsel %vm1738, %v2693, %v2695
    %v2703 = vsel %vm1738, %v2697, %v2699
    %v2708 = vmax.f32 %v2668, %v2700
    %v2709 = vmax.f32 %v2670, %v2701
    %v2710 = vmax.f32 %v2672, %v2702
    %v2711 = vmax.f32 %v2674, %v2703
    %v2712 = vpack.c.bf16 %v2709, %v2708
    %v2713 = vpack.c.bf16 %v2711, %v2710
    %v2716 = vunpack.c.l.b16 %v2712
    %v2717 = vunpack.c.h.b16 %v2712
    %v2718 = vunpack.c.l.b16 %v2713
    %v2719 = vunpack.c.h.b16 %v2713
    %v2720 = vpack.c.b16 %v2716, %v2716
    %v2721 = vpack.c.b16 %v2717, %v2717
    %v2722 = vpack.c.b16 %v2718, %v2718
    %v2723 = vpack.c.b16 %v2719, %v2719
    %2728 = vst.msk [vmem:[#allocation3 + $0xd0] sm:$0xf] %vm1767, %v2720
    %2729 = vst.msk [vmem:[#allocation3 + $0xd4] sm:$0xf] %vm1767, %v2721
    %2730 = vst.msk [vmem:[#allocation3 + $0xd8] sm:$0xf] %vm1767, %v2722
    %2731 = vst.msk [vmem:[#allocation3 + $0xdc] sm:$0xf] %vm1767, %v2723
    %v2732 = vld [vmem:[#allocation2 + $0x680] sm:$0xff]
    %v2733 = vld [vmem:[#allocation2 + $0x688] sm:$0xff]
    %v2734 = vld [vmem:[#allocation2 + $0x690] sm:$0xff]
    %v2735 = vld [vmem:[#allocation2 + $0x698] sm:$0xff]
    %v2736 = vld [vmem:[#allocation2 + $0x6a0] sm:$0xff]
    %v2737 = vld [vmem:[#allocation2 + $0x6a8] sm:$0xff]
    %v2738 = vld [vmem:[#allocation2 + $0x6b0] sm:$0xff]
    %v2739 = vld [vmem:[#allocation2 + $0x6b8] sm:$0xff]
    %v2740 = vld [vmem:[#allocation2 + $0x6c0] sm:$0xff]
    %v2741 = vld [vmem:[#allocation2 + $0x6c8] sm:$0xff]
    %v2742 = vld [vmem:[#allocation2 + $0x6d0] sm:$0xff]
    %v2743 = vld [vmem:[#allocation2 + $0x6d8] sm:$0xff]
    %v2744 = vld [vmem:[#allocation2 + $0x6e0] sm:$0xff]
    %v2745 = vld [vmem:[#allocation2 + $0x6e8] sm:$0xff]
    %v2746 = vld [vmem:[#allocation2 + $0x6f0] sm:$0xff]
    %v2747 = vld [vmem:[#allocation2 + $0x6f8] sm:$0xff]
    %v2748 = vmax.f32 %v2732, %v2740
    %v2749 = vmax.f32 %v2733, %v2741
    %v2750 = vmax.f32 %v2734, %v2742
    %v2751 = vmax.f32 %v2735, %v2743
    %v2752 = vmax.f32 %v2736, %v2744
    %v2753 = vmax.f32 %v2737, %v2745
    %v2754 = vmax.f32 %v2738, %v2746
    %v2755 = vmax.f32 %v2739, %v2747
    %2764 = vrot.lane.b32.xlu0 %v2748, 16
    %v2765 = vpop.permute.xlu0 %2764
    %2766 = vrot.lane.b32.xlu0 %v2749, 16
    %v2767 = vpop.permute.xlu0 %2766
    %2768 = vrot.lane.b32.xlu0 %v2750, 16
    %v2769 = vpop.permute.xlu0 %2768
    %2770 = vrot.lane.b32.xlu0 %v2751, 16
    %v2771 = vpop.permute.xlu0 %2770
    %2772 = vrot.lane.b32.xlu0 %v2752, 16
    %v2773 = vpop.permute.xlu0 %2772
    %2774 = vrot.lane.b32.xlu0 %v2753, 16
    %v2775 = vpop.permute.xlu0 %2774
    %2776 = vrot.lane.b32.xlu0 %v2754, 16
    %v2777 = vpop.permute.xlu0 %2776
    %2778 = vrot.lane.b32.xlu0 %v2755, 16
    %v2779 = vpop.permute.xlu0 %2778
    %v2780 = vsel %vm1738, %v2765, %v2767
    %v2781 = vsel %vm1738, %v2769, %v2771
    %v2782 = vsel %vm1738, %v2773, %v2775
    %v2783 = vsel %vm1738, %v2777, %v2779
    %v2788 = vmax.f32 %v2748, %v2780
    %v2789 = vmax.f32 %v2750, %v2781
    %v2790 = vmax.f32 %v2752, %v2782
    %v2791 = vmax.f32 %v2754, %v2783
    %v2792 = vpack.c.bf16 %v2789, %v2788
    %v2793 = vpack.c.bf16 %v2791, %v2790
    %v2796 = vunpack.c.l.b16 %v2792
    %v2797 = vunpack.c.h.b16 %v2792
    %v2798 = vunpack.c.l.b16 %v2793
    %v2799 = vunpack.c.h.b16 %v2793
    %v2800 = vpack.c.b16 %v2796, %v2796
    %v2801 = vpack.c.b16 %v2797, %v2797
    %v2802 = vpack.c.b16 %v2798, %v2798
    %v2803 = vpack.c.b16 %v2799, %v2799
    %2808 = vst.msk [vmem:[#allocation3 + $0xe0] sm:$0xf] %vm1767, %v2800
    %2809 = vst.msk [vmem:[#allocation3 + $0xe4] sm:$0xf] %vm1767, %v2801
    %2810 = vst.msk [vmem:[#allocation3 + $0xe8] sm:$0xf] %vm1767, %v2802
    %2811 = vst.msk [vmem:[#allocation3 + $0xec] sm:$0xf] %vm1767, %v2803
    %v2812 = vld [vmem:[#allocation3] sm:$0xf]
    %v2813 = vld [vmem:[#allocation3 + $0x4] sm:$0xf]
    %v2814 = vld [vmem:[#allocation3 + $0x8] sm:$0xf]
    %v2815 = vld [vmem:[#allocation3 + $0xc] sm:$0xf]
    %v2816 = vld [vmem:[#allocation3 + $0x10] sm:$0xf]
    %v2817 = vld [vmem:[#allocation3 + $0x14] sm:$0xf]
    %v2818 = vld [vmem:[#allocation3 + $0x18] sm:$0xf]
    %v2819 = vld [vmem:[#allocation3 + $0x1c] sm:$0xf]
    %v2820 = vld [vmem:[#allocation3 + $0x20] sm:$0xf]
    %v2821 = vld [vmem:[#allocation3 + $0x24] sm:$0xf]
    %v2822 = vld [vmem:[#allocation3 + $0x28] sm:$0xf]
    %v2823 = vld [vmem:[#allocation3 + $0x2c] sm:$0xf]
    %v2824 = vld [vmem:[#allocation3 + $0x30] sm:$0xf]
    %v2825 = vld [vmem:[#allocation3 + $0x34] sm:$0xf]
    %v2826 = vld [vmem:[#allocation3 + $0x38] sm:$0xf]
    %v2827 = vld [vmem:[#allocation3 + $0x3c] sm:$0xf]
    %v2828 = vld [vmem:[#allocation3 + $0x40] sm:$0xf]
    %v2829 = vld [vmem:[#allocation3 + $0x44] sm:$0xf]
    %v2830 = vld [vmem:[#allocation3 + $0x48] sm:$0xf]
    %v2831 = vld [vmem:[#allocation3 + $0x4c] sm:$0xf]
    %v2832 = vld [vmem:[#allocation3 + $0x50] sm:$0xf]
    %v2833 = vld [vmem:[#allocation3 + $0x54] sm:$0xf]
    %v2834 = vld [vmem:[#allocation3 + $0x58] sm:$0xf]
    %v2835 = vld [vmem:[#allocation3 + $0x5c] sm:$0xf]
    %v2836 = vld [vmem:[#allocation3 + $0x60] sm:$0xf]
    %v2837 = vld [vmem:[#allocation3 + $0x64] sm:$0xf]
    %v2838 = vld [vmem:[#allocation3 + $0x68] sm:$0xf]
    %v2839 = vld [vmem:[#allocation3 + $0x6c] sm:$0xf]
    %v2840 = vld [vmem:[#allocation3 + $0x70] sm:$0xf]
    %v2841 = vld [vmem:[#allocation3 + $0x74] sm:$0xf]
    %v2842 = vld [vmem:[#allocation3 + $0x78] sm:$0xf]
    %v2843 = vld [vmem:[#allocation3 + $0x7c] sm:$0xf]
    %v2844 = vld [vmem:[#allocation3 + $0x80] sm:$0xf]
    %v2845 = vld [vmem:[#allocation3 + $0x84] sm:$0xf]
    %v2846 = vld [vmem:[#allocation3 + $0x88] sm:$0xf]
    %v2847 = vld [vmem:[#allocation3 + $0x8c] sm:$0xf]
    %v2848 = vld [vmem:[#allocation3 + $0x90] sm:$0xf]
    %v2849 = vld [vmem:[#allocation3 + $0x94] sm:$0xf]
    %v2850 = vld [vmem:[#allocation3 + $0x98] sm:$0xf]
    %v2851 = vld [vmem:[#allocation3 + $0x9c] sm:$0xf]
    %v2852 = vld [vmem:[#allocation3 + $0xa0] sm:$0xf]
    %v2853 = vld [vmem:[#allocation3 + $0xa4] sm:$0xf]
    %v2854 = vld [vmem:[#allocation3 + $0xa8] sm:$0xf]
    %v2855 = vld [vmem:[#allocation3 + $0xac] sm:$0xf]
    %v2856 = vld [vmem:[#allocation3 + $0xb0] sm:$0xf]
    %v2857 = vld [vmem:[#allocation3 + $0xb4] sm:$0xf]
    %v2858 = vld [vmem:[#allocation3 + $0xb8] sm:$0xf]
    %v2859 = vld [vmem:[#allocation3 + $0xbc] sm:$0xf]
    %v2860 = vld [vmem:[#allocation3 + $0xc0] sm:$0xf]
    %v2861 = vld [vmem:[#allocation3 + $0xc4] sm:$0xf]
    %v2862 = vld [vmem:[#allocation3 + $0xc8] sm:$0xf]
    %v2863 = vld [vmem:[#allocation3 + $0xcc] sm:$0xf]
    %v2864 = vld [vmem:[#allocation3 + $0xd0] sm:$0xf]
    %v2865 = vld [vmem:[#allocation3 + $0xd4] sm:$0xf]
    %v2866 = vld [vmem:[#allocation3 + $0xd8] sm:$0xf]
    %v2867 = vld [vmem:[#allocation3 + $0xdc] sm:$0xf]
    %2868 = vst [vmem:[#allocation4] sm:$0xf] %v2812
    %2869 = vst [vmem:[#allocation4 + $0xc] sm:$0xf] %v2813
    %2870 = vst [vmem:[#allocation4 + $0x18] sm:$0xf] %v2814
    %2871 = vst [vmem:[#allocation4 + $0x24] sm:$0xf] %v2815
    %2872 = vst [vmem:[#allocation4 + $0x30] sm:$0xf] %v2816
    %2873 = vst [vmem:[#allocation4 + $0x3c] sm:$0xf] %v2817
    %2874 = vst [vmem:[#allocation4 + $0x48] sm:$0xf] %v2818
    %2875 = vst [vmem:[#allocation4 + $0x54] sm:$0xf] %v2819
    %2876 = vst [vmem:[#allocation4 + $0x60] sm:$0xf] %v2820
    %2877 = vst [vmem:[#allocation4 + $0x6c] sm:$0xf] %v2821
    %2878 = vst [vmem:[#allocation4 + $0x78] sm:$0xf] %v2822
    %2879 = vst [vmem:[#allocation4 + $0x84] sm:$0xf] %v2823
    %2880 = vst [vmem:[#allocation4 + $0x90] sm:$0xf] %v2824
    %2881 = vst [vmem:[#allocation4 + $0x9c] sm:$0xf] %v2825
    %2882 = vst [vmem:[#allocation4 + $0xa8] sm:$0xf] %v2826
    %2883 = vst [vmem:[#allocation4 + $0xb4] sm:$0xf] %v2827
    %2884 = vst [vmem:[#allocation4 + $0xc0] sm:$0xf] %v2828
    %2885 = vst [vmem:[#allocation4 + $0xcc] sm:$0xf] %v2829
    %2886 = vst [vmem:[#allocation4 + $0xd8] sm:$0xf] %v2830
    %2887 = vst [vmem:[#allocation4 + $0xe4] sm:$0xf] %v2831
    %2888 = vst [vmem:[#allocation4 + $0xf0] sm:$0xf] %v2832
    %2889 = vst [vmem:[#allocation4 + $0xfc] sm:$0xf] %v2833
    %2890 = vst [vmem:[#allocation4 + $0x108] sm:$0xf] %v2834
    %2891 = vst [vmem:[#allocation4 + $0x114] sm:$0xf] %v2835
    %2892 = vst [vmem:[#allocation4 + $0x120] sm:$0xf] %v2836
    %2893 = vst [vmem:[#allocation4 + $0x12c] sm:$0xf] %v2837
    %2894 = vst [vmem:[#allocation4 + $0x138] sm:$0xf] %v2838
    %2895 = vst [vmem:[#allocation4 + $0x144] sm:$0xf] %v2839
    %2896 = vst [vmem:[#allocation4 + $0x150] sm:$0xf] %v2840
    %2897 = vst [vmem:[#allocation4 + $0x15c] sm:$0xf] %v2841
    %2898 = vst [vmem:[#allocation4 + $0x168] sm:$0xf] %v2842
    %2899 = vst [vmem:[#allocation4 + $0x174] sm:$0xf] %v2843
    %2900 = vst [vmem:[#allocation4 + $0x180] sm:$0xf] %v2844
    %2901 = vst [vmem:[#allocation4 + $0x18c] sm:$0xf] %v2845
    %2902 = vst [vmem:[#allocation4 + $0x198] sm:$0xf] %v2846
    %2903 = vst [vmem:[#allocation4 + $0x1a4] sm:$0xf] %v2847
    %2904 = vst [vmem:[#allocation4 + $0x1b0] sm:$0xf] %v2848
    %2905 = vst [vmem:[#allocation4 + $0x1bc] sm:$0xf] %v2849
    %2906 = vst [vmem:[#allocation4 + $0x1c8] sm:$0xf] %v2850
    %2907 = vst [vmem:[#allocation4 + $0x1d4] sm:$0xf] %v2851
    %2908 = vst [vmem:[#allocation4 + $0x1e0] sm:$0xf] %v2852
    %2909 = vst [vmem:[#allocation4 + $0x1ec] sm:$0xf] %v2853
    %2910 = vst [vmem:[#allocation4 + $0x1f8] sm:$0xf] %v2854
    %2911 = vst [vmem:[#allocation4 + $0x204] sm:$0xf] %v2855
    %2912 = vst [vmem:[#allocation4 + $0x210] sm:$0xf] %v2856
    %2913 = vst [vmem:[#allocation4 + $0x21c] sm:$0xf] %v2857
    %2914 = vst [vmem:[#allocation4 + $0x228] sm:$0xf] %v2858
    %2915 = vst [vmem:[#allocation4 + $0x234] sm:$0xf] %v2859
    %2916 = vst [vmem:[#allocation4 + $0x240] sm:$0xf] %v2860
    %2917 = vst [vmem:[#allocation4 + $0x24c] sm:$0xf] %v2861
    %2918 = vst [vmem:[#allocation4 + $0x258] sm:$0xf] %v2862
    %2919 = vst [vmem:[#allocation4 + $0x264] sm:$0xf] %v2863
    %2920 = vst [vmem:[#allocation4 + $0x270] sm:$0xf] %v2864
    %2921 = vst [vmem:[#allocation4 + $0x27c] sm:$0xf] %v2865
    %2922 = vst [vmem:[#allocation4 + $0x288] sm:$0xf] %v2866
    %2923 = vst [vmem:[#allocation4 + $0x294] sm:$0xf] %v2867
    %v2924 = vld [vmem:[#allocation3 + $0x10] sm:$0xf]
    %v2925 = vld [vmem:[#allocation3 + $0x14] sm:$0xf]
    %v2926 = vld [vmem:[#allocation3 + $0x18] sm:$0xf]
    %v2927 = vld [vmem:[#allocation3 + $0x1c] sm:$0xf]
    %v2928 = vld [vmem:[#allocation3 + $0x20] sm:$0xf]
    %v2929 = vld [vmem:[#allocation3 + $0x24] sm:$0xf]
    %v2930 = vld [vmem:[#allocation3 + $0x28] sm:$0xf]
    %v2931 = vld [vmem:[#allocation3 + $0x2c] sm:$0xf]
    %v2932 = vld [vmem:[#allocation3 + $0x30] sm:$0xf]
    %v2933 = vld [vmem:[#allocation3 + $0x34] sm:$0xf]
    %v2934 = vld [vmem:[#allocation3 + $0x38] sm:$0xf]
    %v2935 = vld [vmem:[#allocation3 + $0x3c] sm:$0xf]
    %v2936 = vld [vmem:[#allocation3 + $0x40] sm:$0xf]
    %v2937 = vld [vmem:[#allocation3 + $0x44] sm:$0xf]
    %v2938 = vld [vmem:[#allocation3 + $0x48] sm:$0xf]
    %v2939 = vld [vmem:[#allocation3 + $0x4c] sm:$0xf]
    %v2940 = vld [vmem:[#allocation3 + $0x50] sm:$0xf]
    %v2941 = vld [vmem:[#allocation3 + $0x54] sm:$0xf]
    %v2942 = vld [vmem:[#allocation3 + $0x58] sm:$0xf]
    %v2943 = vld [vmem:[#allocation3 + $0x5c] sm:$0xf]
    %v2944 = vld [vmem:[#allocation3 + $0x60] sm:$0xf]
    %v2945 = vld [vmem:[#allocation3 + $0x64] sm:$0xf]
    %v2946 = vld [vmem:[#allocation3 + $0x68] sm:$0xf]
    %v2947 = vld [vmem:[#allocation3 + $0x6c] sm:$0xf]
    %v2948 = vld [vmem:[#allocation3 + $0x70] sm:$0xf]
    %v2949 = vld [vmem:[#allocation3 + $0x74] sm:$0xf]
    %v2950 = vld [vmem:[#allocation3 + $0x78] sm:$0xf]
    %v2951 = vld [vmem:[#allocation3 + $0x7c] sm:$0xf]
    %v2952 = vld [vmem:[#allocation3 + $0x80] sm:$0xf]
    %v2953 = vld [vmem:[#allocation3 + $0x84] sm:$0xf]
    %v2954 = vld [vmem:[#allocation3 + $0x88] sm:$0xf]
    %v2955 = vld [vmem:[#allocation3 + $0x8c] sm:$0xf]
    %v2956 = vld [vmem:[#allocation3 + $0x90] sm:$0xf]
    %v2957 = vld [vmem:[#allocation3 + $0x94] sm:$0xf]
    %v2958 = vld [vmem:[#allocation3 + $0x98] sm:$0xf]
    %v2959 = vld [vmem:[#allocation3 + $0x9c] sm:$0xf]
    %v2960 = vld [vmem:[#allocation3 + $0xa0] sm:$0xf]
    %v2961 = vld [vmem:[#allocation3 + $0xa4] sm:$0xf]
    %v2962 = vld [vmem:[#allocation3 + $0xa8] sm:$0xf]
    %v2963 = vld [vmem:[#allocation3 + $0xac] sm:$0xf]
    %v2964 = vld [vmem:[#allocation3 + $0xb0] sm:$0xf]
    %v2965 = vld [vmem:[#allocation3 + $0xb4] sm:$0xf]
    %v2966 = vld [vmem:[#allocation3 + $0xb8] sm:$0xf]
    %v2967 = vld [vmem:[#allocation3 + $0xbc] sm:$0xf]
    %v2968 = vld [vmem:[#allocation3 + $0xc0] sm:$0xf]
    %v2969 = vld [vmem:[#allocation3 + $0xc4] sm:$0xf]
    %v2970 = vld [vmem:[#allocation3 + $0xc8] sm:$0xf]
    %v2971 = vld [vmem:[#allocation3 + $0xcc] sm:$0xf]
    %v2972 = vld [vmem:[#allocation3 + $0xd0] sm:$0xf]
    %v2973 = vld [vmem:[#allocation3 + $0xd4] sm:$0xf]
    %v2974 = vld [vmem:[#allocation3 + $0xd8] sm:$0xf]
    %v2975 = vld [vmem:[#allocation3 + $0xdc] sm:$0xf]
    %v2976 = vld [vmem:[#allocation3 + $0xe0] sm:$0xf]
    %v2977 = vld [vmem:[#allocation3 + $0xe4] sm:$0xf]
    %v2978 = vld [vmem:[#allocation3 + $0xe8] sm:$0xf]
    %v2979 = vld [vmem:[#allocation3 + $0xec] sm:$0xf]
    %2980 = vst [vmem:[#allocation4 + $0x4] sm:$0xf] %v2924
    %2981 = vst [vmem:[#allocation4 + $0x10] sm:$0xf] %v2925
    %2982 = vst [vmem:[#allocation4 + $0x1c] sm:$0xf] %v2926
    %2983 = vst [vmem:[#allocation4 + $0x28] sm:$0xf] %v2927
    %2984 = vst [vmem:[#allocation4 + $0x34] sm:$0xf] %v2928
    %2985 = vst [vmem:[#allocation4 + $0x40] sm:$0xf] %v2929
    %2986 = vst [vmem:[#allocation4 + $0x4c] sm:$0xf] %v2930
    %2987 = vst [vmem:[#allocation4 + $0x58] sm:$0xf] %v2931
    %2988 = vst [vmem:[#allocation4 + $0x64] sm:$0xf] %v2932
    %2989 = vst [vmem:[#allocation4 + $0x70] sm:$0xf] %v2933
    %2990 = vst [vmem:[#allocation4 + $0x7c] sm:$0xf] %v2934
    %2991 = vst [vmem:[#allocation4 + $0x88] sm:$0xf] %v2935
    %2992 = vst [vmem:[#allocation4 + $0x94] sm:$0xf] %v2936
    %2993 = vst [vmem:[#allocation4 + $0xa0] sm:$0xf] %v2937
    %2994 = vst [vmem:[#allocation4 + $0xac] sm:$0xf] %v2938
    %2995 = vst [vmem:[#allocation4 + $0xb8] sm:$0xf] %v2939
    %2996 = vst [vmem:[#allocation4 + $0xc4] sm:$0xf] %v2940
    %2997 = vst [vmem:[#allocation4 + $0xd0] sm:$0xf] %v2941
    %2998 = vst [vmem:[#allocation4 + $0xdc] sm:$0xf] %v2942
    %2999 = vst [vmem:[#allocation4 + $0xe8] sm:$0xf] %v2943
    %3000 = vst [vmem:[#allocation4 + $0xf4] sm:$0xf] %v2944
    %3001 = vst [vmem:[#allocation4 + $0x100] sm:$0xf] %v2945
    %3002 = vst [vmem:[#allocation4 + $0x10c] sm:$0xf] %v2946
    %3003 = vst [vmem:[#allocation4 + $0x118] sm:$0xf] %v2947
    %3004 = vst [vmem:[#allocation4 + $0x124] sm:$0xf] %v2948
    %3005 = vst [vmem:[#allocation4 + $0x130] sm:$0xf] %v2949
    %3006 = vst [vmem:[#allocation4 + $0x13c] sm:$0xf] %v2950
    %3007 = vst [vmem:[#allocation4 + $0x148] sm:$0xf] %v2951
    %3008 = vst [vmem:[#allocation4 + $0x154] sm:$0xf] %v2952
    %3009 = vst [vmem:[#allocation4 + $0x160] sm:$0xf] %v2953
    %3010 = vst [vmem:[#allocation4 + $0x16c] sm:$0xf] %v2954
    %3011 = vst [vmem:[#allocation4 + $0x178] sm:$0xf] %v2955
    %3012 = vst [vmem:[#allocation4 + $0x184] sm:$0xf] %v2956
    %3013 = vst [vmem:[#allocation4 + $0x190] sm:$0xf] %v2957
    %3014 = vst [vmem:[#allocation4 + $0x19c] sm:$0xf] %v2958
    %3015 = vst [vmem:[#allocation4 + $0x1a8] sm:$0xf] %v2959
    %3016 = vst [vmem:[#allocation4 + $0x1b4] sm:$0xf] %v2960
    %3017 = vst [vmem:[#allocation4 + $0x1c0] sm:$0xf] %v2961
    %3018 = vst [vmem:[#allocation4 + $0x1cc] sm:$0xf] %v2962
    %3019 = vst [vmem:[#allocation4 + $0x1d8] sm:$0xf] %v2963
    %3020 = vst [vmem:[#allocation4 + $0x1e4] sm:$0xf] %v2964
    %3021 = vst [vmem:[#allocation4 + $0x1f0] sm:$0xf] %v2965
    %3022 = vst [vmem:[#allocation4 + $0x1fc] sm:$0xf] %v2966
    %3023 = vst [vmem:[#allocation4 + $0x208] sm:$0xf] %v2967
    %3024 = vst [vmem:[#allocation4 + $0x214] sm:$0xf] %v2968
    %3025 = vst [vmem:[#allocation4 + $0x220] sm:$0xf] %v2969
    %3026 = vst [vmem:[#allocation4 + $0x22c] sm:$0xf] %v2970
    %3027 = vst [vmem:[#allocation4 + $0x238] sm:$0xf] %v2971
    %3028 = vst [vmem:[#allocation4 + $0x244] sm:$0xf] %v2972
    %3029 = vst [vmem:[#allocation4 + $0x250] sm:$0xf] %v2973
    %3030 = vst [vmem:[#allocation4 + $0x25c] sm:$0xf] %v2974
    %3031 = vst [vmem:[#allocation4 + $0x268] sm:$0xf] %v2975
    %3032 = vst [vmem:[#allocation4 + $0x274] sm:$0xf] %v2976
    %3033 = vst [vmem:[#allocation4 + $0x280] sm:$0xf] %v2977
    %3034 = vst [vmem:[#allocation4 + $0x28c] sm:$0xf] %v2978
    %3035 = vst [vmem:[#allocation4 + $0x298] sm:$0xf] %v2979
    %v3036 = vld [vmem:[#allocation3 + $0x20] sm:$0xf]
    %v3037 = vld [vmem:[#allocation3 + $0x24] sm:$0xf]
    %v3038 = vld [vmem:[#allocation3 + $0x28] sm:$0xf]
    %v3039 = vld [vmem:[#allocation3 + $0x2c] sm:$0xf]
    %v3040 = vld [vmem:[#allocation3 + $0x30] sm:$0xf]
    %v3041 = vld [vmem:[#allocation3 + $0x34] sm:$0xf]
    %v3042 = vld [vmem:[#allocation3 + $0x38] sm:$0xf]
    %v3043 = vld [vmem:[#allocation3 + $0x3c] sm:$0xf]
    %v3044 = vld [vmem:[#allocation3 + $0x40] sm:$0xf]
    %v3045 = vld [vmem:[#allocation3 + $0x44] sm:$0xf]
    %v3046 = vld [vmem:[#allocation3 + $0x48] sm:$0xf]
    %v3047 = vld [vmem:[#allocation3 + $0x4c] sm:$0xf]
    %v3048 = vld [vmem:[#allocation3 + $0x50] sm:$0xf]
    %v3049 = vld [vmem:[#allocation3 + $0x54] sm:$0xf]
    %v3050 = vld [vmem:[#allocation3 + $0x58] sm:$0xf]
    %v3051 = vld [vmem:[#allocation3 + $0x5c] sm:$0xf]
    %v3052 = vld [vmem:[#allocation3 + $0x60] sm:$0xf]
    %v3053 = vld [vmem:[#allocation3 + $0x64] sm:$0xf]
    %v3054 = vld [vmem:[#allocation3 + $0x68] sm:$0xf]
    %v3055 = vld [vmem:[#allocation3 + $0x6c] sm:$0xf]
    %v3056 = vld [vmem:[#allocation3 + $0x70] sm:$0xf]
    %v3057 = vld [vmem:[#allocation3 + $0x74] sm:$0xf]
    %v3058 = vld [vmem:[#allocation3 + $0x78] sm:$0xf]
    %v3059 = vld [vmem:[#allocation3 + $0x7c] sm:$0xf]
    %v3060 = vld [vmem:[#allocation3 + $0x80] sm:$0xf]
    %v3061 = vld [vmem:[#allocation3 + $0x84] sm:$0xf]
    %v3062 = vld [vmem:[#allocation3 + $0x88] sm:$0xf]
    %v3063 = vld [vmem:[#allocation3 + $0x8c] sm:$0xf]
    %v3064 = vld [vmem:[#allocation3 + $0x90] sm:$0xf]
    %v3065 = vld [vmem:[#allocation3 + $0x94] sm:$0xf]
    %v3066 = vld [vmem:[#allocation3 + $0x98] sm:$0xf]
    %v3067 = vld [vmem:[#allocation3 + $0x9c] sm:$0xf]
    %v3068 = vld [vmem:[#allocation3 + $0xa0] sm:$0xf]
    %v3069 = vld [vmem:[#allocation3 + $0xa4] sm:$0xf]
    %v3070 = vld [vmem:[#allocation3 + $0xa8] sm:$0xf]
    %v3071 = vld [vmem:[#allocation3 + $0xac] sm:$0xf]
    %v3072 = vld [vmem:[#allocation3 + $0xb0] sm:$0xf]
    %v3073 = vld [vmem:[#allocation3 + $0xb4] sm:$0xf]
    %v3074 = vld [vmem:[#allocation3 + $0xb8] sm:$0xf]
    %v3075 = vld [vmem:[#allocation3 + $0xbc] sm:$0xf]
    %v3076 = vld [vmem:[#allocation3 + $0xc0] sm:$0xf]
    %v3077 = vld [vmem:[#allocation3 + $0xc4] sm:$0xf]
    %v3078 = vld [vmem:[#allocation3 + $0xc8] sm:$0xf]
    %v3079 = vld [vmem:[#allocation3 + $0xcc] sm:$0xf]
    %v3080 = vld [vmem:[#allocation3 + $0xd0] sm:$0xf]
    %v3081 = vld [vmem:[#allocation3 + $0xd4] sm:$0xf]
    %v3082 = vld [vmem:[#allocation3 + $0xd8] sm:$0xf]
    %v3083 = vld [vmem:[#allocation3 + $0xdc] sm:$0xf]
    %v3084 = vld [vmem:[#allocation3 + $0xe0] sm:$0xf]
    %v3085 = vld [vmem:[#allocation3 + $0xe4] sm:$0xf]
    %v3086 = vld [vmem:[#allocation3 + $0xe8] sm:$0xf]
    %v3087 = vld [vmem:[#allocation3 + $0xec] sm:$0xf]
    %v3088 = vld [vmem:[#allocation3 + $0xf0] sm:$0xf]
    %v3089 = vld [vmem:[#allocation3 + $0xf4] sm:$0xf]
    %v3090 = vld [vmem:[#allocation3 + $0xf8] sm:$0xf]
    %v3091 = vld [vmem:[#allocation3 + $0xfc] sm:$0xf]
    %3092 = vst [vmem:[#allocation4 + $0x8] sm:$0xf] %v3036
    %3093 = vst [vmem:[#allocation4 + $0x14] sm:$0xf] %v3037
    %3094 = vst [vmem:[#allocation4 + $0x20] sm:$0xf] %v3038
    %3095 = vst [vmem:[#allocation4 + $0x2c] sm:$0xf] %v3039
    %3096 = vst [vmem:[#allocation4 + $0x38] sm:$0xf] %v3040
    %3097 = vst [vmem:[#allocation4 + $0x44] sm:$0xf] %v3041
    %3098 = vst [vmem:[#allocation4 + $0x50] sm:$0xf] %v3042
    %3099 = vst [vmem:[#allocation4 + $0x5c] sm:$0xf] %v3043
    %3100 = vst [vmem:[#allocation4 + $0x68] sm:$0xf] %v3044
    %3101 = vst [vmem:[#allocation4 + $0x74] sm:$0xf] %v3045
    %3102 = vst [vmem:[#allocation4 + $0x80] sm:$0xf] %v3046
    %3103 = vst [vmem:[#allocation4 + $0x8c] sm:$0xf] %v3047
    %3104 = vst [vmem:[#allocation4 + $0x98] sm:$0xf] %v3048
    %3105 = vst [vmem:[#allocation4 + $0xa4] sm:$0xf] %v3049
    %3106 = vst [vmem:[#allocation4 + $0xb0] sm:$0xf] %v3050
    %3107 = vst [vmem:[#allocation4 + $0xbc] sm:$0xf] %v3051
    %3108 = vst [vmem:[#allocation4 + $0xc8] sm:$0xf] %v3052
    %3109 = vst [vmem:[#allocation4 + $0xd4] sm:$0xf] %v3053
    %3110 = vst [vmem:[#allocation4 + $0xe0] sm:$0xf] %v3054
    %3111 = vst [vmem:[#allocation4 + $0xec] sm:$0xf] %v3055
    %3112 = vst [vmem:[#allocation4 + $0xf8] sm:$0xf] %v3056
    %3113 = vst [vmem:[#allocation4 + $0x104] sm:$0xf] %v3057
    %3114 = vst [vmem:[#allocation4 + $0x110] sm:$0xf] %v3058
    %3115 = vst [vmem:[#allocation4 + $0x11c] sm:$0xf] %v3059
    %3116 = vst [vmem:[#allocation4 + $0x128] sm:$0xf] %v3060
    %3117 = vst [vmem:[#allocation4 + $0x134] sm:$0xf] %v3061
    %3118 = vst [vmem:[#allocation4 + $0x140] sm:$0xf] %v3062
    %3119 = vst [vmem:[#allocation4 + $0x14c] sm:$0xf] %v3063
    %3120 = vst [vmem:[#allocation4 + $0x158] sm:$0xf] %v3064
    %3121 = vst [vmem:[#allocation4 + $0x164] sm:$0xf] %v3065
    %3122 = vst [vmem:[#allocation4 + $0x170] sm:$0xf] %v3066
    %3123 = vst [vmem:[#allocation4 + $0x17c] sm:$0xf] %v3067
    %3124 = vst [vmem:[#allocation4 + $0x188] sm:$0xf] %v3068
    %3125 = vst [vmem:[#allocation4 + $0x194] sm:$0xf] %v3069
    %3126 = vst [vmem:[#allocation4 + $0x1a0] sm:$0xf] %v3070
    %3127 = vst [vmem:[#allocation4 + $0x1ac] sm:$0xf] %v3071
    %3128 = vst [vmem:[#allocation4 + $0x1b8] sm:$0xf] %v3072
    %3129 = vst [vmem:[#allocation4 + $0x1c4] sm:$0xf] %v3073
    %3130 = vst [vmem:[#allocation4 + $0x1d0] sm:$0xf] %v3074
    %3131 = vst [vmem:[#allocation4 + $0x1dc] sm:$0xf] %v3075
    %3132 = vst [vmem:[#allocation4 + $0x1e8] sm:$0xf] %v3076
    %3133 = vst [vmem:[#allocation4 + $0x1f4] sm:$0xf] %v3077
    %3134 = vst [vmem:[#allocation4 + $0x200] sm:$0xf] %v3078
    %3135 = vst [vmem:[#allocation4 + $0x20c] sm:$0xf] %v3079
    %3136 = vst [vmem:[#allocation4 + $0x218] sm:$0xf] %v3080
    %3137 = vst [vmem:[#allocation4 + $0x224] sm:$0xf] %v3081
    %3138 = vst [vmem:[#allocation4 + $0x230] sm:$0xf] %v3082
    %3139 = vst [vmem:[#allocation4 + $0x23c] sm:$0xf] %v3083
    %3140 = vst [vmem:[#allocation4 + $0x248] sm:$0xf] %v3084
    %3141 = vst [vmem:[#allocation4 + $0x254] sm:$0xf] %v3085
    %3142 = vst [vmem:[#allocation4 + $0x260] sm:$0xf] %v3086
    %3143 = vst [vmem:[#allocation4 + $0x26c] sm:$0xf] %v3087
    %3144 = vst [vmem:[#allocation4 + $0x278] sm:$0xf] %v3088
    %3145 = vst [vmem:[#allocation4 + $0x284] sm:$0xf] %v3089
    %3146 = vst [vmem:[#allocation4 + $0x290] sm:$0xf] %v3090
    %3147 = vst [vmem:[#allocation4 + $0x29c] sm:$0xf] %v3091
    %v3148 = vld [vmem:[#allocation4] sm:$0xff]
    %v3149 = vld [vmem:[#allocation4 + $0x8] sm:$0xf]
    %v3150 = vld [vmem:[#allocation4 + $0xc] sm:$0xff]
    %v3151 = vld [vmem:[#allocation4 + $0x14] sm:$0xf]
    %v3152 = vld [vmem:[#allocation4 + $0x18] sm:$0xff]
    %v3153 = vld [vmem:[#allocation4 + $0x20] sm:$0xf]
    %v3154 = vld [vmem:[#allocation4 + $0x24] sm:$0xff]
    %v3155 = vld [vmem:[#allocation4 + $0x2c] sm:$0xf]
    %v3156 = vld [vmem:[#allocation4 + $0x30] sm:$0xff]
    %v3157 = vld [vmem:[#allocation4 + $0x38] sm:$0xf]
    %v3158 = vld [vmem:[#allocation4 + $0x3c] sm:$0xff]
    %v3159 = vld [vmem:[#allocation4 + $0x44] sm:$0xf]
    %v3160 = vld [vmem:[#allocation4 + $0x48] sm:$0xff]
    %v3161 = vld [vmem:[#allocation4 + $0x50] sm:$0xf]
    %v3162 = vld [vmem:[#allocation4 + $0x54] sm:$0xff]
    %v3163 = vld [vmem:[#allocation4 + $0x5c] sm:$0xf]
    %v3164 = vld [vmem:[#allocation4 + $0x60] sm:$0xff]
    %v3165 = vld [vmem:[#allocation4 + $0x68] sm:$0xf]
    %v3166 = vld [vmem:[#allocation4 + $0x6c] sm:$0xff]
    %v3167 = vld [vmem:[#allocation4 + $0x74] sm:$0xf]
    %v3168 = vld [vmem:[#allocation4 + $0x78] sm:$0xff]
    %v3169 = vld [vmem:[#allocation4 + $0x80] sm:$0xf]
    %v3170 = vld [vmem:[#allocation4 + $0x84] sm:$0xff]
    %v3171 = vld [vmem:[#allocation4 + $0x8c] sm:$0xf]
    %v3172 = vld [vmem:[#allocation4 + $0x90] sm:$0xff]
    %v3173 = vld [vmem:[#allocation4 + $0x98] sm:$0xf]
    %v3174 = vld [vmem:[#allocation4 + $0x9c] sm:$0xff]
    %v3175 = vld [vmem:[#allocation4 + $0xa4] sm:$0xf]
    %v3176 = vld [vmem:[#allocation4 + $0xa8] sm:$0xff]
    %v3177 = vld [vmem:[#allocation4 + $0xb0] sm:$0xf]
    %v3178 = vld [vmem:[#allocation4 + $0xb4] sm:$0xff]
    %v3179 = vld [vmem:[#allocation4 + $0xbc] sm:$0xf]
    %v3180 = vld [vmem:[#allocation4 + $0xc0] sm:$0xff]
    %v3181 = vld [vmem:[#allocation4 + $0xc8] sm:$0xf]
    %v3182 = vld [vmem:[#allocation4 + $0xcc] sm:$0xff]
    %v3183 = vld [vmem:[#allocation4 + $0xd4] sm:$0xf]
    %v3184 = vld [vmem:[#allocation4 + $0xd8] sm:$0xff]
    %v3185 = vld [vmem:[#allocation4 + $0xe0] sm:$0xf]
    %v3186 = vld [vmem:[#allocation4 + $0xe4] sm:$0xff]
    %v3187 = vld [vmem:[#allocation4 + $0xec] sm:$0xf]
    %v3188 = vld [vmem:[#allocation4 + $0xf0] sm:$0xff]
    %v3189 = vld [vmem:[#allocation4 + $0xf8] sm:$0xf]
    %v3190 = vld [vmem:[#allocation4 + $0xfc] sm:$0xff]
    %v3191 = vld [vmem:[#allocation4 + $0x104] sm:$0xf]
    %v3192 = vld [vmem:[#allocation4 + $0x108] sm:$0xff]
    %v3193 = vld [vmem:[#allocation4 + $0x110] sm:$0xf]
    %v3194 = vld [vmem:[#allocation4 + $0x114] sm:$0xff]
    %v3195 = vld [vmem:[#allocation4 + $0x11c] sm:$0xf]
    %v3196 = vld [vmem:[#allocation4 + $0x120] sm:$0xff]
    %v3197 = vld [vmem:[#allocation4 + $0x128] sm:$0xf]
    %v3198 = vld [vmem:[#allocation4 + $0x12c] sm:$0xff]
    %v3199 = vld [vmem:[#allocation4 + $0x134] sm:$0xf]
    %v3200 = vld [vmem:[#allocation4 + $0x138] sm:$0xff]
    %v3201 = vld [vmem:[#allocation4 + $0x140] sm:$0xf]
    %v3202 = vld [vmem:[#allocation4 + $0x144] sm:$0xff]
    %v3203 = vld [vmem:[#allocation4 + $0x14c] sm:$0xf]
    %v3204 = vld [vmem:[#allocation4 + $0x150] sm:$0xff]
    %v3205 = vld [vmem:[#allocation4 + $0x158] sm:$0xf]
    %v3206 = vld [vmem:[#allocation4 + $0x15c] sm:$0xff]
    %v3207 = vld [vmem:[#allocation4 + $0x164] sm:$0xf]
    %v3208 = vld [vmem:[#allocation4 + $0x168] sm:$0xff]
    %v3209 = vld [vmem:[#allocation4 + $0x170] sm:$0xf]
    %v3210 = vld [vmem:[#allocation4 + $0x174] sm:$0xff]
    %v3211 = vld [vmem:[#allocation4 + $0x17c] sm:$0xf]
    %v3212 = vld [vmem:[#allocation4 + $0x180] sm:$0xff]
    %v3213 = vld [vmem:[#allocation4 + $0x188] sm:$0xf]
    %v3214 = vld [vmem:[#allocation4 + $0x18c] sm:$0xff]
    %v3215 = vld [vmem:[#allocation4 + $0x194] sm:$0xf]
    %v3216 = vld [vmem:[#allocation4 + $0x198] sm:$0xff]
    %v3217 = vld [vmem:[#allocation4 + $0x1a0] sm:$0xf]
    %v3218 = vld [vmem:[#allocation4 + $0x1a4] sm:$0xff]
    %v3219 = vld [vmem:[#allocation4 + $0x1ac] sm:$0xf]
    %v3220 = vld [vmem:[#allocation4 + $0x1b0] sm:$0xff]
    %v3221 = vld [vmem:[#allocation4 + $0x1b8] sm:$0xf]
    %v3222 = vld [vmem:[#allocation4 + $0x1bc] sm:$0xff]
    %v3223 = vld [vmem:[#allocation4 + $0x1c4] sm:$0xf]
    %v3224 = vld [vmem:[#allocation4 + $0x1c8] sm:$0xff]
    %v3225 = vld [vmem:[#allocation4 + $0x1d0] sm:$0xf]
    %v3226 = vld [vmem:[#allocation4 + $0x1d4] sm:$0xff]
    %v3227 = vld [vmem:[#allocation4 + $0x1dc] sm:$0xf]
    %v3228 = vld [vmem:[#allocation4 + $0x1e0] sm:$0xff]
    %v3229 = vld [vmem:[#allocation4 + $0x1e8] sm:$0xf]
    %v3230 = vld [vmem:[#allocation4 + $0x1ec] sm:$0xff]
    %v3231 = vld [vmem:[#allocation4 + $0x1f4] sm:$0xf]
    %v3232 = vld [vmem:[#allocation4 + $0x1f8] sm:$0xff]
    %v3233 = vld [vmem:[#allocation4 + $0x200] sm:$0xf]
    %v3234 = vld [vmem:[#allocation4 + $0x204] sm:$0xff]
    %v3235 = vld [vmem:[#allocation4 + $0x20c] sm:$0xf]
    %v3236 = vld [vmem:[#allocation4 + $0x210] sm:$0xff]
    %v3237 = vld [vmem:[#allocation4 + $0x218] sm:$0xf]
    %v3238 = vld [vmem:[#allocation4 + $0x21c] sm:$0xff]
    %v3239 = vld [vmem:[#allocation4 + $0x224] sm:$0xf]
    %v3240 = vld [vmem:[#allocation4 + $0x228] sm:$0xff]
    %v3241 = vld [vmem:[#allocation4 + $0x230] sm:$0xf]
    %v3242 = vld [vmem:[#allocation4 + $0x234] sm:$0xff]
    %v3243 = vld [vmem:[#allocation4 + $0x23c] sm:$0xf]
    %v3244 = vld [vmem:[#allocation4 + $0x240] sm:$0xff]
    %v3245 = vld [vmem:[#allocation4 + $0x248] sm:$0xf]
    %v3246 = vld [vmem:[#allocation4 + $0x24c] sm:$0xff]
    %v3247 = vld [vmem:[#allocation4 + $0x254] sm:$0xf]
    %v3248 = vld [vmem:[#allocation4 + $0x258] sm:$0xff]
    %v3249 = vld [vmem:[#allocation4 + $0x260] sm:$0xf]
    %v3250 = vld [vmem:[#allocation4 + $0x264] sm:$0xff]
    %v3251 = vld [vmem:[#allocation4 + $0x26c] sm:$0xf]
    %v3252 = vld [vmem:[#allocation4 + $0x270] sm:$0xff]
    %v3253 = vld [vmem:[#allocation4 + $0x278] sm:$0xf]
    %v3254 = vld [vmem:[#allocation4 + $0x27c] sm:$0xff]
    %v3255 = vld [vmem:[#allocation4 + $0x284] sm:$0xf]
    %v3256 = vld [vmem:[#allocation4 + $0x288] sm:$0xff]
    %v3257 = vld [vmem:[#allocation4 + $0x290] sm:$0xf]
    %v3258 = vld [vmem:[#allocation4 + $0x294] sm:$0xff]
    %v3259 = vld [vmem:[#allocation4 + $0x29c] sm:$0xf]
    %v3260 = vld [vmem:[%s3] sm:$0xff]
    %v3261 = vld [vmem:[%s3 + $0x8] sm:$0xff]
    %v3262 = vld [vmem:[%s3 + $0x10] sm:$0xff]
    %v3263 = vld [vmem:[%s3 + $0x18] sm:$0xff]
    %v3264 = vld [vmem:[%s3 + $0x20] sm:$0xff]
    %v3265 = vld [vmem:[%s3 + $0x28] sm:$0xff]
    %v3266 = vld [vmem:[%s3 + $0x30] sm:$0xff]
    %v3267 = vld [vmem:[%s3 + $0x38] sm:$0xff]
    %v3268 = vld [vmem:[%s3 + $0x40] sm:$0xff]
    %v3269 = vld [vmem:[%s3 + $0x48] sm:$0xff]
    %v3270 = vld [vmem:[%s3 + $0x50] sm:$0xff]
    %v3271 = vld [vmem:[%s3 + $0x58] sm:$0xff]
    %v3272 = vld [vmem:[%s3 + $0x60] sm:$0xff]
    %v3273 = vld [vmem:[%s3 + $0x68] sm:$0xff]
    %v3274 = vld [vmem:[%s3 + $0x70] sm:$0xff]
    %v3275 = vld [vmem:[%s3 + $0x78] sm:$0xff]
    %v3276 = vld [vmem:[%s3 + $0x80] sm:$0xff]
    %v3277 = vld [vmem:[%s3 + $0x88] sm:$0xff]
    %v3278 = vld [vmem:[%s3 + $0x90] sm:$0xff]
    %v3279 = vld [vmem:[%s3 + $0x98] sm:$0xff]
    %v3280 = vld [vmem:[%s3 + $0xa0] sm:$0xff]
    %v3281 = vld [vmem:[%s3 + $0xa8] sm:$0xff]
    %v3282 = vld [vmem:[%s3 + $0xb0] sm:$0xff]
    %v3283 = vld [vmem:[%s3 + $0xb8] sm:$0xff]
    %v3284 = vld [vmem:[%s3 + $0xc0] sm:$0xff]
    %v3285 = vld [vmem:[%s3 + $0xc8] sm:$0xff]
    %v3286 = vld [vmem:[%s3 + $0xd0] sm:$0xff]
    %v3287 = vld [vmem:[%s3 + $0xd8] sm:$0xff]
    %v3288 = vld [vmem:[%s3 + $0xe0] sm:$0xff]
    %v3289 = vld [vmem:[%s3 + $0xe8] sm:$0xff]
    %v3290 = vld [vmem:[%s3 + $0xf0] sm:$0xff]
    %v3291 = vld [vmem:[%s3 + $0xf8] sm:$0xff]
    %v3292 = vld [vmem:[%s3 + $0x100] sm:$0xff]
    %v3293 = vld [vmem:[%s3 + $0x108] sm:$0xff]
    %v3294 = vld [vmem:[%s3 + $0x110] sm:$0xff]
    %v3295 = vld [vmem:[%s3 + $0x118] sm:$0xff]
    %v3296 = vld [vmem:[%s3 + $0x120] sm:$0xff]
    %v3297 = vld [vmem:[%s3 + $0x128] sm:$0xff]
    %v3298 = vld [vmem:[%s3 + $0x130] sm:$0xff]
    %v3299 = vld [vmem:[%s3 + $0x138] sm:$0xff]
    %v3300 = vld [vmem:[%s3 + $0x140] sm:$0xff]
    %v3301 = vld [vmem:[%s3 + $0x148] sm:$0xff]
    %v3302 = vld [vmem:[%s3 + $0x150] sm:$0xff]
    %v3303 = vld [vmem:[%s3 + $0x158] sm:$0xff]
    %v3304 = vld [vmem:[%s3 + $0x160] sm:$0xff]
    %v3305 = vld [vmem:[%s3 + $0x168] sm:$0xff]
    %v3306 = vld [vmem:[%s3 + $0x170] sm:$0xff]
    %v3307 = vld [vmem:[%s3 + $0x178] sm:$0xff]
    %v3308 = vld [vmem:[%s4] sm:$0x3]
    %v3310 = vlaneseq
    %v3311 = vshrl.u32 %v3310, 7
    %v3312 = vsub.s32 0, %v3311
    %v3313 = vrot.slane %v3308, %v3312
    %v3314 = vlaneseq
    %v3315 = vshrl.u32 %v3314, 7
    %v3316 = vsub.s32 1, %v3315
    %v3317 = vrot.slane %v3308, %v3316
    %v3432 = vunpack.c.l.b16 %v3148
    %v3433 = vunpack.c.h.b16 %v3148
    %v3434 = vunpack.c.l.b16 %v3149
    %v3435 = vunpack.c.l.b16 %v3150
    %v3436 = vunpack.c.h.b16 %v3150
    %v3437 = vunpack.c.l.b16 %v3151
    %v3438 = vunpack.c.l.b16 %v3152
    %v3439 = vunpack.c.h.b16 %v3152
    %v3440 = vunpack.c.l.b16 %v3153
    %v3441 = vunpack.c.l.b16 %v3154
    %v3442 = vunpack.c.h.b16 %v3154
    %v3443 = vunpack.c.l.b16 %v3155
    %v3444 = vunpack.c.l.b16 %v3156
    %v3445 = vunpack.c.h.b16 %v3156
    %v3446 = vunpack.c.l.b16 %v3157
    %v3447 = vunpack.c.l.b16 %v3158
    %v3448 = vunpack.c.h.b16 %v3158
    %v3449 = vunpack.c.l.b16 %v3159
    %v3450 = vunpack.c.l.b16 %v3160
    %v3451 = vunpack.c.h.b16 %v3160
    %v3452 = vunpack.c.l.b16 %v3161
    %v3453 = vunpack.c.l.b16 %v3162
    %v3454 = vunpack.c.h.b16 %v3162
    %v3455 = vunpack.c.l.b16 %v3163
    %v3456 = vunpack.c.l.b16 %v3164
    %v3457 = vunpack.c.h.b16 %v3164
    %v3458 = vunpack.c.l.b16 %v3165
    %v3459 = vunpack.c.l.b16 %v3166
    %v3460 = vunpack.c.h.b16 %v3166
    %v3461 = vunpack.c.l.b16 %v3167
    %v3462 = vunpack.c.l.b16 %v3168
    %v3463 = vunpack.c.h.b16 %v3168
    %v3464 = vunpack.c.l.b16 %v3169
    %v3465 = vunpack.c.l.b16 %v3170
    %v3466 = vunpack.c.h.b16 %v3170
    %v3467 = vunpack.c.l.b16 %v3171
    %v3468 = vunpack.c.l.b16 %v3172
    %v3469 = vunpack.c.h.b16 %v3172
    %v3470 = vunpack.c.l.b16 %v3173
    %v3471 = vunpack.c.l.b16 %v3174
    %v3472 = vunpack.c.h.b16 %v3174
    %v3473 = vunpack.c.l.b16 %v3175
    %v3474 = vunpack.c.l.b16 %v3176
    %v3475 = vunpack.c.h.b16 %v3176
    %v3476 = vunpack.c.l.b16 %v3177
    %v3477 = vunpack.c.l.b16 %v3178
    %v3478 = vunpack.c.h.b16 %v3178
    %v3479 = vunpack.c.l.b16 %v3179
    %v3480 = vunpack.c.l.b16 %v3180
    %v3481 = vunpack.c.h.b16 %v3180
    %v3482 = vunpack.c.l.b16 %v3181
    %v3483 = vunpack.c.l.b16 %v3182
    %v3484 = vunpack.c.h.b16 %v3182
    %v3485 = vunpack.c.l.b16 %v3183
    %v3486 = vunpack.c.l.b16 %v3184
    %v3487 = vunpack.c.h.b16 %v3184
    %v3488 = vunpack.c.l.b16 %v3185
    %v3489 = vunpack.c.l.b16 %v3186
    %v3490 = vunpack.c.h.b16 %v3186
    %v3491 = vunpack.c.l.b16 %v3187
    %v3492 = vunpack.c.l.b16 %v3188
    %v3493 = vunpack.c.h.b16 %v3188
    %v3494 = vunpack.c.l.b16 %v3189
    %v3495 = vunpack.c.l.b16 %v3190
    %v3496 = vunpack.c.h.b16 %v3190
    %v3497 = vunpack.c.l.b16 %v3191
    %v3498 = vunpack.c.l.b16 %v3192
    %v3499 = vunpack.c.h.b16 %v3192
    %v3500 = vunpack.c.l.b16 %v3193
    %v3501 = vunpack.c.l.b16 %v3194
    %v3502 = vunpack.c.h.b16 %v3194
    %v3503 = vunpack.c.l.b16 %v3195
    %v3504 = vunpack.c.l.b16 %v3196
    %v3505 = vunpack.c.h.b16 %v3196
    %v3506 = vunpack.c.l.b16 %v3197
    %v3507 = vunpack.c.l.b16 %v3198
    %v3508 = vunpack.c.h.b16 %v3198
    %v3509 = vunpack.c.l.b16 %v3199
    %v3510 = vunpack.c.l.b16 %v3200
    %v3511 = vunpack.c.h.b16 %v3200
    %v3512 = vunpack.c.l.b16 %v3201
    %v3513 = vunpack.c.l.b16 %v3202
    %v3514 = vunpack.c.h.b16 %v3202
    %v3515 = vunpack.c.l.b16 %v3203
    %v3516 = vunpack.c.l.b16 %v3204
    %v3517 = vunpack.c.h.b16 %v3204
    %v3518 = vunpack.c.l.b16 %v3205
    %v3519 = vunpack.c.l.b16 %v3206
    %v3520 = vunpack.c.h.b16 %v3206
    %v3521 = vunpack.c.l.b16 %v3207
    %v3522 = vunpack.c.l.b16 %v3208
    %v3523 = vunpack.c.h.b16 %v3208
    %v3524 = vunpack.c.l.b16 %v3209
    %v3525 = vunpack.c.l.b16 %v3210
    %v3526 = vunpack.c.h.b16 %v3210
    %v3527 = vunpack.c.l.b16 %v3211
    %v3528 = vunpack.c.l.b16 %v3212
    %v3529 = vunpack.c.h.b16 %v3212
    %v3530 = vunpack.c.l.b16 %v3213
    %v3531 = vunpack.c.l.b16 %v3214
    %v3532 = vunpack.c.h.b16 %v3214
    %v3533 = vunpack.c.l.b16 %v3215
    %v3534 = vunpack.c.l.b16 %v3216
    %v3535 = vunpack.c.h.b16 %v3216
    %v3536 = vunpack.c.l.b16 %v3217
    %v3537 = vunpack.c.l.b16 %v3218
    %v3538 = vunpack.c.h.b16 %v3218
    %v3539 = vunpack.c.l.b16 %v3219
    %v3540 = vunpack.c.l.b16 %v3220
    %v3541 = vunpack.c.h.b16 %v3220
    %v3542 = vunpack.c.l.b16 %v3221
    %v3543 = vunpack.c.l.b16 %v3222
    %v3544 = vunpack.c.h.b16 %v3222
    %v3545 = vunpack.c.l.b16 %v3223
    %v3546 = vunpack.c.l.b16 %v3224
    %v3547 = vunpack.c.h.b16 %v3224
    %v3548 = vunpack.c.l.b16 %v3225
    %v3549 = vunpack.c.l.b16 %v3226
    %v3550 = vunpack.c.h.b16 %v3226
    %v3551 = vunpack.c.l.b16 %v3227
    %v3552 = vunpack.c.l.b16 %v3228
    %v3553 = vunpack.c.h.b16 %v3228
    %v3554 = vunpack.c.l.b16 %v3229
    %v3555 = vunpack.c.l.b16 %v3230
    %v3556 = vunpack.c.h.b16 %v3230
    %v3557 = vunpack.c.l.b16 %v3231
    %v3558 = vunpack.c.l.b16 %v3232
    %v3559 = vunpack.c.h.b16 %v3232
    %v3560 = vunpack.c.l.b16 %v3233
    %v3561 = vunpack.c.l.b16 %v3234
    %v3562 = vunpack.c.h.b16 %v3234
    %v3563 = vunpack.c.l.b16 %v3235
    %v3564 = vunpack.c.l.b16 %v3236
    %v3565 = vunpack.c.h.b16 %v3236
    %v3566 = vunpack.c.l.b16 %v3237
    %v3567 = vunpack.c.l.b16 %v3238
    %v3568 = vunpack.c.h.b16 %v3238
    %v3569 = vunpack.c.l.b16 %v3239
    %v3570 = vunpack.c.l.b16 %v3240
    %v3571 = vunpack.c.h.b16 %v3240
    %v3572 = vunpack.c.l.b16 %v3241
    %v3573 = vunpack.c.l.b16 %v3242
    %v3574 = vunpack.c.h.b16 %v3242
    %v3575 = vunpack.c.l.b16 %v3243
    %v3576 = vunpack.c.l.b16 %v3244
    %v3577 = vunpack.c.h.b16 %v3244
    %v3578 = vunpack.c.l.b16 %v3245
    %v3579 = vunpack.c.l.b16 %v3246
    %v3580 = vunpack.c.h.b16 %v3246
    %v3581 = vunpack.c.l.b16 %v3247
    %v3582 = vunpack.c.l.b16 %v3248
    %v3583 = vunpack.c.h.b16 %v3248
    %v3584 = vunpack.c.l.b16 %v3249
    %v3585 = vunpack.c.l.b16 %v3250
    %v3586 = vunpack.c.h.b16 %v3250
    %v3587 = vunpack.c.l.b16 %v3251
    %v3588 = vunpack.c.l.b16 %v3252
    %v3589 = vunpack.c.h.b16 %v3252
    %v3590 = vunpack.c.l.b16 %v3253
    %v3591 = vunpack.c.l.b16 %v3254
    %v3592 = vunpack.c.h.b16 %v3254
    %v3593 = vunpack.c.l.b16 %v3255
    %v3594 = vunpack.c.l.b16 %v3256
    %v3595 = vunpack.c.h.b16 %v3256
    %v3596 = vunpack.c.l.b16 %v3257
    %v3597 = vunpack.c.l.b16 %v3258
    %v3598 = vunpack.c.h.b16 %v3258
    %v3599 = vunpack.c.l.b16 %v3259
    %v3600 = vpack.c.b16 %v3435, %v3432
    %v3601 = vpack.c.b16 %v3436, %v3433
    %v3602 = vpack.c.b16 %v3437, %v3434
    %v3603 = vpack.c.b16 %v3441, %v3438
    %v3604 = vpack.c.b16 %v3442, %v3439
    %v3605 = vpack.c.b16 %v3443, %v3440
    %v3606 = vpack.c.b16 %v3447, %v3444
    %v3607 = vpack.c.b16 %v3448, %v3445
    %v3608 = vpack.c.b16 %v3449, %v3446
    %v3609 = vpack.c.b16 %v3453, %v3450
    %v3610 = vpack.c.b16 %v3454, %v3451
    %v3611 = vpack.c.b16 %v3455, %v3452
    %v3612 = vpack.c.b16 %v3459, %v3456
    %v3613 = vpack.c.b16 %v3460, %v3457
    %v3614 = vpack.c.b16 %v3461, %v3458
    %v3615 = vpack.c.b16 %v3465, %v3462
    %v3616 = vpack.c.b16 %v3466, %v3463
    %v3617 = vpack.c.b16 %v3467, %v3464
    %v3618 = vpack.c.b16 %v3471, %v3468
    %v3619 = vpack.c.b16 %v3472, %v3469
    %v3620 = vpack.c.b16 %v3473, %v3470
    %v3621 = vpack.c.b16 %v3477, %v3474
    %v3622 = vpack.c.b16 %v3478, %v3475
    %v3623 = vpack.c.b16 %v3479, %v3476
    %v3624 = vpack.c.b16 %v3483, %v3480
    %v3625 = vpack.c.b16 %v3484, %v3481
    %v3626 = vpack.c.b16 %v3485, %v3482
    %v3627 = vpack.c.b16 %v3489, %v3486
    %v3628 = vpack.c.b16 %v3490, %v3487
    %v3629 = vpack.c.b16 %v3491, %v3488
    %v3630 = vpack.c.b16 %v3495, %v3492
    %v3631 = vpack.c.b16 %v3496, %v3493
    %v3632 = vpack.c.b16 %v3497, %v3494
    %v3633 = vpack.c.b16 %v3501, %v3498
    %v3634 = vpack.c.b16 %v3502, %v3499
    %v3635 = vpack.c.b16 %v3503, %v3500
    %v3636 = vpack.c.b16 %v3507, %v3504
    %v3637 = vpack.c.b16 %v3508, %v3505
    %v3638 = vpack.c.b16 %v3509, %v3506
    %v3639 = vpack.c.b16 %v3513, %v3510
    %v3640 = vpack.c.b16 %v3514, %v3511
    %v3641 = vpack.c.b16 %v3515, %v3512
    %v3642 = vpack.c.b16 %v3519, %v3516
    %v3643 = vpack.c.b16 %v3520, %v3517
    %v3644 = vpack.c.b16 %v3521, %v3518
    %v3645 = vpack.c.b16 %v3525, %v3522
    %v3646 = vpack.c.b16 %v3526, %v3523
    %v3647 = vpack.c.b16 %v3527, %v3524
    %v3648 = vpack.c.b16 %v3531, %v3528
    %v3649 = vpack.c.b16 %v3532, %v3529
    %v3650 = vpack.c.b16 %v3533, %v3530
    %v3651 = vpack.c.b16 %v3537, %v3534
    %v3652 = vpack.c.b16 %v3538, %v3535
    %v3653 = vpack.c.b16 %v3539, %v3536
    %v3654 = vpack.c.b16 %v3543, %v3540
    %v3655 = vpack.c.b16 %v3544, %v3541
    %v3656 = vpack.c.b16 %v3545, %v3542
    %v3657 = vpack.c.b16 %v3549, %v3546
    %v3658 = vpack.c.b16 %v3550, %v3547
    %v3659 = vpack.c.b16 %v3551, %v3548
    %v3660 = vpack.c.b16 %v3555, %v3552
    %v3661 = vpack.c.b16 %v3556, %v3553
    %v3662 = vpack.c.b16 %v3557, %v3554
    %v3663 = vpack.c.b16 %v3561, %v3558
    %v3664 = vpack.c.b16 %v3562, %v3559
    %v3665 = vpack.c.b16 %v3563, %v3560
    %v3666 = vpack.c.b16 %v3567, %v3564
    %v3667 = vpack.c.b16 %v3568, %v3565
    %v3668 = vpack.c.b16 %v3569, %v3566
    %v3669 = vpack.c.b16 %v3573, %v3570
    %v3670 = vpack.c.b16 %v3574, %v3571
    %v3671 = vpack.c.b16 %v3575, %v3572
    %v3672 = vpack.c.b16 %v3579, %v3576
    %v3673 = vpack.c.b16 %v3580, %v3577
    %v3674 = vpack.c.b16 %v3581, %v3578
    %v3675 = vpack.c.b16 %v3585, %v3582
    %v3676 = vpack.c.b16 %v3586, %v3583
    %v3677 = vpack.c.b16 %v3587, %v3584
    %v3678 = vpack.c.b16 %v3591, %v3588
    %v3679 = vpack.c.b16 %v3592, %v3589
    %v3680 = vpack.c.b16 %v3593, %v3590
    %v3681 = vpack.c.b16 %v3597, %v3594
    %v3682 = vpack.c.b16 %v3598, %v3595
    %v3683 = vpack.c.b16 %v3599, %v3596
    %v3816 = vunpack.c.l.b16 %v3260
    %v3817 = vunpack.c.h.b16 %v3260
    %v3818 = vunpack.c.l.b16 %v3261
    %v3819 = vunpack.c.h.b16 %v3261
    %v3820 = vunpack.c.l.b16 %v3262
    %v3821 = vunpack.c.h.b16 %v3262
    %v3822 = vunpack.c.l.b16 %v3263
    %v3823 = vunpack.c.h.b16 %v3263
    %v3824 = vunpack.c.l.b16 %v3264
    %v3825 = vunpack.c.h.b16 %v3264
    %v3826 = vunpack.c.l.b16 %v3265
    %v3827 = vunpack.c.h.b16 %v3265
    %v3828 = vunpack.c.l.b16 %v3266
    %v3829 = vunpack.c.h.b16 %v3266
    %v3830 = vunpack.c.l.b16 %v3267
    %v3831 = vunpack.c.h.b16 %v3267
    %v3832 = vunpack.c.l.b16 %v3268
    %v3833 = vunpack.c.h.b16 %v3268
    %v3834 = vunpack.c.l.b16 %v3269
    %v3835 = vunpack.c.h.b16 %v3269
    %v3836 = vunpack.c.l.b16 %v3270
    %v3837 = vunpack.c.h.b16 %v3270
    %v3838 = vunpack.c.l.b16 %v3271
    %v3839 = vunpack.c.h.b16 %v3271
    %v3840 = vunpack.c.l.b16 %v3272
    %v3841 = vunpack.c.h.b16 %v3272
    %v3842 = vunpack.c.l.b16 %v3273
    %v3843 = vunpack.c.h.b16 %v3273
    %v3844 = vunpack.c.l.b16 %v3274
    %v3845 = vunpack.c.h.b16 %v3274
    %v3846 = vunpack.c.l.b16 %v3275
    %v3847 = vunpack.c.h.b16 %v3275
    %v3848 = vunpack.c.l.b16 %v3276
    %v3849 = vunpack.c.h.b16 %v3276
    %v3850 = vunpack.c.l.b16 %v3277
    %v3851 = vunpack.c.h.b16 %v3277
    %v3852 = vunpack.c.l.b16 %v3278
    %v3853 = vunpack.c.h.b16 %v3278
    %v3854 = vunpack.c.l.b16 %v3279
    %v3855 = vunpack.c.h.b16 %v3279
    %v3856 = vunpack.c.l.b16 %v3280
    %v3857 = vunpack.c.h.b16 %v3280
    %v3858 = vunpack.c.l.b16 %v3281
    %v3859 = vunpack.c.h.b16 %v3281
    %v3860 = vunpack.c.l.b16 %v3282
    %v3861 = vunpack.c.h.b16 %v3282
    %v3862 = vunpack.c.l.b16 %v3283
    %v3863 = vunpack.c.h.b16 %v3283
    %v3864 = vunpack.c.l.b16 %v3284
    %v3865 = vunpack.c.h.b16 %v3284
    %v3866 = vunpack.c.l.b16 %v3285
    %v3867 = vunpack.c.h.b16 %v3285
    %v3868 = vunpack.c.l.b16 %v3286
    %v3869 = vunpack.c.h.b16 %v3286
    %v3870 = vunpack.c.l.b16 %v3287
    %v3871 = vunpack.c.h.b16 %v3287
    %v3872 = vunpack.c.l.b16 %v3288
    %v3873 = vunpack.c.h.b16 %v3288
    %v3874 = vunpack.c.l.b16 %v3289
    %v3875 = vunpack.c.h.b16 %v3289
    %v3876 = vunpack.c.l.b16 %v3290
    %v3877 = vunpack.c.h.b16 %v3290
    %v3878 = vunpack.c.l.b16 %v3291
    %v3879 = vunpack.c.h.b16 %v3291
    %v3880 = vunpack.c.l.b16 %v3292
    %v3881 = vunpack.c.h.b16 %v3292
    %v3882 = vunpack.c.l.b16 %v3293
    %v3883 = vunpack.c.h.b16 %v3293
    %v3884 = vunpack.c.l.b16 %v3294
    %v3885 = vunpack.c.h.b16 %v3294
    %v3886 = vunpack.c.l.b16 %v3295
    %v3887 = vunpack.c.h.b16 %v3295
    %v3888 = vunpack.c.l.b16 %v3296
    %v3889 = vunpack.c.h.b16 %v3296
    %v3890 = vunpack.c.l.b16 %v3297
    %v3891 = vunpack.c.h.b16 %v3297
    %v3892 = vunpack.c.l.b16 %v3298
    %v3893 = vunpack.c.h.b16 %v3298
    %v3894 = vunpack.c.l.b16 %v3299
    %v3895 = vunpack.c.h.b16 %v3299
    %v3896 = vunpack.c.l.b16 %v3300
    %v3897 = vunpack.c.h.b16 %v3300
    %v3898 = vunpack.c.l.b16 %v3301
    %v3899 = vunpack.c.h.b16 %v3301
    %v3900 = vunpack.c.l.b16 %v3302
    %v3901 = vunpack.c.h.b16 %v3302
    %v3902 = vunpack.c.l.b16 %v3303
    %v3903 = vunpack.c.h.b16 %v3303
    %v3904 = vunpack.c.l.b16 %v3304
    %v3905 = vunpack.c.h.b16 %v3304
    %v3906 = vunpack.c.l.b16 %v3305
    %v3907 = vunpack.c.h.b16 %v3305
    %v3908 = vunpack.c.l.b16 %v3306
    %v3909 = vunpack.c.h.b16 %v3306
    %v3910 = vunpack.c.l.b16 %v3307
    %v3911 = vunpack.c.h.b16 %v3307
    %v3912 = vpack.c.b16 %v3818, %v3816
    %v3913 = vpack.c.b16 %v3819, %v3817
    %v3914 = vpack.c.b16 %v3822, %v3820
    %v3915 = vpack.c.b16 %v3823, %v3821
    %v3916 = vpack.c.b16 %v3826, %v3824
    %v3917 = vpack.c.b16 %v3827, %v3825
    %v3918 = vpack.c.b16 %v3830, %v3828
    %v3919 = vpack.c.b16 %v3831, %v3829
    %v3920 = vpack.c.b16 %v3834, %v3832
    %v3921 = vpack.c.b16 %v3835, %v3833
    %v3922 = vpack.c.b16 %v3838, %v3836
    %v3923 = vpack.c.b16 %v3839, %v3837
    %v3924 = vpack.c.b16 %v3842, %v3840
    %v3925 = vpack.c.b16 %v3843, %v3841
    %v3926 = vpack.c.b16 %v3846, %v3844
    %v3927 = vpack.c.b16 %v3847, %v3845
    %v3928 = vpack.c.b16 %v3850, %v3848
    %v3929 = vpack.c.b16 %v3851, %v3849
    %v3930 = vpack.c.b16 %v3854, %v3852
    %v3931 = vpack.c.b16 %v3855, %v3853
    %v3932 = vpack.c.b16 %v3858, %v3856
    %v3933 = vpack.c.b16 %v3859, %v3857
    %v3934 = vpack.c.b16 %v3862, %v3860
    %v3935 = vpack.c.b16 %v3863, %v3861
    %v3936 = vpack.c.b16 %v3866, %v3864
    %v3937 = vpack.c.b16 %v3867, %v3865
    %v3938 = vpack.c.b16 %v3870, %v3868
    %v3939 = vpack.c.b16 %v3871, %v3869
    %v3940 = vpack.c.b16 %v3874, %v3872
    %v3941 = vpack.c.b16 %v3875, %v3873
    %v3942 = vpack.c.b16 %v3878, %v3876
    %v3943 = vpack.c.b16 %v3879, %v3877
    %v3944 = vpack.c.b16 %v3882, %v3880
    %v3945 = vpack.c.b16 %v3883, %v3881
    %v3946 = vpack.c.b16 %v3886, %v3884
    %v3947 = vpack.c.b16 %v3887, %v3885
    %v3948 = vpack.c.b16 %v3890, %v3888
    %v3949 = vpack.c.b16 %v3891, %v3889
    %v3950 = vpack.c.b16 %v3894, %v3892
    %v3951 = vpack.c.b16 %v3895, %v3893
    %v3952 = vpack.c.b16 %v3898, %v3896
    %v3953 = vpack.c.b16 %v3899, %v3897
    %v3954 = vpack.c.b16 %v3902, %v3900
    %v3955 = vpack.c.b16 %v3903, %v3901
    %v3956 = vpack.c.b16 %v3906, %v3904
    %v3957 = vpack.c.b16 %v3907, %v3905
    %v3958 = vpack.c.b16 %v3910, %v3908
    %v3959 = vpack.c.b16 %v3911, %v3909
    %4008 = vmatprep.subr.bf16.mxu0 %v3927
    %4009 = vmatpush1.bf16.msra.mxu0 %v3926
    %4010 = vmatprep.subr.bf16.mxu0 %v3925
    %4011 = vmatpush1.bf16.msra.mxu0 %v3924
    %4012 = vmatprep.subr.bf16.mxu0 %v3923
    %4013 = vmatpush1.bf16.msra.mxu0 %v3922
    %4014 = vmatprep.subr.bf16.mxu0 %v3921
    %4015 = vmatpush1.bf16.msra.mxu0 %v3920
    %4016 = vmatprep.subr.bf16.mxu0 %v3919
    %4017 = vmatpush1.bf16.msra.mxu0 %v3918
    %4018 = vmatprep.subr.bf16.mxu0 %v3917
    %4019 = vmatpush1.bf16.msra.mxu0 %v3916
    %4020 = vmatprep.subr.bf16.mxu0 %v3915
    %4021 = vmatpush1.bf16.msra.mxu0 %v3914
    %4022 = vmatprep.subr.bf16.mxu0 %v3913
    %4023 = vmatpush1.bf16.msra.mxu0 %v3912
    %4024 = vmatprep.subr.bf16.mxu0 %v3943
    %4025 = vmatpush2.bf16.msra.mxu0 %v3942
    %4026 = vmatprep.subr.bf16.mxu0 %v3941
    %4027 = vmatpush2.bf16.msra.mxu0 %v3940
    %4028 = vmatprep.subr.bf16.mxu0 %v3939
    %4029 = vmatpush2.bf16.msra.mxu0 %v3938
    %4030 = vmatprep.subr.bf16.mxu0 %v3937
    %4031 = vmatpush2.bf16.msra.mxu0 %v3936
    %4032 = vmatprep.subr.bf16.mxu0 %v3935
    %4033 = vmatpush2.bf16.msra.mxu0 %v3934
    %4034 = vmatprep.subr.bf16.mxu0 %v3933
    %4035 = vmatpush2.bf16.msra.mxu0 %v3932
    %4036 = vmatprep.subr.bf16.mxu0 %v3931
    %4037 = vmatpush2.bf16.msra.mxu0 %v3930
    %4038 = vmatprep.subr.bf16.mxu0 %v3929
    %4039 = vmatpush2.bf16.msra.mxu0 %v3928
    %4040 = vmatprep.mubr.bf16.mxu0 %v3601
    %4041 = vmatmul.mubr.bf16.gmra.mxu0 %v3600
    %v4042 = vpop.f32.mrf.mxu0
    %v4043 = vadd.f32 %v3313, %v4042
    %v4044 = vpop.f32.mrf.mxu0
    %v4045 = vadd.f32 %v3317, %v4044
    %v4046 = vpop.f32.mrf.mxu0
    %v4047 = vadd.f32 %v3313, %v4046
    %v4048 = vpop.f32.mrf.mxu0
    %v4049 = vadd.f32 %v3317, %v4048
    %4050 = vmatprep.mubr.bf16.mxu0 %v3604
    %4051 = vmatmul.mubr.bf16.gmra.mxu0 %v3603
    %v4052 = vpop.f32.mrf.mxu0
    %v4053 = vadd.f32 %v3313, %v4052
    %v4054 = vpop.f32.mrf.mxu0
    %v4055 = vadd.f32 %v3317, %v4054
    %v4056 = vpop.f32.mrf.mxu0
    %v4057 = vadd.f32 %v3313, %v4056
    %v4058 = vpop.f32.mrf.mxu0
    %v4059 = vadd.f32 %v3317, %v4058
    %4060 = vmatprep.mubr.bf16.mxu0 %v3607
    %4061 = vmatmul.mubr.bf16.gmra.mxu0 %v3606
    %v4062 = vpop.f32.mrf.mxu0
    %v4063 = vadd.f32 %v3313, %v4062
    %v4064 = vpop.f32.mrf.mxu0
    %v4065 = vadd.f32 %v3317, %v4064
    %v4066 = vpop.f32.mrf.mxu0
    %v4067 = vadd.f32 %v3313, %v4066
    %v4068 = vpop.f32.mrf.mxu0
    %v4069 = vadd.f32 %v3317, %v4068
    %4070 = vmatprep.mubr.bf16.mxu0 %v3610
    %4071 = vmatmul.mubr.bf16.gmra.mxu0 %v3609
    %v4072 = vpop.f32.mrf.mxu0
    %v4073 = vadd.f32 %v3313, %v4072
    %v4074 = vpop.f32.mrf.mxu0
    %v4075 = vadd.f32 %v3317, %v4074
    %v4076 = vpop.f32.mrf.mxu0
    %v4077 = vadd.f32 %v3313, %v4076
    %v4078 = vpop.f32.mrf.mxu0
    %v4079 = vadd.f32 %v3317, %v4078
    %4080 = vmatprep.mubr.bf16.mxu0 %v3613
    %4081 = vmatmul.mubr.bf16.gmra.mxu0 %v3612
    %v4082 = vpop.f32.mrf.mxu0
    %v4083 = vadd.f32 %v3313, %v4082
    %v4084 = vpop.f32.mrf.mxu0
    %v4085 = vadd.f32 %v3317, %v4084
    %v4086 = vpop.f32.mrf.mxu0
    %v4087 = vadd.f32 %v3313, %v4086
    %v4088 = vpop.f32.mrf.mxu0
    %v4089 = vadd.f32 %v3317, %v4088
    %4090 = vmatprep.mubr.bf16.mxu0 %v3616
    %4091 = vmatmul.mubr.bf16.gmra.mxu0 %v3615
    %v4092 = vpop.f32.mrf.mxu0
    %v4093 = vadd.f32 %v3313, %v4092
    %v4094 = vpop.f32.mrf.mxu0
    %v4095 = vadd.f32 %v3317, %v4094
    %v4096 = vpop.f32.mrf.mxu0
    %v4097 = vadd.f32 %v3313, %v4096
    %v4098 = vpop.f32.mrf.mxu0
    %v4099 = vadd.f32 %v3317, %v4098
    %4100 = vmatprep.mubr.bf16.mxu0 %v3619
    %4101 = vmatmul.mubr.bf16.gmra.mxu0 %v3618
    %v4102 = vpop.f32.mrf.mxu0
    %v4103 = vadd.f32 %v3313, %v4102
    %v4104 = vpop.f32.mrf.mxu0
    %v4105 = vadd.f32 %v3317, %v4104
    %v4106 = vpop.f32.mrf.mxu0
    %v4107 = vadd.f32 %v3313, %v4106
    %v4108 = vpop.f32.mrf.mxu0
    %v4109 = vadd.f32 %v3317, %v4108
    %4110 = vmatprep.mubr.bf16.mxu0 %v3622
    %4111 = vmatmul.mubr.bf16.gmra.mxu0 %v3621
    %v4112 = vpop.f32.mrf.mxu0
    %v4113 = vadd.f32 %v3313, %v4112
    %v4114 = vpop.f32.mrf.mxu0
    %v4115 = vadd.f32 %v3317, %v4114
    %v4116 = vpop.f32.mrf.mxu0
    %v4117 = vadd.f32 %v3313, %v4116
    %v4118 = vpop.f32.mrf.mxu0
    %v4119 = vadd.f32 %v3317, %v4118
    %4120 = vmatprep.mubr.bf16.mxu0 %v3625
    %4121 = vmatmul.mubr.bf16.gmra.mxu0 %v3624
    %v4122 = vpop.f32.mrf.mxu0
    %v4123 = vadd.f32 %v3313, %v4122
    %v4124 = vpop.f32.mrf.mxu0
    %v4125 = vadd.f32 %v3317, %v4124
    %v4126 = vpop.f32.mrf.mxu0
    %v4127 = vadd.f32 %v3313, %v4126
    %v4128 = vpop.f32.mrf.mxu0
    %v4129 = vadd.f32 %v3317, %v4128
    %4130 = vmatprep.mubr.bf16.mxu0 %v3628
    %4131 = vmatmul.mubr.bf16.gmra.mxu0 %v3627
    %v4132 = vpop.f32.mrf.mxu0
    %v4133 = vadd.f32 %v3313, %v4132
    %v4134 = vpop.f32.mrf.mxu0
    %v4135 = vadd.f32 %v3317, %v4134
    %v4136 = vpop.f32.mrf.mxu0
    %v4137 = vadd.f32 %v3313, %v4136
    %v4138 = vpop.f32.mrf.mxu0
    %v4139 = vadd.f32 %v3317, %v4138
    %4140 = vmatprep.mubr.bf16.mxu0 %v3631
    %4141 = vmatmul.mubr.bf16.gmra.mxu0 %v3630
    %v4142 = vpop.f32.mrf.mxu0
    %v4143 = vadd.f32 %v3313, %v4142
    %v4144 = vpop.f32.mrf.mxu0
    %v4145 = vadd.f32 %v3317, %v4144
    %v4146 = vpop.f32.mrf.mxu0
    %v4147 = vadd.f32 %v3313, %v4146
    %v4148 = vpop.f32.mrf.mxu0
    %v4149 = vadd.f32 %v3317, %v4148
    %4150 = vmatprep.mubr.bf16.mxu0 %v3634
    %4151 = vmatmul.mubr.bf16.gmra.mxu0 %v3633
    %v4152 = vpop.f32.mrf.mxu0
    %v4153 = vadd.f32 %v3313, %v4152
    %v4154 = vpop.f32.mrf.mxu0
    %v4155 = vadd.f32 %v3317, %v4154
    %v4156 = vpop.f32.mrf.mxu0
    %v4157 = vadd.f32 %v3313, %v4156
    %v4158 = vpop.f32.mrf.mxu0
    %v4159 = vadd.f32 %v3317, %v4158
    %4160 = vmatprep.mubr.bf16.mxu0 %v3637
    %4161 = vmatmul.mubr.bf16.gmra.mxu0 %v3636
    %v4162 = vpop.f32.mrf.mxu0
    %v4163 = vadd.f32 %v3313, %v4162
    %v4164 = vpop.f32.mrf.mxu0
    %v4165 = vadd.f32 %v3317, %v4164
    %v4166 = vpop.f32.mrf.mxu0
    %v4167 = vadd.f32 %v3313, %v4166
    %v4168 = vpop.f32.mrf.mxu0
    %v4169 = vadd.f32 %v3317, %v4168
    %4170 = vmatprep.mubr.bf16.mxu0 %v3640
    %4171 = vmatmul.mubr.bf16.gmra.mxu0 %v3639
    %v4172 = vpop.f32.mrf.mxu0
    %v4173 = vadd.f32 %v3313, %v4172
    %v4174 = vpop.f32.mrf.mxu0
    %v4175 = vadd.f32 %v3317, %v4174
    %v4176 = vpop.f32.mrf.mxu0
    %v4177 = vadd.f32 %v3313, %v4176
    %v4178 = vpop.f32.mrf.mxu0
    %v4179 = vadd.f32 %v3317, %v4178
    %4180 = vmatprep.mubr.bf16.mxu0 %v3643
    %4181 = vmatmul.mubr.bf16.gmra.mxu0 %v3642
    %v4182 = vpop.f32.mrf.mxu0
    %v4183 = vadd.f32 %v3313, %v4182
    %v4184 = vpop.f32.mrf.mxu0
    %v4185 = vadd.f32 %v3317, %v4184
    %v4186 = vpop.f32.mrf.mxu0
    %v4187 = vadd.f32 %v3313, %v4186
    %v4188 = vpop.f32.mrf.mxu0
    %v4189 = vadd.f32 %v3317, %v4188
    %4190 = vmatprep.mubr.bf16.mxu0 %v3646
    %4191 = vmatmul.mubr.bf16.gmra.mxu0 %v3645
    %v4192 = vpop.f32.mrf.mxu0
    %v4193 = vadd.f32 %v3313, %v4192
    %v4194 = vpop.f32.mrf.mxu0
    %v4195 = vadd.f32 %v3317, %v4194
    %v4196 = vpop.f32.mrf.mxu0
    %v4197 = vadd.f32 %v3313, %v4196
    %v4198 = vpop.f32.mrf.mxu0
    %v4199 = vadd.f32 %v3317, %v4198
    %4200 = vmatprep.mubr.bf16.mxu0 %v3649
    %4201 = vmatmul.mubr.bf16.gmra.mxu0 %v3648
    %v4202 = vpop.f32.mrf.mxu0
    %v4203 = vadd.f32 %v3313, %v4202
    %v4204 = vpop.f32.mrf.mxu0
    %v4205 = vadd.f32 %v3317, %v4204
    %v4206 = vpop.f32.mrf.mxu0
    %v4207 = vadd.f32 %v3313, %v4206
    %v4208 = vpop.f32.mrf.mxu0
    %v4209 = vadd.f32 %v3317, %v4208
    %4210 = vmatprep.mubr.bf16.mxu0 %v3652
    %4211 = vmatmul.mubr.bf16.gmra.mxu0 %v3651
    %v4212 = vpop.f32.mrf.mxu0
    %v4213 = vadd.f32 %v3313, %v4212
    %v4214 = vpop.f32.mrf.mxu0
    %v4215 = vadd.f32 %v3317, %v4214
    %v4216 = vpop.f32.mrf.mxu0
    %v4217 = vadd.f32 %v3313, %v4216
    %v4218 = vpop.f32.mrf.mxu0
    %v4219 = vadd.f32 %v3317, %v4218
    %4220 = vmatprep.mubr.bf16.mxu0 %v3655
    %4221 = vmatmul.mubr.bf16.gmra.mxu0 %v3654
    %v4222 = vpop.f32.mrf.mxu0
    %v4223 = vadd.f32 %v3313, %v4222
    %v4224 = vpop.f32.mrf.mxu0
    %v4225 = vadd.f32 %v3317, %v4224
    %v4226 = vpop.f32.mrf.mxu0
    %v4227 = vadd.f32 %v3313, %v4226
    %v4228 = vpop.f32.mrf.mxu0
    %v4229 = vadd.f32 %v3317, %v4228
    %4230 = vmatprep.mubr.bf16.mxu0 %v3658
    %4231 = vmatmul.mubr.bf16.gmra.mxu0 %v3657
    %v4232 = vpop.f32.mrf.mxu0
    %v4233 = vadd.f32 %v3313, %v4232
    %v4234 = vpop.f32.mrf.mxu0
    %v4235 = vadd.f32 %v3317, %v4234
    %v4236 = vpop.f32.mrf.mxu0
    %v4237 = vadd.f32 %v3313, %v4236
    %v4238 = vpop.f32.mrf.mxu0
    %v4239 = vadd.f32 %v3317, %v4238
    %4240 = vmatprep.mubr.bf16.mxu0 %v3661
    %4241 = vmatmul.mubr.bf16.gmra.mxu0 %v3660
    %v4242 = vpop.f32.mrf.mxu0
    %v4243 = vadd.f32 %v3313, %v4242
    %v4244 = vpop.f32.mrf.mxu0
    %v4245 = vadd.f32 %v3317, %v4244
    %v4246 = vpop.f32.mrf.mxu0
    %v4247 = vadd.f32 %v3313, %v4246
    %v4248 = vpop.f32.mrf.mxu0
    %v4249 = vadd.f32 %v3317, %v4248
    %4250 = vmatprep.mubr.bf16.mxu0 %v3664
    %4251 = vmatmul.mubr.bf16.gmra.mxu0 %v3663
    %v4252 = vpop.f32.mrf.mxu0
    %v4253 = vadd.f32 %v3313, %v4252
    %v4254 = vpop.f32.mrf.mxu0
    %v4255 = vadd.f32 %v3317, %v4254
    %v4256 = vpop.f32.mrf.mxu0
    %v4257 = vadd.f32 %v3313, %v4256
    %v4258 = vpop.f32.mrf.mxu0
    %v4259 = vadd.f32 %v3317, %v4258
    %4260 = vmatprep.mubr.bf16.mxu0 %v3667
    %4261 = vmatmul.mubr.bf16.gmra.mxu0 %v3666
    %v4262 = vpop.f32.mrf.mxu0
    %v4263 = vadd.f32 %v3313, %v4262
    %v4264 = vpop.f32.mrf.mxu0
    %v4265 = vadd.f32 %v3317, %v4264
    %v4266 = vpop.f32.mrf.mxu0
    %v4267 = vadd.f32 %v3313, %v4266
    %v4268 = vpop.f32.mrf.mxu0
    %v4269 = vadd.f32 %v3317, %v4268
    %4270 = vmatprep.mubr.bf16.mxu0 %v3670
    %4271 = vmatmul.mubr.bf16.gmra.mxu0 %v3669
    %v4272 = vpop.f32.mrf.mxu0
    %v4273 = vadd.f32 %v3313, %v4272
    %v4274 = vpop.f32.mrf.mxu0
    %v4275 = vadd.f32 %v3317, %v4274
    %v4276 = vpop.f32.mrf.mxu0
    %v4277 = vadd.f32 %v3313, %v4276
    %v4278 = vpop.f32.mrf.mxu0
    %v4279 = vadd.f32 %v3317, %v4278
    %4280 = vmatprep.mubr.bf16.mxu0 %v3673
    %4281 = vmatmul.mubr.bf16.gmra.mxu0 %v3672
    %v4282 = vpop.f32.mrf.mxu0
    %v4283 = vadd.f32 %v3313, %v4282
    %v4284 = vpop.f32.mrf.mxu0
    %v4285 = vadd.f32 %v3317, %v4284
    %v4286 = vpop.f32.mrf.mxu0
    %v4287 = vadd.f32 %v3313, %v4286
    %v4288 = vpop.f32.mrf.mxu0
    %v4289 = vadd.f32 %v3317, %v4288
    %4290 = vmatprep.mubr.bf16.mxu0 %v3676
    %4291 = vmatmul.mubr.bf16.gmra.mxu0 %v3675
    %v4292 = vpop.f32.mrf.mxu0
    %v4293 = vadd.f32 %v3313, %v4292
    %v4294 = vpop.f32.mrf.mxu0
    %v4295 = vadd.f32 %v3317, %v4294
    %v4296 = vpop.f32.mrf.mxu0
    %v4297 = vadd.f32 %v3313, %v4296
    %v4298 = vpop.f32.mrf.mxu0
    %v4299 = vadd.f32 %v3317, %v4298
    %4300 = vmatprep.mubr.bf16.mxu0 %v3679
    %4301 = vmatmul.mubr.bf16.gmra.mxu0 %v3678
    %v4302 = vpop.f32.mrf.mxu0
    %v4303 = vadd.f32 %v3313, %v4302
    %v4304 = vpop.f32.mrf.mxu0
    %v4305 = vadd.f32 %v3317, %v4304
    %v4306 = vpop.f32.mrf.mxu0
    %v4307 = vadd.f32 %v3313, %v4306
    %v4308 = vpop.f32.mrf.mxu0
    %v4309 = vadd.f32 %v3317, %v4308
    %4310 = vmatprep.mubr.bf16.mxu0 %v3682
    %4311 = vmatmul.mubr.bf16.gmra.mxu0 %v3681
    %v4312 = vpop.f32.mrf.mxu0
    %v4313 = vadd.f32 %v3313, %v4312
    %v4314 = vpop.f32.mrf.mxu0
    %v4315 = vadd.f32 %v3317, %v4314
    %v4316 = vpop.f32.mrf.mxu0
    %v4317 = vadd.f32 %v3313, %v4316
    %v4318 = vpop.f32.mrf.mxu0
    %v4319 = vadd.f32 %v3317, %v4318
    %4320 = vdwg.mxu0
    %4321 = vmatprep.subr.bf16.mxu0 %v3959
    %4322 = vmatpush1.bf16.msra.mxu0 %v3958
    %4323 = vmatprep.subr.bf16.mxu0 %v3957
    %4324 = vmatpush1.bf16.msra.mxu0 %v3956
    %4325 = vmatprep.subr.bf16.mxu0 %v3955
    %4326 = vmatpush1.bf16.msra.mxu0 %v3954
    %4327 = vmatprep.subr.bf16.mxu0 %v3953
    %4328 = vmatpush1.bf16.msra.mxu0 %v3952
    %4329 = vmatprep.subr.bf16.mxu0 %v3951
    %4330 = vmatpush1.bf16.msra.mxu0 %v3950
    %4331 = vmatprep.subr.bf16.mxu0 %v3949
    %4332 = vmatpush1.bf16.msra.mxu0 %v3948
    %4333 = vmatprep.subr.bf16.mxu0 %v3947
    %4334 = vmatpush1.bf16.msra.mxu0 %v3946
    %4335 = vmatprep.subr.bf16.mxu0 %v3945
    %4336 = vmatpush1.bf16.msra.mxu0 %v3944
    %4337 = vmatprep.subr.bf16.mxu0 0
    %4338 = vmatpush2.bf16.msra.mxu0 0
    %4339 = vmatprep.subr.bf16.mxu0 0
    %4340 = vmatpush2.bf16.msra.mxu0 0
    %4341 = vmatprep.subr.bf16.mxu0 0
    %4342 = vmatpush2.bf16.msra.mxu0 0
    %4343 = vmatprep.subr.bf16.mxu0 0
    %4344 = vmatpush2.bf16.msra.mxu0 0
    %4345 = vmatprep.subr.bf16.mxu0 0
    %4346 = vmatpush2.bf16.msra.mxu0 0
    %4347 = vmatprep.subr.bf16.mxu0 0
    %4348 = vmatpush2.bf16.msra.mxu0 0
    %4349 = vmatprep.subr.bf16.mxu0 0
    %4350 = vmatpush2.bf16.msra.mxu0 0
    %4351 = vmatprep.subr.bf16.mxu0 0
    %4352 = vmatpush2.bf16.msra.mxu0 0
    %4353 = vmatprep.mubr.bf16.mxu0 0
    %4354 = vmatmul.mubr.bf16.gmra.mxu0 %v3602
    %v4355 = vpop.f32.mrf.mxu0
    %v4356 = vadd.f32 %v4043, %v4355
    %v4357 = vpop.f32.mrf.mxu0
    %v4358 = vadd.f32 %v4045, %v4357
    %v4359 = vpop.f32.mrf.mxu0
    %v4360 = vadd.f32 %v4047, %v4359
    %v4361 = vpop.f32.mrf.mxu0
    %v4362 = vadd.f32 %v4049, %v4361
    %4363 = vmatprep.mubr.bf16.mxu0 0
    %4364 = vmatmul.mubr.bf16.gmra.mxu0 %v3605
    %v4365 = vpop.f32.mrf.mxu0
    %v4366 = vadd.f32 %v4053, %v4365
    %v4367 = vpop.f32.mrf.mxu0
    %v4368 = vadd.f32 %v4055, %v4367
    %v4369 = vpop.f32.mrf.mxu0
    %v4370 = vadd.f32 %v4057, %v4369
    %v4371 = vpop.f32.mrf.mxu0
    %v4372 = vadd.f32 %v4059, %v4371
    %4373 = vmatprep.mubr.bf16.mxu0 0
    %4374 = vmatmul.mubr.bf16.gmra.mxu0 %v3608
    %v4375 = vpop.f32.mrf.mxu0
    %v4376 = vadd.f32 %v4063, %v4375
    %v4377 = vpop.f32.mrf.mxu0
    %v4378 = vadd.f32 %v4065, %v4377
    %v4379 = vpop.f32.mrf.mxu0
    %v4380 = vadd.f32 %v4067, %v4379
    %v4381 = vpop.f32.mrf.mxu0
    %v4382 = vadd.f32 %v4069, %v4381
    %4383 = vmatprep.mubr.bf16.mxu0 0
    %4384 = vmatmul.mubr.bf16.gmra.mxu0 %v3611
    %v4385 = vpop.f32.mrf.mxu0
    %v4386 = vadd.f32 %v4073, %v4385
    %v4387 = vpop.f32.mrf.mxu0
    %v4388 = vadd.f32 %v4075, %v4387
    %v4389 = vpop.f32.mrf.mxu0
    %v4390 = vadd.f32 %v4077, %v4389
    %v4391 = vpop.f32.mrf.mxu0
    %v4392 = vadd.f32 %v4079, %v4391
    %4393 = vmatprep.mubr.bf16.mxu0 0
    %4394 = vmatmul.mubr.bf16.gmra.mxu0 %v3614
    %v4395 = vpop.f32.mrf.mxu0
    %v4396 = vadd.f32 %v4083, %v4395
    %v4397 = vpop.f32.mrf.mxu0
    %v4398 = vadd.f32 %v4085, %v4397
    %v4399 = vpop.f32.mrf.mxu0
    %v4400 = vadd.f32 %v4087, %v4399
    %v4401 = vpop.f32.mrf.mxu0
    %v4402 = vadd.f32 %v4089, %v4401
    %4403 = vmatprep.mubr.bf16.mxu0 0
    %4404 = vmatmul.mubr.bf16.gmra.mxu0 %v3617
    %v4405 = vpop.f32.mrf.mxu0
    %v4406 = vadd.f32 %v4093, %v4405
    %v4407 = vpop.f32.mrf.mxu0
    %v4408 = vadd.f32 %v4095, %v4407
    %v4409 = vpop.f32.mrf.mxu0
    %v4410 = vadd.f32 %v4097, %v4409
    %v4411 = vpop.f32.mrf.mxu0
    %v4412 = vadd.f32 %v4099, %v4411
    %4413 = vmatprep.mubr.bf16.mxu0 0
    %4414 = vmatmul.mubr.bf16.gmra.mxu0 %v3620
    %v4415 = vpop.f32.mrf.mxu0
    %v4416 = vadd.f32 %v4103, %v4415
    %v4417 = vpop.f32.mrf.mxu0
    %v4418 = vadd.f32 %v4105, %v4417
    %v4419 = vpop.f32.mrf.mxu0
    %v4420 = vadd.f32 %v4107, %v4419
    %v4421 = vpop.f32.mrf.mxu0
    %v4422 = vadd.f32 %v4109, %v4421
    %4423 = vmatprep.mubr.bf16.mxu0 0
    %4424 = vmatmul.mubr.bf16.gmra.mxu0 %v3623
    %v4425 = vpop.f32.mrf.mxu0
    %v4426 = vadd.f32 %v4113, %v4425
    %v4427 = vpop.f32.mrf.mxu0
    %v4428 = vadd.f32 %v4115, %v4427
    %v4429 = vpop.f32.mrf.mxu0
    %v4430 = vadd.f32 %v4117, %v4429
    %v4431 = vpop.f32.mrf.mxu0
    %v4432 = vadd.f32 %v4119, %v4431
    %4433 = vmatprep.mubr.bf16.mxu0 0
    %4434 = vmatmul.mubr.bf16.gmra.mxu0 %v3626
    %v4435 = vpop.f32.mrf.mxu0
    %v4436 = vadd.f32 %v4123, %v4435
    %v4437 = vpop.f32.mrf.mxu0
    %v4438 = vadd.f32 %v4125, %v4437
    %v4439 = vpop.f32.mrf.mxu0
    %v4440 = vadd.f32 %v4127, %v4439
    %v4441 = vpop.f32.mrf.mxu0
    %v4442 = vadd.f32 %v4129, %v4441
    %4443 = vmatprep.mubr.bf16.mxu0 0
    %4444 = vmatmul.mubr.bf16.gmra.mxu0 %v3629
    %v4445 = vpop.f32.mrf.mxu0
    %v4446 = vadd.f32 %v4133, %v4445
    %v4447 = vpop.f32.mrf.mxu0
    %v4448 = vadd.f32 %v4135, %v4447
    %v4449 = vpop.f32.mrf.mxu0
    %v4450 = vadd.f32 %v4137, %v4449
    %v4451 = vpop.f32.mrf.mxu0
    %v4452 = vadd.f32 %v4139, %v4451
    %4453 = vmatprep.mubr.bf16.mxu0 0
    %4454 = vmatmul.mubr.bf16.gmra.mxu0 %v3632
    %v4455 = vpop.f32.mrf.mxu0
    %v4456 = vadd.f32 %v4143, %v4455
    %v4457 = vpop.f32.mrf.mxu0
    %v4458 = vadd.f32 %v4145, %v4457
    %v4459 = vpop.f32.mrf.mxu0
    %v4460 = vadd.f32 %v4147, %v4459
    %v4461 = vpop.f32.mrf.mxu0
    %v4462 = vadd.f32 %v4149, %v4461
    %4463 = vmatprep.mubr.bf16.mxu0 0
    %4464 = vmatmul.mubr.bf16.gmra.mxu0 %v3635
    %v4465 = vpop.f32.mrf.mxu0
    %v4466 = vadd.f32 %v4153, %v4465
    %v4467 = vpop.f32.mrf.mxu0
    %v4468 = vadd.f32 %v4155, %v4467
    %v4469 = vpop.f32.mrf.mxu0
    %v4470 = vadd.f32 %v4157, %v4469
    %v4471 = vpop.f32.mrf.mxu0
    %v4472 = vadd.f32 %v4159, %v4471
    %4473 = vmatprep.mubr.bf16.mxu0 0
    %4474 = vmatmul.mubr.bf16.gmra.mxu0 %v3638
    %v4475 = vpop.f32.mrf.mxu0
    %v4476 = vadd.f32 %v4163, %v4475
    %v4477 = vpop.f32.mrf.mxu0
    %v4478 = vadd.f32 %v4165, %v4477
    %v4479 = vpop.f32.mrf.mxu0
    %v4480 = vadd.f32 %v4167, %v4479
    %v4481 = vpop.f32.mrf.mxu0
    %v4482 = vadd.f32 %v4169, %v4481
    %4483 = vmatprep.mubr.bf16.mxu0 0
    %4484 = vmatmul.mubr.bf16.gmra.mxu0 %v3641
    %v4485 = vpop.f32.mrf.mxu0
    %v4486 = vadd.f32 %v4173, %v4485
    %v4487 = vpop.f32.mrf.mxu0
    %v4488 = vadd.f32 %v4175, %v4487
    %v4489 = vpop.f32.mrf.mxu0
    %v4490 = vadd.f32 %v4177, %v4489
    %v4491 = vpop.f32.mrf.mxu0
    %v4492 = vadd.f32 %v4179, %v4491
    %4493 = vmatprep.mubr.bf16.mxu0 0
    %4494 = vmatmul.mubr.bf16.gmra.mxu0 %v3644
    %v4495 = vpop.f32.mrf.mxu0
    %v4496 = vadd.f32 %v4183, %v4495
    %v4497 = vpop.f32.mrf.mxu0
    %v4498 = vadd.f32 %v4185, %v4497
    %v4499 = vpop.f32.mrf.mxu0
    %v4500 = vadd.f32 %v4187, %v4499
    %v4501 = vpop.f32.mrf.mxu0
    %v4502 = vadd.f32 %v4189, %v4501
    %4503 = vmatprep.mubr.bf16.mxu0 0
    %4504 = vmatmul.mubr.bf16.gmra.mxu0 %v3647
    %v4505 = vpop.f32.mrf.mxu0
    %v4506 = vadd.f32 %v4193, %v4505
    %v4507 = vpop.f32.mrf.mxu0
    %v4508 = vadd.f32 %v4195, %v4507
    %v4509 = vpop.f32.mrf.mxu0
    %v4510 = vadd.f32 %v4197, %v4509
    %v4511 = vpop.f32.mrf.mxu0
    %v4512 = vadd.f32 %v4199, %v4511
    %4513 = vmatprep.mubr.bf16.mxu0 0
    %4514 = vmatmul.mubr.bf16.gmra.mxu0 %v3650
    %v4515 = vpop.f32.mrf.mxu0
    %v4516 = vadd.f32 %v4203, %v4515
    %v4517 = vpop.f32.mrf.mxu0
    %v4518 = vadd.f32 %v4205, %v4517
    %v4519 = vpop.f32.mrf.mxu0
    %v4520 = vadd.f32 %v4207, %v4519
    %v4521 = vpop.f32.mrf.mxu0
    %v4522 = vadd.f32 %v4209, %v4521
    %4523 = vmatprep.mubr.bf16.mxu0 0
    %4524 = vmatmul.mubr.bf16.gmra.mxu0 %v3653
    %v4525 = vpop.f32.mrf.mxu0
    %v4526 = vadd.f32 %v4213, %v4525
    %v4527 = vpop.f32.mrf.mxu0
    %v4528 = vadd.f32 %v4215, %v4527
    %v4529 = vpop.f32.mrf.mxu0
    %v4530 = vadd.f32 %v4217, %v4529
    %v4531 = vpop.f32.mrf.mxu0
    %v4532 = vadd.f32 %v4219, %v4531
    %4533 = vmatprep.mubr.bf16.mxu0 0
    %4534 = vmatmul.mubr.bf16.gmra.mxu0 %v3656
    %v4535 = vpop.f32.mrf.mxu0
    %v4536 = vadd.f32 %v4223, %v4535
    %v4537 = vpop.f32.mrf.mxu0
    %v4538 = vadd.f32 %v4225, %v4537
    %v4539 = vpop.f32.mrf.mxu0
    %v4540 = vadd.f32 %v4227, %v4539
    %v4541 = vpop.f32.mrf.mxu0
    %v4542 = vadd.f32 %v4229, %v4541
    %4543 = vmatprep.mubr.bf16.mxu0 0
    %4544 = vmatmul.mubr.bf16.gmra.mxu0 %v3659
    %v4545 = vpop.f32.mrf.mxu0
    %v4546 = vadd.f32 %v4233, %v4545
    %v4547 = vpop.f32.mrf.mxu0
    %v4548 = vadd.f32 %v4235, %v4547
    %v4549 = vpop.f32.mrf.mxu0
    %v4550 = vadd.f32 %v4237, %v4549
    %v4551 = vpop.f32.mrf.mxu0
    %v4552 = vadd.f32 %v4239, %v4551
    %4553 = vmatprep.mubr.bf16.mxu0 0
    %4554 = vmatmul.mubr.bf16.gmra.mxu0 %v3662
    %v4555 = vpop.f32.mrf.mxu0
    %v4556 = vadd.f32 %v4243, %v4555
    %v4557 = vpop.f32.mrf.mxu0
    %v4558 = vadd.f32 %v4245, %v4557
    %v4559 = vpop.f32.mrf.mxu0
    %v4560 = vadd.f32 %v4247, %v4559
    %v4561 = vpop.f32.mrf.mxu0
    %v4562 = vadd.f32 %v4249, %v4561
    %4563 = vmatprep.mubr.bf16.mxu0 0
    %4564 = vmatmul.mubr.bf16.gmra.mxu0 %v3665
    %v4565 = vpop.f32.mrf.mxu0
    %v4566 = vadd.f32 %v4253, %v4565
    %v4567 = vpop.f32.mrf.mxu0
    %v4568 = vadd.f32 %v4255, %v4567
    %v4569 = vpop.f32.mrf.mxu0
    %v4570 = vadd.f32 %v4257, %v4569
    %v4571 = vpop.f32.mrf.mxu0
    %v4572 = vadd.f32 %v4259, %v4571
    %4573 = vmatprep.mubr.bf16.mxu0 0
    %4574 = vmatmul.mubr.bf16.gmra.mxu0 %v3668
    %v4575 = vpop.f32.mrf.mxu0
    %v4576 = vadd.f32 %v4263, %v4575
    %v4577 = vpop.f32.mrf.mxu0
    %v4578 = vadd.f32 %v4265, %v4577
    %v4579 = vpop.f32.mrf.mxu0
    %v4580 = vadd.f32 %v4267, %v4579
    %v4581 = vpop.f32.mrf.mxu0
    %v4582 = vadd.f32 %v4269, %v4581
    %4583 = vmatprep.mubr.bf16.mxu0 0
    %4584 = vmatmul.mubr.bf16.gmra.mxu0 %v3671
    %v4585 = vpop.f32.mrf.mxu0
    %v4586 = vadd.f32 %v4273, %v4585
    %v4587 = vpop.f32.mrf.mxu0
    %v4588 = vadd.f32 %v4275, %v4587
    %v4589 = vpop.f32.mrf.mxu0
    %v4590 = vadd.f32 %v4277, %v4589
    %v4591 = vpop.f32.mrf.mxu0
    %v4592 = vadd.f32 %v4279, %v4591
    %4593 = vmatprep.mubr.bf16.mxu0 0
    %4594 = vmatmul.mubr.bf16.gmra.mxu0 %v3674
    %v4595 = vpop.f32.mrf.mxu0
    %v4596 = vadd.f32 %v4283, %v4595
    %v4597 = vpop.f32.mrf.mxu0
    %v4598 = vadd.f32 %v4285, %v4597
    %v4599 = vpop.f32.mrf.mxu0
    %v4600 = vadd.f32 %v4287, %v4599
    %v4601 = vpop.f32.mrf.mxu0
    %v4602 = vadd.f32 %v4289, %v4601
    %4603 = vmatprep.mubr.bf16.mxu0 0
    %4604 = vmatmul.mubr.bf16.gmra.mxu0 %v3677
    %v4605 = vpop.f32.mrf.mxu0
    %v4606 = vadd.f32 %v4293, %v4605
    %v4607 = vpop.f32.mrf.mxu0
    %v4608 = vadd.f32 %v4295, %v4607
    %v4609 = vpop.f32.mrf.mxu0
    %v4610 = vadd.f32 %v4297, %v4609
    %v4611 = vpop.f32.mrf.mxu0
    %v4612 = vadd.f32 %v4299, %v4611
    %4613 = vmatprep.mubr.bf16.mxu0 0
    %4614 = vmatmul.mubr.bf16.gmra.mxu0 %v3680
    %v4615 = vpop.f32.mrf.mxu0
    %v4616 = vadd.f32 %v4303, %v4615
    %v4617 = vpop.f32.mrf.mxu0
    %v4618 = vadd.f32 %v4305, %v4617
    %v4619 = vpop.f32.mrf.mxu0
    %v4620 = vadd.f32 %v4307, %v4619
    %v4621 = vpop.f32.mrf.mxu0
    %v4622 = vadd.f32 %v4309, %v4621
    %4623 = vmatprep.mubr.bf16.mxu0 0
    %4624 = vmatmul.mubr.bf16.gmra.mxu0 %v3683
    %v4625 = vpop.f32.mrf.mxu0
    %v4626 = vadd.f32 %v4313, %v4625
    %v4627 = vpop.f32.mrf.mxu0
    %v4628 = vadd.f32 %v4315, %v4627
    %v4629 = vpop.f32.mrf.mxu0
    %v4630 = vadd.f32 %v4317, %v4629
    %v4631 = vpop.f32.mrf.mxu0
    %v4632 = vadd.f32 %v4319, %v4631
    %4633 = vdwg.mxu0
    %v4634 = vmax.f32 %v4356, 0.0
    %v4635 = vmax.f32 %v4358, 0.0
    %v4636 = vmax.f32 %v4360, 0.0
    %v4637 = vmax.f32 %v4362, 0.0
    %v4638 = vmax.f32 %v4366, 0.0
    %v4639 = vmax.f32 %v4368, 0.0
    %v4640 = vmax.f32 %v4370, 0.0
    %v4641 = vmax.f32 %v4372, 0.0
    %v4642 = vmax.f32 %v4376, 0.0
    %v4643 = vmax.f32 %v4378, 0.0
    %v4644 = vmax.f32 %v4380, 0.0
    %v4645 = vmax.f32 %v4382, 0.0
    %v4646 = vmax.f32 %v4386, 0.0
    %v4647 = vmax.f32 %v4388, 0.0
    %v4648 = vmax.f32 %v4390, 0.0
    %v4649 = vmax.f32 %v4392, 0.0
    %v4650 = vmax.f32 %v4396, 0.0
    %v4651 = vmax.f32 %v4398, 0.0
    %v4652 = vmax.f32 %v4400, 0.0
    %v4653 = vmax.f32 %v4402, 0.0
    %v4654 = vmax.f32 %v4406, 0.0
    %v4655 = vmax.f32 %v4408, 0.0
    %v4656 = vmax.f32 %v4410, 0.0
    %v4657 = vmax.f32 %v4412, 0.0
    %v4658 = vmax.f32 %v4416, 0.0
    %v4659 = vmax.f32 %v4418, 0.0
    %v4660 = vmax.f32 %v4420, 0.0
    %v4661 = vmax.f32 %v4422, 0.0
    %v4662 = vmax.f32 %v4426, 0.0
    %v4663 = vmax.f32 %v4428, 0.0
    %v4664 = vmax.f32 %v4430, 0.0
    %v4665 = vmax.f32 %v4432, 0.0
    %v4666 = vmax.f32 %v4436, 0.0
    %v4667 = vmax.f32 %v4438, 0.0
    %v4668 = vmax.f32 %v4440, 0.0
    %v4669 = vmax.f32 %v4442, 0.0
    %v4670 = vmax.f32 %v4446, 0.0
    %v4671 = vmax.f32 %v4448, 0.0
    %v4672 = vmax.f32 %v4450, 0.0
    %v4673 = vmax.f32 %v4452, 0.0
    %v4674 = vmax.f32 %v4456, 0.0
    %v4675 = vmax.f32 %v4458, 0.0
    %v4676 = vmax.f32 %v4460, 0.0
    %v4677 = vmax.f32 %v4462, 0.0
    %v4678 = vmax.f32 %v4466, 0.0
    %v4679 = vmax.f32 %v4468, 0.0
    %v4680 = vmax.f32 %v4470, 0.0
    %v4681 = vmax.f32 %v4472, 0.0
    %v4682 = vmax.f32 %v4476, 0.0
    %v4683 = vmax.f32 %v4478, 0.0
    %v4684 = vmax.f32 %v4480, 0.0
    %v4685 = vmax.f32 %v4482, 0.0
    %v4686 = vmax.f32 %v4486, 0.0
    %v4687 = vmax.f32 %v4488, 0.0
    %v4688 = vmax.f32 %v4490, 0.0
    %v4689 = vmax.f32 %v4492, 0.0
    %v4690 = vmax.f32 %v4496, 0.0
    %v4691 = vmax.f32 %v4498, 0.0
    %v4692 = vmax.f32 %v4500, 0.0
    %v4693 = vmax.f32 %v4502, 0.0
    %v4694 = vmax.f32 %v4506, 0.0
    %v4695 = vmax.f32 %v4508, 0.0
    %v4696 = vmax.f32 %v4510, 0.0
    %v4697 = vmax.f32 %v4512, 0.0
    %v4698 = vmax.f32 %v4516, 0.0
    %v4699 = vmax.f32 %v4518, 0.0
    %v4700 = vmax.f32 %v4520, 0.0
    %v4701 = vmax.f32 %v4522, 0.0
    %v4702 = vmax.f32 %v4526, 0.0
    %v4703 = vmax.f32 %v4528, 0.0
    %v4704 = vmax.f32 %v4530, 0.0
    %v4705 = vmax.f32 %v4532, 0.0
    %v4706 = vmax.f32 %v4536, 0.0
    %v4707 = vmax.f32 %v4538, 0.0
    %v4708 = vmax.f32 %v4540, 0.0
    %v4709 = vmax.f32 %v4542, 0.0
    %v4710 = vmax.f32 %v4546, 0.0
    %v4711 = vmax.f32 %v4548, 0.0
    %v4712 = vmax.f32 %v4550, 0.0
    %v4713 = vmax.f32 %v4552, 0.0
    %v4714 = vmax.f32 %v4556, 0.0
    %v4715 = vmax.f32 %v4558, 0.0
    %v4716 = vmax.f32 %v4560, 0.0
    %v4717 = vmax.f32 %v4562, 0.0
    %v4718 = vmax.f32 %v4566, 0.0
    %v4719 = vmax.f32 %v4568, 0.0
    %v4720 = vmax.f32 %v4570, 0.0
    %v4721 = vmax.f32 %v4572, 0.0
    %v4722 = vmax.f32 %v4576, 0.0
    %v4723 = vmax.f32 %v4578, 0.0
    %v4724 = vmax.f32 %v4580, 0.0
    %v4725 = vmax.f32 %v4582, 0.0
    %v4726 = vmax.f32 %v4586, 0.0
    %v4727 = vmax.f32 %v4588, 0.0
    %v4728 = vmax.f32 %v4590, 0.0
    %v4729 = vmax.f32 %v4592, 0.0
    %v4730 = vmax.f32 %v4596, 0.0
    %v4731 = vmax.f32 %v4598, 0.0
    %v4732 = vmax.f32 %v4600, 0.0
    %v4733 = vmax.f32 %v4602, 0.0
    %v4734 = vmax.f32 %v4606, 0.0
    %v4735 = vmax.f32 %v4608, 0.0
    %v4736 = vmax.f32 %v4610, 0.0
    %v4737 = vmax.f32 %v4612, 0.0
    %v4738 = vmax.f32 %v4616, 0.0
    %v4739 = vmax.f32 %v4618, 0.0
    %v4740 = vmax.f32 %v4620, 0.0
    %v4741 = vmax.f32 %v4622, 0.0
    %v4742 = vmax.f32 %v4626, 0.0
    %v4743 = vmax.f32 %v4628, 0.0
    %v4744 = vmax.f32 %v4630, 0.0
    %v4745 = vmax.f32 %v4632, 0.0
    %4746 = vst [vmem:[#allocation5] sm:$0xff] %v4634
    %4747 = vst.msk [vmem:[#allocation5 + $0x8] sm:$0xff] %vm1402, %v4635
    %4748 = vst [vmem:[#allocation5 + $0x10] sm:$0xff] %v4636
    %4749 = vst.msk [vmem:[#allocation5 + $0x18] sm:$0xff] %vm1402, %v4637
    %4750 = vst [vmem:[#allocation5 + $0x20] sm:$0xff] %v4638
    %4751 = vst.msk [vmem:[#allocation5 + $0x28] sm:$0xff] %vm1402, %v4639
    %4752 = vst [vmem:[#allocation5 + $0x30] sm:$0xff] %v4640
    %4753 = vst.msk [vmem:[#allocation5 + $0x38] sm:$0xff] %vm1402, %v4641
    %4754 = vst [vmem:[#allocation5 + $0x40] sm:$0xff] %v4642
    %4755 = vst.msk [vmem:[#allocation5 + $0x48] sm:$0xff] %vm1402, %v4643
    %4756 = vst [vmem:[#allocation5 + $0x50] sm:$0xff] %v4644
    %4757 = vst.msk [vmem:[#allocation5 + $0x58] sm:$0xff] %vm1402, %v4645
    %4758 = vst [vmem:[#allocation5 + $0x60] sm:$0xff] %v4646
    %4759 = vst.msk [vmem:[#allocation5 + $0x68] sm:$0xff] %vm1402, %v4647
    %4760 = vst [vmem:[#allocation5 + $0x70] sm:$0xff] %v4648
    %4761 = vst.msk [vmem:[#allocation5 + $0x78] sm:$0xff] %vm1402, %v4649
    %4762 = vst [vmem:[#allocation5 + $0x80] sm:$0xff] %v4650
    %4763 = vst.msk [vmem:[#allocation5 + $0x88] sm:$0xff] %vm1402, %v4651
    %4764 = vst [vmem:[#allocation5 + $0x90] sm:$0xff] %v4652
    %4765 = vst.msk [vmem:[#allocation5 + $0x98] sm:$0xff] %vm1402, %v4653
    %4766 = vst [vmem:[#allocation5 + $0xa0] sm:$0xff] %v4654
    %4767 = vst.msk [vmem:[#allocation5 + $0xa8] sm:$0xff] %vm1402, %v4655
    %4768 = vst [vmem:[#allocation5 + $0xb0] sm:$0xff] %v4656
    %4769 = vst.msk [vmem:[#allocation5 + $0xb8] sm:$0xff] %vm1402, %v4657
    %4770 = vst [vmem:[#allocation5 + $0xc0] sm:$0xff] %v4658
    %4771 = vst.msk [vmem:[#allocation5 + $0xc8] sm:$0xff] %vm1402, %v4659
    %4772 = vst [vmem:[#allocation5 + $0xd0] sm:$0xff] %v4660
    %4773 = vst.msk [vmem:[#allocation5 + $0xd8] sm:$0xff] %vm1402, %v4661
    %4774 = vst [vmem:[#allocation5 + $0xe0] sm:$0xff] %v4662
    %4775 = vst.msk [vmem:[#allocation5 + $0xe8] sm:$0xff] %vm1402, %v4663
    %4776 = vst [vmem:[#allocation5 + $0xf0] sm:$0xff] %v4664
    %4777 = vst.msk [vmem:[#allocation5 + $0xf8] sm:$0xff] %vm1402, %v4665
    %4778 = vst [vmem:[#allocation5 + $0x100] sm:$0xff] %v4666
    %4779 = vst.msk [vmem:[#allocation5 + $0x108] sm:$0xff] %vm1402, %v4667
    %4780 = vst [vmem:[#allocation5 + $0x110] sm:$0xff] %v4668
    %4781 = vst.msk [vmem:[#allocation5 + $0x118] sm:$0xff] %vm1402, %v4669
    %4782 = vst [vmem:[#allocation5 + $0x120] sm:$0xff] %v4670
    %4783 = vst.msk [vmem:[#allocation5 + $0x128] sm:$0xff] %vm1402, %v4671
    %4784 = vst [vmem:[#allocation5 + $0x130] sm:$0xff] %v4672
    %4785 = vst.msk [vmem:[#allocation5 + $0x138] sm:$0xff] %vm1402, %v4673
    %4786 = vst [vmem:[#allocation5 + $0x140] sm:$0xff] %v4674
    %4787 = vst.msk [vmem:[#allocation5 + $0x148] sm:$0xff] %vm1402, %v4675
    %4788 = vst [vmem:[#allocation5 + $0x150] sm:$0xff] %v4676
    %4789 = vst.msk [vmem:[#allocation5 + $0x158] sm:$0xff] %vm1402, %v4677
    %4790 = vst [vmem:[#allocation5 + $0x160] sm:$0xff] %v4678
    %4791 = vst.msk [vmem:[#allocation5 + $0x168] sm:$0xff] %vm1402, %v4679
    %4792 = vst [vmem:[#allocation5 + $0x170] sm:$0xff] %v4680
    %4793 = vst.msk [vmem:[#allocation5 + $0x178] sm:$0xff] %vm1402, %v4681
    %4794 = vst [vmem:[#allocation5 + $0x180] sm:$0xff] %v4682
    %4795 = vst.msk [vmem:[#allocation5 + $0x188] sm:$0xff] %vm1402, %v4683
    %4796 = vst [vmem:[#allocation5 + $0x190] sm:$0xff] %v4684
    %4797 = vst.msk [vmem:[#allocation5 + $0x198] sm:$0xff] %vm1402, %v4685
    %4798 = vst [vmem:[#allocation5 + $0x1a0] sm:$0xff] %v4686
    %4799 = vst.msk [vmem:[#allocation5 + $0x1a8] sm:$0xff] %vm1402, %v4687
    %4800 = vst [vmem:[#allocation5 + $0x1b0] sm:$0xff] %v4688
    %4801 = vst.msk [vmem:[#allocation5 + $0x1b8] sm:$0xff] %vm1402, %v4689
    %4802 = vst [vmem:[#allocation5 + $0x1c0] sm:$0xff] %v4690
    %4803 = vst.msk [vmem:[#allocation5 + $0x1c8] sm:$0xff] %vm1402, %v4691
    %4804 = vst [vmem:[#allocation5 + $0x1d0] sm:$0xff] %v4692
    %4805 = vst.msk [vmem:[#allocation5 + $0x1d8] sm:$0xff] %vm1402, %v4693
    %4806 = vst [vmem:[#allocation5 + $0x1e0] sm:$0xff] %v4694
    %4807 = vst.msk [vmem:[#allocation5 + $0x1e8] sm:$0xff] %vm1402, %v4695
    %4808 = vst [vmem:[#allocation5 + $0x1f0] sm:$0xff] %v4696
    %4809 = vst.msk [vmem:[#allocation5 + $0x1f8] sm:$0xff] %vm1402, %v4697
    %4810 = vst [vmem:[#allocation5 + $0x200] sm:$0xff] %v4698
    %4811 = vst.msk [vmem:[#allocation5 + $0x208] sm:$0xff] %vm1402, %v4699
    %4812 = vst [vmem:[#allocation5 + $0x210] sm:$0xff] %v4700
    %4813 = vst.msk [vmem:[#allocation5 + $0x218] sm:$0xff] %vm1402, %v4701
    %4814 = vst [vmem:[#allocation5 + $0x220] sm:$0xff] %v4702
    %4815 = vst.msk [vmem:[#allocation5 + $0x228] sm:$0xff] %vm1402, %v4703
    %4816 = vst [vmem:[#allocation5 + $0x230] sm:$0xff] %v4704
    %4817 = vst.msk [vmem:[#allocation5 + $0x238] sm:$0xff] %vm1402, %v4705
    %4818 = vst [vmem:[#allocation5 + $0x240] sm:$0xff] %v4706
    %4819 = vst.msk [vmem:[#allocation5 + $0x248] sm:$0xff] %vm1402, %v4707
    %4820 = vst [vmem:[#allocation5 + $0x250] sm:$0xff] %v4708
    %4821 = vst.msk [vmem:[#allocation5 + $0x258] sm:$0xff] %vm1402, %v4709
    %4822 = vst [vmem:[#allocation5 + $0x260] sm:$0xff] %v4710
    %4823 = vst.msk [vmem:[#allocation5 + $0x268] sm:$0xff] %vm1402, %v4711
    %4824 = vst [vmem:[#allocation5 + $0x270] sm:$0xff] %v4712
    %4825 = vst.msk [vmem:[#allocation5 + $0x278] sm:$0xff] %vm1402, %v4713
    %4826 = vst [vmem:[#allocation5 + $0x280] sm:$0xff] %v4714
    %4827 = vst.msk [vmem:[#allocation5 + $0x288] sm:$0xff] %vm1402, %v4715
    %4828 = vst [vmem:[#allocation5 + $0x290] sm:$0xff] %v4716
    %4829 = vst.msk [vmem:[#allocation5 + $0x298] sm:$0xff] %vm1402, %v4717
    %4830 = vst [vmem:[#allocation5 + $0x2a0] sm:$0xff] %v4718
    %4831 = vst.msk [vmem:[#allocation5 + $0x2a8] sm:$0xff] %vm1402, %v4719
    %4832 = vst [vmem:[#allocation5 + $0x2b0] sm:$0xff] %v4720
    %4833 = vst.msk [vmem:[#allocation5 + $0x2b8] sm:$0xff] %vm1402, %v4721
    %4834 = vst [vmem:[#allocation5 + $0x2c0] sm:$0xff] %v4722
    %4835 = vst.msk [vmem:[#allocation5 + $0x2c8] sm:$0xff] %vm1402, %v4723
    %4836 = vst [vmem:[#allocation5 + $0x2d0] sm:$0xff] %v4724
    %4837 = vst.msk [vmem:[#allocation5 + $0x2d8] sm:$0xff] %vm1402, %v4725
    %4838 = vst [vmem:[#allocation5 + $0x2e0] sm:$0xff] %v4726
    %4839 = vst.msk [vmem:[#allocation5 + $0x2e8] sm:$0xff] %vm1402, %v4727
    %4840 = vst [vmem:[#allocation5 + $0x2f0] sm:$0xff] %v4728
    %4841 = vst.msk [vmem:[#allocation5 + $0x2f8] sm:$0xff] %vm1402, %v4729
    %4842 = vst [vmem:[#allocation5 + $0x300] sm:$0xff] %v4730
    %4843 = vst.msk [vmem:[#allocation5 + $0x308] sm:$0xff] %vm1402, %v4731
    %4844 = vst [vmem:[#allocation5 + $0x310] sm:$0xff] %v4732
    %4845 = vst.msk [vmem:[#allocation5 + $0x318] sm:$0xff] %vm1402, %v4733
    %4846 = vst [vmem:[#allocation5 + $0x320] sm:$0xff] %v4734
    %4847 = vst.msk [vmem:[#allocation5 + $0x328] sm:$0xff] %vm1402, %v4735
    %4848 = vst [vmem:[#allocation5 + $0x330] sm:$0xff] %v4736
    %4849 = vst.msk [vmem:[#allocation5 + $0x338] sm:$0xff] %vm1402, %v4737
    %4850 = vst [vmem:[#allocation5 + $0x340] sm:$0xff] %v4738
    %4851 = vst.msk [vmem:[#allocation5 + $0x348] sm:$0xff] %vm1402, %v4739
    %4852 = vst [vmem:[#allocation5 + $0x350] sm:$0xff] %v4740
    %4853 = vst.msk [vmem:[#allocation5 + $0x358] sm:$0xff] %vm1402, %v4741
    %4854 = vst [vmem:[#allocation5 + $0x360] sm:$0xff] %v4742
    %4855 = vst.msk [vmem:[#allocation5 + $0x368] sm:$0xff] %vm1402, %v4743
    %4856 = vst [vmem:[#allocation5 + $0x370] sm:$0xff] %v4744
    %4857 = vst.msk [vmem:[#allocation5 + $0x378] sm:$0xff] %vm1402, %v4745
    %v4858 = vld [vmem:[#allocation5] sm:$0xff]
    %v4859 = vld [vmem:[#allocation5 + $0x8] sm:$0xff]
    %v4860 = vld [vmem:[#allocation5 + $0x10] sm:$0xff]
    %v4861 = vld [vmem:[#allocation5 + $0x18] sm:$0xff]
    %v4862 = vld [vmem:[#allocation5 + $0x20] sm:$0xff]
    %v4863 = vld [vmem:[#allocation5 + $0x28] sm:$0xff]
    %v4864 = vld [vmem:[#allocation5 + $0x30] sm:$0xff]
    %v4865 = vld [vmem:[#allocation5 + $0x38] sm:$0xff]
    %v4866 = vld [vmem:[#allocation5 + $0x40] sm:$0xff]
    %v4867 = vld [vmem:[#allocation5 + $0x48] sm:$0xff]
    %v4868 = vld [vmem:[#allocation5 + $0x50] sm:$0xff]
    %v4869 = vld [vmem:[#allocation5 + $0x58] sm:$0xff]
    %v4870 = vld [vmem:[#allocation5 + $0x60] sm:$0xff]
    %v4871 = vld [vmem:[#allocation5 + $0x68] sm:$0xff]
    %v4872 = vld [vmem:[#allocation5 + $0x70] sm:$0xff]
    %v4873 = vld [vmem:[#allocation5 + $0x78] sm:$0xff]
    %v4874 = vmax.f32 %v4858, %v4866
    %v4875 = vmax.f32 %v4859, %v4867
    %v4876 = vmax.f32 %v4860, %v4868
    %v4877 = vmax.f32 %v4861, %v4869
    %v4878 = vmax.f32 %v4862, %v4870
    %v4879 = vmax.f32 %v4863, %v4871
    %v4880 = vmax.f32 %v4864, %v4872
    %v4881 = vmax.f32 %v4865, %v4873
    %4890 = vrot.lane.b32.xlu0 %v4874, 16
    %v4891 = vpop.permute.xlu0 %4890
    %4892 = vrot.lane.b32.xlu0 %v4875, 16
    %v4893 = vpop.permute.xlu0 %4892
    %4894 = vrot.lane.b32.xlu0 %v4876, 16
    %v4895 = vpop.permute.xlu0 %4894
    %4896 = vrot.lane.b32.xlu0 %v4877, 16
    %v4897 = vpop.permute.xlu0 %4896
    %4898 = vrot.lane.b32.xlu0 %v4878, 16
    %v4899 = vpop.permute.xlu0 %4898
    %4900 = vrot.lane.b32.xlu0 %v4879, 16
    %v4901 = vpop.permute.xlu0 %4900
    %4902 = vrot.lane.b32.xlu0 %v4880, 16
    %v4903 = vpop.permute.xlu0 %4902
    %4904 = vrot.lane.b32.xlu0 %v4881, 16
    %v4905 = vpop.permute.xlu0 %4904
    %v4906 = vsel %vm1738, %v4891, %v4893
    %v4907 = vsel %vm1738, %v4895, %v4897
    %v4908 = vsel %vm1738, %v4899, %v4901
    %v4909 = vsel %vm1738, %v4903, %v4905
    %v4914 = vmax.f32 %v4874, %v4906
    %v4915 = vmax.f32 %v4876, %v4907
    %v4916 = vmax.f32 %v4878, %v4908
    %v4917 = vmax.f32 %v4880, %v4909
    %v4918 = vpack.c.bf16 %v4915, %v4914
    %v4919 = vpack.c.bf16 %v4917, %v4916
    %v4920 = vld [vmem:[%s5] sm:$0xf]
    %v4921 = vld [vmem:[%s5 + $0x4] sm:$0xf]
    %v4922 = vld [vmem:[%s5 + $0x8] sm:$0xf]
    %v4923 = vld [vmem:[%s5 + $0xc] sm:$0xf]
    %v4924 = vld [vmem:[%s5 + $0x10] sm:$0xf]
    %v4925 = vld [vmem:[%s5 + $0x14] sm:$0xf]
    %v4926 = vld [vmem:[%s5 + $0x18] sm:$0xf]
    %v4927 = vld [vmem:[%s5 + $0x1c] sm:$0xf]
    %v4928 = vld [vmem:[%s5 + $0x20] sm:$0xf]
    %v4929 = vld [vmem:[%s5 + $0x24] sm:$0xf]
    %v4930 = vld [vmem:[%s5 + $0x28] sm:$0xf]
    %v4931 = vld [vmem:[%s5 + $0x2c] sm:$0xf]
    %v4932 = vld [vmem:[%s5 + $0x30] sm:$0xf]
    %v4933 = vld [vmem:[%s5 + $0x34] sm:$0xf]
    %v4934 = vld [vmem:[#allocation5 + $0x80] sm:$0xff]
    %v4935 = vld [vmem:[#allocation5 + $0x88] sm:$0xff]
    %v4936 = vld [vmem:[#allocation5 + $0x90] sm:$0xff]
    %v4937 = vld [vmem:[#allocation5 + $0x98] sm:$0xff]
    %v4938 = vld [vmem:[#allocation5 + $0xa0] sm:$0xff]
    %v4939 = vld [vmem:[#allocation5 + $0xa8] sm:$0xff]
    %v4940 = vld [vmem:[#allocation5 + $0xb0] sm:$0xff]
    %v4941 = vld [vmem:[#allocation5 + $0xb8] sm:$0xff]
    %v4942 = vld [vmem:[#allocation5 + $0xc0] sm:$0xff]
    %v4943 = vld [vmem:[#allocation5 + $0xc8] sm:$0xff]
    %v4944 = vld [vmem:[#allocation5 + $0xd0] sm:$0xff]
    %v4945 = vld [vmem:[#allocation5 + $0xd8] sm:$0xff]
    %v4946 = vld [vmem:[#allocation5 + $0xe0] sm:$0xff]
    %v4947 = vld [vmem:[#allocation5 + $0xe8] sm:$0xff]
    %v4948 = vld [vmem:[#allocation5 + $0xf0] sm:$0xff]
    %v4949 = vld [vmem:[#allocation5 + $0xf8] sm:$0xff]
    %v4950 = vmax.f32 %v4934, %v4942
    %v4951 = vmax.f32 %v4935, %v4943
    %v4952 = vmax.f32 %v4936, %v4944
    %v4953 = vmax.f32 %v4937, %v4945
    %v4954 = vmax.f32 %v4938, %v4946
    %v4955 = vmax.f32 %v4939, %v4947
    %v4956 = vmax.f32 %v4940, %v4948
    %v4957 = vmax.f32 %v4941, %v4949
    %4966 = vrot.lane.b32.xlu0 %v4950, 16
    %v4967 = vpop.permute.xlu0 %4966
    %4968 = vrot.lane.b32.xlu0 %v4951, 16
    %v4969 = vpop.permute.xlu0 %4968
    %4970 = vrot.lane.b32.xlu0 %v4952, 16
    %v4971 = vpop.permute.xlu0 %4970
    %4972 = vrot.lane.b32.xlu0 %v4953, 16
    %v4973 = vpop.permute.xlu0 %4972
    %4974 = vrot.lane.b32.xlu0 %v4954, 16
    %v4975 = vpop.permute.xlu0 %4974
    %4976 = vrot.lane.b32.xlu0 %v4955, 16
    %v4977 = vpop.permute.xlu0 %4976
    %4978 = vrot.lane.b32.xlu0 %v4956, 16
    %v4979 = vpop.permute.xlu0 %4978
    %4980 = vrot.lane.b32.xlu0 %v4957, 16
    %v4981 = vpop.permute.xlu0 %4980
    %v4982 = vsel %vm1738, %v4967, %v4969
    %v4983 = vsel %vm1738, %v4971, %v4973
    %v4984 = vsel %vm1738, %v4975, %v4977
    %v4985 = vsel %vm1738, %v4979, %v4981
    %v4990 = vmax.f32 %v4950, %v4982
    %v4991 = vmax.f32 %v4952, %v4983
    %v4992 = vmax.f32 %v4954, %v4984
    %v4993 = vmax.f32 %v4956, %v4985
    %v4994 = vpack.c.bf16 %v4991, %v4990
    %v4995 = vpack.c.bf16 %v4993, %v4992
    %s4996 = scalar_lea.vmem %s5, 56
    %v4997 = vld [vmem:[%s4996] sm:$0xf]
    %v4998 = vld [vmem:[%s4996 + $0x4] sm:$0xf]
    %v4999 = vld [vmem:[%s4996 + $0x8] sm:$0xf]
    %v5000 = vld [vmem:[%s4996 + $0xc] sm:$0xf]
    %v5001 = vld [vmem:[%s4996 + $0x10] sm:$0xf]
    %v5002 = vld [vmem:[%s4996 + $0x14] sm:$0xf]
    %v5003 = vld [vmem:[%s4996 + $0x18] sm:$0xf]
    %v5004 = vld [vmem:[%s4996 + $0x1c] sm:$0xf]
    %v5005 = vld [vmem:[%s4996 + $0x20] sm:$0xf]
    %v5006 = vld [vmem:[%s4996 + $0x24] sm:$0xf]
    %v5007 = vld [vmem:[%s4996 + $0x28] sm:$0xf]
    %v5008 = vld [vmem:[%s4996 + $0x2c] sm:$0xf]
    %v5009 = vld [vmem:[%s4996 + $0x30] sm:$0xf]
    %v5010 = vld [vmem:[%s4996 + $0x34] sm:$0xf]
    %v5025 = vunpack.c.l.b16 %v4997
    %v5026 = vunpack.c.l.b16 %v4998
    %v5027 = vunpack.c.l.b16 %v4999
    %v5028 = vunpack.c.l.b16 %v5000
    %v5029 = vunpack.c.l.b16 %v5001
    %v5030 = vunpack.c.l.b16 %v5002
    %v5031 = vunpack.c.l.b16 %v5003
    %v5032 = vunpack.c.l.b16 %v5004
    %v5033 = vunpack.c.l.b16 %v5005
    %v5034 = vunpack.c.l.b16 %v5006
    %v5035 = vunpack.c.l.b16 %v5007
    %v5036 = vunpack.c.l.b16 %v5008
    %v5037 = vunpack.c.l.b16 %v5009
    %v5038 = vunpack.c.l.b16 %v5010
    %v5039 = vpack.c.b16 %v5026, %v5025
    %v5040 = vpack.c.b16 %v5028, %v5027
    %v5041 = vpack.c.b16 %v5030, %v5029
    %v5042 = vpack.c.b16 %v5032, %v5031
    %v5043 = vpack.c.b16 %v5034, %v5033
    %v5044 = vpack.c.b16 %v5036, %v5035
    %v5045 = vpack.c.b16 %v5038, %v5037
    %vm5053 = vcmask 916480
    %v5055 = vsel %vm5053, %v4994, 0
    %v5058 = vsel %vm5053, %v4995, 0
    %5060 = vmatprep.subr.bf16.mxu0 0
    %5061 = vmatpush1.bf16.msra.mxu0 0
    %5062 = vmatprep.subr.bf16.mxu0 0
    %5063 = vmatpush1.bf16.msra.mxu0 %v5045
    %5064 = vmatprep.subr.bf16.mxu0 0
    %5065 = vmatpush1.bf16.msra.mxu0 %v5044
    %5066 = vmatprep.subr.bf16.mxu0 0
    %5067 = vmatpush1.bf16.msra.mxu0 %v5043
    %5068 = vmatprep.subr.bf16.mxu0 0
    %5069 = vmatpush1.bf16.msra.mxu0 %v5042
    %5070 = vmatprep.subr.bf16.mxu0 0
    %5071 = vmatpush1.bf16.msra.mxu0 %v5041
    %5072 = vmatprep.subr.bf16.mxu0 0
    %5073 = vmatpush1.bf16.msra.mxu0 %v5040
    %5074 = vmatprep.subr.bf16.mxu0 0
    %5075 = vmatpush1.bf16.msra.mxu0 %v5039
    %5076 = vmatprep.subr.bf16.mxu0 0
    %5077 = vmatpush2.bf16.msra.mxu0 0
    %5078 = vmatprep.subr.bf16.mxu0 0
    %5079 = vmatpush2.bf16.msra.mxu0 0
    %5080 = vmatprep.subr.bf16.mxu0 0
    %5081 = vmatpush2.bf16.msra.mxu0 0
    %5082 = vmatprep.subr.bf16.mxu0 0
    %5083 = vmatpush2.bf16.msra.mxu0 0
    %5084 = vmatprep.subr.bf16.mxu0 0
    %5085 = vmatpush2.bf16.msra.mxu0 0
    %5086 = vmatprep.subr.bf16.mxu0 0
    %5087 = vmatpush2.bf16.msra.mxu0 0
    %5088 = vmatprep.subr.bf16.mxu0 0
    %5089 = vmatpush2.bf16.msra.mxu0 0
    %5090 = vmatprep.subr.bf16.mxu0 0
    %5091 = vmatpush2.bf16.msra.mxu0 0
    %5092 = vmatprep.mubr.bf16.mxu0 0
    %5093 = vmatmul.mubr.bf16.gmra.mxu0 %v5055
    %v5094 = vpop.f32.mrf.mxu0
    %v5095 = vadd.f32 0.0, %v5094
    %v5096 = vpop.f32.mrf.mxu0
    %v5097 = vpop.f32.mrf.mxu0
    %v5098 = vadd.f32 0.0, %v5097
    %v5099 = vpop.f32.mrf.mxu0
    %5100 = vmatprep.mubr.bf16.mxu0 0
    %5101 = vmatmul.mubr.bf16.gmra.mxu0 %v5058
    %v5102 = vpop.f32.mrf.mxu0
    %v5103 = vadd.f32 0.0, %v5102
    %v5104 = vpop.f32.mrf.mxu0
    %v5105 = vpop.f32.mrf.mxu0
    %v5106 = vadd.f32 0.0, %v5105
    %v5107 = vpop.f32.mrf.mxu0
    %5108 = vdwg.mxu0
    %v5123 = vunpack.c.l.b16 %v4920
    %v5124 = vunpack.c.l.b16 %v4921
    %v5125 = vunpack.c.l.b16 %v4922
    %v5126 = vunpack.c.l.b16 %v4923
    %v5127 = vunpack.c.l.b16 %v4924
    %v5128 = vunpack.c.l.b16 %v4925
    %v5129 = vunpack.c.l.b16 %v4926
    %v5130 = vunpack.c.l.b16 %v4927
    %v5131 = vunpack.c.l.b16 %v4928
    %v5132 = vunpack.c.l.b16 %v4929
    %v5133 = vunpack.c.l.b16 %v4930
    %v5134 = vunpack.c.l.b16 %v4931
    %v5135 = vunpack.c.l.b16 %v4932
    %v5136 = vunpack.c.l.b16 %v4933
    %v5137 = vpack.c.b16 %v5124, %v5123
    %v5138 = vpack.c.b16 %v5126, %v5125
    %v5139 = vpack.c.b16 %v5128, %v5127
    %v5140 = vpack.c.b16 %v5130, %v5129
    %v5141 = vpack.c.b16 %v5132, %v5131
    %v5142 = vpack.c.b16 %v5134, %v5133
    %v5143 = vpack.c.b16 %v5136, %v5135
    %v5152 = vsel %vm5053, %v4918, 0
    %v5155 = vsel %vm5053, %v4919, 0
    %5157 = vmatprep.subr.bf16.mxu0 0
    %5158 = vmatpush1.bf16.msra.mxu0 0
    %5159 = vmatprep.subr.bf16.mxu0 0
    %5160 = vmatpush1.bf16.msra.mxu0 %v5143
    %5161 = vmatprep.subr.bf16.mxu0 0
    %5162 = vmatpush1.bf16.msra.mxu0 %v5142
    %5163 = vmatprep.subr.bf16.mxu0 0
    %5164 = vmatpush1.bf16.msra.mxu0 %v5141
    %5165 = vmatprep.subr.bf16.mxu0 0
    %5166 = vmatpush1.bf16.msra.mxu0 %v5140
    %5167 = vmatprep.subr.bf16.mxu0 0
    %5168 = vmatpush1.bf16.msra.mxu0 %v5139
    %5169 = vmatprep.subr.bf16.mxu0 0
    %5170 = vmatpush1.bf16.msra.mxu0 %v5138
    %5171 = vmatprep.subr.bf16.mxu0 0
    %5172 = vmatpush1.bf16.msra.mxu0 %v5137
    %5173 = vmatprep.subr.bf16.mxu0 0
    %5174 = vmatpush2.bf16.msra.mxu0 0
    %5175 = vmatprep.subr.bf16.mxu0 0
    %5176 = vmatpush2.bf16.msra.mxu0 0
    %5177 = vmatprep.subr.bf16.mxu0 0
    %5178 = vmatpush2.bf16.msra.mxu0 0
    %5179 = vmatprep.subr.bf16.mxu0 0
    %5180 = vmatpush2.bf16.msra.mxu0 0
    %5181 = vmatprep.subr.bf16.mxu0 0
    %5182 = vmatpush2.bf16.msra.mxu0 0
    %5183 = vmatprep.subr.bf16.mxu0 0
    %5184 = vmatpush2.bf16.msra.mxu0 0
    %5185 = vmatprep.subr.bf16.mxu0 0
    %5186 = vmatpush2.bf16.msra.mxu0 0
    %5187 = vmatprep.subr.bf16.mxu0 0
    %5188 = vmatpush2.bf16.msra.mxu0 0
    %5189 = vmatprep.mubr.bf16.mxu0 0
    %5190 = vmatmul.mubr.bf16.gmra.mxu0 %v5152
    %v5191 = vpop.f32.mrf.mxu0
    %v5192 = vadd.f32 %v5095, %v5191
    %v5193 = vpop.f32.mrf.mxu0
    %v5194 = vpop.f32.mrf.mxu0
    %v5195 = vadd.f32 %v5098, %v5194
    %v5196 = vpop.f32.mrf.mxu0
    %5197 = vmatprep.mubr.bf16.mxu0 0
    %5198 = vmatmul.mubr.bf16.gmra.mxu0 %v5155
    %v5199 = vpop.f32.mrf.mxu0
    %v5200 = vadd.f32 %v5103, %v5199
    %v5201 = vpop.f32.mrf.mxu0
    %v5202 = vpop.f32.mrf.mxu0
    %v5203 = vadd.f32 %v5106, %v5202
    %v5204 = vpop.f32.mrf.mxu0
    %5205 = vdwg.mxu0
    %v5206 = vld [vmem:[#allocation5 + $0x100] sm:$0xff]
    %v5207 = vld [vmem:[#allocation5 + $0x108] sm:$0xff]
    %v5208 = vld [vmem:[#allocation5 + $0x110] sm:$0xff]
    %v5209 = vld [vmem:[#allocation5 + $0x118] sm:$0xff]
    %v5210 = vld [vmem:[#allocation5 + $0x120] sm:$0xff]
    %v5211 = vld [vmem:[#allocation5 + $0x128] sm:$0xff]
    %v5212 = vld [vmem:[#allocation5 + $0x130] sm:$0xff]
    %v5213 = vld [vmem:[#allocation5 + $0x138] sm:$0xff]
    %v5214 = vld [vmem:[#allocation5 + $0x140] sm:$0xff]
    %v5215 = vld [vmem:[#allocation5 + $0x148] sm:$0xff]
    %v5216 = vld [vmem:[#allocation5 + $0x150] sm:$0xff]
    %v5217 = vld [vmem:[#allocation5 + $0x158] sm:$0xff]
    %v5218 = vld [vmem:[#allocation5 + $0x160] sm:$0xff]
    %v5219 = vld [vmem:[#allocation5 + $0x168] sm:$0xff]
    %v5220 = vld [vmem:[#allocation5 + $0x170] sm:$0xff]
    %v5221 = vld [vmem:[#allocation5 + $0x178] sm:$0xff]
    %v5222 = vmax.f32 %v5206, %v5214
    %v5223 = vmax.f32 %v5207, %v5215
    %v5224 = vmax.f32 %v5208, %v5216
    %v5225 = vmax.f32 %v5209, %v5217
    %v5226 = vmax.f32 %v5210, %v5218
    %v5227 = vmax.f32 %v5211, %v5219
    %v5228 = vmax.f32 %v5212, %v5220
    %v5229 = vmax.f32 %v5213, %v5221
    %5238 = vrot.lane.b32.xlu0 %v5222, 16
    %v5239 = vpop.permute.xlu0 %5238
    %5240 = vrot.lane.b32.xlu0 %v5223, 16
    %v5241 = vpop.permute.xlu0 %5240
    %5242 = vrot.lane.b32.xlu0 %v5224, 16
    %v5243 = vpop.permute.xlu0 %5242
    %5244 = vrot.lane.b32.xlu0 %v5225, 16
    %v5245 = vpop.permute.xlu0 %5244
    %5246 = vrot.lane.b32.xlu0 %v5226, 16
    %v5247 = vpop.permute.xlu0 %5246
    %5248 = vrot.lane.b32.xlu0 %v5227, 16
    %v5249 = vpop.permute.xlu0 %5248
    %5250 = vrot.lane.b32.xlu0 %v5228, 16
    %v5251 = vpop.permute.xlu0 %5250
    %5252 = vrot.lane.b32.xlu0 %v5229, 16
    %v5253 = vpop.permute.xlu0 %5252
    %v5254 = vsel %vm1738, %v5239, %v5241
    %v5255 = vsel %vm1738, %v5243, %v5245
    %v5256 = vsel %vm1738, %v5247, %v5249
    %v5257 = vsel %vm1738, %v5251, %v5253
    %v5262 = vmax.f32 %v5222, %v5254
    %v5263 = vmax.f32 %v5224, %v5255
    %v5264 = vmax.f32 %v5226, %v5256
    %v5265 = vmax.f32 %v5228, %v5257
    %v5266 = vpack.c.bf16 %v5263, %v5262
    %v5267 = vpack.c.bf16 %v5265, %v5264
    %s5268 = scalar_lea.vmem %s5, 112
    %v5269 = vld [vmem:[%s5268] sm:$0xf]
    %v5270 = vld [vmem:[%s5268 + $0x4] sm:$0xf]
    %v5271 = vld [vmem:[%s5268 + $0x8] sm:$0xf]
    %v5272 = vld [vmem:[%s5268 + $0xc] sm:$0xf]
    %v5273 = vld [vmem:[%s5268 + $0x10] sm:$0xf]
    %v5274 = vld [vmem:[%s5268 + $0x14] sm:$0xf]
    %v5275 = vld [vmem:[%s5268 + $0x18] sm:$0xf]
    %v5276 = vld [vmem:[%s5268 + $0x1c] sm:$0xf]
    %v5277 = vld [vmem:[%s5268 + $0x20] sm:$0xf]
    %v5278 = vld [vmem:[%s5268 + $0x24] sm:$0xf]
    %v5279 = vld [vmem:[%s5268 + $0x28] sm:$0xf]
    %v5280 = vld [vmem:[%s5268 + $0x2c] sm:$0xf]
    %v5281 = vld [vmem:[%s5268 + $0x30] sm:$0xf]
    %v5282 = vld [vmem:[%s5268 + $0x34] sm:$0xf]
    %v5297 = vunpack.c.l.b16 %v5269
    %v5298 = vunpack.c.l.b16 %v5270
    %v5299 = vunpack.c.l.b16 %v5271
    %v5300 = vunpack.c.l.b16 %v5272
    %v5301 = vunpack.c.l.b16 %v5273
    %v5302 = vunpack.c.l.b16 %v5274
    %v5303 = vunpack.c.l.b16 %v5275
    %v5304 = vunpack.c.l.b16 %v5276
    %v5305 = vunpack.c.l.b16 %v5277
    %v5306 = vunpack.c.l.b16 %v5278
    %v5307 = vunpack.c.l.b16 %v5279
    %v5308 = vunpack.c.l.b16 %v5280
    %v5309 = vunpack.c.l.b16 %v5281
    %v5310 = vunpack.c.l.b16 %v5282
    %v5311 = vpack.c.b16 %v5298, %v5297
    %v5312 = vpack.c.b16 %v5300, %v5299
    %v5313 = vpack.c.b16 %v5302, %v5301
    %v5314 = vpack.c.b16 %v5304, %v5303
    %v5315 = vpack.c.b16 %v5306, %v5305
    %v5316 = vpack.c.b16 %v5308, %v5307
    %v5317 = vpack.c.b16 %v5310, %v5309
    %v5326 = vsel %vm5053, %v5266, 0
    %v5329 = vsel %vm5053, %v5267, 0
    %5331 = vmatprep.subr.bf16.mxu0 0
    %5332 = vmatpush1.bf16.msra.mxu0 0
    %5333 = vmatprep.subr.bf16.mxu0 0
    %5334 = vmatpush1.bf16.msra.mxu0 %v5317
    %5335 = vmatprep.subr.bf16.mxu0 0
    %5336 = vmatpush1.bf16.msra.mxu0 %v5316
    %5337 = vmatprep.subr.bf16.mxu0 0
    %5338 = vmatpush1.bf16.msra.mxu0 %v5315
    %5339 = vmatprep.subr.bf16.mxu0 0
    %5340 = vmatpush1.bf16.msra.mxu0 %v5314
    %5341 = vmatprep.subr.bf16.mxu0 0
    %5342 = vmatpush1.bf16.msra.mxu0 %v5313
    %5343 = vmatprep.subr.bf16.mxu0 0
    %5344 = vmatpush1.bf16.msra.mxu0 %v5312
    %5345 = vmatprep.subr.bf16.mxu0 0
    %5346 = vmatpush1.bf16.msra.mxu0 %v5311
    %5347 = vmatprep.subr.bf16.mxu0 0
    %5348 = vmatpush2.bf16.msra.mxu0 0
    %5349 = vmatprep.subr.bf16.mxu0 0
    %5350 = vmatpush2.bf16.msra.mxu0 0
    %5351 = vmatprep.subr.bf16.mxu0 0
    %5352 = vmatpush2.bf16.msra.mxu0 0
    %5353 = vmatprep.subr.bf16.mxu0 0
    %5354 = vmatpush2.bf16.msra.mxu0 0
    %5355 = vmatprep.subr.bf16.mxu0 0
    %5356 = vmatpush2.bf16.msra.mxu0 0
    %5357 = vmatprep.subr.bf16.mxu0 0
    %5358 = vmatpush2.bf16.msra.mxu0 0
    %5359 = vmatprep.subr.bf16.mxu0 0
    %5360 = vmatpush2.bf16.msra.mxu0 0
    %5361 = vmatprep.subr.bf16.mxu0 0
    %5362 = vmatpush2.bf16.msra.mxu0 0
    %5363 = vmatprep.mubr.bf16.mxu0 0
    %5364 = vmatmul.mubr.bf16.gmra.mxu0 %v5326
    %v5365 = vpop.f32.mrf.mxu0
    %v5366 = vadd.f32 0.0, %v5365
    %v5367 = vpop.f32.mrf.mxu0
    %v5368 = vpop.f32.mrf.mxu0
    %v5369 = vadd.f32 0.0, %v5368
    %v5370 = vpop.f32.mrf.mxu0
    %5371 = vmatprep.mubr.bf16.mxu0 0
    %5372 = vmatmul.mubr.bf16.gmra.mxu0 %v5329
    %v5373 = vpop.f32.mrf.mxu0
    %v5374 = vadd.f32 0.0, %v5373
    %v5375 = vpop.f32.mrf.mxu0
    %v5376 = vpop.f32.mrf.mxu0
    %v5377 = vadd.f32 0.0, %v5376
    %v5378 = vpop.f32.mrf.mxu0
    %5379 = vdwg.mxu0
    %v5380 = vadd.f32 %v5192, %v5366
    %v5381 = vadd.f32 %v5195, %v5369
    %v5382 = vadd.f32 %v5200, %v5374
    %v5383 = vadd.f32 %v5203, %v5377
    %v5384 = vld [vmem:[#allocation5 + $0x180] sm:$0xff]
    %v5385 = vld [vmem:[#allocation5 + $0x188] sm:$0xff]
    %v5386 = vld [vmem:[#allocation5 + $0x190] sm:$0xff]
    %v5387 = vld [vmem:[#allocation5 + $0x198] sm:$0xff]
    %v5388 = vld [vmem:[#allocation5 + $0x1a0] sm:$0xff]
    %v5389 = vld [vmem:[#allocation5 + $0x1a8] sm:$0xff]
    %v5390 = vld [vmem:[#allocation5 + $0x1b0] sm:$0xff]
    %v5391 = vld [vmem:[#allocation5 + $0x1b8] sm:$0xff]
    %v5392 = vld [vmem:[#allocation5 + $0x1c0] sm:$0xff]
    %v5393 = vld [vmem:[#allocation5 + $0x1c8] sm:$0xff]
    %v5394 = vld [vmem:[#allocation5 + $0x1d0] sm:$0xff]
    %v5395 = vld [vmem:[#allocation5 + $0x1d8] sm:$0xff]
    %v5396 = vld [vmem:[#allocation5 + $0x1e0] sm:$0xff]
    %v5397 = vld [vmem:[#allocation5 + $0x1e8] sm:$0xff]
    %v5398 = vld [vmem:[#allocation5 + $0x1f0] sm:$0xff]
    %v5399 = vld [vmem:[#allocation5 + $0x1f8] sm:$0xff]
    %v5400 = vmax.f32 %v5384, %v5392
    %v5401 = vmax.f32 %v5385, %v5393
    %v5402 = vmax.f32 %v5386, %v5394
    %v5403 = vmax.f32 %v5387, %v5395
    %v5404 = vmax.f32 %v5388, %v5396
    %v5405 = vmax.f32 %v5389, %v5397
    %v5406 = vmax.f32 %v5390, %v5398
    %v5407 = vmax.f32 %v5391, %v5399
    %5416 = vrot.lane.b32.xlu0 %v5400, 16
    %v5417 = vpop.permute.xlu0 %5416
    %5418 = vrot.lane.b32.xlu0 %v5401, 16
    %v5419 = vpop.permute.xlu0 %5418
    %5420 = vrot.lane.b32.xlu0 %v5402, 16
    %v5421 = vpop.permute.xlu0 %5420
    %5422 = vrot.lane.b32.xlu0 %v5403, 16
    %v5423 = vpop.permute.xlu0 %5422
    %5424 = vrot.lane.b32.xlu0 %v5404, 16
    %v5425 = vpop.permute.xlu0 %5424
    %5426 = vrot.lane.b32.xlu0 %v5405, 16
    %v5427 = vpop.permute.xlu0 %5426
    %5428 = vrot.lane.b32.xlu0 %v5406, 16
    %v5429 = vpop.permute.xlu0 %5428
    %5430 = vrot.lane.b32.xlu0 %v5407, 16
    %v5431 = vpop.permute.xlu0 %5430
    %v5432 = vsel %vm1738, %v5417, %v5419
    %v5433 = vsel %vm1738, %v5421, %v5423
    %v5434 = vsel %vm1738, %v5425, %v5427
    %v5435 = vsel %vm1738, %v5429, %v5431
    %v5440 = vmax.f32 %v5400, %v5432
    %v5441 = vmax.f32 %v5402, %v5433
    %v5442 = vmax.f32 %v5404, %v5434
    %v5443 = vmax.f32 %v5406, %v5435
    %v5444 = vpack.c.bf16 %v5441, %v5440
    %v5445 = vpack.c.bf16 %v5443, %v5442
    %s5446 = scalar_lea.vmem %s5, 168
    %v5447 = vld [vmem:[%s5446] sm:$0xf]
    %v5448 = vld [vmem:[%s5446 + $0x4] sm:$0xf]
    %v5449 = vld [vmem:[%s5446 + $0x8] sm:$0xf]
    %v5450 = vld [vmem:[%s5446 + $0xc] sm:$0xf]
    %v5451 = vld [vmem:[%s5446 + $0x10] sm:$0xf]
    %v5452 = vld [vmem:[%s5446 + $0x14] sm:$0xf]
    %v5453 = vld [vmem:[%s5446 + $0x18] sm:$0xf]
    %v5454 = vld [vmem:[%s5446 + $0x1c] sm:$0xf]
    %v5455 = vld [vmem:[%s5446 + $0x20] sm:$0xf]
    %v5456 = vld [vmem:[%s5446 + $0x24] sm:$0xf]
    %v5457 = vld [vmem:[%s5446 + $0x28] sm:$0xf]
    %v5458 = vld [vmem:[%s5446 + $0x2c] sm:$0xf]
    %v5459 = vld [vmem:[%s5446 + $0x30] sm:$0xf]
    %v5460 = vld [vmem:[%s5446 + $0x34] sm:$0xf]
    %v5475 = vunpack.c.l.b16 %v5447
    %v5476 = vunpack.c.l.b16 %v5448
    %v5477 = vunpack.c.l.b16 %v5449
    %v5478 = vunpack.c.l.b16 %v5450
    %v5479 = vunpack.c.l.b16 %v5451
    %v5480 = vunpack.c.l.b16 %v5452
    %v5481 = vunpack.c.l.b16 %v5453
    %v5482 = vunpack.c.l.b16 %v5454
    %v5483 = vunpack.c.l.b16 %v5455
    %v5484 = vunpack.c.l.b16 %v5456
    %v5485 = vunpack.c.l.b16 %v5457
    %v5486 = vunpack.c.l.b16 %v5458
    %v5487 = vunpack.c.l.b16 %v5459
    %v5488 = vunpack.c.l.b16 %v5460
    %v5489 = vpack.c.b16 %v5476, %v5475
    %v5490 = vpack.c.b16 %v5478, %v5477
    %v5491 = vpack.c.b16 %v5480, %v5479
    %v5492 = vpack.c.b16 %v5482, %v5481
    %v5493 = vpack.c.b16 %v5484, %v5483
    %v5494 = vpack.c.b16 %v5486, %v5485
    %v5495 = vpack.c.b16 %v5488, %v5487
    %v5504 = vsel %vm5053, %v5444, 0
    %v5507 = vsel %vm5053, %v5445, 0
    %5509 = vmatprep.subr.bf16.mxu0 0
    %5510 = vmatpush1.bf16.msra.mxu0 0
    %5511 = vmatprep.subr.bf16.mxu0 0
    %5512 = vmatpush1.bf16.msra.mxu0 %v5495
    %5513 = vmatprep.subr.bf16.mxu0 0
    %5514 = vmatpush1.bf16.msra.mxu0 %v5494
    %5515 = vmatprep.subr.bf16.mxu0 0
    %5516 = vmatpush1.bf16.msra.mxu0 %v5493
    %5517 = vmatprep.subr.bf16.mxu0 0
    %5518 = vmatpush1.bf16.msra.mxu0 %v5492
    %5519 = vmatprep.subr.bf16.mxu0 0
    %5520 = vmatpush1.bf16.msra.mxu0 %v5491
    %5521 = vmatprep.subr.bf16.mxu0 0
    %5522 = vmatpush1.bf16.msra.mxu0 %v5490
    %5523 = vmatprep.subr.bf16.mxu0 0
    %5524 = vmatpush1.bf16.msra.mxu0 %v5489
    %5525 = vmatprep.subr.bf16.mxu0 0
    %5526 = vmatpush2.bf16.msra.mxu0 0
    %5527 = vmatprep.subr.bf16.mxu0 0
    %5528 = vmatpush2.bf16.msra.mxu0 0
    %5529 = vmatprep.subr.bf16.mxu0 0
    %5530 = vmatpush2.bf16.msra.mxu0 0
    %5531 = vmatprep.subr.bf16.mxu0 0
    %5532 = vmatpush2.bf16.msra.mxu0 0
    %5533 = vmatprep.subr.bf16.mxu0 0
    %5534 = vmatpush2.bf16.msra.mxu0 0
    %5535 = vmatprep.subr.bf16.mxu0 0
    %5536 = vmatpush2.bf16.msra.mxu0 0
    %5537 = vmatprep.subr.bf16.mxu0 0
    %5538 = vmatpush2.bf16.msra.mxu0 0
    %5539 = vmatprep.subr.bf16.mxu0 0
    %5540 = vmatpush2.bf16.msra.mxu0 0
    %5541 = vmatprep.mubr.bf16.mxu0 0
    %5542 = vmatmul.mubr.bf16.gmra.mxu0 %v5504
    %v5543 = vpop.f32.mrf.mxu0
    %v5544 = vadd.f32 0.0, %v5543
    %v5545 = vpop.f32.mrf.mxu0
    %v5546 = vpop.f32.mrf.mxu0
    %v5547 = vadd.f32 0.0, %v5546
    %v5548 = vpop.f32.mrf.mxu0
    %5549 = vmatprep.mubr.bf16.mxu0 0
    %5550 = vmatmul.mubr.bf16.gmra.mxu0 %v5507
    %v5551 = vpop.f32.mrf.mxu0
    %v5552 = vadd.f32 0.0, %v5551
    %v5553 = vpop.f32.mrf.mxu0
    %v5554 = vpop.f32.mrf.mxu0
    %v5555 = vadd.f32 0.0, %v5554
    %v5556 = vpop.f32.mrf.mxu0
    %5557 = vdwg.mxu0
    %v5558 = vadd.f32 %v5380, %v5544
    %v5559 = vadd.f32 %v5381, %v5547
    %v5560 = vadd.f32 %v5382, %v5552
    %v5561 = vadd.f32 %v5383, %v5555
    %v5562 = vld [vmem:[#allocation5 + $0x200] sm:$0xff]
    %v5563 = vld [vmem:[#allocation5 + $0x208] sm:$0xff]
    %v5564 = vld [vmem:[#allocation5 + $0x210] sm:$0xff]
    %v5565 = vld [vmem:[#allocation5 + $0x218] sm:$0xff]
    %v5566 = vld [vmem:[#allocation5 + $0x220] sm:$0xff]
    %v5567 = vld [vmem:[#allocation5 + $0x228] sm:$0xff]
    %v5568 = vld [vmem:[#allocation5 + $0x230] sm:$0xff]
    %v5569 = vld [vmem:[#allocation5 + $0x238] sm:$0xff]
    %v5570 = vld [vmem:[#allocation5 + $0x240] sm:$0xff]
    %v5571 = vld [vmem:[#allocation5 + $0x248] sm:$0xff]
    %v5572 = vld [vmem:[#allocation5 + $0x250] sm:$0xff]
    %v5573 = vld [vmem:[#allocation5 + $0x258] sm:$0xff]
    %v5574 = vld [vmem:[#allocation5 + $0x260] sm:$0xff]
    %v5575 = vld [vmem:[#allocation5 + $0x268] sm:$0xff]
    %v5576 = vld [vmem:[#allocation5 + $0x270] sm:$0xff]
    %v5577 = vld [vmem:[#allocation5 + $0x278] sm:$0xff]
    %v5578 = vmax.f32 %v5562, %v5570
    %v5579 = vmax.f32 %v5563, %v5571
    %v5580 = vmax.f32 %v5564, %v5572
    %v5581 = vmax.f32 %v5565, %v5573
    %v5582 = vmax.f32 %v5566, %v5574
    %v5583 = vmax.f32 %v5567, %v5575
    %v5584 = vmax.f32 %v5568, %v5576
    %v5585 = vmax.f32 %v5569, %v5577
    %5594 = vrot.lane.b32.xlu0 %v5578, 16
    %v5595 = vpop.permute.xlu0 %5594
    %5596 = vrot.lane.b32.xlu0 %v5579, 16
    %v5597 = vpop.permute.xlu0 %5596
    %5598 = vrot.lane.b32.xlu0 %v5580, 16
    %v5599 = vpop.permute.xlu0 %5598
    %5600 = vrot.lane.b32.xlu0 %v5581, 16
    %v5601 = vpop.permute.xlu0 %5600
    %5602 = vrot.lane.b32.xlu0 %v5582, 16
    %v5603 = vpop.permute.xlu0 %5602
    %5604 = vrot.lane.b32.xlu0 %v5583, 16
    %v5605 = vpop.permute.xlu0 %5604
    %5606 = vrot.lane.b32.xlu0 %v5584, 16
    %v5607 = vpop.permute.xlu0 %5606
    %5608 = vrot.lane.b32.xlu0 %v5585, 16
    %v5609 = vpop.permute.xlu0 %5608
    %v5610 = vsel %vm1738, %v5595, %v5597
    %v5611 = vsel %vm1738, %v5599, %v5601
    %v5612 = vsel %vm1738, %v5603, %v5605
    %v5613 = vsel %vm1738, %v5607, %v5609
    %v5618 = vmax.f32 %v5578, %v5610
    %v5619 = vmax.f32 %v5580, %v5611
    %v5620 = vmax.f32 %v5582, %v5612
    %v5621 = vmax.f32 %v5584, %v5613
    %v5622 = vpack.c.bf16 %v5619, %v5618
    %v5623 = vpack.c.bf16 %v5621, %v5620
    %s5624 = scalar_lea.vmem %s5, 224
    %v5625 = vld [vmem:[%s5624] sm:$0xf]
    %v5626 = vld [vmem:[%s5624 + $0x4] sm:$0xf]
    %v5627 = vld [vmem:[%s5624 + $0x8] sm:$0xf]
    %v5628 = vld [vmem:[%s5624 + $0xc] sm:$0xf]
    %v5629 = vld [vmem:[%s5624 + $0x10] sm:$0xf]
    %v5630 = vld [vmem:[%s5624 + $0x14] sm:$0xf]
    %v5631 = vld [vmem:[%s5624 + $0x18] sm:$0xf]
    %v5632 = vld [vmem:[%s5624 + $0x1c] sm:$0xf]
    %v5633 = vld [vmem:[%s5624 + $0x20] sm:$0xf]
    %v5634 = vld [vmem:[%s5624 + $0x24] sm:$0xf]
    %v5635 = vld [vmem:[%s5624 + $0x28] sm:$0xf]
    %v5636 = vld [vmem:[%s5624 + $0x2c] sm:$0xf]
    %v5637 = vld [vmem:[%s5624 + $0x30] sm:$0xf]
    %v5638 = vld [vmem:[%s5624 + $0x34] sm:$0xf]
    %v5653 = vunpack.c.l.b16 %v5625
    %v5654 = vunpack.c.l.b16 %v5626
    %v5655 = vunpack.c.l.b16 %v5627
    %v5656 = vunpack.c.l.b16 %v5628
    %v5657 = vunpack.c.l.b16 %v5629
    %v5658 = vunpack.c.l.b16 %v5630
    %v5659 = vunpack.c.l.b16 %v5631
    %v5660 = vunpack.c.l.b16 %v5632
    %v5661 = vunpack.c.l.b16 %v5633
    %v5662 = vunpack.c.l.b16 %v5634
    %v5663 = vunpack.c.l.b16 %v5635
    %v5664 = vunpack.c.l.b16 %v5636
    %v5665 = vunpack.c.l.b16 %v5637
    %v5666 = vunpack.c.l.b16 %v5638
    %v5667 = vpack.c.b16 %v5654, %v5653
    %v5668 = vpack.c.b16 %v5656, %v5655
    %v5669 = vpack.c.b16 %v5658, %v5657
    %v5670 = vpack.c.b16 %v5660, %v5659
    %v5671 = vpack.c.b16 %v5662, %v5661
    %v5672 = vpack.c.b16 %v5664, %v5663
    %v5673 = vpack.c.b16 %v5666, %v5665
    %v5682 = vsel %vm5053, %v5622, 0
    %v5685 = vsel %vm5053, %v5623, 0
    %5687 = vmatprep.subr.bf16.mxu0 0
    %5688 = vmatpush1.bf16.msra.mxu0 0
    %5689 = vmatprep.subr.bf16.mxu0 0
    %5690 = vmatpush1.bf16.msra.mxu0 %v5673
    %5691 = vmatprep.subr.bf16.mxu0 0
    %5692 = vmatpush1.bf16.msra.mxu0 %v5672
    %5693 = vmatprep.subr.bf16.mxu0 0
    %5694 = vmatpush1.bf16.msra.mxu0 %v5671
    %5695 = vmatprep.subr.bf16.mxu0 0
    %5696 = vmatpush1.bf16.msra.mxu0 %v5670
    %5697 = vmatprep.subr.bf16.mxu0 0
    %5698 = vmatpush1.bf16.msra.mxu0 %v5669
    %5699 = vmatprep.subr.bf16.mxu0 0
    %5700 = vmatpush1.bf16.msra.mxu0 %v5668
    %5701 = vmatprep.subr.bf16.mxu0 0
    %5702 = vmatpush1.bf16.msra.mxu0 %v5667
    %5703 = vmatprep.subr.bf16.mxu0 0
    %5704 = vmatpush2.bf16.msra.mxu0 0
    %5705 = vmatprep.subr.bf16.mxu0 0
    %5706 = vmatpush2.bf16.msra.mxu0 0
    %5707 = vmatprep.subr.bf16.mxu0 0
    %5708 = vmatpush2.bf16.msra.mxu0 0
    %5709 = vmatprep.subr.bf16.mxu0 0
    %5710 = vmatpush2.bf16.msra.mxu0 0
    %5711 = vmatprep.subr.bf16.mxu0 0
    %5712 = vmatpush2.bf16.msra.mxu0 0
    %5713 = vmatprep.subr.bf16.mxu0 0
    %5714 = vmatpush2.bf16.msra.mxu0 0
    %5715 = vmatprep.subr.bf16.mxu0 0
    %5716 = vmatpush2.bf16.msra.mxu0 0
    %5717 = vmatprep.subr.bf16.mxu0 0
    %5718 = vmatpush2.bf16.msra.mxu0 0
    %5719 = vmatprep.mubr.bf16.mxu0 0
    %5720 = vmatmul.mubr.bf16.gmra.mxu0 %v5682
    %v5721 = vpop.f32.mrf.mxu0
    %v5722 = vadd.f32 0.0, %v5721
    %v5723 = vpop.f32.mrf.mxu0
    %v5724 = vpop.f32.mrf.mxu0
    %v5725 = vadd.f32 0.0, %v5724
    %v5726 = vpop.f32.mrf.mxu0
    %5727 = vmatprep.mubr.bf16.mxu0 0
    %5728 = vmatmul.mubr.bf16.gmra.mxu0 %v5685
    %v5729 = vpop.f32.mrf.mxu0
    %v5730 = vadd.f32 0.0, %v5729
    %v5731 = vpop.f32.mrf.mxu0
    %v5732 = vpop.f32.mrf.mxu0
    %v5733 = vadd.f32 0.0, %v5732
    %v5734 = vpop.f32.mrf.mxu0
    %5735 = vdwg.mxu0
    %v5736 = vadd.f32 %v5558, %v5722
    %v5737 = vadd.f32 %v5559, %v5725
    %v5738 = vadd.f32 %v5560, %v5730
    %v5739 = vadd.f32 %v5561, %v5733
    %v5740 = vld [vmem:[#allocation5 + $0x280] sm:$0xff]
    %v5741 = vld [vmem:[#allocation5 + $0x288] sm:$0xff]
    %v5742 = vld [vmem:[#allocation5 + $0x290] sm:$0xff]
    %v5743 = vld [vmem:[#allocation5 + $0x298] sm:$0xff]
    %v5744 = vld [vmem:[#allocation5 + $0x2a0] sm:$0xff]
    %v5745 = vld [vmem:[#allocation5 + $0x2a8] sm:$0xff]
    %v5746 = vld [vmem:[#allocation5 + $0x2b0] sm:$0xff]
    %v5747 = vld [vmem:[#allocation5 + $0x2b8] sm:$0xff]
    %v5748 = vld [vmem:[#allocation5 + $0x2c0] sm:$0xff]
    %v5749 = vld [vmem:[#allocation5 + $0x2c8] sm:$0xff]
    %v5750 = vld [vmem:[#allocation5 + $0x2d0] sm:$0xff]
    %v5751 = vld [vmem:[#allocation5 + $0x2d8] sm:$0xff]
    %v5752 = vld [vmem:[#allocation5 + $0x2e0] sm:$0xff]
    %v5753 = vld [vmem:[#allocation5 + $0x2e8] sm:$0xff]
    %v5754 = vld [vmem:[#allocation5 + $0x2f0] sm:$0xff]
    %v5755 = vld [vmem:[#allocation5 + $0x2f8] sm:$0xff]
    %v5756 = vmax.f32 %v5740, %v5748
    %v5757 = vmax.f32 %v5741, %v5749
    %v5758 = vmax.f32 %v5742, %v5750
    %v5759 = vmax.f32 %v5743, %v5751
    %v5760 = vmax.f32 %v5744, %v5752
    %v5761 = vmax.f32 %v5745, %v5753
    %v5762 = vmax.f32 %v5746, %v5754
    %v5763 = vmax.f32 %v5747, %v5755
    %5772 = vrot.lane.b32.xlu0 %v5756, 16
    %v5773 = vpop.permute.xlu0 %5772
    %5774 = vrot.lane.b32.xlu0 %v5757, 16
    %v5775 = vpop.permute.xlu0 %5774
    %5776 = vrot.lane.b32.xlu0 %v5758, 16
    %v5777 = vpop.permute.xlu0 %5776
    %5778 = vrot.lane.b32.xlu0 %v5759, 16
    %v5779 = vpop.permute.xlu0 %5778
    %5780 = vrot.lane.b32.xlu0 %v5760, 16
    %v5781 = vpop.permute.xlu0 %5780
    %5782 = vrot.lane.b32.xlu0 %v5761, 16
    %v5783 = vpop.permute.xlu0 %5782
    %5784 = vrot.lane.b32.xlu0 %v5762, 16
    %v5785 = vpop.permute.xlu0 %5784
    %5786 = vrot.lane.b32.xlu0 %v5763, 16
    %v5787 = vpop.permute.xlu0 %5786
    %v5788 = vsel %vm1738, %v5773, %v5775
    %v5789 = vsel %vm1738, %v5777, %v5779
    %v5790 = vsel %vm1738, %v5781, %v5783
    %v5791 = vsel %vm1738, %v5785, %v5787
    %v5796 = vmax.f32 %v5756, %v5788
    %v5797 = vmax.f32 %v5758, %v5789
    %v5798 = vmax.f32 %v5760, %v5790
    %v5799 = vmax.f32 %v5762, %v5791
    %v5800 = vpack.c.bf16 %v5797, %v5796
    %v5801 = vpack.c.bf16 %v5799, %v5798
    %s5802 = scalar_lea.vmem %s5, 280
    %v5803 = vld [vmem:[%s5802] sm:$0xf]
    %v5804 = vld [vmem:[%s5802 + $0x4] sm:$0xf]
    %v5805 = vld [vmem:[%s5802 + $0x8] sm:$0xf]
    %v5806 = vld [vmem:[%s5802 + $0xc] sm:$0xf]
    %v5807 = vld [vmem:[%s5802 + $0x10] sm:$0xf]
    %v5808 = vld [vmem:[%s5802 + $0x14] sm:$0xf]
    %v5809 = vld [vmem:[%s5802 + $0x18] sm:$0xf]
    %v5810 = vld [vmem:[%s5802 + $0x1c] sm:$0xf]
    %v5811 = vld [vmem:[%s5802 + $0x20] sm:$0xf]
    %v5812 = vld [vmem:[%s5802 + $0x24] sm:$0xf]
    %v5813 = vld [vmem:[%s5802 + $0x28] sm:$0xf]
    %v5814 = vld [vmem:[%s5802 + $0x2c] sm:$0xf]
    %v5815 = vld [vmem:[%s5802 + $0x30] sm:$0xf]
    %v5816 = vld [vmem:[%s5802 + $0x34] sm:$0xf]
    %v5831 = vunpack.c.l.b16 %v5803
    %v5832 = vunpack.c.l.b16 %v5804
    %v5833 = vunpack.c.l.b16 %v5805
    %v5834 = vunpack.c.l.b16 %v5806
    %v5835 = vunpack.c.l.b16 %v5807
    %v5836 = vunpack.c.l.b16 %v5808
    %v5837 = vunpack.c.l.b16 %v5809
    %v5838 = vunpack.c.l.b16 %v5810
    %v5839 = vunpack.c.l.b16 %v5811
    %v5840 = vunpack.c.l.b16 %v5812
    %v5841 = vunpack.c.l.b16 %v5813
    %v5842 = vunpack.c.l.b16 %v5814
    %v5843 = vunpack.c.l.b16 %v5815
    %v5844 = vunpack.c.l.b16 %v5816
    %v5845 = vpack.c.b16 %v5832, %v5831
    %v5846 = vpack.c.b16 %v5834, %v5833
    %v5847 = vpack.c.b16 %v5836, %v5835
    %v5848 = vpack.c.b16 %v5838, %v5837
    %v5849 = vpack.c.b16 %v5840, %v5839
    %v5850 = vpack.c.b16 %v5842, %v5841
    %v5851 = vpack.c.b16 %v5844, %v5843
    %v5860 = vsel %vm5053, %v5800, 0
    %v5863 = vsel %vm5053, %v5801, 0
    %5865 = vmatprep.subr.bf16.mxu0 0
    %5866 = vmatpush1.bf16.msra.mxu0 0
    %5867 = vmatprep.subr.bf16.mxu0 0
    %5868 = vmatpush1.bf16.msra.mxu0 %v5851
    %5869 = vmatprep.subr.bf16.mxu0 0
    %5870 = vmatpush1.bf16.msra.mxu0 %v5850
    %5871 = vmatprep.subr.bf16.mxu0 0
    %5872 = vmatpush1.bf16.msra.mxu0 %v5849
    %5873 = vmatprep.subr.bf16.mxu0 0
    %5874 = vmatpush1.bf16.msra.mxu0 %v5848
    %5875 = vmatprep.subr.bf16.mxu0 0
    %5876 = vmatpush1.bf16.msra.mxu0 %v5847
    %5877 = vmatprep.subr.bf16.mxu0 0
    %5878 = vmatpush1.bf16.msra.mxu0 %v5846
    %5879 = vmatprep.subr.bf16.mxu0 0
    %5880 = vmatpush1.bf16.msra.mxu0 %v5845
    %5881 = vmatprep.subr.bf16.mxu0 0
    %5882 = vmatpush2.bf16.msra.mxu0 0
    %5883 = vmatprep.subr.bf16.mxu0 0
    %5884 = vmatpush2.bf16.msra.mxu0 0
    %5885 = vmatprep.subr.bf16.mxu0 0
    %5886 = vmatpush2.bf16.msra.mxu0 0
    %5887 = vmatprep.subr.bf16.mxu0 0
    %5888 = vmatpush2.bf16.msra.mxu0 0
    %5889 = vmatprep.subr.bf16.mxu0 0
    %5890 = vmatpush2.bf16.msra.mxu0 0
    %5891 = vmatprep.subr.bf16.mxu0 0
    %5892 = vmatpush2.bf16.msra.mxu0 0
    %5893 = vmatprep.subr.bf16.mxu0 0
    %5894 = vmatpush2.bf16.msra.mxu0 0
    %5895 = vmatprep.subr.bf16.mxu0 0
    %5896 = vmatpush2.bf16.msra.mxu0 0
    %5897 = vmatprep.mubr.bf16.mxu0 0
    %5898 = vmatmul.mubr.bf16.gmra.mxu0 %v5860
    %v5899 = vpop.f32.mrf.mxu0
    %v5900 = vadd.f32 0.0, %v5899
    %v5901 = vpop.f32.mrf.mxu0
    %v5902 = vpop.f32.mrf.mxu0
    %v5903 = vadd.f32 0.0, %v5902
    %v5904 = vpop.f32.mrf.mxu0
    %5905 = vmatprep.mubr.bf16.mxu0 0
    %5906 = vmatmul.mubr.bf16.gmra.mxu0 %v5863
    %v5907 = vpop.f32.mrf.mxu0
    %v5908 = vadd.f32 0.0, %v5907
    %v5909 = vpop.f32.mrf.mxu0
    %v5910 = vpop.f32.mrf.mxu0
    %v5911 = vadd.f32 0.0, %v5910
    %v5912 = vpop.f32.mrf.mxu0
    %5913 = vdwg.mxu0
    %v5914 = vadd.f32 %v5736, %v5900
    %v5915 = vadd.f32 %v5737, %v5903
    %v5916 = vadd.f32 %v5738, %v5908
    %v5917 = vadd.f32 %v5739, %v5911
    %v5918 = vld [vmem:[#allocation5 + $0x300] sm:$0xff]
    %v5919 = vld [vmem:[#allocation5 + $0x308] sm:$0xff]
    %v5920 = vld [vmem:[#allocation5 + $0x310] sm:$0xff]
    %v5921 = vld [vmem:[#allocation5 + $0x318] sm:$0xff]
    %v5922 = vld [vmem:[#allocation5 + $0x320] sm:$0xff]
    %v5923 = vld [vmem:[#allocation5 + $0x328] sm:$0xff]
    %v5924 = vld [vmem:[#allocation5 + $0x330] sm:$0xff]
    %v5925 = vld [vmem:[#allocation5 + $0x338] sm:$0xff]
    %v5926 = vld [vmem:[#allocation5 + $0x340] sm:$0xff]
    %v5927 = vld [vmem:[#allocation5 + $0x348] sm:$0xff]
    %v5928 = vld [vmem:[#allocation5 + $0x350] sm:$0xff]
    %v5929 = vld [vmem:[#allocation5 + $0x358] sm:$0xff]
    %v5930 = vld [vmem:[#allocation5 + $0x360] sm:$0xff]
    %v5931 = vld [vmem:[#allocation5 + $0x368] sm:$0xff]
    %v5932 = vld [vmem:[#allocation5 + $0x370] sm:$0xff]
    %v5933 = vld [vmem:[#allocation5 + $0x378] sm:$0xff]
    %v5934 = vmax.f32 %v5918, %v5926
    %v5935 = vmax.f32 %v5919, %v5927
    %v5936 = vmax.f32 %v5920, %v5928
    %v5937 = vmax.f32 %v5921, %v5929
    %v5938 = vmax.f32 %v5922, %v5930
    %v5939 = vmax.f32 %v5923, %v5931
    %v5940 = vmax.f32 %v5924, %v5932
    %v5941 = vmax.f32 %v5925, %v5933
    %5950 = vrot.lane.b32.xlu0 %v5934, 16
    %v5951 = vpop.permute.xlu0 %5950
    %5952 = vrot.lane.b32.xlu0 %v5935, 16
    %v5953 = vpop.permute.xlu0 %5952
    %5954 = vrot.lane.b32.xlu0 %v5936, 16
    %v5955 = vpop.permute.xlu0 %5954
    %5956 = vrot.lane.b32.xlu0 %v5937, 16
    %v5957 = vpop.permute.xlu0 %5956
    %5958 = vrot.lane.b32.xlu0 %v5938, 16
    %v5959 = vpop.permute.xlu0 %5958
    %5960 = vrot.lane.b32.xlu0 %v5939, 16
    %v5961 = vpop.permute.xlu0 %5960
    %5962 = vrot.lane.b32.xlu0 %v5940, 16
    %v5963 = vpop.permute.xlu0 %5962
    %5964 = vrot.lane.b32.xlu0 %v5941, 16
    %v5965 = vpop.permute.xlu0 %5964
    %v5966 = vsel %vm1738, %v5951, %v5953
    %v5967 = vsel %vm1738, %v5955, %v5957
    %v5968 = vsel %vm1738, %v5959, %v5961
    %v5969 = vsel %vm1738, %v5963, %v5965
    %v5974 = vmax.f32 %v5934, %v5966
    %v5975 = vmax.f32 %v5936, %v5967
    %v5976 = vmax.f32 %v5938, %v5968
    %v5977 = vmax.f32 %v5940, %v5969
    %v5978 = vpack.c.bf16 %v5975, %v5974
    %v5979 = vpack.c.bf16 %v5977, %v5976
    %s5980 = scalar_lea.vmem %s5, 336
    %v5981 = vld [vmem:[%s5980] sm:$0xf]
    %v5982 = vld [vmem:[%s5980 + $0x4] sm:$0xf]
    %v5983 = vld [vmem:[%s5980 + $0x8] sm:$0xf]
    %v5984 = vld [vmem:[%s5980 + $0xc] sm:$0xf]
    %v5985 = vld [vmem:[%s5980 + $0x10] sm:$0xf]
    %v5986 = vld [vmem:[%s5980 + $0x14] sm:$0xf]
    %v5987 = vld [vmem:[%s5980 + $0x18] sm:$0xf]
    %v5988 = vld [vmem:[%s5980 + $0x1c] sm:$0xf]
    %v5989 = vld [vmem:[%s5980 + $0x20] sm:$0xf]
    %v5990 = vld [vmem:[%s5980 + $0x24] sm:$0xf]
    %v5991 = vld [vmem:[%s5980 + $0x28] sm:$0xf]
    %v5992 = vld [vmem:[%s5980 + $0x2c] sm:$0xf]
    %v5993 = vld [vmem:[%s5980 + $0x30] sm:$0xf]
    %v5994 = vld [vmem:[%s5980 + $0x34] sm:$0xf]
    %v6009 = vunpack.c.l.b16 %v5981
    %v6010 = vunpack.c.l.b16 %v5982
    %v6011 = vunpack.c.l.b16 %v5983
    %v6012 = vunpack.c.l.b16 %v5984
    %v6013 = vunpack.c.l.b16 %v5985
    %v6014 = vunpack.c.l.b16 %v5986
    %v6015 = vunpack.c.l.b16 %v5987
    %v6016 = vunpack.c.l.b16 %v5988
    %v6017 = vunpack.c.l.b16 %v5989
    %v6018 = vunpack.c.l.b16 %v5990
    %v6019 = vunpack.c.l.b16 %v5991
    %v6020 = vunpack.c.l.b16 %v5992
    %v6021 = vunpack.c.l.b16 %v5993
    %v6022 = vunpack.c.l.b16 %v5994
    %v6023 = vpack.c.b16 %v6010, %v6009
    %v6024 = vpack.c.b16 %v6012, %v6011
    %v6025 = vpack.c.b16 %v6014, %v6013
    %v6026 = vpack.c.b16 %v6016, %v6015
    %v6027 = vpack.c.b16 %v6018, %v6017
    %v6028 = vpack.c.b16 %v6020, %v6019
    %v6029 = vpack.c.b16 %v6022, %v6021
    %v6038 = vsel %vm5053, %v5978, 0
    %v6041 = vsel %vm5053, %v5979, 0
    %6043 = vmatprep.subr.bf16.mxu0 0
    %6044 = vmatpush1.bf16.msra.mxu0 0
    %6045 = vmatprep.subr.bf16.mxu0 0
    %6046 = vmatpush1.bf16.msra.mxu0 %v6029
    %6047 = vmatprep.subr.bf16.mxu0 0
    %6048 = vmatpush1.bf16.msra.mxu0 %v6028
    %6049 = vmatprep.subr.bf16.mxu0 0
    %6050 = vmatpush1.bf16.msra.mxu0 %v6027
    %6051 = vmatprep.subr.bf16.mxu0 0
    %6052 = vmatpush1.bf16.msra.mxu0 %v6026
    %6053 = vmatprep.subr.bf16.mxu0 0
    %6054 = vmatpush1.bf16.msra.mxu0 %v6025
    %6055 = vmatprep.subr.bf16.mxu0 0
    %6056 = vmatpush1.bf16.msra.mxu0 %v6024
    %6057 = vmatprep.subr.bf16.mxu0 0
    %6058 = vmatpush1.bf16.msra.mxu0 %v6023
    %6059 = vmatprep.subr.bf16.mxu0 0
    %6060 = vmatpush2.bf16.msra.mxu0 0
    %6061 = vmatprep.subr.bf16.mxu0 0
    %6062 = vmatpush2.bf16.msra.mxu0 0
    %6063 = vmatprep.subr.bf16.mxu0 0
    %6064 = vmatpush2.bf16.msra.mxu0 0
    %6065 = vmatprep.subr.bf16.mxu0 0
    %6066 = vmatpush2.bf16.msra.mxu0 0
    %6067 = vmatprep.subr.bf16.mxu0 0
    %6068 = vmatpush2.bf16.msra.mxu0 0
    %6069 = vmatprep.subr.bf16.mxu0 0
    %6070 = vmatpush2.bf16.msra.mxu0 0
    %6071 = vmatprep.subr.bf16.mxu0 0
    %6072 = vmatpush2.bf16.msra.mxu0 0
    %6073 = vmatprep.subr.bf16.mxu0 0
    %6074 = vmatpush2.bf16.msra.mxu0 0
    %6075 = vmatprep.mubr.bf16.mxu0 0
    %6076 = vmatmul.mubr.bf16.gmra.mxu0 %v6038
    %v6077 = vpop.f32.mrf.mxu0
    %v6078 = vadd.f32 0.0, %v6077
    %v6079 = vpop.f32.mrf.mxu0
    %v6080 = vpop.f32.mrf.mxu0
    %v6081 = vadd.f32 0.0, %v6080
    %v6082 = vpop.f32.mrf.mxu0
    %6083 = vmatprep.mubr.bf16.mxu0 0
    %6084 = vmatmul.mubr.bf16.gmra.mxu0 %v6041
    %v6085 = vpop.f32.mrf.mxu0
    %v6086 = vadd.f32 0.0, %v6085
    %v6087 = vpop.f32.mrf.mxu0
    %v6088 = vpop.f32.mrf.mxu0
    %v6089 = vadd.f32 0.0, %v6088
    %v6090 = vpop.f32.mrf.mxu0
    %6091 = vdwg.mxu0
    %v6092 = vadd.f32 %v5914, %v6078
    %v6093 = vadd.f32 %v5915, %v6081
    %v6094 = vadd.f32 %v5916, %v6086
    %v6095 = vadd.f32 %v5917, %v6089
    %v6096 = vld [vmem:[%s6] sm:$0x1]
    %v6098 = vlaneseq
    %v6099 = vshrl.u32 %v6098, 7
    %v6100 = vsub.s32 0, %v6099
    %v6101 = vrot.slane %v6096, %v6100
    %v6103 = vadd.f32 %v6092, %v6101
    %v6104 = vadd.f32 %v6093, %v6101
    %v6105 = vadd.f32 %v6094, %v6101
    %v6106 = vadd.f32 %v6095, %v6101
    %6107 = vst [vmem:[#allocation6] sm:$0xff] %v6103
    %6108 = vst [vmem:[#allocation6 + $0x8] sm:$0xff] %v6104
    %6109 = vst [vmem:[#allocation6 + $0x10] sm:$0xff] %v6105
    %6110 = vst [vmem:[#allocation6 + $0x18] sm:$0xff] %v6106
    // Predicated region
    $region30: #{tpu_custom_call.1} parent=1 // pred_check
      _
    $region31: #{tpu_custom_call.1} parent=1 // pred_check_branch
      %6112 = sbr.rel (0) target = $region33
    $region32: #{tpu_custom_call.1} parent=1 // pred_region
      %s6114 = ssub.s32 512, 512
      %6115 = vsyncadd [#allocation7], %s6114
      %s6116 = sshll.u32 [#allocation6], 4
      %s6117 = int_to_ptr.vmem [resolvable:$true] %s6116
      %6122 = dma.vmem_to_hbm [thread:$0]  %s6117, 512, %s7, [#allocation7], 128, 128, 8
    $region33: #{tpu_custom_call.1} parent=1 // pred_fallthru
      _
    // Predicated region
    $region34: #{tpu_custom_call.1} parent=1 // pred_check
      _
    $region35: #{tpu_custom_call.1} parent=1 // pred_check_branch
      %6124 = sbr.rel (0) target = $region37
    $region36: #{tpu_custom_call.1} parent=1 // pred_region
      %6125 = dma.done [#allocation7], 512
    $region37: #{tpu_custom_call.1} parent=1 // pred_fallthru
      _
    %6126 = vsyncpa [#allocation7], 1

</llo_original>
